<compile_context>
chip_gen: v6e
topology: v6e:2x2x1
jax: 0.10.0
libtpu: 0.0.40
codegen_flags: <defaults>
</compile_context>

<pallas_src>
import math

import jax
import jax.numpy as jnp
from jax.experimental import pallas as pl
from jax.experimental.pallas import tpu as pltpu

DIM_IN = 1024            # hard-coded in AMROD.__init__ (dim_in = 1024)
NUM_CLASSES = 8          # small synthetic class count
NUM_LOGITS = NUM_CLASSES + 1   # ROI box predictor adds a background class


def _resident_blockspec(block_shape, index_map):
    """BlockSpec for operands whose index_map is constant across the grid
    (weights / biases): request a single VMEM buffer instead of the default
    double buffer to cut resident VMEM (matters most on v7x's 64 MiB)."""
    try:
        return pl.BlockSpec(block_shape, index_map, pipeline_mode=pl.Buffered(1))
    except (AttributeError, TypeError):   # older pallas without pipeline_mode
        return pl.BlockSpec(block_shape, index_map)


# ----------------------------------------------------------------------------
# Kernel 1: query_head / value_head MLP  (matmul hot path, bf16 MXU, f32 accum)
# ----------------------------------------------------------------------------
def _mlp_head_kernel(x_ref, w1_ref, b1_ref, w2_ref, b2_ref, o_ref):
    # x / w1 / w2 arrive as bf16 -> native bf16 MXU passes, f32 accumulation.
    h = jnp.dot(x_ref[...], w1_ref[...], preferred_element_type=jnp.float32)
    h = jnp.maximum(h + b1_ref[...], 0.0)                       # bias + ReLU in f32
    y = jnp.dot(h.astype(jnp.bfloat16), w2_ref[...],
                preferred_element_type=jnp.float32) + b2_ref[...]
    o_ref[...] = y.astype(o_ref.dtype)


def head_to_bf16(params):
    """Persistent bf16 copies of the head weights (compute ONCE outside the
    adapt step and reuse every iteration; refresh after optimizer.step()).
    Biases stay f32 — the bias add / ReLU run in f32 inside the kernel."""
    # TODO(synk): on v7x an fp8 weight copy (int8 on v5e/v6e) would halve the
    # weight traffic again — only if adaptation quality tolerates it.
    return {"w1": params["w1"].astype(jnp.bfloat16),
            "w2": params["w2"].astype(jnp.bfloat16),
            "b1": params["b1"], "b2": params["b2"]}


def mlp_head(x, params_bf16, tile_n=128, out_dtype=jnp.float32):
    n, d = x.shape
    tile_n = n if n < tile_n else tile_n
    assert n % tile_n == 0, (n, tile_n)
    xb = x if x.dtype == jnp.bfloat16 else x.astype(jnp.bfloat16)
    return pl.pallas_call(
        _mlp_head_kernel,
        out_shape=jax.ShapeDtypeStruct((n, d), out_dtype),
        grid=(n // tile_n,),
        in_specs=[
            pl.BlockSpec((tile_n, d), lambda i: (i, 0)),
            _resident_blockspec((d, d), lambda i: (0, 0)),
            _resident_blockspec((1, d), lambda i: (0, 0)),
            _resident_blockspec((d, d), lambda i: (0, 0)),
            _resident_blockspec((1, d), lambda i: (0, 0)),
        ],
        out_specs=pl.BlockSpec((tile_n, d), lambda i: (i, 0)),
        compiler_params=pltpu.CompilerParams(
            dimension_semantics=("parallel",),     # grid=(2,) -> both v7x TCs
            vmem_limit_bytes=32 << 20,
        ),
    )(xb, params_bf16["w1"], params_bf16["b1"],
      params_bf16["w2"], params_bf16["b2"])


def query_head_fused(s_feat, t_feat, params_bf16, tile_n=128):
    """Project student + teacher box features through query_head with ONE
    pallas_call so the (1024,1024) weights are DMA'd from HBM a single time.
    Activations are cast to bf16 BEFORE the concat (halves the copy)."""
    n = s_feat.shape[0]
    both = jnp.concatenate(
        [s_feat.astype(jnp.bfloat16), t_feat.astype(jnp.bfloat16)], axis=0)
    out = mlp_head(both, params_bf16, tile_n=tile_n)
    return out[:n], out[n:]


# ----------------------------------------------------------------------------
# KD_loss — plain JAX (perf review: a pallas_call on a 128x9 block costs more
# in launch/DMA overhead than the math; XLA fuses this for free).
# ----------------------------------------------------------------------------
def kd_loss(student_logits, teacher_logits):
    # F.kl_div(log_softmax(student), softmax(teacher), reduction='batchmean')
    t_logp = jax.nn.log_softmax(teacher_logits, axis=1)
    t_p = jnp.exp(t_logp)
    s_logp = jax.nn.log_softmax(student_logits, axis=1)
    return jnp.sum(t_p * (t_logp - s_logp)) / student_logits.shape[0]


# ----------------------------------------------------------------------------
# Kernel 2 (fused): mean-teacher EMA of both head weights  +  stochastic
# restore blend of the student w1 toward the anchor.  One streaming pass:
#   new_t_w1 = s_w1*(1-keep) + t_w1*keep
#   new_t_w2 = s_w2*(1-keep) + t_w2*keep
#   restored_w1 = anchor_w1*mask + s_w1*(1-mask)      (mask arrives as int8)
# Teacher buffers and the student w1 buffer are updated in place via
# input_output_aliases (matches the module's in-place load_state_dict / p.data).
# ----------------------------------------------------------------------------
def _ema_restore_kernel(keep_ref, s_w1_ref, s_w2_ref, t_w1_ref, t_w2_ref,
                        a_w1_ref, mask_ref, o_tw1_ref, o_tw2_ref, o_rw1_ref):
    keep = keep_ref[0]                       # scalar EMA keep_rate from SMEM
    s_w1 = s_w1_ref[...]                     # read once, feeds EMA and restore
    o_tw1_ref[...] = (s_w1 * (1.0 - keep)
                      + t_w1_ref[...] * keep).astype(o_tw1_ref.dtype)
    o_tw2_ref[...] = (s_w2_ref[...] * (1.0 - keep)
                      + t_w2_ref[...] * keep).astype(o_tw2_ref.dtype)
    m = mask_ref[...].astype(jnp.float32)    # int8 {0,1} -> f32
    o_rw1_ref[...] = (a_w1_ref[...] * m + s_w1 * (1.0 - m)).astype(o_rw1_ref.dtype)


def ema_and_restore(student, teacher, anchor_w1, mask_i8, keep_rate,
                    tile_rows=512):
    rows, cols = student["w1"].shape
    if rows < tile_rows or rows % tile_rows:
        tile_rows = rows
    w_spec = pl.BlockSpec((tile_rows, cols), lambda i: (i, 0))
    keep_arr = jnp.full((1,), keep_rate, jnp.float32)
    new_w1, new_w2, restored_w1 = pl.pallas_call(
        _ema_restore_kernel,
        out_shape=(
            jax.ShapeDtypeStruct(teacher["w1"].shape, teacher["w1"].dtype),
            jax.ShapeDtypeStruct(teacher["w2"].shape, teacher["w2"].dtype),
            jax.ShapeDtypeStruct(student["w1"].shape, student["w1"].dtype),
        ),
        grid=(rows // tile_rows,),
        in_specs=[
            pl.BlockSpec(memory_space=pltpu.MemorySpace.SMEM),  # keep_rate scalar
            w_spec,        # student w1 (f32)
            w_spec,        # student w2 (f32)
            w_spec,        # teacher w1 (f32)
            w_spec,        # teacher w2 (f32)
            w_spec,        # anchor  w1 (f32)
            w_spec,        # restore mask (int8)
        ],
        out_specs=(w_spec, w_spec, w_spec),
        # teacher weights + student w1 updated in place (buffer donation)
        input_output_aliases={3: 0, 4: 1, 1: 2},
        compiler_params=pltpu.CompilerParams(
            dimension_semantics=("parallel",),
            # ~33 MB double-buffered at (512,1024) tiles: set an explicit limit
            # so v5e's 16 MiB scoped default is not the binding constraint and
            # we stay inside v7x's 64 MiB physical VMEM.
            vmem_limit_bytes=48 << 20,
        ),
    )(keep_arr, student["w1"], student["w2"], teacher["w1"], teacher["w2"],
      anchor_w1, mask_i8)
    # Tiny (1,1024) biases: launch overhead >> work, leave to XLA.
    kr = keep_rate
    new_b1 = student["b1"] * (1.0 - kr) + teacher["b1"] * kr
    new_b2 = student["b2"] * (1.0 - kr) + teacher["b2"] * kr
    new_teacher = {"w1": new_w1, "b1": new_b1, "w2": new_w2, "b2": new_b2}
    return new_teacher, restored_w1


# ----------------------------------------------------------------------------
# Plain-JAX glue reproducing the module's scalar / bookkeeping logic
# (kept fully on-device: no python float() host syncs inside the adapt step)
# ----------------------------------------------------------------------------
def find_weight_quantile(key, matrix, perc):
    # mask = (weights * rand_like(weights)) < linear-interp quantile(perc)
    # Returned as int8 so the restore kernel only streams 1 MB, not 4 MB.
    # TODO(synk): the exact 1M-element sort is kept for semantic parity with
    # torch.sort; a histogram / top-k quantile estimate would be much cheaper.
    weights = matrix / jnp.max(matrix)
    noise = jax.random.uniform(key, matrix.shape, dtype=matrix.dtype)
    wwn = weights * noise
    arr = jnp.sort(wwn.reshape(-1))
    n = arr.shape[0]
    frac_idx = perc * (n - 1)
    low = min(int(frac_idx), n - 2)        # clamp: avoids OOB at perc == 1.0
    frac = frac_idx - low
    threshold = arr[low] + (arr[low + 1] - arr[low]) * frac
    return (wwn < threshold).astype(jnp.int8)


def dynamic_threshold(thresholds, score_mean, gamma_dt, alpha_dt, t_max, t_min):
    # vectorized, stays on device
    updated = gamma_dt * thresholds + (1.0 - gamma_dt) * alpha_dt * jnp.sqrt(
        jnp.maximum(score_mean, 0.0))
    new_th = jnp.where(score_mean > 0, updated, thresholds)
    return jnp.clip(new_th, t_min, t_max)


def init_linear(key, fan_in, fan_out, dtype=jnp.float32):
    # torch nn.Linear default: uniform(-1/sqrt(fan_in), 1/sqrt(fan_in))
    kw, kb = jax.random.split(key)
    bound = 1.0 / math.sqrt(fan_in)
    w = jax.random.uniform(kw, (fan_in, fan_out), dtype, -bound, bound)
    b = jax.random.uniform(kb, (1, fan_out), dtype, -bound, bound)
    return w, b


def init_head(key, dim_in):
    k1, k2 = jax.random.split(key)
    w1, b1 = init_linear(k1, dim_in, dim_in)
    w2, b2 = init_linear(k2, dim_in, dim_in)
    return {"w1": w1, "b1": b1, "w2": w2, "b2": b2}


# ----------------------------------------------------------------------------
# AMROD forward_and_adapt (Pallas-backed pieces only)
# ----------------------------------------------------------------------------
def amrod_adapt_step(query_params, query_params_bf16, teacher_params,
                     anchor_params, inputs, cfg, rng):
    scores = inputs["scores"]
    pred_classes = inputs["pred_classes"]

    # ------ score gating / EMA of mean score (all on-device) ------
    valid = scores > 0.1
    valid_scores = jnp.where(valid, scores, 0.0)
    mean_all = jnp.sum(valid_scores) / jnp.maximum(jnp.sum(valid), 1)
    score_em = cfg["score_gamma"] * cfg["score_em"] + (1.0 - cfg["score_gamma"]) * mean_all
    # TODO(synk): the data-dependent early returns (valid_map.sum()==0 and the
    # score-ratio gate) branch on detectron2 inference outputs and need host
    # control flow; not reproduced here.

    # ------ per-class score means -> dynamic per-class thresholds (vectorized) ------
    onehot = (pred_classes[:, None] == jnp.arange(NUM_CLASSES)[None, :]) & valid[:, None]
    cls_cnt = jnp.sum(onehot, axis=0)
    cls_sum = jnp.sum(valid_scores[:, None] * onehot, axis=0)
    score_mean = jnp.where(cls_cnt > 0, cls_sum / jnp.maximum(cls_cnt, 1), 0.0)
    thresholds = dynamic_threshold(cfg["thresholds"], score_mean,
                                   cfg["gamma_dt"], cfg["alpha_dt"],
                                   cfg["thresholds_max"], cfg["thresholds_mini"])
    # TODO(synk): process_pseudo_label / threshold_bbox operates on detectron2
    # Instances (boxes + NMS output); no Pallas equivalent for box bookkeeping.

    # ------ contrastive-query projections: ONE fused Pallas MLP call ------
    s_query, t_query = query_head_fused(inputs["s_box_features"],
                                        inputs["t_box_features"],
                                        query_params_bf16)
    # TODO(synk): AMRODConLoss is not defined in the reference source; the
    # projected queries are returned instead of a contrastive loss value.

    # ------ student/teacher logit consistency (plain JAX, XLA-fused) ------
    st_const = kd_loss(inputs["s_roih_logits"], inputs["t_roih_logits"])

    # TODO(synk): backbone / RPN / ROI-heads losses, optimizer.zero_grad /
    # backward / step have no in-kernel equivalent (autodiff + optimizer state).

    # ------ mean-teacher EMA + stochastic restore: ONE fused, aliased Pallas call ------
    fisher_surrogate = jnp.square(
        jax.random.normal(rng, query_params["w1"].shape, jnp.float32))  # stands in for grad**2
    mask_i8 = find_weight_quantile(jax.random.fold_in(rng, 1),
                                   fisher_surrogate, cfg["rst_m"])
    new_teacher_params, restored_w1 = ema_and_restore(
        query_params, teacher_params, anchor_params["w1"], mask_i8, cfg["mt"])

    return {
        "s_query": s_query,
        "t_query": t_query,
        "st_const": st_const,
        "thresholds": thresholds,
        "score_em": score_em,
        "teacher_params": new_teacher_params,
        "restored_w1": restored_w1,
    }


if __name__ == "__main__":
    key = jax.random.PRNGKey(0)
    (k_params, k_teacher, k_sf, k_tf, k_sl,
     k_tl, k_sc, k_cls, k_rst) = jax.random.split(key, 9)

    n_prop = 128  # number of kept teacher proposals (cfg.SOLVER.PROPOSALS)

    query_params = init_head(k_params, DIM_IN)                 # student head (f32 masters)
    query_params_bf16 = head_to_bf16(query_params)             # persistent bf16 MXU copies
    teacher_params = init_head(k_teacher, DIM_IN)              # separate teacher head
    anchor_params = jax.tree_util.tree_map(lambda p: p + 0.01, query_params)

    inputs = {
        "s_box_features": jax.random.normal(k_sf, (n_prop, DIM_IN), jnp.float32),
        "t_box_features": jax.random.normal(k_tf, (n_prop, DIM_IN), jnp.float32),
        "s_roih_logits": jax.random.normal(k_sl, (n_prop, NUM_LOGITS), jnp.float32),
        "t_roih_logits": jax.random.normal(k_tl, (n_prop, NUM_LOGITS), jnp.float32),
        "scores": jax.random.uniform(k_sc, (n_prop,), jnp.float32),
        "pred_classes": jax.random.randint(k_cls, (n_prop,), 0, NUM_CLASSES),
    }

    cfg = {
        "thresholds": jnp.full((NUM_CLASSES,), 0.5, jnp.float32),  # threshold_init
        "thresholds_max": 0.9,
        "thresholds_mini": 0.25,
        "alpha_dt": 0.5,
        "gamma_dt": 0.9,
        "mt": 0.999,                          # EMA keep_rate
        "rst_m": 0.1,
        "score_em": 0.5,
        "score_gamma": 0.9,
    }

    # ---- references computed BEFORE the adapt step: the fused EMA/restore
    #      kernel donates the teacher / student parameter buffers via
    #      input_output_aliases, so the pre-update arrays may not be read after ----
    def ref_mlp_bf16(x, p):
        # mirrors the kernel numerics: bf16 matmul operands, f32 accumulation
        f32 = jnp.float32
        xb = x.astype(jnp.bfloat16).astype(f32)
        w1 = p["w1"].astype(jnp.bfloat16).astype(f32)
        w2 = p["w2"].astype(jnp.bfloat16).astype(f32)
        h = jnp.maximum(xb @ w1 + p["b1"], 0.0)
        hb = h.astype(jnp.bfloat16).astype(f32)
        return hb @ w2 + p["b2"]

    ref_s_query = ref_mlp_bf16(inputs["s_box_features"], query_params)
    t_prob = jax.nn.softmax(inputs["t_roih_logits"], axis=1)
    s_logp = jax.nn.log_softmax(inputs["s_roih_logits"], axis=1)
    ref_kd = jnp.sum(t_prob * (jnp.log(t_prob) - s_logp)) / n_prop
    ref_teacher_w1 = (query_params["w1"] * (1.0 - cfg["mt"])
                      + teacher_params["w1"] * cfg["mt"])
    fisher_ref = jnp.square(jax.random.normal(k_rst, query_params["w1"].shape, jnp.float32))
    mask_ref = find_weight_quantile(jax.random.fold_in(k_rst, 1),
                                    fisher_ref, cfg["rst_m"]).astype(jnp.float32)
    ref_restored_w1 = (anchor_params["w1"] * mask_ref
                       + query_params["w1"] * (1.0 - mask_ref))
    jax.block_until_ready((ref_s_query, ref_kd, ref_teacher_w1, ref_restored_w1))

    outputs = amrod_adapt_step(query_params, query_params_bf16, teacher_params,
                               anchor_params, inputs, cfg, k_rst)
    jax.block_until_ready((outputs["s_query"], outputs["t_query"], outputs["st_const"],
                           outputs["teacher_params"]["w1"], outputs["restored_w1"],
                           outputs["thresholds"], outputs["score_em"]))

    # sanity checks against plain-JAX references
    assert jnp.allclose(outputs["s_query"], ref_s_query, atol=1e-2, rtol=1e-2)
    assert jnp.allclose(outputs["st_const"], ref_kd, atol=1e-4, rtol=1e-4)
    assert jnp.allclose(outputs["teacher_params"]["w1"], ref_teacher_w1,
                        atol=1e-6, rtol=1e-6)
    assert jnp.allclose(outputs["restored_w1"], ref_restored_w1, atol=1e-6, rtol=1e-6)

    print("KERNEL_OK")
</pallas_src>

<mosaic_0001>
module attributes {stable_mosaic.version = 11 : i64} {
  func.func @_mlp_head_kernel(%arg0: i32, %arg1: memref<128x1024xbf16, #tpu.memory_space<vmem>>, %arg2: memref<1024x1024xbf16, #tpu.memory_space<vmem>>, %arg3: memref<1x1024xf32, #tpu.memory_space<vmem>>, %arg4: memref<1024x1024xbf16, #tpu.memory_space<vmem>>, %arg5: memref<1x1024xf32, #tpu.memory_space<vmem>>, %arg6: memref<128x1024xf32, #tpu.memory_space<vmem>>) attributes {dimension_semantics = [#tpu.dimension_semantics<parallel>], iteration_bounds = array<i64: 2>, scalar_prefetch = 0 : i64, scratch_operands = 0 : i64, tpu.core_type = #tpu.core_type<tc>, window_params = [{transform_indices = @transform_0, window_bounds = array<i64: 128, 1024>}, {pipeline_mode = #tpu.pipeline_mode<synchronous>, transform_indices = @transform_1, window_bounds = array<i64: 1024, 1024>}, {pipeline_mode = #tpu.pipeline_mode<synchronous>, transform_indices = @transform_2, window_bounds = array<i64: 1, 1024>}, {pipeline_mode = #tpu.pipeline_mode<synchronous>, transform_indices = @transform_3, window_bounds = array<i64: 1024, 1024>}, {pipeline_mode = #tpu.pipeline_mode<synchronous>, transform_indices = @transform_4, window_bounds = array<i64: 1, 1024>}, {transform_indices = @transform_5, window_bounds = array<i64: 128, 1024>}]} {
    %c0 = arith.constant 0 : index
    %c0_0 = arith.constant 0 : index
    %0 = vector.load %arg1[%c0, %c0_0] : memref<128x1024xbf16, #tpu.memory_space<vmem>>, vector<128x1024xbf16>
    %c0_1 = arith.constant 0 : index
    %c0_2 = arith.constant 0 : index
    %1 = vector.load %arg2[%c0_1, %c0_2] : memref<1024x1024xbf16, #tpu.memory_space<vmem>>, vector<1024x1024xbf16>
    %cst = arith.constant dense<0.000000e+00> : vector<128x1024xf32>
    %2 = tpu.matmul %0, %1, %cst {dimension_numbers = #tpu.dot_dimension_numbers<[1], [0], [0], [1], [0, 0, 1, 1], [], []>} : vector<128x1024xbf16>, vector<1024x1024xbf16>, vector<128x1024xf32> -> vector<128x1024xf32>
    %c0_3 = arith.constant 0 : index
    %c0_4 = arith.constant 0 : index
    %3 = vector.load %arg3[%c0_3, %c0_4] : memref<1x1024xf32, #tpu.memory_space<vmem>>, vector<1x1024xf32>
    %4 = vector.broadcast %3 : vector<1x1024xf32> to vector<128x1024xf32>
    %5 = arith.addf %2, %4 : vector<128x1024xf32>
    %cst_5 = arith.constant 0.000000e+00 : f32
    %6 = vector.broadcast %cst_5 : f32 to vector<128x1024xf32>
    %7 = arith.maximumf %5, %6 : vector<128x1024xf32>
    %8 = arith.truncf %7 : vector<128x1024xf32> to vector<128x1024xbf16>
    %c0_6 = arith.constant 0 : index
    %c0_7 = arith.constant 0 : index
    %9 = vector.load %arg4[%c0_6, %c0_7] : memref<1024x1024xbf16, #tpu.memory_space<vmem>>, vector<1024x1024xbf16>
    %cst_8 = arith.constant dense<0.000000e+00> : vector<128x1024xf32>
    %10 = tpu.matmul %8, %9, %cst_8 {dimension_numbers = #tpu.dot_dimension_numbers<[1], [0], [0], [1], [0, 0, 1, 1], [], []>} : vector<128x1024xbf16>, vector<1024x1024xbf16>, vector<128x1024xf32> -> vector<128x1024xf32>
    %c0_9 = arith.constant 0 : index
    %c0_10 = arith.constant 0 : index
    %11 = vector.load %arg5[%c0_9, %c0_10] : memref<1x1024xf32, #tpu.memory_space<vmem>>, vector<1x1024xf32>
    %12 = vector.broadcast %11 : vector<1x1024xf32> to vector<128x1024xf32>
    %13 = arith.addf %10, %12 : vector<128x1024xf32>
    %c0_11 = arith.constant 0 : index
    %c0_12 = arith.constant 0 : index
    %14 = vector.load %arg6[%c0_11, %c0_12] : memref<128x1024xf32, #tpu.memory_space<vmem>>, vector<128x1024xf32>
    tpu.vector_store %arg6[%c0_11, %c0_12], %13 {strides = array<i32>} : memref<128x1024xf32, #tpu.memory_space<vmem>>, vector<128x1024xf32>,
    return
  }
  func.func @transform_0(%arg0: i32) -> (i32, i32) {
    %c0_i32 = arith.constant 0 : i32
    %c0_i32_0 = arith.constant 0 : i32
    return %arg0, %c0_i32 : i32, i32
  }
  func.func @transform_1(%arg0: i32) -> (i32, i32) {
    %c0_i32 = arith.constant 0 : i32
    %c0_i32_0 = arith.constant 0 : i32
    %c0_i32_1 = arith.constant 0 : i32
    return %c0_i32, %c0_i32_0 : i32, i32
  }
  func.func @transform_2(%arg0: i32) -> (i32, i32) {
    %c0_i32 = arith.constant 0 : i32
    %c0_i32_0 = arith.constant 0 : i32
    %c0_i32_1 = arith.constant 0 : i32
    return %c0_i32, %c0_i32_0 : i32, i32
  }
  func.func @transform_3(%arg0: i32) -> (i32, i32) {
    %c0_i32 = arith.constant 0 : i32
    %c0_i32_0 = arith.constant 0 : i32
    %c0_i32_1 = arith.constant 0 : i32
    return %c0_i32, %c0_i32_0 : i32, i32
  }
  func.func @transform_4(%arg0: i32) -> (i32, i32) {
    %c0_i32 = arith.constant 0 : i32
    %c0_i32_0 = arith.constant 0 : i32
    %c0_i32_1 = arith.constant 0 : i32
    return %c0_i32, %c0_i32_0 : i32, i32
  }
  func.func @transform_5(%arg0: i32) -> (i32, i32) {
    %c0_i32 = arith.constant 0 : i32
    %c0_i32_0 = arith.constant 0 : i32
    return %arg0, %c0_i32 : i32, i32
  }
}

</mosaic_0001>

<llo_original>
// kernel: tpu_custom_call.1
$region0: #{tpu_custom_call.1}
  #allocation0 [shape = 'u32[]', space=smem, size = 0x4, offset = 0x4, fixed_abs, tag = 'smem constant byte address 0x4 - core index']
  #allocation1 [shape = 'u32[144,128]{1,0:T(1,128)}', space=vmem, size = 0x12000, scoped, tag = 'internal scratch']
  %s0 = inlined_call_operand.hbm [shape: bf16[256,1024], index: 0, kind: input, shape index: {}]
  %s1 = inlined_call_operand.hbm [shape: bf16[1024,1024], index: 1, kind: input, shape index: {}]
  %s2 = inlined_call_operand.hbm [shape: f32[1,1024], index: 2, kind: input, shape index: {}]
  %s3 = inlined_call_operand.hbm [shape: bf16[1024,1024], index: 3, kind: input, shape index: {}]
  %s4 = inlined_call_operand.hbm [shape: f32[1,1024], index: 4, kind: input, shape index: {}]
  %s5 = inlined_call_operand.hbm [shape: f32[256,1024], index: 5, kind: output, shape index: {}]
  %s6 = sld [smem:[#allocation0]]
  $region73: #{tpu_custom_call.1} parent=0
    _
  %s8 = ssub.s32 1, %s6
  %s9 = scalar_select 0, %s8, %s6
  $region1: #{tpu_custom_call.1} parent=0
    #allocation2 [shape = 'u8[524288]{0}', space=vmem, size = 0x80000, scoped, tag = 'input window, operand 0']
    #allocation3 [shape = 's32[2]{0}', space=sflag, size = 0x8, scoped, tag = 'scoped memory for tpu_custom_call.1']
    #allocation4 [shape = 's32[2]{0}', space=sflag, size = 0x8, scoped, tag = 'scoped memory for tpu_custom_call.1']
    #allocation5 [shape = 'u8[2097152]{0}', space=vmem, size = 0x200000, scoped, tag = 'input window, operand 1, single buffered']
    #allocation6 [shape = 's32[1]{0}', space=sflag, size = 0x4, scoped, tag = 'scoped memory for tpu_custom_call.1']
    #allocation7 [shape = 'u8[4096]{0}', space=vmem, size = 0x1000, scoped, tag = 'input window, operand 2, single buffered']
    #allocation8 [shape = 'u8[2097152]{0}', space=vmem, size = 0x200000, scoped, tag = 'input window, operand 3, single buffered']
    #allocation9 [shape = 's32[1]{0}', space=sflag, size = 0x4, scoped, tag = 'scoped memory for tpu_custom_call.1']
    #allocation10 [shape = 'u8[4096]{0}', space=vmem, size = 0x1000, scoped, tag = 'input window, operand 4, single buffered']
    #allocation11 [shape = 'u8[1048576]{0}', space=vmem, size = 0x100000, scoped, tag = 'output window, operand 0']
    %10 = vsyncpa [#allocation3], 0
    %s11 = scalar_lea.sflag [#allocation3], 1
    %12 = vsyncpa %s11, 0
    %13 = vsyncpa [#allocation6], 0
    %14 = vsyncpa [#allocation9], 0
    %15 = vsyncpa [#allocation4], 0
    %s16 = scalar_lea.sflag [#allocation4], 1
    %17 = vsyncpa %s16, 0
    loop: start=0, step=1, limit=4
    $region2: #{tpu_custom_call.1} parent=1 // loop_pre_header
      _
    $region3: #{tpu_custom_call.1} parent=1 // loop_header
      %s19 = sphi 0, %s23
      %p20 = scmp.ge.s32.totalorder %s19, 4
      %s29 = sphi 0, %s31
      %s32 = sphi 0, %s29
      %s33 = sphi 0, %s32
      %s49 = sphi 0, %s33
      %s53 = sphi 0, %s53
      %s55 = sphi 0, %s53
      %s56 = sphi 0, %s55
      %s70 = sphi 0, %s56
      %s74 = sphi 0, %s74
      %s76 = sphi 0, %s74
      %s77 = sphi 0, %s76
      %s91 = sphi 0, %s77
      %s95 = sphi 0, %s95
      %s97 = sphi 0, %s95
      %s98 = sphi 0, %s97
      %s112 = sphi 0, %s98
      %s116 = sphi 0, %s116
      %s118 = sphi 0, %s116
      %s119 = sphi 0, %s118
      %s133 = sphi 0, %s119
      %s139 = sphi 0, %s141
      %s142 = sphi 0, %s139
      %s143 = sphi 0, %s142
      %s159 = sphi 0, %s143
    $region4: #{tpu_custom_call.1} parent=1 // loop_header_branch
      %22 = sbr.rel (%p20) target = $region8
    $region5: #{tpu_custom_call.1} parent=1 // loop_body
      %s24 = ssub.s32 %s19, 1
      %s25 = ssub.s32 %s19, 2
      %s26 = sadd.s32 %s19, 1
      %s27 = ssub.s32 %s19, %s26
      %p28 = scmp.eq.s32.totalorder %s27, 0
      %s30 = sadd.s32 %s29, 1
      %s31 = scalar_select %p28, %s29, %s30
      %p34 = pneg %p28
      %p35 = scmp.eq.s32.totalorder %s19, 1
      %p36 = por %p34, %p35
      %p37 = scmp.ne.s32.totalorder %s29, %s32
      %p38 = scmp.eq.s32.totalorder %s19, 0
      %p39 = por %p37, %p38
      %p40 = scmp.ne.s32.totalorder %s29, %s32
      %p41 = scmp.eq.s32.totalorder %s24, 1
      %p42 = por %p40, %p41
      %p43 = scmp.ne.s32.totalorder %s32, %s33
      %p44 = scmp.eq.s32.totalorder %s24, 0
      %p45 = por %p43, %p44
      %p46 = scmp.ne.s32.totalorder %s32, %s33
      %p47 = scmp.eq.s32.totalorder %s25, 1
      %p48 = por %p46, %p47
      %p50 = scmp.ne.s32.totalorder %s33, %s49
      %p51 = scmp.eq.s32.totalorder %s25, 0
      %p52 = por %p50, %p51
      %s54 = sadd.s32 %s53, 1
      %p57 = scmp.eq.s32.totalorder %s19, 1
      %p58 = scmp.ne.s32.totalorder %s53, %s55
      %p59 = scmp.eq.s32.totalorder %s19, 0
      %p60 = por %p58, %p59
      %p61 = scmp.ne.s32.totalorder %s53, %s55
      %p62 = scmp.eq.s32.totalorder %s24, 1
      %p63 = por %p61, %p62
      %p64 = scmp.ne.s32.totalorder %s55, %s56
      %p65 = scmp.eq.s32.totalorder %s24, 0
      %p66 = por %p64, %p65
      %p67 = scmp.ne.s32.totalorder %s55, %s56
      %p68 = scmp.eq.s32.totalorder %s25, 1
      %p69 = por %p67, %p68
      %p71 = scmp.ne.s32.totalorder %s56, %s70
      %p72 = scmp.eq.s32.totalorder %s25, 0
      %p73 = por %p71, %p72
      %s75 = sadd.s32 %s74, 1
      %p78 = scmp.eq.s32.totalorder %s19, 1
      %p79 = scmp.ne.s32.totalorder %s74, %s76
      %p80 = scmp.eq.s32.totalorder %s19, 0
      %p81 = por %p79, %p80
      %p82 = scmp.ne.s32.totalorder %s74, %s76
      %p83 = scmp.eq.s32.totalorder %s24, 1
      %p84 = por %p82, %p83
      %p85 = scmp.ne.s32.totalorder %s76, %s77
      %p86 = scmp.eq.s32.totalorder %s24, 0
      %p87 = por %p85, %p86
      %p88 = scmp.ne.s32.totalorder %s76, %s77
      %p89 = scmp.eq.s32.totalorder %s25, 1
      %p90 = por %p88, %p89
      %p92 = scmp.ne.s32.totalorder %s77, %s91
      %p93 = scmp.eq.s32.totalorder %s25, 0
      %p94 = por %p92, %p93
      %s96 = sadd.s32 %s95, 1
      %p99 = scmp.eq.s32.totalorder %s19, 1
      %p100 = scmp.ne.s32.totalorder %s95, %s97
      %p101 = scmp.eq.s32.totalorder %s19, 0
      %p102 = por %p100, %p101
      %p103 = scmp.ne.s32.totalorder %s95, %s97
      %p104 = scmp.eq.s32.totalorder %s24, 1
      %p105 = por %p103, %p104
      %p106 = scmp.ne.s32.totalorder %s97, %s98
      %p107 = scmp.eq.s32.totalorder %s24, 0
      %p108 = por %p106, %p107
      %p109 = scmp.ne.s32.totalorder %s97, %s98
      %p110 = scmp.eq.s32.totalorder %s25, 1
      %p111 = por %p109, %p110
      %p113 = scmp.ne.s32.totalorder %s98, %s112
      %p114 = scmp.eq.s32.totalorder %s25, 0
      %p115 = por %p113, %p114
      %s117 = sadd.s32 %s116, 1
      %p120 = scmp.eq.s32.totalorder %s19, 1
      %p121 = scmp.ne.s32.totalorder %s116, %s118
      %p122 = scmp.eq.s32.totalorder %s19, 0
      %p123 = por %p121, %p122
      %p124 = scmp.ne.s32.totalorder %s116, %s118
      %p125 = scmp.eq.s32.totalorder %s24, 1
      %p126 = por %p124, %p125
      %p127 = scmp.ne.s32.totalorder %s118, %s119
      %p128 = scmp.eq.s32.totalorder %s24, 0
      %p129 = por %p127, %p128
      %p130 = scmp.ne.s32.totalorder %s118, %s119
      %p131 = scmp.eq.s32.totalorder %s25, 1
      %p132 = por %p130, %p131
      %p134 = scmp.ne.s32.totalorder %s119, %s133
      %p135 = scmp.eq.s32.totalorder %s25, 0
      %p136 = por %p134, %p135
      %s137 = ssub.s32 %s19, %s26
      %p138 = scmp.eq.s32.totalorder %s137, 0
      %s140 = sadd.s32 %s139, 1
      %s141 = scalar_select %p138, %s139, %s140
      %p144 = pneg %p138
      %p145 = scmp.eq.s32.totalorder %s19, 1
      %p146 = por %p144, %p145
      %p147 = scmp.ne.s32.totalorder %s139, %s142
      %p148 = scmp.eq.s32.totalorder %s19, 0
      %p149 = por %p147, %p148
      %p150 = scmp.ne.s32.totalorder %s139, %s142
      %p151 = scmp.eq.s32.totalorder %s24, 1
      %p152 = por %p150, %p151
      %p153 = scmp.ne.s32.totalorder %s142, %s143
      %p154 = scmp.eq.s32.totalorder %s24, 0
      %p155 = por %p153, %p154
      %p156 = scmp.ne.s32.totalorder %s142, %s143
      %p157 = scmp.eq.s32.totalorder %s25, 1
      %p158 = por %p156, %p157
      %p160 = scmp.ne.s32.totalorder %s143, %s159
      %p161 = scmp.eq.s32.totalorder %s25, 0
      %p162 = por %p160, %p161
      %p163 = scmp.le.s32.totalorder 1, %s19
      %p164 = scmp.lt.s32.totalorder %s19, 3
      %p165 = pnand %p163, %p164
      %p166 = pneg %p165
      // Predicated region
      $region9: #{tpu_custom_call.1} parent=5 // pred_check
        _
      $region10: #{tpu_custom_call.1} parent=5 // pred_check_branch
        %168 = sbr.rel (%p165) target = $region12
      $region11: #{tpu_custom_call.1} parent=5 // pred_region
        %s169 = ssub.s32 %s19, 1
        // Predicated region
        $region13: #{tpu_custom_call.1} parent=11 // pred_check
          %p170 = pneg %p66
        $region14: #{tpu_custom_call.1} parent=11 // pred_check_branch
          %172 = sbr.rel (%p170) target = $region16
        $region15: #{tpu_custom_call.1} parent=11 // pred_region
          %s174 = ssub.s32 65536, 65536
          %175 = vsyncadd [#allocation6], %s174
          %s176 = sshll.u32 [#allocation5], 4
          %s177 = int_to_ptr.vmem [resolvable:$true] %s176
          %182 = dma.hbm_to_vmem [thread:$0]  %s1, 65536, %s177, [#allocation6], 512, 512, 32
        $region16: #{tpu_custom_call.1} parent=11 // pred_fallthru
          _
        // Predicated region
        $region17: #{tpu_custom_call.1} parent=11 // pred_check
          %p183 = pneg %p87
        $region18: #{tpu_custom_call.1} parent=11 // pred_check_branch
          %185 = sbr.rel (%p183) target = $region20
        $region19: #{tpu_custom_call.1} parent=11 // pred_region
          %s187 = ssub.s32 128, 128
          %188 = vsyncadd [#allocation6], %s187
          %s190 = sshll.u32 [#allocation7], 4
          %s191 = int_to_ptr.vmem [resolvable:$true] %s190
          %193 = dma.hbm_to_vmem [thread:$0]  %s2, 128, %s191, [#allocation6]
        $region20: #{tpu_custom_call.1} parent=11 // pred_fallthru
          _
        // Predicated region
        $region21: #{tpu_custom_call.1} parent=11 // pred_check
          %p194 = pneg %p108
        $region22: #{tpu_custom_call.1} parent=11 // pred_check_branch
          %196 = sbr.rel (%p194) target = $region24
        $region23: #{tpu_custom_call.1} parent=11 // pred_region
          %s198 = ssub.s32 65536, 65536
          %199 = vsyncadd [#allocation9], %s198
          %s200 = sshll.u32 [#allocation8], 4
          %s201 = int_to_ptr.vmem [resolvable:$true] %s200
          %206 = dma.hbm_to_vmem [thread:$0]  %s3, 65536, %s201, [#allocation9], 512, 512, 32
        $region24: #{tpu_custom_call.1} parent=11 // pred_fallthru
          _
        // Predicated region
        $region25: #{tpu_custom_call.1} parent=11 // pred_check
          %p207 = pneg %p129
        $region26: #{tpu_custom_call.1} parent=11 // pred_check_branch
          %209 = sbr.rel (%p207) target = $region28
        $region27: #{tpu_custom_call.1} parent=11 // pred_region
          %s211 = ssub.s32 128, 128
          %212 = vsyncadd [#allocation9], %s211
          %s214 = sshll.u32 [#allocation10], 4
          %s215 = int_to_ptr.vmem [resolvable:$true] %s214
          %217 = dma.hbm_to_vmem [thread:$0]  %s4, 128, %s215, [#allocation9]
        $region28: #{tpu_custom_call.1} parent=11 // pred_fallthru
          _
      $region12: #{tpu_custom_call.1} parent=5 // pred_fallthru
        _
      %p218 = scmp.lt.s32.totalorder %s19, 2
      // Predicated region
      $region29: #{tpu_custom_call.1} parent=5 // pred_check
        %p219 = pneg %p218
      $region30: #{tpu_custom_call.1} parent=5 // pred_check_branch
        %221 = sbr.rel (%p219) target = $region32
      $region31: #{tpu_custom_call.1} parent=5 // pred_region
        // Predicated region
        $region33: #{tpu_custom_call.1} parent=31 // pred_check
          %p222 = pneg %p39
        $region34: #{tpu_custom_call.1} parent=31 // pred_check_branch
          %224 = sbr.rel (%p222) target = $region36
        $region35: #{tpu_custom_call.1} parent=31 // pred_region
          %s225 = sand.u32 %s29, 1
          %s226 = scalar_lea.sflag [#allocation3], %s225
          %s227 = sand.u32 %s29, 1
          %s228 = smul.addr %s227, 512
          %s229 = scalar_lea.vmem [#allocation2], %s228
          %s230 = smul.u32 16, %s19
          %s232 = ssub.s32 8192, 8192
          %233 = vsyncadd %s226, %s232
          %s234 = smul.addr %s230, 8
          %s235 = smul.addr %s234, 64
          %s236 = scalar_lea.hbm %s0, %s235
          %s237 = sshll.u32 %s229, 4
          %s238 = int_to_ptr.vmem [resolvable:$true] %s237
          %243 = dma.hbm_to_vmem [thread:$0]  %s236, 8192, %s238, %s226, 512, 512, 32
        $region36: #{tpu_custom_call.1} parent=31 // pred_fallthru
          _
      $region32: #{tpu_custom_call.1} parent=5 // pred_fallthru
        _
      %p244 = scmp.le.s32.totalorder 1, %s19
      %p245 = scmp.lt.s32.totalorder %s19, 3
      %p246 = pnand %p244, %p245
      %p247 = pneg %p246
      // Predicated region
      $region37: #{tpu_custom_call.1} parent=5 // pred_check
        _
      $region38: #{tpu_custom_call.1} parent=5 // pred_check_branch
        %249 = sbr.rel (%p246) target = $region40
      $region39: #{tpu_custom_call.1} parent=5 // pred_region
        %s250 = ssub.s32 %s19, 1
        %s251 = sand.u32 %s32, 1
        %s252 = scalar_lea.sflag [#allocation3], %s251
        %s253 = sand.u32 %s32, 1
        %s254 = smul.addr %s253, 512
        %s255 = scalar_lea.vmem [#allocation2], %s254
        // Predicated region
        $region41: #{tpu_custom_call.1} parent=39 // pred_check
          %p256 = pneg %p45
        $region42: #{tpu_custom_call.1} parent=39 // pred_check_branch
          %258 = sbr.rel (%p256) target = $region44
        $region43: #{tpu_custom_call.1} parent=39 // pred_region
          %259 = dma.done %s252, 8192
        $region44: #{tpu_custom_call.1} parent=39 // pred_fallthru
          _
        // Predicated region
        $region45: #{tpu_custom_call.1} parent=39 // pred_check
          %p260 = pneg %p66
        $region46: #{tpu_custom_call.1} parent=39 // pred_check_branch
          %262 = sbr.rel (%p260) target = $region48
        $region47: #{tpu_custom_call.1} parent=39 // pred_region
          %263 = dma.done [#allocation6], 65536
        $region48: #{tpu_custom_call.1} parent=39 // pred_fallthru
          _
        // Predicated region
        $region49: #{tpu_custom_call.1} parent=39 // pred_check
          %p264 = pneg %p87
        $region50: #{tpu_custom_call.1} parent=39 // pred_check_branch
          %266 = sbr.rel (%p264) target = $region52
        $region51: #{tpu_custom_call.1} parent=39 // pred_region
          %267 = dma.done [#allocation6], 128
        $region52: #{tpu_custom_call.1} parent=39 // pred_fallthru
          _
        // Predicated region
        $region53: #{tpu_custom_call.1} parent=39 // pred_check
          %p268 = pneg %p108
        $region54: #{tpu_custom_call.1} parent=39 // pred_check_branch
          %270 = sbr.rel (%p268) target = $region56
        $region55: #{tpu_custom_call.1} parent=39 // pred_region
          %271 = dma.done [#allocation9], 65536
        $region56: #{tpu_custom_call.1} parent=39 // pred_fallthru
          _
        // Predicated region
        $region57: #{tpu_custom_call.1} parent=39 // pred_check
          %p272 = pneg %p129
        $region58: #{tpu_custom_call.1} parent=39 // pred_check_branch
          %274 = sbr.rel (%p272) target = $region60
        $region59: #{tpu_custom_call.1} parent=39 // pred_region
          %275 = dma.done [#allocation9], 128
        $region60: #{tpu_custom_call.1} parent=39 // pred_fallthru
          _
        %s276 = sand.u32 %s32, 1
        %s277 = scalar_lea.sflag [#allocation3], %s276
        %s278 = sand.u32 %s32, 1
        %s279 = smul.addr %s278, 512
        %s280 = scalar_lea.vmem [#allocation2], %s279
        %p281 = pneg %p45
        %p282 = pneg %p42
        %p283 = pneg %p66
        %p284 = pneg %p63
        %p285 = pneg %p87
        %p286 = pneg %p84
        %p287 = pneg %p108
        %p288 = pneg %p105
        %p289 = pneg %p129
        %p290 = pneg %p126
        %p291 = pneg %p155
        %p292 = pneg %p152
        %s293 = sand.u32 %s142, 1
        %s294 = scalar_lea.sflag [#allocation4], %s293
        %s295 = sand.u32 %s142, 1
        %s296 = smul.addr %s295, 1024
        %s297 = scalar_lea.vmem [#allocation11], %s296
        %s298 = smul.u32 16, %s24
        %s299 = smul.u32 16, %s24
        %v300 = vld [vmem:[%s255] sm:$0xff]
        %v301 = vld [vmem:[%s255 + $0x8] sm:$0xff]
        %v302 = vld [vmem:[%s255 + $0x10] sm:$0xff]
        %v303 = vld [vmem:[%s255 + $0x18] sm:$0xff]
        %v304 = vld [vmem:[%s255 + $0x20] sm:$0xff]
        %v305 = vld [vmem:[%s255 + $0x28] sm:$0xff]
        %v306 = vld [vmem:[%s255 + $0x30] sm:$0xff]
        %v307 = vld [vmem:[%s255 + $0x38] sm:$0xff]
        %v308 = vld [vmem:[%s255 + $0x40] sm:$0xff]
        %v309 = vld [vmem:[%s255 + $0x48] sm:$0xff]
        %v310 = vld [vmem:[%s255 + $0x50] sm:$0xff]
        %v311 = vld [vmem:[%s255 + $0x58] sm:$0xff]
        %v312 = vld [vmem:[%s255 + $0x60] sm:$0xff]
        %v313 = vld [vmem:[%s255 + $0x68] sm:$0xff]
        %v314 = vld [vmem:[%s255 + $0x70] sm:$0xff]
        %v315 = vld [vmem:[%s255 + $0x78] sm:$0xff]
        %v316 = vld [vmem:[%s255 + $0x80] sm:$0xff]
        %v317 = vld [vmem:[%s255 + $0x88] sm:$0xff]
        %v318 = vld [vmem:[%s255 + $0x90] sm:$0xff]
        %v319 = vld [vmem:[%s255 + $0x98] sm:$0xff]
        %v320 = vld [vmem:[%s255 + $0xa0] sm:$0xff]
        %v321 = vld [vmem:[%s255 + $0xa8] sm:$0xff]
        %v322 = vld [vmem:[%s255 + $0xb0] sm:$0xff]
        %v323 = vld [vmem:[%s255 + $0xb8] sm:$0xff]
        %v324 = vld [vmem:[%s255 + $0xc0] sm:$0xff]
        %v325 = vld [vmem:[%s255 + $0xc8] sm:$0xff]
        %v326 = vld [vmem:[%s255 + $0xd0] sm:$0xff]
        %v327 = vld [vmem:[%s255 + $0xd8] sm:$0xff]
        %v328 = vld [vmem:[%s255 + $0xe0] sm:$0xff]
        %v329 = vld [vmem:[%s255 + $0xe8] sm:$0xff]
        %v330 = vld [vmem:[%s255 + $0xf0] sm:$0xff]
        %v331 = vld [vmem:[%s255 + $0xf8] sm:$0xff]
        %v332 = vld [vmem:[%s255 + $0x100] sm:$0xff]
        %v333 = vld [vmem:[%s255 + $0x108] sm:$0xff]
        %v334 = vld [vmem:[%s255 + $0x110] sm:$0xff]
        %v335 = vld [vmem:[%s255 + $0x118] sm:$0xff]
        %v336 = vld [vmem:[%s255 + $0x120] sm:$0xff]
        %v337 = vld [vmem:[%s255 + $0x128] sm:$0xff]
        %v338 = vld [vmem:[%s255 + $0x130] sm:$0xff]
        %v339 = vld [vmem:[%s255 + $0x138] sm:$0xff]
        %v340 = vld [vmem:[%s255 + $0x140] sm:$0xff]
        %v341 = vld [vmem:[%s255 + $0x148] sm:$0xff]
        %v342 = vld [vmem:[%s255 + $0x150] sm:$0xff]
        %v343 = vld [vmem:[%s255 + $0x158] sm:$0xff]
        %v344 = vld [vmem:[%s255 + $0x160] sm:$0xff]
        %v345 = vld [vmem:[%s255 + $0x168] sm:$0xff]
        %v346 = vld [vmem:[%s255 + $0x170] sm:$0xff]
        %v347 = vld [vmem:[%s255 + $0x178] sm:$0xff]
        %v348 = vld [vmem:[%s255 + $0x180] sm:$0xff]
        %v349 = vld [vmem:[%s255 + $0x188] sm:$0xff]
        %v350 = vld [vmem:[%s255 + $0x190] sm:$0xff]
        %v351 = vld [vmem:[%s255 + $0x198] sm:$0xff]
        %v352 = vld [vmem:[%s255 + $0x1a0] sm:$0xff]
        %v353 = vld [vmem:[%s255 + $0x1a8] sm:$0xff]
        %v354 = vld [vmem:[%s255 + $0x1b0] sm:$0xff]
        %v355 = vld [vmem:[%s255 + $0x1b8] sm:$0xff]
        %v356 = vld [vmem:[%s255 + $0x1c0] sm:$0xff]
        %v357 = vld [vmem:[%s255 + $0x1c8] sm:$0xff]
        %v358 = vld [vmem:[%s255 + $0x1d0] sm:$0xff]
        %v359 = vld [vmem:[%s255 + $0x1d8] sm:$0xff]
        %v360 = vld [vmem:[%s255 + $0x1e0] sm:$0xff]
        %v361 = vld [vmem:[%s255 + $0x1e8] sm:$0xff]
        %v362 = vld [vmem:[%s255 + $0x1f0] sm:$0xff]
        %v363 = vld [vmem:[%s255 + $0x1f8] sm:$0xff]
        %v364 = vld [vmem:[#allocation5] sm:$0xff]
        %v365 = vld [vmem:[#allocation5 + $0x8] sm:$0xff]
        %v366 = vld [vmem:[#allocation5 + $0x10] sm:$0xff]
        %v367 = vld [vmem:[#allocation5 + $0x18] sm:$0xff]
        %v368 = vld [vmem:[#allocation5 + $0x20] sm:$0xff]
        %v369 = vld [vmem:[#allocation5 + $0x28] sm:$0xff]
        %v370 = vld [vmem:[#allocation5 + $0x30] sm:$0xff]
        %v371 = vld [vmem:[#allocation5 + $0x38] sm:$0xff]
        %v372 = vld [vmem:[#allocation5 + $0x40] sm:$0xff]
        %v373 = vld [vmem:[#allocation5 + $0x48] sm:$0xff]
        %v374 = vld [vmem:[#allocation5 + $0x50] sm:$0xff]
        %v375 = vld [vmem:[#allocation5 + $0x58] sm:$0xff]
        %v376 = vld [vmem:[#allocation5 + $0x60] sm:$0xff]
        %v377 = vld [vmem:[#allocation5 + $0x68] sm:$0xff]
        %v378 = vld [vmem:[#allocation5 + $0x70] sm:$0xff]
        %v379 = vld [vmem:[#allocation5 + $0x78] sm:$0xff]
        %v380 = vld [vmem:[#allocation5 + $0x80] sm:$0xff]
        %v381 = vld [vmem:[#allocation5 + $0x88] sm:$0xff]
        %v382 = vld [vmem:[#allocation5 + $0x90] sm:$0xff]
        %v383 = vld [vmem:[#allocation5 + $0x98] sm:$0xff]
        %v384 = vld [vmem:[#allocation5 + $0xa0] sm:$0xff]
        %v385 = vld [vmem:[#allocation5 + $0xa8] sm:$0xff]
        %v386 = vld [vmem:[#allocation5 + $0xb0] sm:$0xff]
        %v387 = vld [vmem:[#allocation5 + $0xb8] sm:$0xff]
        %v388 = vld [vmem:[#allocation5 + $0xc0] sm:$0xff]
        %v389 = vld [vmem:[#allocation5 + $0xc8] sm:$0xff]
        %v390 = vld [vmem:[#allocation5 + $0xd0] sm:$0xff]
        %v391 = vld [vmem:[#allocation5 + $0xd8] sm:$0xff]
        %v392 = vld [vmem:[#allocation5 + $0xe0] sm:$0xff]
        %v393 = vld [vmem:[#allocation5 + $0xe8] sm:$0xff]
        %v394 = vld [vmem:[#allocation5 + $0xf0] sm:$0xff]
        %v395 = vld [vmem:[#allocation5 + $0xf8] sm:$0xff]
        %v396 = vld [vmem:[#allocation5 + $0x100] sm:$0xff]
        %v397 = vld [vmem:[#allocation5 + $0x108] sm:$0xff]
        %v398 = vld [vmem:[#allocation5 + $0x110] sm:$0xff]
        %v399 = vld [vmem:[#allocation5 + $0x118] sm:$0xff]
        %v400 = vld [vmem:[#allocation5 + $0x120] sm:$0xff]
        %v401 = vld [vmem:[#allocation5 + $0x128] sm:$0xff]
        %v402 = vld [vmem:[#allocation5 + $0x130] sm:$0xff]
        %v403 = vld [vmem:[#allocation5 + $0x138] sm:$0xff]
        %v404 = vld [vmem:[#allocation5 + $0x140] sm:$0xff]
        %v405 = vld [vmem:[#allocation5 + $0x148] sm:$0xff]
        %v406 = vld [vmem:[#allocation5 + $0x150] sm:$0xff]
        %v407 = vld [vmem:[#allocation5 + $0x158] sm:$0xff]
        %v408 = vld [vmem:[#allocation5 + $0x160] sm:$0xff]
        %v409 = vld [vmem:[#allocation5 + $0x168] sm:$0xff]
        %v410 = vld [vmem:[#allocation5 + $0x170] sm:$0xff]
        %v411 = vld [vmem:[#allocation5 + $0x178] sm:$0xff]
        %v412 = vld [vmem:[#allocation5 + $0x180] sm:$0xff]
        %v413 = vld [vmem:[#allocation5 + $0x188] sm:$0xff]
        %v414 = vld [vmem:[#allocation5 + $0x190] sm:$0xff]
        %v415 = vld [vmem:[#allocation5 + $0x198] sm:$0xff]
        %v416 = vld [vmem:[#allocation5 + $0x1a0] sm:$0xff]
        %v417 = vld [vmem:[#allocation5 + $0x1a8] sm:$0xff]
        %v418 = vld [vmem:[#allocation5 + $0x1b0] sm:$0xff]
        %v419 = vld [vmem:[#allocation5 + $0x1b8] sm:$0xff]
        %v420 = vld [vmem:[#allocation5 + $0x1c0] sm:$0xff]
        %v421 = vld [vmem:[#allocation5 + $0x1c8] sm:$0xff]
        %v422 = vld [vmem:[#allocation5 + $0x1d0] sm:$0xff]
        %v423 = vld [vmem:[#allocation5 + $0x1d8] sm:$0xff]
        %v424 = vld [vmem:[#allocation5 + $0x1e0] sm:$0xff]
        %v425 = vld [vmem:[#allocation5 + $0x1e8] sm:$0xff]
        %v426 = vld [vmem:[#allocation5 + $0x1f0] sm:$0xff]
        %v427 = vld [vmem:[#allocation5 + $0x1f8] sm:$0xff]
        %v428 = vld [vmem:[#allocation5 + $0x200] sm:$0xff]
        %v429 = vld [vmem:[#allocation5 + $0x208] sm:$0xff]
        %v430 = vld [vmem:[#allocation5 + $0x210] sm:$0xff]
        %v431 = vld [vmem:[#allocation5 + $0x218] sm:$0xff]
        %v432 = vld [vmem:[#allocation5 + $0x220] sm:$0xff]
        %v433 = vld [vmem:[#allocation5 + $0x228] sm:$0xff]
        %v434 = vld [vmem:[#allocation5 + $0x230] sm:$0xff]
        %v435 = vld [vmem:[#allocation5 + $0x238] sm:$0xff]
        %v436 = vld [vmem:[#allocation5 + $0x240] sm:$0xff]
        %v437 = vld [vmem:[#allocation5 + $0x248] sm:$0xff]
        %v438 = vld [vmem:[#allocation5 + $0x250] sm:$0xff]
        %v439 = vld [vmem:[#allocation5 + $0x258] sm:$0xff]
        %v440 = vld [vmem:[#allocation5 + $0x260] sm:$0xff]
        %v441 = vld [vmem:[#allocation5 + $0x268] sm:$0xff]
        %v442 = vld [vmem:[#allocation5 + $0x270] sm:$0xff]
        %v443 = vld [vmem:[#allocation5 + $0x278] sm:$0xff]
        %v444 = vld [vmem:[#allocation5 + $0x280] sm:$0xff]
        %v445 = vld [vmem:[#allocation5 + $0x288] sm:$0xff]
        %v446 = vld [vmem:[#allocation5 + $0x290] sm:$0xff]
        %v447 = vld [vmem:[#allocation5 + $0x298] sm:$0xff]
        %v448 = vld [vmem:[#allocation5 + $0x2a0] sm:$0xff]
        %v449 = vld [vmem:[#allocation5 + $0x2a8] sm:$0xff]
        %v450 = vld [vmem:[#allocation5 + $0x2b0] sm:$0xff]
        %v451 = vld [vmem:[#allocation5 + $0x2b8] sm:$0xff]
        %v452 = vld [vmem:[#allocation5 + $0x2c0] sm:$0xff]
        %v453 = vld [vmem:[#allocation5 + $0x2c8] sm:$0xff]
        %v454 = vld [vmem:[#allocation5 + $0x2d0] sm:$0xff]
        %v455 = vld [vmem:[#allocation5 + $0x2d8] sm:$0xff]
        %v456 = vld [vmem:[#allocation5 + $0x2e0] sm:$0xff]
        %v457 = vld [vmem:[#allocation5 + $0x2e8] sm:$0xff]
        %v458 = vld [vmem:[#allocation5 + $0x2f0] sm:$0xff]
        %v459 = vld [vmem:[#allocation5 + $0x2f8] sm:$0xff]
        %v460 = vld [vmem:[#allocation5 + $0x300] sm:$0xff]
        %v461 = vld [vmem:[#allocation5 + $0x308] sm:$0xff]
        %v462 = vld [vmem:[#allocation5 + $0x310] sm:$0xff]
        %v463 = vld [vmem:[#allocation5 + $0x318] sm:$0xff]
        %v464 = vld [vmem:[#allocation5 + $0x320] sm:$0xff]
        %v465 = vld [vmem:[#allocation5 + $0x328] sm:$0xff]
        %v466 = vld [vmem:[#allocation5 + $0x330] sm:$0xff]
        %v467 = vld [vmem:[#allocation5 + $0x338] sm:$0xff]
        %v468 = vld [vmem:[#allocation5 + $0x340] sm:$0xff]
        %v469 = vld [vmem:[#allocation5 + $0x348] sm:$0xff]
        %v470 = vld [vmem:[#allocation5 + $0x350] sm:$0xff]
        %v471 = vld [vmem:[#allocation5 + $0x358] sm:$0xff]
        %v472 = vld [vmem:[#allocation5 + $0x360] sm:$0xff]
        %v473 = vld [vmem:[#allocation5 + $0x368] sm:$0xff]
        %v474 = vld [vmem:[#allocation5 + $0x370] sm:$0xff]
        %v475 = vld [vmem:[#allocation5 + $0x378] sm:$0xff]
        %v476 = vld [vmem:[#allocation5 + $0x380] sm:$0xff]
        %v477 = vld [vmem:[#allocation5 + $0x388] sm:$0xff]
        %v478 = vld [vmem:[#allocation5 + $0x390] sm:$0xff]
        %v479 = vld [vmem:[#allocation5 + $0x398] sm:$0xff]
        %v480 = vld [vmem:[#allocation5 + $0x3a0] sm:$0xff]
        %v481 = vld [vmem:[#allocation5 + $0x3a8] sm:$0xff]
        %v482 = vld [vmem:[#allocation5 + $0x3b0] sm:$0xff]
        %v483 = vld [vmem:[#allocation5 + $0x3b8] sm:$0xff]
        %v484 = vld [vmem:[#allocation5 + $0x3c0] sm:$0xff]
        %v485 = vld [vmem:[#allocation5 + $0x3c8] sm:$0xff]
        %v486 = vld [vmem:[#allocation5 + $0x3d0] sm:$0xff]
        %v487 = vld [vmem:[#allocation5 + $0x3d8] sm:$0xff]
        %v488 = vld [vmem:[#allocation5 + $0x3e0] sm:$0xff]
        %v489 = vld [vmem:[#allocation5 + $0x3e8] sm:$0xff]
        %v490 = vld [vmem:[#allocation5 + $0x3f0] sm:$0xff]
        %v491 = vld [vmem:[#allocation5 + $0x3f8] sm:$0xff]
        %v492 = vld [vmem:[#allocation5 + $0x400] sm:$0xff]
        %v493 = vld [vmem:[#allocation5 + $0x408] sm:$0xff]
        %v494 = vld [vmem:[#allocation5 + $0x410] sm:$0xff]
        %v495 = vld [vmem:[#allocation5 + $0x418] sm:$0xff]
        %v496 = vld [vmem:[#allocation5 + $0x420] sm:$0xff]
        %v497 = vld [vmem:[#allocation5 + $0x428] sm:$0xff]
        %v498 = vld [vmem:[#allocation5 + $0x430] sm:$0xff]
        %v499 = vld [vmem:[#allocation5 + $0x438] sm:$0xff]
        %v500 = vld [vmem:[#allocation5 + $0x440] sm:$0xff]
        %v501 = vld [vmem:[#allocation5 + $0x448] sm:$0xff]
        %v502 = vld [vmem:[#allocation5 + $0x450] sm:$0xff]
        %v503 = vld [vmem:[#allocation5 + $0x458] sm:$0xff]
        %v504 = vld [vmem:[#allocation5 + $0x460] sm:$0xff]
        %v505 = vld [vmem:[#allocation5 + $0x468] sm:$0xff]
        %v506 = vld [vmem:[#allocation5 + $0x470] sm:$0xff]
        %v507 = vld [vmem:[#allocation5 + $0x478] sm:$0xff]
        %v508 = vld [vmem:[#allocation5 + $0x480] sm:$0xff]
        %v509 = vld [vmem:[#allocation5 + $0x488] sm:$0xff]
        %v510 = vld [vmem:[#allocation5 + $0x490] sm:$0xff]
        %v511 = vld [vmem:[#allocation5 + $0x498] sm:$0xff]
        %v512 = vld [vmem:[#allocation5 + $0x4a0] sm:$0xff]
        %v513 = vld [vmem:[#allocation5 + $0x4a8] sm:$0xff]
        %v514 = vld [vmem:[#allocation5 + $0x4b0] sm:$0xff]
        %v515 = vld [vmem:[#allocation5 + $0x4b8] sm:$0xff]
        %v516 = vld [vmem:[#allocation5 + $0x4c0] sm:$0xff]
        %v517 = vld [vmem:[#allocation5 + $0x4c8] sm:$0xff]
        %v518 = vld [vmem:[#allocation5 + $0x4d0] sm:$0xff]
        %v519 = vld [vmem:[#allocation5 + $0x4d8] sm:$0xff]
        %v520 = vld [vmem:[#allocation5 + $0x4e0] sm:$0xff]
        %v521 = vld [vmem:[#allocation5 + $0x4e8] sm:$0xff]
        %v522 = vld [vmem:[#allocation5 + $0x4f0] sm:$0xff]
        %v523 = vld [vmem:[#allocation5 + $0x4f8] sm:$0xff]
        %v524 = vld [vmem:[#allocation5 + $0x500] sm:$0xff]
        %v525 = vld [vmem:[#allocation5 + $0x508] sm:$0xff]
        %v526 = vld [vmem:[#allocation5 + $0x510] sm:$0xff]
        %v527 = vld [vmem:[#allocation5 + $0x518] sm:$0xff]
        %v528 = vld [vmem:[#allocation5 + $0x520] sm:$0xff]
        %v529 = vld [vmem:[#allocation5 + $0x528] sm:$0xff]
        %v530 = vld [vmem:[#allocation5 + $0x530] sm:$0xff]
        %v531 = vld [vmem:[#allocation5 + $0x538] sm:$0xff]
        %v532 = vld [vmem:[#allocation5 + $0x540] sm:$0xff]
        %v533 = vld [vmem:[#allocation5 + $0x548] sm:$0xff]
        %v534 = vld [vmem:[#allocation5 + $0x550] sm:$0xff]
        %v535 = vld [vmem:[#allocation5 + $0x558] sm:$0xff]
        %v536 = vld [vmem:[#allocation5 + $0x560] sm:$0xff]
        %v537 = vld [vmem:[#allocation5 + $0x568] sm:$0xff]
        %v538 = vld [vmem:[#allocation5 + $0x570] sm:$0xff]
        %v539 = vld [vmem:[#allocation5 + $0x578] sm:$0xff]
        %v540 = vld [vmem:[#allocation5 + $0x580] sm:$0xff]
        %v541 = vld [vmem:[#allocation5 + $0x588] sm:$0xff]
        %v542 = vld [vmem:[#allocation5 + $0x590] sm:$0xff]
        %v543 = vld [vmem:[#allocation5 + $0x598] sm:$0xff]
        %v544 = vld [vmem:[#allocation5 + $0x5a0] sm:$0xff]
        %v545 = vld [vmem:[#allocation5 + $0x5a8] sm:$0xff]
        %v546 = vld [vmem:[#allocation5 + $0x5b0] sm:$0xff]
        %v547 = vld [vmem:[#allocation5 + $0x5b8] sm:$0xff]
        %v548 = vld [vmem:[#allocation5 + $0x5c0] sm:$0xff]
        %v549 = vld [vmem:[#allocation5 + $0x5c8] sm:$0xff]
        %v550 = vld [vmem:[#allocation5 + $0x5d0] sm:$0xff]
        %v551 = vld [vmem:[#allocation5 + $0x5d8] sm:$0xff]
        %v552 = vld [vmem:[#allocation5 + $0x5e0] sm:$0xff]
        %v553 = vld [vmem:[#allocation5 + $0x5e8] sm:$0xff]
        %v554 = vld [vmem:[#allocation5 + $0x5f0] sm:$0xff]
        %v555 = vld [vmem:[#allocation5 + $0x5f8] sm:$0xff]
        %v556 = vld [vmem:[#allocation5 + $0x600] sm:$0xff]
        %v557 = vld [vmem:[#allocation5 + $0x608] sm:$0xff]
        %v558 = vld [vmem:[#allocation5 + $0x610] sm:$0xff]
        %v559 = vld [vmem:[#allocation5 + $0x618] sm:$0xff]
        %v560 = vld [vmem:[#allocation5 + $0x620] sm:$0xff]
        %v561 = vld [vmem:[#allocation5 + $0x628] sm:$0xff]
        %v562 = vld [vmem:[#allocation5 + $0x630] sm:$0xff]
        %v563 = vld [vmem:[#allocation5 + $0x638] sm:$0xff]
        %v564 = vld [vmem:[#allocation5 + $0x640] sm:$0xff]
        %v565 = vld [vmem:[#allocation5 + $0x648] sm:$0xff]
        %v566 = vld [vmem:[#allocation5 + $0x650] sm:$0xff]
        %v567 = vld [vmem:[#allocation5 + $0x658] sm:$0xff]
        %v568 = vld [vmem:[#allocation5 + $0x660] sm:$0xff]
        %v569 = vld [vmem:[#allocation5 + $0x668] sm:$0xff]
        %v570 = vld [vmem:[#allocation5 + $0x670] sm:$0xff]
        %v571 = vld [vmem:[#allocation5 + $0x678] sm:$0xff]
        %v572 = vld [vmem:[#allocation5 + $0x680] sm:$0xff]
        %v573 = vld [vmem:[#allocation5 + $0x688] sm:$0xff]
        %v574 = vld [vmem:[#allocation5 + $0x690] sm:$0xff]
        %v575 = vld [vmem:[#allocation5 + $0x698] sm:$0xff]
        %v576 = vld [vmem:[#allocation5 + $0x6a0] sm:$0xff]
        %v577 = vld [vmem:[#allocation5 + $0x6a8] sm:$0xff]
        %v578 = vld [vmem:[#allocation5 + $0x6b0] sm:$0xff]
        %v579 = vld [vmem:[#allocation5 + $0x6b8] sm:$0xff]
        %v580 = vld [vmem:[#allocation5 + $0x6c0] sm:$0xff]
        %v581 = vld [vmem:[#allocation5 + $0x6c8] sm:$0xff]
        %v582 = vld [vmem:[#allocation5 + $0x6d0] sm:$0xff]
        %v583 = vld [vmem:[#allocation5 + $0x6d8] sm:$0xff]
        %v584 = vld [vmem:[#allocation5 + $0x6e0] sm:$0xff]
        %v585 = vld [vmem:[#allocation5 + $0x6e8] sm:$0xff]
        %v586 = vld [vmem:[#allocation5 + $0x6f0] sm:$0xff]
        %v587 = vld [vmem:[#allocation5 + $0x6f8] sm:$0xff]
        %v588 = vld [vmem:[#allocation5 + $0x700] sm:$0xff]
        %v589 = vld [vmem:[#allocation5 + $0x708] sm:$0xff]
        %v590 = vld [vmem:[#allocation5 + $0x710] sm:$0xff]
        %v591 = vld [vmem:[#allocation5 + $0x718] sm:$0xff]
        %v592 = vld [vmem:[#allocation5 + $0x720] sm:$0xff]
        %v593 = vld [vmem:[#allocation5 + $0x728] sm:$0xff]
        %v594 = vld [vmem:[#allocation5 + $0x730] sm:$0xff]
        %v595 = vld [vmem:[#allocation5 + $0x738] sm:$0xff]
        %v596 = vld [vmem:[#allocation5 + $0x740] sm:$0xff]
        %v597 = vld [vmem:[#allocation5 + $0x748] sm:$0xff]
        %v598 = vld [vmem:[#allocation5 + $0x750] sm:$0xff]
        %v599 = vld [vmem:[#allocation5 + $0x758] sm:$0xff]
        %v600 = vld [vmem:[#allocation5 + $0x760] sm:$0xff]
        %v601 = vld [vmem:[#allocation5 + $0x768] sm:$0xff]
        %v602 = vld [vmem:[#allocation5 + $0x770] sm:$0xff]
        %v603 = vld [vmem:[#allocation5 + $0x778] sm:$0xff]
        %v604 = vld [vmem:[#allocation5 + $0x780] sm:$0xff]
        %v605 = vld [vmem:[#allocation5 + $0x788] sm:$0xff]
        %v606 = vld [vmem:[#allocation5 + $0x790] sm:$0xff]
        %v607 = vld [vmem:[#allocation5 + $0x798] sm:$0xff]
        %v608 = vld [vmem:[#allocation5 + $0x7a0] sm:$0xff]
        %v609 = vld [vmem:[#allocation5 + $0x7a8] sm:$0xff]
        %v610 = vld [vmem:[#allocation5 + $0x7b0] sm:$0xff]
        %v611 = vld [vmem:[#allocation5 + $0x7b8] sm:$0xff]
        %v612 = vld [vmem:[#allocation5 + $0x7c0] sm:$0xff]
        %v613 = vld [vmem:[#allocation5 + $0x7c8] sm:$0xff]
        %v614 = vld [vmem:[#allocation5 + $0x7d0] sm:$0xff]
        %v615 = vld [vmem:[#allocation5 + $0x7d8] sm:$0xff]
        %v616 = vld [vmem:[#allocation5 + $0x7e0] sm:$0xff]
        %v617 = vld [vmem:[#allocation5 + $0x7e8] sm:$0xff]
        %v618 = vld [vmem:[#allocation5 + $0x7f0] sm:$0xff]
        %v619 = vld [vmem:[#allocation5 + $0x7f8] sm:$0xff]
        %v620 = vld [vmem:[#allocation5 + $0x800] sm:$0xff]
        %v621 = vld [vmem:[#allocation5 + $0x808] sm:$0xff]
        %v622 = vld [vmem:[#allocation5 + $0x810] sm:$0xff]
        %v623 = vld [vmem:[#allocation5 + $0x818] sm:$0xff]
        %v624 = vld [vmem:[#allocation5 + $0x820] sm:$0xff]
        %v625 = vld [vmem:[#allocation5 + $0x828] sm:$0xff]
        %v626 = vld [vmem:[#allocation5 + $0x830] sm:$0xff]
        %v627 = vld [vmem:[#allocation5 + $0x838] sm:$0xff]
        %v628 = vld [vmem:[#allocation5 + $0x840] sm:$0xff]
        %v629 = vld [vmem:[#allocation5 + $0x848] sm:$0xff]
        %v630 = vld [vmem:[#allocation5 + $0x850] sm:$0xff]
        %v631 = vld [vmem:[#allocation5 + $0x858] sm:$0xff]
        %v632 = vld [vmem:[#allocation5 + $0x860] sm:$0xff]
        %v633 = vld [vmem:[#allocation5 + $0x868] sm:$0xff]
        %v634 = vld [vmem:[#allocation5 + $0x870] sm:$0xff]
        %v635 = vld [vmem:[#allocation5 + $0x878] sm:$0xff]
        %v636 = vld [vmem:[#allocation5 + $0x880] sm:$0xff]
        %v637 = vld [vmem:[#allocation5 + $0x888] sm:$0xff]
        %v638 = vld [vmem:[#allocation5 + $0x890] sm:$0xff]
        %v639 = vld [vmem:[#allocation5 + $0x898] sm:$0xff]
        %v640 = vld [vmem:[#allocation5 + $0x8a0] sm:$0xff]
        %v641 = vld [vmem:[#allocation5 + $0x8a8] sm:$0xff]
        %v642 = vld [vmem:[#allocation5 + $0x8b0] sm:$0xff]
        %v643 = vld [vmem:[#allocation5 + $0x8b8] sm:$0xff]
        %v644 = vld [vmem:[#allocation5 + $0x8c0] sm:$0xff]
        %v645 = vld [vmem:[#allocation5 + $0x8c8] sm:$0xff]
        %v646 = vld [vmem:[#allocation5 + $0x8d0] sm:$0xff]
        %v647 = vld [vmem:[#allocation5 + $0x8d8] sm:$0xff]
        %v648 = vld [vmem:[#allocation5 + $0x8e0] sm:$0xff]
        %v649 = vld [vmem:[#allocation5 + $0x8e8] sm:$0xff]
        %v650 = vld [vmem:[#allocation5 + $0x8f0] sm:$0xff]
        %v651 = vld [vmem:[#allocation5 + $0x8f8] sm:$0xff]
        %v652 = vld [vmem:[#allocation5 + $0x900] sm:$0xff]
        %v653 = vld [vmem:[#allocation5 + $0x908] sm:$0xff]
        %v654 = vld [vmem:[#allocation5 + $0x910] sm:$0xff]
        %v655 = vld [vmem:[#allocation5 + $0x918] sm:$0xff]
        %v656 = vld [vmem:[#allocation5 + $0x920] sm:$0xff]
        %v657 = vld [vmem:[#allocation5 + $0x928] sm:$0xff]
        %v658 = vld [vmem:[#allocation5 + $0x930] sm:$0xff]
        %v659 = vld [vmem:[#allocation5 + $0x938] sm:$0xff]
        %v660 = vld [vmem:[#allocation5 + $0x940] sm:$0xff]
        %v661 = vld [vmem:[#allocation5 + $0x948] sm:$0xff]
        %v662 = vld [vmem:[#allocation5 + $0x950] sm:$0xff]
        %v663 = vld [vmem:[#allocation5 + $0x958] sm:$0xff]
        %v664 = vld [vmem:[#allocation5 + $0x960] sm:$0xff]
        %v665 = vld [vmem:[#allocation5 + $0x968] sm:$0xff]
        %v666 = vld [vmem:[#allocation5 + $0x970] sm:$0xff]
        %v667 = vld [vmem:[#allocation5 + $0x978] sm:$0xff]
        %v668 = vld [vmem:[#allocation5 + $0x980] sm:$0xff]
        %v669 = vld [vmem:[#allocation5 + $0x988] sm:$0xff]
        %v670 = vld [vmem:[#allocation5 + $0x990] sm:$0xff]
        %v671 = vld [vmem:[#allocation5 + $0x998] sm:$0xff]
        %v672 = vld [vmem:[#allocation5 + $0x9a0] sm:$0xff]
        %v673 = vld [vmem:[#allocation5 + $0x9a8] sm:$0xff]
        %v674 = vld [vmem:[#allocation5 + $0x9b0] sm:$0xff]
        %v675 = vld [vmem:[#allocation5 + $0x9b8] sm:$0xff]
        %v676 = vld [vmem:[#allocation5 + $0x9c0] sm:$0xff]
        %v677 = vld [vmem:[#allocation5 + $0x9c8] sm:$0xff]
        %v678 = vld [vmem:[#allocation5 + $0x9d0] sm:$0xff]
        %v679 = vld [vmem:[#allocation5 + $0x9d8] sm:$0xff]
        %v680 = vld [vmem:[#allocation5 + $0x9e0] sm:$0xff]
        %v681 = vld [vmem:[#allocation5 + $0x9e8] sm:$0xff]
        %v682 = vld [vmem:[#allocation5 + $0x9f0] sm:$0xff]
        %v683 = vld [vmem:[#allocation5 + $0x9f8] sm:$0xff]
        %v684 = vld [vmem:[#allocation5 + $0xa00] sm:$0xff]
        %v685 = vld [vmem:[#allocation5 + $0xa08] sm:$0xff]
        %v686 = vld [vmem:[#allocation5 + $0xa10] sm:$0xff]
        %v687 = vld [vmem:[#allocation5 + $0xa18] sm:$0xff]
        %v688 = vld [vmem:[#allocation5 + $0xa20] sm:$0xff]
        %v689 = vld [vmem:[#allocation5 + $0xa28] sm:$0xff]
        %v690 = vld [vmem:[#allocation5 + $0xa30] sm:$0xff]
        %v691 = vld [vmem:[#allocation5 + $0xa38] sm:$0xff]
        %v692 = vld [vmem:[#allocation5 + $0xa40] sm:$0xff]
        %v693 = vld [vmem:[#allocation5 + $0xa48] sm:$0xff]
        %v694 = vld [vmem:[#allocation5 + $0xa50] sm:$0xff]
        %v695 = vld [vmem:[#allocation5 + $0xa58] sm:$0xff]
        %v696 = vld [vmem:[#allocation5 + $0xa60] sm:$0xff]
        %v697 = vld [vmem:[#allocation5 + $0xa68] sm:$0xff]
        %v698 = vld [vmem:[#allocation5 + $0xa70] sm:$0xff]
        %v699 = vld [vmem:[#allocation5 + $0xa78] sm:$0xff]
        %v700 = vld [vmem:[#allocation5 + $0xa80] sm:$0xff]
        %v701 = vld [vmem:[#allocation5 + $0xa88] sm:$0xff]
        %v702 = vld [vmem:[#allocation5 + $0xa90] sm:$0xff]
        %v703 = vld [vmem:[#allocation5 + $0xa98] sm:$0xff]
        %v704 = vld [vmem:[#allocation5 + $0xaa0] sm:$0xff]
        %v705 = vld [vmem:[#allocation5 + $0xaa8] sm:$0xff]
        %v706 = vld [vmem:[#allocation5 + $0xab0] sm:$0xff]
        %v707 = vld [vmem:[#allocation5 + $0xab8] sm:$0xff]
        %v708 = vld [vmem:[#allocation5 + $0xac0] sm:$0xff]
        %v709 = vld [vmem:[#allocation5 + $0xac8] sm:$0xff]
        %v710 = vld [vmem:[#allocation5 + $0xad0] sm:$0xff]
        %v711 = vld [vmem:[#allocation5 + $0xad8] sm:$0xff]
        %v712 = vld [vmem:[#allocation5 + $0xae0] sm:$0xff]
        %v713 = vld [vmem:[#allocation5 + $0xae8] sm:$0xff]
        %v714 = vld [vmem:[#allocation5 + $0xaf0] sm:$0xff]
        %v715 = vld [vmem:[#allocation5 + $0xaf8] sm:$0xff]
        %v716 = vld [vmem:[#allocation5 + $0xb00] sm:$0xff]
        %v717 = vld [vmem:[#allocation5 + $0xb08] sm:$0xff]
        %v718 = vld [vmem:[#allocation5 + $0xb10] sm:$0xff]
        %v719 = vld [vmem:[#allocation5 + $0xb18] sm:$0xff]
        %v720 = vld [vmem:[#allocation5 + $0xb20] sm:$0xff]
        %v721 = vld [vmem:[#allocation5 + $0xb28] sm:$0xff]
        %v722 = vld [vmem:[#allocation5 + $0xb30] sm:$0xff]
        %v723 = vld [vmem:[#allocation5 + $0xb38] sm:$0xff]
        %v724 = vld [vmem:[#allocation5 + $0xb40] sm:$0xff]
        %v725 = vld [vmem:[#allocation5 + $0xb48] sm:$0xff]
        %v726 = vld [vmem:[#allocation5 + $0xb50] sm:$0xff]
        %v727 = vld [vmem:[#allocation5 + $0xb58] sm:$0xff]
        %v728 = vld [vmem:[#allocation5 + $0xb60] sm:$0xff]
        %v729 = vld [vmem:[#allocation5 + $0xb68] sm:$0xff]
        %v730 = vld [vmem:[#allocation5 + $0xb70] sm:$0xff]
        %v731 = vld [vmem:[#allocation5 + $0xb78] sm:$0xff]
        %v732 = vld [vmem:[#allocation5 + $0xb80] sm:$0xff]
        %v733 = vld [vmem:[#allocation5 + $0xb88] sm:$0xff]
        %v734 = vld [vmem:[#allocation5 + $0xb90] sm:$0xff]
        %v735 = vld [vmem:[#allocation5 + $0xb98] sm:$0xff]
        %v736 = vld [vmem:[#allocation5 + $0xba0] sm:$0xff]
        %v737 = vld [vmem:[#allocation5 + $0xba8] sm:$0xff]
        %v738 = vld [vmem:[#allocation5 + $0xbb0] sm:$0xff]
        %v739 = vld [vmem:[#allocation5 + $0xbb8] sm:$0xff]
        %v740 = vld [vmem:[#allocation5 + $0xbc0] sm:$0xff]
        %v741 = vld [vmem:[#allocation5 + $0xbc8] sm:$0xff]
        %v742 = vld [vmem:[#allocation5 + $0xbd0] sm:$0xff]
        %v743 = vld [vmem:[#allocation5 + $0xbd8] sm:$0xff]
        %v744 = vld [vmem:[#allocation5 + $0xbe0] sm:$0xff]
        %v745 = vld [vmem:[#allocation5 + $0xbe8] sm:$0xff]
        %v746 = vld [vmem:[#allocation5 + $0xbf0] sm:$0xff]
        %v747 = vld [vmem:[#allocation5 + $0xbf8] sm:$0xff]
        %v748 = vld [vmem:[#allocation5 + $0xc00] sm:$0xff]
        %v749 = vld [vmem:[#allocation5 + $0xc08] sm:$0xff]
        %v750 = vld [vmem:[#allocation5 + $0xc10] sm:$0xff]
        %v751 = vld [vmem:[#allocation5 + $0xc18] sm:$0xff]
        %v752 = vld [vmem:[#allocation5 + $0xc20] sm:$0xff]
        %v753 = vld [vmem:[#allocation5 + $0xc28] sm:$0xff]
        %v754 = vld [vmem:[#allocation5 + $0xc30] sm:$0xff]
        %v755 = vld [vmem:[#allocation5 + $0xc38] sm:$0xff]
        %v756 = vld [vmem:[#allocation5 + $0xc40] sm:$0xff]
        %v757 = vld [vmem:[#allocation5 + $0xc48] sm:$0xff]
        %v758 = vld [vmem:[#allocation5 + $0xc50] sm:$0xff]
        %v759 = vld [vmem:[#allocation5 + $0xc58] sm:$0xff]
        %v760 = vld [vmem:[#allocation5 + $0xc60] sm:$0xff]
        %v761 = vld [vmem:[#allocation5 + $0xc68] sm:$0xff]
        %v762 = vld [vmem:[#allocation5 + $0xc70] sm:$0xff]
        %v763 = vld [vmem:[#allocation5 + $0xc78] sm:$0xff]
        %v764 = vld [vmem:[#allocation5 + $0xc80] sm:$0xff]
        %v765 = vld [vmem:[#allocation5 + $0xc88] sm:$0xff]
        %v766 = vld [vmem:[#allocation5 + $0xc90] sm:$0xff]
        %v767 = vld [vmem:[#allocation5 + $0xc98] sm:$0xff]
        %v768 = vld [vmem:[#allocation5 + $0xca0] sm:$0xff]
        %v769 = vld [vmem:[#allocation5 + $0xca8] sm:$0xff]
        %v770 = vld [vmem:[#allocation5 + $0xcb0] sm:$0xff]
        %v771 = vld [vmem:[#allocation5 + $0xcb8] sm:$0xff]
        %v772 = vld [vmem:[#allocation5 + $0xcc0] sm:$0xff]
        %v773 = vld [vmem:[#allocation5 + $0xcc8] sm:$0xff]
        %v774 = vld [vmem:[#allocation5 + $0xcd0] sm:$0xff]
        %v775 = vld [vmem:[#allocation5 + $0xcd8] sm:$0xff]
        %v776 = vld [vmem:[#allocation5 + $0xce0] sm:$0xff]
        %v777 = vld [vmem:[#allocation5 + $0xce8] sm:$0xff]
        %v778 = vld [vmem:[#allocation5 + $0xcf0] sm:$0xff]
        %v779 = vld [vmem:[#allocation5 + $0xcf8] sm:$0xff]
        %v780 = vld [vmem:[#allocation5 + $0xd00] sm:$0xff]
        %v781 = vld [vmem:[#allocation5 + $0xd08] sm:$0xff]
        %v782 = vld [vmem:[#allocation5 + $0xd10] sm:$0xff]
        %v783 = vld [vmem:[#allocation5 + $0xd18] sm:$0xff]
        %v784 = vld [vmem:[#allocation5 + $0xd20] sm:$0xff]
        %v785 = vld [vmem:[#allocation5 + $0xd28] sm:$0xff]
        %v786 = vld [vmem:[#allocation5 + $0xd30] sm:$0xff]
        %v787 = vld [vmem:[#allocation5 + $0xd38] sm:$0xff]
        %v788 = vld [vmem:[#allocation5 + $0xd40] sm:$0xff]
        %v789 = vld [vmem:[#allocation5 + $0xd48] sm:$0xff]
        %v790 = vld [vmem:[#allocation5 + $0xd50] sm:$0xff]
        %v791 = vld [vmem:[#allocation5 + $0xd58] sm:$0xff]
        %v792 = vld [vmem:[#allocation5 + $0xd60] sm:$0xff]
        %v793 = vld [vmem:[#allocation5 + $0xd68] sm:$0xff]
        %v794 = vld [vmem:[#allocation5 + $0xd70] sm:$0xff]
        %v795 = vld [vmem:[#allocation5 + $0xd78] sm:$0xff]
        %v796 = vld [vmem:[#allocation5 + $0xd80] sm:$0xff]
        %v797 = vld [vmem:[#allocation5 + $0xd88] sm:$0xff]
        %v798 = vld [vmem:[#allocation5 + $0xd90] sm:$0xff]
        %v799 = vld [vmem:[#allocation5 + $0xd98] sm:$0xff]
        %v800 = vld [vmem:[#allocation5 + $0xda0] sm:$0xff]
        %v801 = vld [vmem:[#allocation5 + $0xda8] sm:$0xff]
        %v802 = vld [vmem:[#allocation5 + $0xdb0] sm:$0xff]
        %v803 = vld [vmem:[#allocation5 + $0xdb8] sm:$0xff]
        %v804 = vld [vmem:[#allocation5 + $0xdc0] sm:$0xff]
        %v805 = vld [vmem:[#allocation5 + $0xdc8] sm:$0xff]
        %v806 = vld [vmem:[#allocation5 + $0xdd0] sm:$0xff]
        %v807 = vld [vmem:[#allocation5 + $0xdd8] sm:$0xff]
        %v808 = vld [vmem:[#allocation5 + $0xde0] sm:$0xff]
        %v809 = vld [vmem:[#allocation5 + $0xde8] sm:$0xff]
        %v810 = vld [vmem:[#allocation5 + $0xdf0] sm:$0xff]
        %v811 = vld [vmem:[#allocation5 + $0xdf8] sm:$0xff]
        %v812 = vld [vmem:[#allocation5 + $0xe00] sm:$0xff]
        %v813 = vld [vmem:[#allocation5 + $0xe08] sm:$0xff]
        %v814 = vld [vmem:[#allocation5 + $0xe10] sm:$0xff]
        %v815 = vld [vmem:[#allocation5 + $0xe18] sm:$0xff]
        %v816 = vld [vmem:[#allocation5 + $0xe20] sm:$0xff]
        %v817 = vld [vmem:[#allocation5 + $0xe28] sm:$0xff]
        %v818 = vld [vmem:[#allocation5 + $0xe30] sm:$0xff]
        %v819 = vld [vmem:[#allocation5 + $0xe38] sm:$0xff]
        %v820 = vld [vmem:[#allocation5 + $0xe40] sm:$0xff]
        %v821 = vld [vmem:[#allocation5 + $0xe48] sm:$0xff]
        %v822 = vld [vmem:[#allocation5 + $0xe50] sm:$0xff]
        %v823 = vld [vmem:[#allocation5 + $0xe58] sm:$0xff]
        %v824 = vld [vmem:[#allocation5 + $0xe60] sm:$0xff]
        %v825 = vld [vmem:[#allocation5 + $0xe68] sm:$0xff]
        %v826 = vld [vmem:[#allocation5 + $0xe70] sm:$0xff]
        %v827 = vld [vmem:[#allocation5 + $0xe78] sm:$0xff]
        %v828 = vld [vmem:[#allocation5 + $0xe80] sm:$0xff]
        %v829 = vld [vmem:[#allocation5 + $0xe88] sm:$0xff]
        %v830 = vld [vmem:[#allocation5 + $0xe90] sm:$0xff]
        %v831 = vld [vmem:[#allocation5 + $0xe98] sm:$0xff]
        %v832 = vld [vmem:[#allocation5 + $0xea0] sm:$0xff]
        %v833 = vld [vmem:[#allocation5 + $0xea8] sm:$0xff]
        %v834 = vld [vmem:[#allocation5 + $0xeb0] sm:$0xff]
        %v835 = vld [vmem:[#allocation5 + $0xeb8] sm:$0xff]
        %v836 = vld [vmem:[#allocation5 + $0xec0] sm:$0xff]
        %v837 = vld [vmem:[#allocation5 + $0xec8] sm:$0xff]
        %v838 = vld [vmem:[#allocation5 + $0xed0] sm:$0xff]
        %v839 = vld [vmem:[#allocation5 + $0xed8] sm:$0xff]
        %v840 = vld [vmem:[#allocation5 + $0xee0] sm:$0xff]
        %v841 = vld [vmem:[#allocation5 + $0xee8] sm:$0xff]
        %v842 = vld [vmem:[#allocation5 + $0xef0] sm:$0xff]
        %v843 = vld [vmem:[#allocation5 + $0xef8] sm:$0xff]
        %v844 = vld [vmem:[#allocation5 + $0xf00] sm:$0xff]
        %v845 = vld [vmem:[#allocation5 + $0xf08] sm:$0xff]
        %v846 = vld [vmem:[#allocation5 + $0xf10] sm:$0xff]
        %v847 = vld [vmem:[#allocation5 + $0xf18] sm:$0xff]
        %v848 = vld [vmem:[#allocation5 + $0xf20] sm:$0xff]
        %v849 = vld [vmem:[#allocation5 + $0xf28] sm:$0xff]
        %v850 = vld [vmem:[#allocation5 + $0xf30] sm:$0xff]
        %v851 = vld [vmem:[#allocation5 + $0xf38] sm:$0xff]
        %v852 = vld [vmem:[#allocation5 + $0xf40] sm:$0xff]
        %v853 = vld [vmem:[#allocation5 + $0xf48] sm:$0xff]
        %v854 = vld [vmem:[#allocation5 + $0xf50] sm:$0xff]
        %v855 = vld [vmem:[#allocation5 + $0xf58] sm:$0xff]
        %v856 = vld [vmem:[#allocation5 + $0xf60] sm:$0xff]
        %v857 = vld [vmem:[#allocation5 + $0xf68] sm:$0xff]
        %v858 = vld [vmem:[#allocation5 + $0xf70] sm:$0xff]
        %v859 = vld [vmem:[#allocation5 + $0xf78] sm:$0xff]
        %v860 = vld [vmem:[#allocation5 + $0xf80] sm:$0xff]
        %v861 = vld [vmem:[#allocation5 + $0xf88] sm:$0xff]
        %v862 = vld [vmem:[#allocation5 + $0xf90] sm:$0xff]
        %v863 = vld [vmem:[#allocation5 + $0xf98] sm:$0xff]
        %v864 = vld [vmem:[#allocation5 + $0xfa0] sm:$0xff]
        %v865 = vld [vmem:[#allocation5 + $0xfa8] sm:$0xff]
        %v866 = vld [vmem:[#allocation5 + $0xfb0] sm:$0xff]
        %v867 = vld [vmem:[#allocation5 + $0xfb8] sm:$0xff]
        %v868 = vld [vmem:[#allocation5 + $0xfc0] sm:$0xff]
        %v869 = vld [vmem:[#allocation5 + $0xfc8] sm:$0xff]
        %v870 = vld [vmem:[#allocation5 + $0xfd0] sm:$0xff]
        %v871 = vld [vmem:[#allocation5 + $0xfd8] sm:$0xff]
        %v872 = vld [vmem:[#allocation5 + $0xfe0] sm:$0xff]
        %v873 = vld [vmem:[#allocation5 + $0xfe8] sm:$0xff]
        %v874 = vld [vmem:[#allocation5 + $0xff0] sm:$0xff]
        %v875 = vld [vmem:[#allocation5 + $0xff8] sm:$0xff]
        %v876 = vld [vmem:[#allocation7] sm:$0xff]
        %v878 = vlaneseq
        %v879 = vshrl.u32 %v878, 7
        %v880 = vsub.s32 0, %v879
        %v881 = vrot.slane %v876, %v880
        %v882 = vlaneseq
        %v883 = vshrl.u32 %v882, 7
        %v884 = vsub.s32 1, %v883
        %v885 = vrot.slane %v876, %v884
        %v886 = vlaneseq
        %v887 = vshrl.u32 %v886, 7
        %v888 = vsub.s32 2, %v887
        %v889 = vrot.slane %v876, %v888
        %v890 = vlaneseq
        %v891 = vshrl.u32 %v890, 7
        %v892 = vsub.s32 3, %v891
        %v893 = vrot.slane %v876, %v892
        %v894 = vlaneseq
        %v895 = vshrl.u32 %v894, 7
        %v896 = vsub.s32 4, %v895
        %v897 = vrot.slane %v876, %v896
        %v898 = vlaneseq
        %v899 = vshrl.u32 %v898, 7
        %v900 = vsub.s32 5, %v899
        %v901 = vrot.slane %v876, %v900
        %v902 = vlaneseq
        %v903 = vshrl.u32 %v902, 7
        %v904 = vsub.s32 6, %v903
        %v905 = vrot.slane %v876, %v904
        %v906 = vlaneseq
        %v907 = vshrl.u32 %v906, 7
        %v908 = vsub.s32 7, %v907
        %v909 = vrot.slane %v876, %v908
        %v982 = vunpack.c.l.b16 %v300
        %v983 = vunpack.c.h.b16 %v300
        %v984 = vunpack.c.l.b16 %v301
        %v985 = vunpack.c.h.b16 %v301
        %v986 = vunpack.c.l.b16 %v302
        %v987 = vunpack.c.h.b16 %v302
        %v988 = vunpack.c.l.b16 %v303
        %v989 = vunpack.c.h.b16 %v303
        %v990 = vunpack.c.l.b16 %v304
        %v991 = vunpack.c.h.b16 %v304
        %v992 = vunpack.c.l.b16 %v305
        %v993 = vunpack.c.h.b16 %v305
        %v994 = vunpack.c.l.b16 %v306
        %v995 = vunpack.c.h.b16 %v306
        %v996 = vunpack.c.l.b16 %v307
        %v997 = vunpack.c.h.b16 %v307
        %v998 = vunpack.c.l.b16 %v308
        %v999 = vunpack.c.h.b16 %v308
        %v1000 = vunpack.c.l.b16 %v309
        %v1001 = vunpack.c.h.b16 %v309
        %v1002 = vunpack.c.l.b16 %v310
        %v1003 = vunpack.c.h.b16 %v310
        %v1004 = vunpack.c.l.b16 %v311
        %v1005 = vunpack.c.h.b16 %v311
        %v1006 = vunpack.c.l.b16 %v312
        %v1007 = vunpack.c.h.b16 %v312
        %v1008 = vunpack.c.l.b16 %v313
        %v1009 = vunpack.c.h.b16 %v313
        %v1010 = vunpack.c.l.b16 %v314
        %v1011 = vunpack.c.h.b16 %v314
        %v1012 = vunpack.c.l.b16 %v315
        %v1013 = vunpack.c.h.b16 %v315
        %v1014 = vunpack.c.l.b16 %v316
        %v1015 = vunpack.c.h.b16 %v316
        %v1016 = vunpack.c.l.b16 %v317
        %v1017 = vunpack.c.h.b16 %v317
        %v1018 = vunpack.c.l.b16 %v318
        %v1019 = vunpack.c.h.b16 %v318
        %v1020 = vunpack.c.l.b16 %v319
        %v1021 = vunpack.c.h.b16 %v319
        %v1022 = vunpack.c.l.b16 %v320
        %v1023 = vunpack.c.h.b16 %v320
        %v1024 = vunpack.c.l.b16 %v321
        %v1025 = vunpack.c.h.b16 %v321
        %v1026 = vunpack.c.l.b16 %v322
        %v1027 = vunpack.c.h.b16 %v322
        %v1028 = vunpack.c.l.b16 %v323
        %v1029 = vunpack.c.h.b16 %v323
        %v1030 = vunpack.c.l.b16 %v324
        %v1031 = vunpack.c.h.b16 %v324
        %v1032 = vunpack.c.l.b16 %v325
        %v1033 = vunpack.c.h.b16 %v325
        %v1034 = vunpack.c.l.b16 %v326
        %v1035 = vunpack.c.h.b16 %v326
        %v1036 = vunpack.c.l.b16 %v327
        %v1037 = vunpack.c.h.b16 %v327
        %v1038 = vunpack.c.l.b16 %v328
        %v1039 = vunpack.c.h.b16 %v328
        %v1040 = vunpack.c.l.b16 %v329
        %v1041 = vunpack.c.h.b16 %v329
        %v1042 = vunpack.c.l.b16 %v330
        %v1043 = vunpack.c.h.b16 %v330
        %v1044 = vunpack.c.l.b16 %v331
        %v1045 = vunpack.c.h.b16 %v331
        %v1046 = vunpack.c.l.b16 %v332
        %v1047 = vunpack.c.h.b16 %v332
        %v1048 = vunpack.c.l.b16 %v333
        %v1049 = vunpack.c.h.b16 %v333
        %v1050 = vunpack.c.l.b16 %v334
        %v1051 = vunpack.c.h.b16 %v334
        %v1052 = vunpack.c.l.b16 %v335
        %v1053 = vunpack.c.h.b16 %v335
        %v1054 = vunpack.c.l.b16 %v336
        %v1055 = vunpack.c.h.b16 %v336
        %v1056 = vunpack.c.l.b16 %v337
        %v1057 = vunpack.c.h.b16 %v337
        %v1058 = vunpack.c.l.b16 %v338
        %v1059 = vunpack.c.h.b16 %v338
        %v1060 = vunpack.c.l.b16 %v339
        %v1061 = vunpack.c.h.b16 %v339
        %v1062 = vunpack.c.l.b16 %v340
        %v1063 = vunpack.c.h.b16 %v340
        %v1064 = vunpack.c.l.b16 %v341
        %v1065 = vunpack.c.h.b16 %v341
        %v1066 = vunpack.c.l.b16 %v342
        %v1067 = vunpack.c.h.b16 %v342
        %v1068 = vunpack.c.l.b16 %v343
        %v1069 = vunpack.c.h.b16 %v343
        %v1070 = vunpack.c.l.b16 %v344
        %v1071 = vunpack.c.h.b16 %v344
        %v1072 = vunpack.c.l.b16 %v345
        %v1073 = vunpack.c.h.b16 %v345
        %v1074 = vunpack.c.l.b16 %v346
        %v1075 = vunpack.c.h.b16 %v346
        %v1076 = vunpack.c.l.b16 %v347
        %v1077 = vunpack.c.h.b16 %v347
        %v1078 = vunpack.c.l.b16 %v348
        %v1079 = vunpack.c.h.b16 %v348
        %v1080 = vunpack.c.l.b16 %v349
        %v1081 = vunpack.c.h.b16 %v349
        %v1082 = vunpack.c.l.b16 %v350
        %v1083 = vunpack.c.h.b16 %v350
        %v1084 = vunpack.c.l.b16 %v351
        %v1085 = vunpack.c.h.b16 %v351
        %v1086 = vunpack.c.l.b16 %v352
        %v1087 = vunpack.c.h.b16 %v352
        %v1088 = vunpack.c.l.b16 %v353
        %v1089 = vunpack.c.h.b16 %v353
        %v1090 = vunpack.c.l.b16 %v354
        %v1091 = vunpack.c.h.b16 %v354
        %v1092 = vunpack.c.l.b16 %v355
        %v1093 = vunpack.c.h.b16 %v355
        %v1094 = vunpack.c.l.b16 %v356
        %v1095 = vunpack.c.h.b16 %v356
        %v1096 = vunpack.c.l.b16 %v357
        %v1097 = vunpack.c.h.b16 %v357
        %v1098 = vunpack.c.l.b16 %v358
        %v1099 = vunpack.c.h.b16 %v358
        %v1100 = vunpack.c.l.b16 %v359
        %v1101 = vunpack.c.h.b16 %v359
        %v1102 = vunpack.c.l.b16 %v360
        %v1103 = vunpack.c.h.b16 %v360
        %v1104 = vunpack.c.l.b16 %v361
        %v1105 = vunpack.c.h.b16 %v361
        %v1106 = vunpack.c.l.b16 %v362
        %v1107 = vunpack.c.h.b16 %v362
        %v1108 = vunpack.c.l.b16 %v363
        %v1109 = vunpack.c.h.b16 %v363
        %v1110 = vpack.c.b16 %v990, %v982
        %v1111 = vpack.c.b16 %v991, %v983
        %v1112 = vpack.c.b16 %v992, %v984
        %v1113 = vpack.c.b16 %v993, %v985
        %v1114 = vpack.c.b16 %v994, %v986
        %v1115 = vpack.c.b16 %v995, %v987
        %v1116 = vpack.c.b16 %v996, %v988
        %v1117 = vpack.c.b16 %v997, %v989
        %v1118 = vpack.c.b16 %v1006, %v998
        %v1119 = vpack.c.b16 %v1007, %v999
        %v1120 = vpack.c.b16 %v1008, %v1000
        %v1121 = vpack.c.b16 %v1009, %v1001
        %v1122 = vpack.c.b16 %v1010, %v1002
        %v1123 = vpack.c.b16 %v1011, %v1003
        %v1124 = vpack.c.b16 %v1012, %v1004
        %v1125 = vpack.c.b16 %v1013, %v1005
        %v1126 = vpack.c.b16 %v1022, %v1014
        %v1127 = vpack.c.b16 %v1023, %v1015
        %v1128 = vpack.c.b16 %v1024, %v1016
        %v1129 = vpack.c.b16 %v1025, %v1017
        %v1130 = vpack.c.b16 %v1026, %v1018
        %v1131 = vpack.c.b16 %v1027, %v1019
        %v1132 = vpack.c.b16 %v1028, %v1020
        %v1133 = vpack.c.b16 %v1029, %v1021
        %v1134 = vpack.c.b16 %v1038, %v1030
        %v1135 = vpack.c.b16 %v1039, %v1031
        %v1136 = vpack.c.b16 %v1040, %v1032
        %v1137 = vpack.c.b16 %v1041, %v1033
        %v1138 = vpack.c.b16 %v1042, %v1034
        %v1139 = vpack.c.b16 %v1043, %v1035
        %v1140 = vpack.c.b16 %v1044, %v1036
        %v1141 = vpack.c.b16 %v1045, %v1037
        %v1142 = vpack.c.b16 %v1054, %v1046
        %v1143 = vpack.c.b16 %v1055, %v1047
        %v1144 = vpack.c.b16 %v1056, %v1048
        %v1145 = vpack.c.b16 %v1057, %v1049
        %v1146 = vpack.c.b16 %v1058, %v1050
        %v1147 = vpack.c.b16 %v1059, %v1051
        %v1148 = vpack.c.b16 %v1060, %v1052
        %v1149 = vpack.c.b16 %v1061, %v1053
        %v1150 = vpack.c.b16 %v1070, %v1062
        %v1151 = vpack.c.b16 %v1071, %v1063
        %v1152 = vpack.c.b16 %v1072, %v1064
        %v1153 = vpack.c.b16 %v1073, %v1065
        %v1154 = vpack.c.b16 %v1074, %v1066
        %v1155 = vpack.c.b16 %v1075, %v1067
        %v1156 = vpack.c.b16 %v1076, %v1068
        %v1157 = vpack.c.b16 %v1077, %v1069
        %v1158 = vpack.c.b16 %v1086, %v1078
        %v1159 = vpack.c.b16 %v1087, %v1079
        %v1160 = vpack.c.b16 %v1088, %v1080
        %v1161 = vpack.c.b16 %v1089, %v1081
        %v1162 = vpack.c.b16 %v1090, %v1082
        %v1163 = vpack.c.b16 %v1091, %v1083
        %v1164 = vpack.c.b16 %v1092, %v1084
        %v1165 = vpack.c.b16 %v1093, %v1085
        %v1166 = vpack.c.b16 %v1102, %v1094
        %v1167 = vpack.c.b16 %v1103, %v1095
        %v1168 = vpack.c.b16 %v1104, %v1096
        %v1169 = vpack.c.b16 %v1105, %v1097
        %v1170 = vpack.c.b16 %v1106, %v1098
        %v1171 = vpack.c.b16 %v1107, %v1099
        %v1172 = vpack.c.b16 %v1108, %v1100
        %v1173 = vpack.c.b16 %v1109, %v1101
        %v1750 = vunpack.c.l.b16 %v364
        %v1751 = vunpack.c.h.b16 %v364
        %v1752 = vunpack.c.l.b16 %v365
        %v1753 = vunpack.c.h.b16 %v365
        %v1754 = vunpack.c.l.b16 %v366
        %v1755 = vunpack.c.h.b16 %v366
        %v1756 = vunpack.c.l.b16 %v367
        %v1757 = vunpack.c.h.b16 %v367
        %v1758 = vunpack.c.l.b16 %v368
        %v1759 = vunpack.c.h.b16 %v368
        %v1760 = vunpack.c.l.b16 %v369
        %v1761 = vunpack.c.h.b16 %v369
        %v1762 = vunpack.c.l.b16 %v370
        %v1763 = vunpack.c.h.b16 %v370
        %v1764 = vunpack.c.l.b16 %v371
        %v1765 = vunpack.c.h.b16 %v371
        %v1766 = vunpack.c.l.b16 %v372
        %v1767 = vunpack.c.h.b16 %v372
        %v1768 = vunpack.c.l.b16 %v373
        %v1769 = vunpack.c.h.b16 %v373
        %v1770 = vunpack.c.l.b16 %v374
        %v1771 = vunpack.c.h.b16 %v374
        %v1772 = vunpack.c.l.b16 %v375
        %v1773 = vunpack.c.h.b16 %v375
        %v1774 = vunpack.c.l.b16 %v376
        %v1775 = vunpack.c.h.b16 %v376
        %v1776 = vunpack.c.l.b16 %v377
        %v1777 = vunpack.c.h.b16 %v377
        %v1778 = vunpack.c.l.b16 %v378
        %v1779 = vunpack.c.h.b16 %v378
        %v1780 = vunpack.c.l.b16 %v379
        %v1781 = vunpack.c.h.b16 %v379
        %v1782 = vunpack.c.l.b16 %v380
        %v1783 = vunpack.c.h.b16 %v380
        %v1784 = vunpack.c.l.b16 %v381
        %v1785 = vunpack.c.h.b16 %v381
        %v1786 = vunpack.c.l.b16 %v382
        %v1787 = vunpack.c.h.b16 %v382
        %v1788 = vunpack.c.l.b16 %v383
        %v1789 = vunpack.c.h.b16 %v383
        %v1790 = vunpack.c.l.b16 %v384
        %v1791 = vunpack.c.h.b16 %v384
        %v1792 = vunpack.c.l.b16 %v385
        %v1793 = vunpack.c.h.b16 %v385
        %v1794 = vunpack.c.l.b16 %v386
        %v1795 = vunpack.c.h.b16 %v386
        %v1796 = vunpack.c.l.b16 %v387
        %v1797 = vunpack.c.h.b16 %v387
        %v1798 = vunpack.c.l.b16 %v388
        %v1799 = vunpack.c.h.b16 %v388
        %v1800 = vunpack.c.l.b16 %v389
        %v1801 = vunpack.c.h.b16 %v389
        %v1802 = vunpack.c.l.b16 %v390
        %v1803 = vunpack.c.h.b16 %v390
        %v1804 = vunpack.c.l.b16 %v391
        %v1805 = vunpack.c.h.b16 %v391
        %v1806 = vunpack.c.l.b16 %v392
        %v1807 = vunpack.c.h.b16 %v392
        %v1808 = vunpack.c.l.b16 %v393
        %v1809 = vunpack.c.h.b16 %v393
        %v1810 = vunpack.c.l.b16 %v394
        %v1811 = vunpack.c.h.b16 %v394
        %v1812 = vunpack.c.l.b16 %v395
        %v1813 = vunpack.c.h.b16 %v395
        %v1814 = vunpack.c.l.b16 %v396
        %v1815 = vunpack.c.h.b16 %v396
        %v1816 = vunpack.c.l.b16 %v397
        %v1817 = vunpack.c.h.b16 %v397
        %v1818 = vunpack.c.l.b16 %v398
        %v1819 = vunpack.c.h.b16 %v398
        %v1820 = vunpack.c.l.b16 %v399
        %v1821 = vunpack.c.h.b16 %v399
        %v1822 = vunpack.c.l.b16 %v400
        %v1823 = vunpack.c.h.b16 %v400
        %v1824 = vunpack.c.l.b16 %v401
        %v1825 = vunpack.c.h.b16 %v401
        %v1826 = vunpack.c.l.b16 %v402
        %v1827 = vunpack.c.h.b16 %v402
        %v1828 = vunpack.c.l.b16 %v403
        %v1829 = vunpack.c.h.b16 %v403
        %v1830 = vunpack.c.l.b16 %v404
        %v1831 = vunpack.c.h.b16 %v404
        %v1832 = vunpack.c.l.b16 %v405
        %v1833 = vunpack.c.h.b16 %v405
        %v1834 = vunpack.c.l.b16 %v406
        %v1835 = vunpack.c.h.b16 %v406
        %v1836 = vunpack.c.l.b16 %v407
        %v1837 = vunpack.c.h.b16 %v407
        %v1838 = vunpack.c.l.b16 %v408
        %v1839 = vunpack.c.h.b16 %v408
        %v1840 = vunpack.c.l.b16 %v409
        %v1841 = vunpack.c.h.b16 %v409
        %v1842 = vunpack.c.l.b16 %v410
        %v1843 = vunpack.c.h.b16 %v410
        %v1844 = vunpack.c.l.b16 %v411
        %v1845 = vunpack.c.h.b16 %v411
        %v1846 = vunpack.c.l.b16 %v412
        %v1847 = vunpack.c.h.b16 %v412
        %v1848 = vunpack.c.l.b16 %v413
        %v1849 = vunpack.c.h.b16 %v413
        %v1850 = vunpack.c.l.b16 %v414
        %v1851 = vunpack.c.h.b16 %v414
        %v1852 = vunpack.c.l.b16 %v415
        %v1853 = vunpack.c.h.b16 %v415
        %v1854 = vunpack.c.l.b16 %v416
        %v1855 = vunpack.c.h.b16 %v416
        %v1856 = vunpack.c.l.b16 %v417
        %v1857 = vunpack.c.h.b16 %v417
        %v1858 = vunpack.c.l.b16 %v418
        %v1859 = vunpack.c.h.b16 %v418
        %v1860 = vunpack.c.l.b16 %v419
        %v1861 = vunpack.c.h.b16 %v419
        %v1862 = vunpack.c.l.b16 %v420
        %v1863 = vunpack.c.h.b16 %v420
        %v1864 = vunpack.c.l.b16 %v421
        %v1865 = vunpack.c.h.b16 %v421
        %v1866 = vunpack.c.l.b16 %v422
        %v1867 = vunpack.c.h.b16 %v422
        %v1868 = vunpack.c.l.b16 %v423
        %v1869 = vunpack.c.h.b16 %v423
        %v1870 = vunpack.c.l.b16 %v424
        %v1871 = vunpack.c.h.b16 %v424
        %v1872 = vunpack.c.l.b16 %v425
        %v1873 = vunpack.c.h.b16 %v425
        %v1874 = vunpack.c.l.b16 %v426
        %v1875 = vunpack.c.h.b16 %v426
        %v1876 = vunpack.c.l.b16 %v427
        %v1877 = vunpack.c.h.b16 %v427
        %v1878 = vunpack.c.l.b16 %v428
        %v1879 = vunpack.c.h.b16 %v428
        %v1880 = vunpack.c.l.b16 %v429
        %v1881 = vunpack.c.h.b16 %v429
        %v1882 = vunpack.c.l.b16 %v430
        %v1883 = vunpack.c.h.b16 %v430
        %v1884 = vunpack.c.l.b16 %v431
        %v1885 = vunpack.c.h.b16 %v431
        %v1886 = vunpack.c.l.b16 %v432
        %v1887 = vunpack.c.h.b16 %v432
        %v1888 = vunpack.c.l.b16 %v433
        %v1889 = vunpack.c.h.b16 %v433
        %v1890 = vunpack.c.l.b16 %v434
        %v1891 = vunpack.c.h.b16 %v434
        %v1892 = vunpack.c.l.b16 %v435
        %v1893 = vunpack.c.h.b16 %v435
        %v1894 = vunpack.c.l.b16 %v436
        %v1895 = vunpack.c.h.b16 %v436
        %v1896 = vunpack.c.l.b16 %v437
        %v1897 = vunpack.c.h.b16 %v437
        %v1898 = vunpack.c.l.b16 %v438
        %v1899 = vunpack.c.h.b16 %v438
        %v1900 = vunpack.c.l.b16 %v439
        %v1901 = vunpack.c.h.b16 %v439
        %v1902 = vunpack.c.l.b16 %v440
        %v1903 = vunpack.c.h.b16 %v440
        %v1904 = vunpack.c.l.b16 %v441
        %v1905 = vunpack.c.h.b16 %v441
        %v1906 = vunpack.c.l.b16 %v442
        %v1907 = vunpack.c.h.b16 %v442
        %v1908 = vunpack.c.l.b16 %v443
        %v1909 = vunpack.c.h.b16 %v443
        %v1910 = vunpack.c.l.b16 %v444
        %v1911 = vunpack.c.h.b16 %v444
        %v1912 = vunpack.c.l.b16 %v445
        %v1913 = vunpack.c.h.b16 %v445
        %v1914 = vunpack.c.l.b16 %v446
        %v1915 = vunpack.c.h.b16 %v446
        %v1916 = vunpack.c.l.b16 %v447
        %v1917 = vunpack.c.h.b16 %v447
        %v1918 = vunpack.c.l.b16 %v448
        %v1919 = vunpack.c.h.b16 %v448
        %v1920 = vunpack.c.l.b16 %v449
        %v1921 = vunpack.c.h.b16 %v449
        %v1922 = vunpack.c.l.b16 %v450
        %v1923 = vunpack.c.h.b16 %v450
        %v1924 = vunpack.c.l.b16 %v451
        %v1925 = vunpack.c.h.b16 %v451
        %v1926 = vunpack.c.l.b16 %v452
        %v1927 = vunpack.c.h.b16 %v452
        %v1928 = vunpack.c.l.b16 %v453
        %v1929 = vunpack.c.h.b16 %v453
        %v1930 = vunpack.c.l.b16 %v454
        %v1931 = vunpack.c.h.b16 %v454
        %v1932 = vunpack.c.l.b16 %v455
        %v1933 = vunpack.c.h.b16 %v455
        %v1934 = vunpack.c.l.b16 %v456
        %v1935 = vunpack.c.h.b16 %v456
        %v1936 = vunpack.c.l.b16 %v457
        %v1937 = vunpack.c.h.b16 %v457
        %v1938 = vunpack.c.l.b16 %v458
        %v1939 = vunpack.c.h.b16 %v458
        %v1940 = vunpack.c.l.b16 %v459
        %v1941 = vunpack.c.h.b16 %v459
        %v1942 = vunpack.c.l.b16 %v460
        %v1943 = vunpack.c.h.b16 %v460
        %v1944 = vunpack.c.l.b16 %v461
        %v1945 = vunpack.c.h.b16 %v461
        %v1946 = vunpack.c.l.b16 %v462
        %v1947 = vunpack.c.h.b16 %v462
        %v1948 = vunpack.c.l.b16 %v463
        %v1949 = vunpack.c.h.b16 %v463
        %v1950 = vunpack.c.l.b16 %v464
        %v1951 = vunpack.c.h.b16 %v464
        %v1952 = vunpack.c.l.b16 %v465
        %v1953 = vunpack.c.h.b16 %v465
        %v1954 = vunpack.c.l.b16 %v466
        %v1955 = vunpack.c.h.b16 %v466
        %v1956 = vunpack.c.l.b16 %v467
        %v1957 = vunpack.c.h.b16 %v467
        %v1958 = vunpack.c.l.b16 %v468
        %v1959 = vunpack.c.h.b16 %v468
        %v1960 = vunpack.c.l.b16 %v469
        %v1961 = vunpack.c.h.b16 %v469
        %v1962 = vunpack.c.l.b16 %v470
        %v1963 = vunpack.c.h.b16 %v470
        %v1964 = vunpack.c.l.b16 %v471
        %v1965 = vunpack.c.h.b16 %v471
        %v1966 = vunpack.c.l.b16 %v472
        %v1967 = vunpack.c.h.b16 %v472
        %v1968 = vunpack.c.l.b16 %v473
        %v1969 = vunpack.c.h.b16 %v473
        %v1970 = vunpack.c.l.b16 %v474
        %v1971 = vunpack.c.h.b16 %v474
        %v1972 = vunpack.c.l.b16 %v475
        %v1973 = vunpack.c.h.b16 %v475
        %v1974 = vunpack.c.l.b16 %v476
        %v1975 = vunpack.c.h.b16 %v476
        %v1976 = vunpack.c.l.b16 %v477
        %v1977 = vunpack.c.h.b16 %v477
        %v1978 = vunpack.c.l.b16 %v478
        %v1979 = vunpack.c.h.b16 %v478
        %v1980 = vunpack.c.l.b16 %v479
        %v1981 = vunpack.c.h.b16 %v479
        %v1982 = vunpack.c.l.b16 %v480
        %v1983 = vunpack.c.h.b16 %v480
        %v1984 = vunpack.c.l.b16 %v481
        %v1985 = vunpack.c.h.b16 %v481
        %v1986 = vunpack.c.l.b16 %v482
        %v1987 = vunpack.c.h.b16 %v482
        %v1988 = vunpack.c.l.b16 %v483
        %v1989 = vunpack.c.h.b16 %v483
        %v1990 = vunpack.c.l.b16 %v484
        %v1991 = vunpack.c.h.b16 %v484
        %v1992 = vunpack.c.l.b16 %v485
        %v1993 = vunpack.c.h.b16 %v485
        %v1994 = vunpack.c.l.b16 %v486
        %v1995 = vunpack.c.h.b16 %v486
        %v1996 = vunpack.c.l.b16 %v487
        %v1997 = vunpack.c.h.b16 %v487
        %v1998 = vunpack.c.l.b16 %v488
        %v1999 = vunpack.c.h.b16 %v488
        %v2000 = vunpack.c.l.b16 %v489
        %v2001 = vunpack.c.h.b16 %v489
        %v2002 = vunpack.c.l.b16 %v490
        %v2003 = vunpack.c.h.b16 %v490
        %v2004 = vunpack.c.l.b16 %v491
        %v2005 = vunpack.c.h.b16 %v491
        %v2006 = vunpack.c.l.b16 %v492
        %v2007 = vunpack.c.h.b16 %v492
        %v2008 = vunpack.c.l.b16 %v493
        %v2009 = vunpack.c.h.b16 %v493
        %v2010 = vunpack.c.l.b16 %v494
        %v2011 = vunpack.c.h.b16 %v494
        %v2012 = vunpack.c.l.b16 %v495
        %v2013 = vunpack.c.h.b16 %v495
        %v2014 = vunpack.c.l.b16 %v496
        %v2015 = vunpack.c.h.b16 %v496
        %v2016 = vunpack.c.l.b16 %v497
        %v2017 = vunpack.c.h.b16 %v497
        %v2018 = vunpack.c.l.b16 %v498
        %v2019 = vunpack.c.h.b16 %v498
        %v2020 = vunpack.c.l.b16 %v499
        %v2021 = vunpack.c.h.b16 %v499
        %v2022 = vunpack.c.l.b16 %v500
        %v2023 = vunpack.c.h.b16 %v500
        %v2024 = vunpack.c.l.b16 %v501
        %v2025 = vunpack.c.h.b16 %v501
        %v2026 = vunpack.c.l.b16 %v502
        %v2027 = vunpack.c.h.b16 %v502
        %v2028 = vunpack.c.l.b16 %v503
        %v2029 = vunpack.c.h.b16 %v503
        %v2030 = vunpack.c.l.b16 %v504
        %v2031 = vunpack.c.h.b16 %v504
        %v2032 = vunpack.c.l.b16 %v505
        %v2033 = vunpack.c.h.b16 %v505
        %v2034 = vunpack.c.l.b16 %v506
        %v2035 = vunpack.c.h.b16 %v506
        %v2036 = vunpack.c.l.b16 %v507
        %v2037 = vunpack.c.h.b16 %v507
        %v2038 = vunpack.c.l.b16 %v508
        %v2039 = vunpack.c.h.b16 %v508
        %v2040 = vunpack.c.l.b16 %v509
        %v2041 = vunpack.c.h.b16 %v509
        %v2042 = vunpack.c.l.b16 %v510
        %v2043 = vunpack.c.h.b16 %v510
        %v2044 = vunpack.c.l.b16 %v511
        %v2045 = vunpack.c.h.b16 %v511
        %v2046 = vunpack.c.l.b16 %v512
        %v2047 = vunpack.c.h.b16 %v512
        %v2048 = vunpack.c.l.b16 %v513
        %v2049 = vunpack.c.h.b16 %v513
        %v2050 = vunpack.c.l.b16 %v514
        %v2051 = vunpack.c.h.b16 %v514
        %v2052 = vunpack.c.l.b16 %v515
        %v2053 = vunpack.c.h.b16 %v515
        %v2054 = vunpack.c.l.b16 %v516
        %v2055 = vunpack.c.h.b16 %v516
        %v2056 = vunpack.c.l.b16 %v517
        %v2057 = vunpack.c.h.b16 %v517
        %v2058 = vunpack.c.l.b16 %v518
        %v2059 = vunpack.c.h.b16 %v518
        %v2060 = vunpack.c.l.b16 %v519
        %v2061 = vunpack.c.h.b16 %v519
        %v2062 = vunpack.c.l.b16 %v520
        %v2063 = vunpack.c.h.b16 %v520
        %v2064 = vunpack.c.l.b16 %v521
        %v2065 = vunpack.c.h.b16 %v521
        %v2066 = vunpack.c.l.b16 %v522
        %v2067 = vunpack.c.h.b16 %v522
        %v2068 = vunpack.c.l.b16 %v523
        %v2069 = vunpack.c.h.b16 %v523
        %v2070 = vunpack.c.l.b16 %v524
        %v2071 = vunpack.c.h.b16 %v524
        %v2072 = vunpack.c.l.b16 %v525
        %v2073 = vunpack.c.h.b16 %v525
        %v2074 = vunpack.c.l.b16 %v526
        %v2075 = vunpack.c.h.b16 %v526
        %v2076 = vunpack.c.l.b16 %v527
        %v2077 = vunpack.c.h.b16 %v527
        %v2078 = vunpack.c.l.b16 %v528
        %v2079 = vunpack.c.h.b16 %v528
        %v2080 = vunpack.c.l.b16 %v529
        %v2081 = vunpack.c.h.b16 %v529
        %v2082 = vunpack.c.l.b16 %v530
        %v2083 = vunpack.c.h.b16 %v530
        %v2084 = vunpack.c.l.b16 %v531
        %v2085 = vunpack.c.h.b16 %v531
        %v2086 = vunpack.c.l.b16 %v532
        %v2087 = vunpack.c.h.b16 %v532
        %v2088 = vunpack.c.l.b16 %v533
        %v2089 = vunpack.c.h.b16 %v533
        %v2090 = vunpack.c.l.b16 %v534
        %v2091 = vunpack.c.h.b16 %v534
        %v2092 = vunpack.c.l.b16 %v535
        %v2093 = vunpack.c.h.b16 %v535
        %v2094 = vunpack.c.l.b16 %v536
        %v2095 = vunpack.c.h.b16 %v536
        %v2096 = vunpack.c.l.b16 %v537
        %v2097 = vunpack.c.h.b16 %v537
        %v2098 = vunpack.c.l.b16 %v538
        %v2099 = vunpack.c.h.b16 %v538
        %v2100 = vunpack.c.l.b16 %v539
        %v2101 = vunpack.c.h.b16 %v539
        %v2102 = vunpack.c.l.b16 %v540
        %v2103 = vunpack.c.h.b16 %v540
        %v2104 = vunpack.c.l.b16 %v541
        %v2105 = vunpack.c.h.b16 %v541
        %v2106 = vunpack.c.l.b16 %v542
        %v2107 = vunpack.c.h.b16 %v542
        %v2108 = vunpack.c.l.b16 %v543
        %v2109 = vunpack.c.h.b16 %v543
        %v2110 = vunpack.c.l.b16 %v544
        %v2111 = vunpack.c.h.b16 %v544
        %v2112 = vunpack.c.l.b16 %v545
        %v2113 = vunpack.c.h.b16 %v545
        %v2114 = vunpack.c.l.b16 %v546
        %v2115 = vunpack.c.h.b16 %v546
        %v2116 = vunpack.c.l.b16 %v547
        %v2117 = vunpack.c.h.b16 %v547
        %v2118 = vunpack.c.l.b16 %v548
        %v2119 = vunpack.c.h.b16 %v548
        %v2120 = vunpack.c.l.b16 %v549
        %v2121 = vunpack.c.h.b16 %v549
        %v2122 = vunpack.c.l.b16 %v550
        %v2123 = vunpack.c.h.b16 %v550
        %v2124 = vunpack.c.l.b16 %v551
        %v2125 = vunpack.c.h.b16 %v551
        %v2126 = vunpack.c.l.b16 %v552
        %v2127 = vunpack.c.h.b16 %v552
        %v2128 = vunpack.c.l.b16 %v553
        %v2129 = vunpack.c.h.b16 %v553
        %v2130 = vunpack.c.l.b16 %v554
        %v2131 = vunpack.c.h.b16 %v554
        %v2132 = vunpack.c.l.b16 %v555
        %v2133 = vunpack.c.h.b16 %v555
        %v2134 = vunpack.c.l.b16 %v556
        %v2135 = vunpack.c.h.b16 %v556
        %v2136 = vunpack.c.l.b16 %v557
        %v2137 = vunpack.c.h.b16 %v557
        %v2138 = vunpack.c.l.b16 %v558
        %v2139 = vunpack.c.h.b16 %v558
        %v2140 = vunpack.c.l.b16 %v559
        %v2141 = vunpack.c.h.b16 %v559
        %v2142 = vunpack.c.l.b16 %v560
        %v2143 = vunpack.c.h.b16 %v560
        %v2144 = vunpack.c.l.b16 %v561
        %v2145 = vunpack.c.h.b16 %v561
        %v2146 = vunpack.c.l.b16 %v562
        %v2147 = vunpack.c.h.b16 %v562
        %v2148 = vunpack.c.l.b16 %v563
        %v2149 = vunpack.c.h.b16 %v563
        %v2150 = vunpack.c.l.b16 %v564
        %v2151 = vunpack.c.h.b16 %v564
        %v2152 = vunpack.c.l.b16 %v565
        %v2153 = vunpack.c.h.b16 %v565
        %v2154 = vunpack.c.l.b16 %v566
        %v2155 = vunpack.c.h.b16 %v566
        %v2156 = vunpack.c.l.b16 %v567
        %v2157 = vunpack.c.h.b16 %v567
        %v2158 = vunpack.c.l.b16 %v568
        %v2159 = vunpack.c.h.b16 %v568
        %v2160 = vunpack.c.l.b16 %v569
        %v2161 = vunpack.c.h.b16 %v569
        %v2162 = vunpack.c.l.b16 %v570
        %v2163 = vunpack.c.h.b16 %v570
        %v2164 = vunpack.c.l.b16 %v571
        %v2165 = vunpack.c.h.b16 %v571
        %v2166 = vunpack.c.l.b16 %v572
        %v2167 = vunpack.c.h.b16 %v572
        %v2168 = vunpack.c.l.b16 %v573
        %v2169 = vunpack.c.h.b16 %v573
        %v2170 = vunpack.c.l.b16 %v574
        %v2171 = vunpack.c.h.b16 %v574
        %v2172 = vunpack.c.l.b16 %v575
        %v2173 = vunpack.c.h.b16 %v575
        %v2174 = vunpack.c.l.b16 %v576
        %v2175 = vunpack.c.h.b16 %v576
        %v2176 = vunpack.c.l.b16 %v577
        %v2177 = vunpack.c.h.b16 %v577
        %v2178 = vunpack.c.l.b16 %v578
        %v2179 = vunpack.c.h.b16 %v578
        %v2180 = vunpack.c.l.b16 %v579
        %v2181 = vunpack.c.h.b16 %v579
        %v2182 = vunpack.c.l.b16 %v580
        %v2183 = vunpack.c.h.b16 %v580
        %v2184 = vunpack.c.l.b16 %v581
        %v2185 = vunpack.c.h.b16 %v581
        %v2186 = vunpack.c.l.b16 %v582
        %v2187 = vunpack.c.h.b16 %v582
        %v2188 = vunpack.c.l.b16 %v583
        %v2189 = vunpack.c.h.b16 %v583
        %v2190 = vunpack.c.l.b16 %v584
        %v2191 = vunpack.c.h.b16 %v584
        %v2192 = vunpack.c.l.b16 %v585
        %v2193 = vunpack.c.h.b16 %v585
        %v2194 = vunpack.c.l.b16 %v586
        %v2195 = vunpack.c.h.b16 %v586
        %v2196 = vunpack.c.l.b16 %v587
        %v2197 = vunpack.c.h.b16 %v587
        %v2198 = vunpack.c.l.b16 %v588
        %v2199 = vunpack.c.h.b16 %v588
        %v2200 = vunpack.c.l.b16 %v589
        %v2201 = vunpack.c.h.b16 %v589
        %v2202 = vunpack.c.l.b16 %v590
        %v2203 = vunpack.c.h.b16 %v590
        %v2204 = vunpack.c.l.b16 %v591
        %v2205 = vunpack.c.h.b16 %v591
        %v2206 = vunpack.c.l.b16 %v592
        %v2207 = vunpack.c.h.b16 %v592
        %v2208 = vunpack.c.l.b16 %v593
        %v2209 = vunpack.c.h.b16 %v593
        %v2210 = vunpack.c.l.b16 %v594
        %v2211 = vunpack.c.h.b16 %v594
        %v2212 = vunpack.c.l.b16 %v595
        %v2213 = vunpack.c.h.b16 %v595
        %v2214 = vunpack.c.l.b16 %v596
        %v2215 = vunpack.c.h.b16 %v596
        %v2216 = vunpack.c.l.b16 %v597
        %v2217 = vunpack.c.h.b16 %v597
        %v2218 = vunpack.c.l.b16 %v598
        %v2219 = vunpack.c.h.b16 %v598
        %v2220 = vunpack.c.l.b16 %v599
        %v2221 = vunpack.c.h.b16 %v599
        %v2222 = vunpack.c.l.b16 %v600
        %v2223 = vunpack.c.h.b16 %v600
        %v2224 = vunpack.c.l.b16 %v601
        %v2225 = vunpack.c.h.b16 %v601
        %v2226 = vunpack.c.l.b16 %v602
        %v2227 = vunpack.c.h.b16 %v602
        %v2228 = vunpack.c.l.b16 %v603
        %v2229 = vunpack.c.h.b16 %v603
        %v2230 = vunpack.c.l.b16 %v604
        %v2231 = vunpack.c.h.b16 %v604
        %v2232 = vunpack.c.l.b16 %v605
        %v2233 = vunpack.c.h.b16 %v605
        %v2234 = vunpack.c.l.b16 %v606
        %v2235 = vunpack.c.h.b16 %v606
        %v2236 = vunpack.c.l.b16 %v607
        %v2237 = vunpack.c.h.b16 %v607
        %v2238 = vunpack.c.l.b16 %v608
        %v2239 = vunpack.c.h.b16 %v608
        %v2240 = vunpack.c.l.b16 %v609
        %v2241 = vunpack.c.h.b16 %v609
        %v2242 = vunpack.c.l.b16 %v610
        %v2243 = vunpack.c.h.b16 %v610
        %v2244 = vunpack.c.l.b16 %v611
        %v2245 = vunpack.c.h.b16 %v611
        %v2246 = vunpack.c.l.b16 %v612
        %v2247 = vunpack.c.h.b16 %v612
        %v2248 = vunpack.c.l.b16 %v613
        %v2249 = vunpack.c.h.b16 %v613
        %v2250 = vunpack.c.l.b16 %v614
        %v2251 = vunpack.c.h.b16 %v614
        %v2252 = vunpack.c.l.b16 %v615
        %v2253 = vunpack.c.h.b16 %v615
        %v2254 = vunpack.c.l.b16 %v616
        %v2255 = vunpack.c.h.b16 %v616
        %v2256 = vunpack.c.l.b16 %v617
        %v2257 = vunpack.c.h.b16 %v617
        %v2258 = vunpack.c.l.b16 %v618
        %v2259 = vunpack.c.h.b16 %v618
        %v2260 = vunpack.c.l.b16 %v619
        %v2261 = vunpack.c.h.b16 %v619
        %v2262 = vunpack.c.l.b16 %v620
        %v2263 = vunpack.c.h.b16 %v620
        %v2264 = vunpack.c.l.b16 %v621
        %v2265 = vunpack.c.h.b16 %v621
        %v2266 = vunpack.c.l.b16 %v622
        %v2267 = vunpack.c.h.b16 %v622
        %v2268 = vunpack.c.l.b16 %v623
        %v2269 = vunpack.c.h.b16 %v623
        %v2270 = vunpack.c.l.b16 %v624
        %v2271 = vunpack.c.h.b16 %v624
        %v2272 = vunpack.c.l.b16 %v625
        %v2273 = vunpack.c.h.b16 %v625
        %v2274 = vunpack.c.l.b16 %v626
        %v2275 = vunpack.c.h.b16 %v626
        %v2276 = vunpack.c.l.b16 %v627
        %v2277 = vunpack.c.h.b16 %v627
        %v2278 = vunpack.c.l.b16 %v628
        %v2279 = vunpack.c.h.b16 %v628
        %v2280 = vunpack.c.l.b16 %v629
        %v2281 = vunpack.c.h.b16 %v629
        %v2282 = vunpack.c.l.b16 %v630
        %v2283 = vunpack.c.h.b16 %v630
        %v2284 = vunpack.c.l.b16 %v631
        %v2285 = vunpack.c.h.b16 %v631
        %v2286 = vunpack.c.l.b16 %v632
        %v2287 = vunpack.c.h.b16 %v632
        %v2288 = vunpack.c.l.b16 %v633
        %v2289 = vunpack.c.h.b16 %v633
        %v2290 = vunpack.c.l.b16 %v634
        %v2291 = vunpack.c.h.b16 %v634
        %v2292 = vunpack.c.l.b16 %v635
        %v2293 = vunpack.c.h.b16 %v635
        %v2294 = vunpack.c.l.b16 %v636
        %v2295 = vunpack.c.h.b16 %v636
        %v2296 = vunpack.c.l.b16 %v637
        %v2297 = vunpack.c.h.b16 %v637
        %v2298 = vunpack.c.l.b16 %v638
        %v2299 = vunpack.c.h.b16 %v638
        %v2300 = vunpack.c.l.b16 %v639
        %v2301 = vunpack.c.h.b16 %v639
        %v2302 = vunpack.c.l.b16 %v640
        %v2303 = vunpack.c.h.b16 %v640
        %v2304 = vunpack.c.l.b16 %v641
        %v2305 = vunpack.c.h.b16 %v641
        %v2306 = vunpack.c.l.b16 %v642
        %v2307 = vunpack.c.h.b16 %v642
        %v2308 = vunpack.c.l.b16 %v643
        %v2309 = vunpack.c.h.b16 %v643
        %v2310 = vunpack.c.l.b16 %v644
        %v2311 = vunpack.c.h.b16 %v644
        %v2312 = vunpack.c.l.b16 %v645
        %v2313 = vunpack.c.h.b16 %v645
        %v2314 = vunpack.c.l.b16 %v646
        %v2315 = vunpack.c.h.b16 %v646
        %v2316 = vunpack.c.l.b16 %v647
        %v2317 = vunpack.c.h.b16 %v647
        %v2318 = vunpack.c.l.b16 %v648
        %v2319 = vunpack.c.h.b16 %v648
        %v2320 = vunpack.c.l.b16 %v649
        %v2321 = vunpack.c.h.b16 %v649
        %v2322 = vunpack.c.l.b16 %v650
        %v2323 = vunpack.c.h.b16 %v650
        %v2324 = vunpack.c.l.b16 %v651
        %v2325 = vunpack.c.h.b16 %v651
        %v2326 = vunpack.c.l.b16 %v652
        %v2327 = vunpack.c.h.b16 %v652
        %v2328 = vunpack.c.l.b16 %v653
        %v2329 = vunpack.c.h.b16 %v653
        %v2330 = vunpack.c.l.b16 %v654
        %v2331 = vunpack.c.h.b16 %v654
        %v2332 = vunpack.c.l.b16 %v655
        %v2333 = vunpack.c.h.b16 %v655
        %v2334 = vunpack.c.l.b16 %v656
        %v2335 = vunpack.c.h.b16 %v656
        %v2336 = vunpack.c.l.b16 %v657
        %v2337 = vunpack.c.h.b16 %v657
        %v2338 = vunpack.c.l.b16 %v658
        %v2339 = vunpack.c.h.b16 %v658
        %v2340 = vunpack.c.l.b16 %v659
        %v2341 = vunpack.c.h.b16 %v659
        %v2342 = vunpack.c.l.b16 %v660
        %v2343 = vunpack.c.h.b16 %v660
        %v2344 = vunpack.c.l.b16 %v661
        %v2345 = vunpack.c.h.b16 %v661
        %v2346 = vunpack.c.l.b16 %v662
        %v2347 = vunpack.c.h.b16 %v662
        %v2348 = vunpack.c.l.b16 %v663
        %v2349 = vunpack.c.h.b16 %v663
        %v2350 = vunpack.c.l.b16 %v664
        %v2351 = vunpack.c.h.b16 %v664
        %v2352 = vunpack.c.l.b16 %v665
        %v2353 = vunpack.c.h.b16 %v665
        %v2354 = vunpack.c.l.b16 %v666
        %v2355 = vunpack.c.h.b16 %v666
        %v2356 = vunpack.c.l.b16 %v667
        %v2357 = vunpack.c.h.b16 %v667
        %v2358 = vunpack.c.l.b16 %v668
        %v2359 = vunpack.c.h.b16 %v668
        %v2360 = vunpack.c.l.b16 %v669
        %v2361 = vunpack.c.h.b16 %v669
        %v2362 = vunpack.c.l.b16 %v670
        %v2363 = vunpack.c.h.b16 %v670
        %v2364 = vunpack.c.l.b16 %v671
        %v2365 = vunpack.c.h.b16 %v671
        %v2366 = vunpack.c.l.b16 %v672
        %v2367 = vunpack.c.h.b16 %v672
        %v2368 = vunpack.c.l.b16 %v673
        %v2369 = vunpack.c.h.b16 %v673
        %v2370 = vunpack.c.l.b16 %v674
        %v2371 = vunpack.c.h.b16 %v674
        %v2372 = vunpack.c.l.b16 %v675
        %v2373 = vunpack.c.h.b16 %v675
        %v2374 = vunpack.c.l.b16 %v676
        %v2375 = vunpack.c.h.b16 %v676
        %v2376 = vunpack.c.l.b16 %v677
        %v2377 = vunpack.c.h.b16 %v677
        %v2378 = vunpack.c.l.b16 %v678
        %v2379 = vunpack.c.h.b16 %v678
        %v2380 = vunpack.c.l.b16 %v679
        %v2381 = vunpack.c.h.b16 %v679
        %v2382 = vunpack.c.l.b16 %v680
        %v2383 = vunpack.c.h.b16 %v680
        %v2384 = vunpack.c.l.b16 %v681
        %v2385 = vunpack.c.h.b16 %v681
        %v2386 = vunpack.c.l.b16 %v682
        %v2387 = vunpack.c.h.b16 %v682
        %v2388 = vunpack.c.l.b16 %v683
        %v2389 = vunpack.c.h.b16 %v683
        %v2390 = vunpack.c.l.b16 %v684
        %v2391 = vunpack.c.h.b16 %v684
        %v2392 = vunpack.c.l.b16 %v685
        %v2393 = vunpack.c.h.b16 %v685
        %v2394 = vunpack.c.l.b16 %v686
        %v2395 = vunpack.c.h.b16 %v686
        %v2396 = vunpack.c.l.b16 %v687
        %v2397 = vunpack.c.h.b16 %v687
        %v2398 = vunpack.c.l.b16 %v688
        %v2399 = vunpack.c.h.b16 %v688
        %v2400 = vunpack.c.l.b16 %v689
        %v2401 = vunpack.c.h.b16 %v689
        %v2402 = vunpack.c.l.b16 %v690
        %v2403 = vunpack.c.h.b16 %v690
        %v2404 = vunpack.c.l.b16 %v691
        %v2405 = vunpack.c.h.b16 %v691
        %v2406 = vunpack.c.l.b16 %v692
        %v2407 = vunpack.c.h.b16 %v692
        %v2408 = vunpack.c.l.b16 %v693
        %v2409 = vunpack.c.h.b16 %v693
        %v2410 = vunpack.c.l.b16 %v694
        %v2411 = vunpack.c.h.b16 %v694
        %v2412 = vunpack.c.l.b16 %v695
        %v2413 = vunpack.c.h.b16 %v695
        %v2414 = vunpack.c.l.b16 %v696
        %v2415 = vunpack.c.h.b16 %v696
        %v2416 = vunpack.c.l.b16 %v697
        %v2417 = vunpack.c.h.b16 %v697
        %v2418 = vunpack.c.l.b16 %v698
        %v2419 = vunpack.c.h.b16 %v698
        %v2420 = vunpack.c.l.b16 %v699
        %v2421 = vunpack.c.h.b16 %v699
        %v2422 = vunpack.c.l.b16 %v700
        %v2423 = vunpack.c.h.b16 %v700
        %v2424 = vunpack.c.l.b16 %v701
        %v2425 = vunpack.c.h.b16 %v701
        %v2426 = vunpack.c.l.b16 %v702
        %v2427 = vunpack.c.h.b16 %v702
        %v2428 = vunpack.c.l.b16 %v703
        %v2429 = vunpack.c.h.b16 %v703
        %v2430 = vunpack.c.l.b16 %v704
        %v2431 = vunpack.c.h.b16 %v704
        %v2432 = vunpack.c.l.b16 %v705
        %v2433 = vunpack.c.h.b16 %v705
        %v2434 = vunpack.c.l.b16 %v706
        %v2435 = vunpack.c.h.b16 %v706
        %v2436 = vunpack.c.l.b16 %v707
        %v2437 = vunpack.c.h.b16 %v707
        %v2438 = vunpack.c.l.b16 %v708
        %v2439 = vunpack.c.h.b16 %v708
        %v2440 = vunpack.c.l.b16 %v709
        %v2441 = vunpack.c.h.b16 %v709
        %v2442 = vunpack.c.l.b16 %v710
        %v2443 = vunpack.c.h.b16 %v710
        %v2444 = vunpack.c.l.b16 %v711
        %v2445 = vunpack.c.h.b16 %v711
        %v2446 = vunpack.c.l.b16 %v712
        %v2447 = vunpack.c.h.b16 %v712
        %v2448 = vunpack.c.l.b16 %v713
        %v2449 = vunpack.c.h.b16 %v713
        %v2450 = vunpack.c.l.b16 %v714
        %v2451 = vunpack.c.h.b16 %v714
        %v2452 = vunpack.c.l.b16 %v715
        %v2453 = vunpack.c.h.b16 %v715
        %v2454 = vunpack.c.l.b16 %v716
        %v2455 = vunpack.c.h.b16 %v716
        %v2456 = vunpack.c.l.b16 %v717
        %v2457 = vunpack.c.h.b16 %v717
        %v2458 = vunpack.c.l.b16 %v718
        %v2459 = vunpack.c.h.b16 %v718
        %v2460 = vunpack.c.l.b16 %v719
        %v2461 = vunpack.c.h.b16 %v719
        %v2462 = vunpack.c.l.b16 %v720
        %v2463 = vunpack.c.h.b16 %v720
        %v2464 = vunpack.c.l.b16 %v721
        %v2465 = vunpack.c.h.b16 %v721
        %v2466 = vunpack.c.l.b16 %v722
        %v2467 = vunpack.c.h.b16 %v722
        %v2468 = vunpack.c.l.b16 %v723
        %v2469 = vunpack.c.h.b16 %v723
        %v2470 = vunpack.c.l.b16 %v724
        %v2471 = vunpack.c.h.b16 %v724
        %v2472 = vunpack.c.l.b16 %v725
        %v2473 = vunpack.c.h.b16 %v725
        %v2474 = vunpack.c.l.b16 %v726
        %v2475 = vunpack.c.h.b16 %v726
        %v2476 = vunpack.c.l.b16 %v727
        %v2477 = vunpack.c.h.b16 %v727
        %v2478 = vunpack.c.l.b16 %v728
        %v2479 = vunpack.c.h.b16 %v728
        %v2480 = vunpack.c.l.b16 %v729
        %v2481 = vunpack.c.h.b16 %v729
        %v2482 = vunpack.c.l.b16 %v730
        %v2483 = vunpack.c.h.b16 %v730
        %v2484 = vunpack.c.l.b16 %v731
        %v2485 = vunpack.c.h.b16 %v731
        %v2486 = vunpack.c.l.b16 %v732
        %v2487 = vunpack.c.h.b16 %v732
        %v2488 = vunpack.c.l.b16 %v733
        %v2489 = vunpack.c.h.b16 %v733
        %v2490 = vunpack.c.l.b16 %v734
        %v2491 = vunpack.c.h.b16 %v734
        %v2492 = vunpack.c.l.b16 %v735
        %v2493 = vunpack.c.h.b16 %v735
        %v2494 = vunpack.c.l.b16 %v736
        %v2495 = vunpack.c.h.b16 %v736
        %v2496 = vunpack.c.l.b16 %v737
        %v2497 = vunpack.c.h.b16 %v737
        %v2498 = vunpack.c.l.b16 %v738
        %v2499 = vunpack.c.h.b16 %v738
        %v2500 = vunpack.c.l.b16 %v739
        %v2501 = vunpack.c.h.b16 %v739
        %v2502 = vunpack.c.l.b16 %v740
        %v2503 = vunpack.c.h.b16 %v740
        %v2504 = vunpack.c.l.b16 %v741
        %v2505 = vunpack.c.h.b16 %v741
        %v2506 = vunpack.c.l.b16 %v742
        %v2507 = vunpack.c.h.b16 %v742
        %v2508 = vunpack.c.l.b16 %v743
        %v2509 = vunpack.c.h.b16 %v743
        %v2510 = vunpack.c.l.b16 %v744
        %v2511 = vunpack.c.h.b16 %v744
        %v2512 = vunpack.c.l.b16 %v745
        %v2513 = vunpack.c.h.b16 %v745
        %v2514 = vunpack.c.l.b16 %v746
        %v2515 = vunpack.c.h.b16 %v746
        %v2516 = vunpack.c.l.b16 %v747
        %v2517 = vunpack.c.h.b16 %v747
        %v2518 = vunpack.c.l.b16 %v748
        %v2519 = vunpack.c.h.b16 %v748
        %v2520 = vunpack.c.l.b16 %v749
        %v2521 = vunpack.c.h.b16 %v749
        %v2522 = vunpack.c.l.b16 %v750
        %v2523 = vunpack.c.h.b16 %v750
        %v2524 = vunpack.c.l.b16 %v751
        %v2525 = vunpack.c.h.b16 %v751
        %v2526 = vunpack.c.l.b16 %v752
        %v2527 = vunpack.c.h.b16 %v752
        %v2528 = vunpack.c.l.b16 %v753
        %v2529 = vunpack.c.h.b16 %v753
        %v2530 = vunpack.c.l.b16 %v754
        %v2531 = vunpack.c.h.b16 %v754
        %v2532 = vunpack.c.l.b16 %v755
        %v2533 = vunpack.c.h.b16 %v755
        %v2534 = vunpack.c.l.b16 %v756
        %v2535 = vunpack.c.h.b16 %v756
        %v2536 = vunpack.c.l.b16 %v757
        %v2537 = vunpack.c.h.b16 %v757
        %v2538 = vunpack.c.l.b16 %v758
        %v2539 = vunpack.c.h.b16 %v758
        %v2540 = vunpack.c.l.b16 %v759
        %v2541 = vunpack.c.h.b16 %v759
        %v2542 = vunpack.c.l.b16 %v760
        %v2543 = vunpack.c.h.b16 %v760
        %v2544 = vunpack.c.l.b16 %v761
        %v2545 = vunpack.c.h.b16 %v761
        %v2546 = vunpack.c.l.b16 %v762
        %v2547 = vunpack.c.h.b16 %v762
        %v2548 = vunpack.c.l.b16 %v763
        %v2549 = vunpack.c.h.b16 %v763
        %v2550 = vunpack.c.l.b16 %v764
        %v2551 = vunpack.c.h.b16 %v764
        %v2552 = vunpack.c.l.b16 %v765
        %v2553 = vunpack.c.h.b16 %v765
        %v2554 = vunpack.c.l.b16 %v766
        %v2555 = vunpack.c.h.b16 %v766
        %v2556 = vunpack.c.l.b16 %v767
        %v2557 = vunpack.c.h.b16 %v767
        %v2558 = vunpack.c.l.b16 %v768
        %v2559 = vunpack.c.h.b16 %v768
        %v2560 = vunpack.c.l.b16 %v769
        %v2561 = vunpack.c.h.b16 %v769
        %v2562 = vunpack.c.l.b16 %v770
        %v2563 = vunpack.c.h.b16 %v770
        %v2564 = vunpack.c.l.b16 %v771
        %v2565 = vunpack.c.h.b16 %v771
        %v2566 = vunpack.c.l.b16 %v772
        %v2567 = vunpack.c.h.b16 %v772
        %v2568 = vunpack.c.l.b16 %v773
        %v2569 = vunpack.c.h.b16 %v773
        %v2570 = vunpack.c.l.b16 %v774
        %v2571 = vunpack.c.h.b16 %v774
        %v2572 = vunpack.c.l.b16 %v775
        %v2573 = vunpack.c.h.b16 %v775
        %v2574 = vunpack.c.l.b16 %v776
        %v2575 = vunpack.c.h.b16 %v776
        %v2576 = vunpack.c.l.b16 %v777
        %v2577 = vunpack.c.h.b16 %v777
        %v2578 = vunpack.c.l.b16 %v778
        %v2579 = vunpack.c.h.b16 %v778
        %v2580 = vunpack.c.l.b16 %v779
        %v2581 = vunpack.c.h.b16 %v779
        %v2582 = vunpack.c.l.b16 %v780
        %v2583 = vunpack.c.h.b16 %v780
        %v2584 = vunpack.c.l.b16 %v781
        %v2585 = vunpack.c.h.b16 %v781
        %v2586 = vunpack.c.l.b16 %v782
        %v2587 = vunpack.c.h.b16 %v782
        %v2588 = vunpack.c.l.b16 %v783
        %v2589 = vunpack.c.h.b16 %v783
        %v2590 = vunpack.c.l.b16 %v784
        %v2591 = vunpack.c.h.b16 %v784
        %v2592 = vunpack.c.l.b16 %v785
        %v2593 = vunpack.c.h.b16 %v785
        %v2594 = vunpack.c.l.b16 %v786
        %v2595 = vunpack.c.h.b16 %v786
        %v2596 = vunpack.c.l.b16 %v787
        %v2597 = vunpack.c.h.b16 %v787
        %v2598 = vunpack.c.l.b16 %v788
        %v2599 = vunpack.c.h.b16 %v788
        %v2600 = vunpack.c.l.b16 %v789
        %v2601 = vunpack.c.h.b16 %v789
        %v2602 = vunpack.c.l.b16 %v790
        %v2603 = vunpack.c.h.b16 %v790
        %v2604 = vunpack.c.l.b16 %v791
        %v2605 = vunpack.c.h.b16 %v791
        %v2606 = vunpack.c.l.b16 %v792
        %v2607 = vunpack.c.h.b16 %v792
        %v2608 = vunpack.c.l.b16 %v793
        %v2609 = vunpack.c.h.b16 %v793
        %v2610 = vunpack.c.l.b16 %v794
        %v2611 = vunpack.c.h.b16 %v794
        %v2612 = vunpack.c.l.b16 %v795
        %v2613 = vunpack.c.h.b16 %v795
        %v2614 = vunpack.c.l.b16 %v796
        %v2615 = vunpack.c.h.b16 %v796
        %v2616 = vunpack.c.l.b16 %v797
        %v2617 = vunpack.c.h.b16 %v797
        %v2618 = vunpack.c.l.b16 %v798
        %v2619 = vunpack.c.h.b16 %v798
        %v2620 = vunpack.c.l.b16 %v799
        %v2621 = vunpack.c.h.b16 %v799
        %v2622 = vunpack.c.l.b16 %v800
        %v2623 = vunpack.c.h.b16 %v800
        %v2624 = vunpack.c.l.b16 %v801
        %v2625 = vunpack.c.h.b16 %v801
        %v2626 = vunpack.c.l.b16 %v802
        %v2627 = vunpack.c.h.b16 %v802
        %v2628 = vunpack.c.l.b16 %v803
        %v2629 = vunpack.c.h.b16 %v803
        %v2630 = vunpack.c.l.b16 %v804
        %v2631 = vunpack.c.h.b16 %v804
        %v2632 = vunpack.c.l.b16 %v805
        %v2633 = vunpack.c.h.b16 %v805
        %v2634 = vunpack.c.l.b16 %v806
        %v2635 = vunpack.c.h.b16 %v806
        %v2636 = vunpack.c.l.b16 %v807
        %v2637 = vunpack.c.h.b16 %v807
        %v2638 = vunpack.c.l.b16 %v808
        %v2639 = vunpack.c.h.b16 %v808
        %v2640 = vunpack.c.l.b16 %v809
        %v2641 = vunpack.c.h.b16 %v809
        %v2642 = vunpack.c.l.b16 %v810
        %v2643 = vunpack.c.h.b16 %v810
        %v2644 = vunpack.c.l.b16 %v811
        %v2645 = vunpack.c.h.b16 %v811
        %v2646 = vunpack.c.l.b16 %v812
        %v2647 = vunpack.c.h.b16 %v812
        %v2648 = vunpack.c.l.b16 %v813
        %v2649 = vunpack.c.h.b16 %v813
        %v2650 = vunpack.c.l.b16 %v814
        %v2651 = vunpack.c.h.b16 %v814
        %v2652 = vunpack.c.l.b16 %v815
        %v2653 = vunpack.c.h.b16 %v815
        %v2654 = vunpack.c.l.b16 %v816
        %v2655 = vunpack.c.h.b16 %v816
        %v2656 = vunpack.c.l.b16 %v817
        %v2657 = vunpack.c.h.b16 %v817
        %v2658 = vunpack.c.l.b16 %v818
        %v2659 = vunpack.c.h.b16 %v818
        %v2660 = vunpack.c.l.b16 %v819
        %v2661 = vunpack.c.h.b16 %v819
        %v2662 = vunpack.c.l.b16 %v820
        %v2663 = vunpack.c.h.b16 %v820
        %v2664 = vunpack.c.l.b16 %v821
        %v2665 = vunpack.c.h.b16 %v821
        %v2666 = vunpack.c.l.b16 %v822
        %v2667 = vunpack.c.h.b16 %v822
        %v2668 = vunpack.c.l.b16 %v823
        %v2669 = vunpack.c.h.b16 %v823
        %v2670 = vunpack.c.l.b16 %v824
        %v2671 = vunpack.c.h.b16 %v824
        %v2672 = vunpack.c.l.b16 %v825
        %v2673 = vunpack.c.h.b16 %v825
        %v2674 = vunpack.c.l.b16 %v826
        %v2675 = vunpack.c.h.b16 %v826
        %v2676 = vunpack.c.l.b16 %v827
        %v2677 = vunpack.c.h.b16 %v827
        %v2678 = vunpack.c.l.b16 %v828
        %v2679 = vunpack.c.h.b16 %v828
        %v2680 = vunpack.c.l.b16 %v829
        %v2681 = vunpack.c.h.b16 %v829
        %v2682 = vunpack.c.l.b16 %v830
        %v2683 = vunpack.c.h.b16 %v830
        %v2684 = vunpack.c.l.b16 %v831
        %v2685 = vunpack.c.h.b16 %v831
        %v2686 = vunpack.c.l.b16 %v832
        %v2687 = vunpack.c.h.b16 %v832
        %v2688 = vunpack.c.l.b16 %v833
        %v2689 = vunpack.c.h.b16 %v833
        %v2690 = vunpack.c.l.b16 %v834
        %v2691 = vunpack.c.h.b16 %v834
        %v2692 = vunpack.c.l.b16 %v835
        %v2693 = vunpack.c.h.b16 %v835
        %v2694 = vunpack.c.l.b16 %v836
        %v2695 = vunpack.c.h.b16 %v836
        %v2696 = vunpack.c.l.b16 %v837
        %v2697 = vunpack.c.h.b16 %v837
        %v2698 = vunpack.c.l.b16 %v838
        %v2699 = vunpack.c.h.b16 %v838
        %v2700 = vunpack.c.l.b16 %v839
        %v2701 = vunpack.c.h.b16 %v839
        %v2702 = vunpack.c.l.b16 %v840
        %v2703 = vunpack.c.h.b16 %v840
        %v2704 = vunpack.c.l.b16 %v841
        %v2705 = vunpack.c.h.b16 %v841
        %v2706 = vunpack.c.l.b16 %v842
        %v2707 = vunpack.c.h.b16 %v842
        %v2708 = vunpack.c.l.b16 %v843
        %v2709 = vunpack.c.h.b16 %v843
        %v2710 = vunpack.c.l.b16 %v844
        %v2711 = vunpack.c.h.b16 %v844
        %v2712 = vunpack.c.l.b16 %v845
        %v2713 = vunpack.c.h.b16 %v845
        %v2714 = vunpack.c.l.b16 %v846
        %v2715 = vunpack.c.h.b16 %v846
        %v2716 = vunpack.c.l.b16 %v847
        %v2717 = vunpack.c.h.b16 %v847
        %v2718 = vunpack.c.l.b16 %v848
        %v2719 = vunpack.c.h.b16 %v848
        %v2720 = vunpack.c.l.b16 %v849
        %v2721 = vunpack.c.h.b16 %v849
        %v2722 = vunpack.c.l.b16 %v850
        %v2723 = vunpack.c.h.b16 %v850
        %v2724 = vunpack.c.l.b16 %v851
        %v2725 = vunpack.c.h.b16 %v851
        %v2726 = vunpack.c.l.b16 %v852
        %v2727 = vunpack.c.h.b16 %v852
        %v2728 = vunpack.c.l.b16 %v853
        %v2729 = vunpack.c.h.b16 %v853
        %v2730 = vunpack.c.l.b16 %v854
        %v2731 = vunpack.c.h.b16 %v854
        %v2732 = vunpack.c.l.b16 %v855
        %v2733 = vunpack.c.h.b16 %v855
        %v2734 = vunpack.c.l.b16 %v856
        %v2735 = vunpack.c.h.b16 %v856
        %v2736 = vunpack.c.l.b16 %v857
        %v2737 = vunpack.c.h.b16 %v857
        %v2738 = vunpack.c.l.b16 %v858
        %v2739 = vunpack.c.h.b16 %v858
        %v2740 = vunpack.c.l.b16 %v859
        %v2741 = vunpack.c.h.b16 %v859
        %v2742 = vunpack.c.l.b16 %v860
        %v2743 = vunpack.c.h.b16 %v860
        %v2744 = vunpack.c.l.b16 %v861
        %v2745 = vunpack.c.h.b16 %v861
        %v2746 = vunpack.c.l.b16 %v862
        %v2747 = vunpack.c.h.b16 %v862
        %v2748 = vunpack.c.l.b16 %v863
        %v2749 = vunpack.c.h.b16 %v863
        %v2750 = vunpack.c.l.b16 %v864
        %v2751 = vunpack.c.h.b16 %v864
        %v2752 = vunpack.c.l.b16 %v865
        %v2753 = vunpack.c.h.b16 %v865
        %v2754 = vunpack.c.l.b16 %v866
        %v2755 = vunpack.c.h.b16 %v866
        %v2756 = vunpack.c.l.b16 %v867
        %v2757 = vunpack.c.h.b16 %v867
        %v2758 = vunpack.c.l.b16 %v868
        %v2759 = vunpack.c.h.b16 %v868
        %v2760 = vunpack.c.l.b16 %v869
        %v2761 = vunpack.c.h.b16 %v869
        %v2762 = vunpack.c.l.b16 %v870
        %v2763 = vunpack.c.h.b16 %v870
        %v2764 = vunpack.c.l.b16 %v871
        %v2765 = vunpack.c.h.b16 %v871
        %v2766 = vunpack.c.l.b16 %v872
        %v2767 = vunpack.c.h.b16 %v872
        %v2768 = vunpack.c.l.b16 %v873
        %v2769 = vunpack.c.h.b16 %v873
        %v2770 = vunpack.c.l.b16 %v874
        %v2771 = vunpack.c.h.b16 %v874
        %v2772 = vunpack.c.l.b16 %v875
        %v2773 = vunpack.c.h.b16 %v875
        %v2774 = vpack.c.b16 %v1758, %v1750
        %v2775 = vpack.c.b16 %v1759, %v1751
        %v2776 = vpack.c.b16 %v1760, %v1752
        %v2777 = vpack.c.b16 %v1761, %v1753
        %v2778 = vpack.c.b16 %v1762, %v1754
        %v2779 = vpack.c.b16 %v1763, %v1755
        %v2780 = vpack.c.b16 %v1764, %v1756
        %v2781 = vpack.c.b16 %v1765, %v1757
        %v2782 = vpack.c.b16 %v1774, %v1766
        %v2783 = vpack.c.b16 %v1775, %v1767
        %v2784 = vpack.c.b16 %v1776, %v1768
        %v2785 = vpack.c.b16 %v1777, %v1769
        %v2786 = vpack.c.b16 %v1778, %v1770
        %v2787 = vpack.c.b16 %v1779, %v1771
        %v2788 = vpack.c.b16 %v1780, %v1772
        %v2789 = vpack.c.b16 %v1781, %v1773
        %v2790 = vpack.c.b16 %v1790, %v1782
        %v2791 = vpack.c.b16 %v1791, %v1783
        %v2792 = vpack.c.b16 %v1792, %v1784
        %v2793 = vpack.c.b16 %v1793, %v1785
        %v2794 = vpack.c.b16 %v1794, %v1786
        %v2795 = vpack.c.b16 %v1795, %v1787
        %v2796 = vpack.c.b16 %v1796, %v1788
        %v2797 = vpack.c.b16 %v1797, %v1789
        %v2798 = vpack.c.b16 %v1806, %v1798
        %v2799 = vpack.c.b16 %v1807, %v1799
        %v2800 = vpack.c.b16 %v1808, %v1800
        %v2801 = vpack.c.b16 %v1809, %v1801
        %v2802 = vpack.c.b16 %v1810, %v1802
        %v2803 = vpack.c.b16 %v1811, %v1803
        %v2804 = vpack.c.b16 %v1812, %v1804
        %v2805 = vpack.c.b16 %v1813, %v1805
        %v2806 = vpack.c.b16 %v1822, %v1814
        %v2807 = vpack.c.b16 %v1823, %v1815
        %v2808 = vpack.c.b16 %v1824, %v1816
        %v2809 = vpack.c.b16 %v1825, %v1817
        %v2810 = vpack.c.b16 %v1826, %v1818
        %v2811 = vpack.c.b16 %v1827, %v1819
        %v2812 = vpack.c.b16 %v1828, %v1820
        %v2813 = vpack.c.b16 %v1829, %v1821
        %v2814 = vpack.c.b16 %v1838, %v1830
        %v2815 = vpack.c.b16 %v1839, %v1831
        %v2816 = vpack.c.b16 %v1840, %v1832
        %v2817 = vpack.c.b16 %v1841, %v1833
        %v2818 = vpack.c.b16 %v1842, %v1834
        %v2819 = vpack.c.b16 %v1843, %v1835
        %v2820 = vpack.c.b16 %v1844, %v1836
        %v2821 = vpack.c.b16 %v1845, %v1837
        %v2822 = vpack.c.b16 %v1854, %v1846
        %v2823 = vpack.c.b16 %v1855, %v1847
        %v2824 = vpack.c.b16 %v1856, %v1848
        %v2825 = vpack.c.b16 %v1857, %v1849
        %v2826 = vpack.c.b16 %v1858, %v1850
        %v2827 = vpack.c.b16 %v1859, %v1851
        %v2828 = vpack.c.b16 %v1860, %v1852
        %v2829 = vpack.c.b16 %v1861, %v1853
        %v2830 = vpack.c.b16 %v1870, %v1862
        %v2831 = vpack.c.b16 %v1871, %v1863
        %v2832 = vpack.c.b16 %v1872, %v1864
        %v2833 = vpack.c.b16 %v1873, %v1865
        %v2834 = vpack.c.b16 %v1874, %v1866
        %v2835 = vpack.c.b16 %v1875, %v1867
        %v2836 = vpack.c.b16 %v1876, %v1868
        %v2837 = vpack.c.b16 %v1877, %v1869
        %v2838 = vpack.c.b16 %v1886, %v1878
        %v2839 = vpack.c.b16 %v1887, %v1879
        %v2840 = vpack.c.b16 %v1888, %v1880
        %v2841 = vpack.c.b16 %v1889, %v1881
        %v2842 = vpack.c.b16 %v1890, %v1882
        %v2843 = vpack.c.b16 %v1891, %v1883
        %v2844 = vpack.c.b16 %v1892, %v1884
        %v2845 = vpack.c.b16 %v1893, %v1885
        %v2846 = vpack.c.b16 %v1902, %v1894
        %v2847 = vpack.c.b16 %v1903, %v1895
        %v2848 = vpack.c.b16 %v1904, %v1896
        %v2849 = vpack.c.b16 %v1905, %v1897
        %v2850 = vpack.c.b16 %v1906, %v1898
        %v2851 = vpack.c.b16 %v1907, %v1899
        %v2852 = vpack.c.b16 %v1908, %v1900
        %v2853 = vpack.c.b16 %v1909, %v1901
        %v2854 = vpack.c.b16 %v1918, %v1910
        %v2855 = vpack.c.b16 %v1919, %v1911
        %v2856 = vpack.c.b16 %v1920, %v1912
        %v2857 = vpack.c.b16 %v1921, %v1913
        %v2858 = vpack.c.b16 %v1922, %v1914
        %v2859 = vpack.c.b16 %v1923, %v1915
        %v2860 = vpack.c.b16 %v1924, %v1916
        %v2861 = vpack.c.b16 %v1925, %v1917
        %v2862 = vpack.c.b16 %v1934, %v1926
        %v2863 = vpack.c.b16 %v1935, %v1927
        %v2864 = vpack.c.b16 %v1936, %v1928
        %v2865 = vpack.c.b16 %v1937, %v1929
        %v2866 = vpack.c.b16 %v1938, %v1930
        %v2867 = vpack.c.b16 %v1939, %v1931
        %v2868 = vpack.c.b16 %v1940, %v1932
        %v2869 = vpack.c.b16 %v1941, %v1933
        %v2870 = vpack.c.b16 %v1950, %v1942
        %v2871 = vpack.c.b16 %v1951, %v1943
        %v2872 = vpack.c.b16 %v1952, %v1944
        %v2873 = vpack.c.b16 %v1953, %v1945
        %v2874 = vpack.c.b16 %v1954, %v1946
        %v2875 = vpack.c.b16 %v1955, %v1947
        %v2876 = vpack.c.b16 %v1956, %v1948
        %v2877 = vpack.c.b16 %v1957, %v1949
        %v2878 = vpack.c.b16 %v1966, %v1958
        %v2879 = vpack.c.b16 %v1967, %v1959
        %v2880 = vpack.c.b16 %v1968, %v1960
        %v2881 = vpack.c.b16 %v1969, %v1961
        %v2882 = vpack.c.b16 %v1970, %v1962
        %v2883 = vpack.c.b16 %v1971, %v1963
        %v2884 = vpack.c.b16 %v1972, %v1964
        %v2885 = vpack.c.b16 %v1973, %v1965
        %v2886 = vpack.c.b16 %v1982, %v1974
        %v2887 = vpack.c.b16 %v1983, %v1975
        %v2888 = vpack.c.b16 %v1984, %v1976
        %v2889 = vpack.c.b16 %v1985, %v1977
        %v2890 = vpack.c.b16 %v1986, %v1978
        %v2891 = vpack.c.b16 %v1987, %v1979
        %v2892 = vpack.c.b16 %v1988, %v1980
        %v2893 = vpack.c.b16 %v1989, %v1981
        %v2894 = vpack.c.b16 %v1998, %v1990
        %v2895 = vpack.c.b16 %v1999, %v1991
        %v2896 = vpack.c.b16 %v2000, %v1992
        %v2897 = vpack.c.b16 %v2001, %v1993
        %v2898 = vpack.c.b16 %v2002, %v1994
        %v2899 = vpack.c.b16 %v2003, %v1995
        %v2900 = vpack.c.b16 %v2004, %v1996
        %v2901 = vpack.c.b16 %v2005, %v1997
        %v2902 = vpack.c.b16 %v2014, %v2006
        %v2903 = vpack.c.b16 %v2015, %v2007
        %v2904 = vpack.c.b16 %v2016, %v2008
        %v2905 = vpack.c.b16 %v2017, %v2009
        %v2906 = vpack.c.b16 %v2018, %v2010
        %v2907 = vpack.c.b16 %v2019, %v2011
        %v2908 = vpack.c.b16 %v2020, %v2012
        %v2909 = vpack.c.b16 %v2021, %v2013
        %v2910 = vpack.c.b16 %v2030, %v2022
        %v2911 = vpack.c.b16 %v2031, %v2023
        %v2912 = vpack.c.b16 %v2032, %v2024
        %v2913 = vpack.c.b16 %v2033, %v2025
        %v2914 = vpack.c.b16 %v2034, %v2026
        %v2915 = vpack.c.b16 %v2035, %v2027
        %v2916 = vpack.c.b16 %v2036, %v2028
        %v2917 = vpack.c.b16 %v2037, %v2029
        %v2918 = vpack.c.b16 %v2046, %v2038
        %v2919 = vpack.c.b16 %v2047, %v2039
        %v2920 = vpack.c.b16 %v2048, %v2040
        %v2921 = vpack.c.b16 %v2049, %v2041
        %v2922 = vpack.c.b16 %v2050, %v2042
        %v2923 = vpack.c.b16 %v2051, %v2043
        %v2924 = vpack.c.b16 %v2052, %v2044
        %v2925 = vpack.c.b16 %v2053, %v2045
        %v2926 = vpack.c.b16 %v2062, %v2054
        %v2927 = vpack.c.b16 %v2063, %v2055
        %v2928 = vpack.c.b16 %v2064, %v2056
        %v2929 = vpack.c.b16 %v2065, %v2057
        %v2930 = vpack.c.b16 %v2066, %v2058
        %v2931 = vpack.c.b16 %v2067, %v2059
        %v2932 = vpack.c.b16 %v2068, %v2060
        %v2933 = vpack.c.b16 %v2069, %v2061
        %v2934 = vpack.c.b16 %v2078, %v2070
        %v2935 = vpack.c.b16 %v2079, %v2071
        %v2936 = vpack.c.b16 %v2080, %v2072
        %v2937 = vpack.c.b16 %v2081, %v2073
        %v2938 = vpack.c.b16 %v2082, %v2074
        %v2939 = vpack.c.b16 %v2083, %v2075
        %v2940 = vpack.c.b16 %v2084, %v2076
        %v2941 = vpack.c.b16 %v2085, %v2077
        %v2942 = vpack.c.b16 %v2094, %v2086
        %v2943 = vpack.c.b16 %v2095, %v2087
        %v2944 = vpack.c.b16 %v2096, %v2088
        %v2945 = vpack.c.b16 %v2097, %v2089
        %v2946 = vpack.c.b16 %v2098, %v2090
        %v2947 = vpack.c.b16 %v2099, %v2091
        %v2948 = vpack.c.b16 %v2100, %v2092
        %v2949 = vpack.c.b16 %v2101, %v2093
        %v2950 = vpack.c.b16 %v2110, %v2102
        %v2951 = vpack.c.b16 %v2111, %v2103
        %v2952 = vpack.c.b16 %v2112, %v2104
        %v2953 = vpack.c.b16 %v2113, %v2105
        %v2954 = vpack.c.b16 %v2114, %v2106
        %v2955 = vpack.c.b16 %v2115, %v2107
        %v2956 = vpack.c.b16 %v2116, %v2108
        %v2957 = vpack.c.b16 %v2117, %v2109
        %v2958 = vpack.c.b16 %v2126, %v2118
        %v2959 = vpack.c.b16 %v2127, %v2119
        %v2960 = vpack.c.b16 %v2128, %v2120
        %v2961 = vpack.c.b16 %v2129, %v2121
        %v2962 = vpack.c.b16 %v2130, %v2122
        %v2963 = vpack.c.b16 %v2131, %v2123
        %v2964 = vpack.c.b16 %v2132, %v2124
        %v2965 = vpack.c.b16 %v2133, %v2125
        %v2966 = vpack.c.b16 %v2142, %v2134
        %v2967 = vpack.c.b16 %v2143, %v2135
        %v2968 = vpack.c.b16 %v2144, %v2136
        %v2969 = vpack.c.b16 %v2145, %v2137
        %v2970 = vpack.c.b16 %v2146, %v2138
        %v2971 = vpack.c.b16 %v2147, %v2139
        %v2972 = vpack.c.b16 %v2148, %v2140
        %v2973 = vpack.c.b16 %v2149, %v2141
        %v2974 = vpack.c.b16 %v2158, %v2150
        %v2975 = vpack.c.b16 %v2159, %v2151
        %v2976 = vpack.c.b16 %v2160, %v2152
        %v2977 = vpack.c.b16 %v2161, %v2153
        %v2978 = vpack.c.b16 %v2162, %v2154
        %v2979 = vpack.c.b16 %v2163, %v2155
        %v2980 = vpack.c.b16 %v2164, %v2156
        %v2981 = vpack.c.b16 %v2165, %v2157
        %v2982 = vpack.c.b16 %v2174, %v2166
        %v2983 = vpack.c.b16 %v2175, %v2167
        %v2984 = vpack.c.b16 %v2176, %v2168
        %v2985 = vpack.c.b16 %v2177, %v2169
        %v2986 = vpack.c.b16 %v2178, %v2170
        %v2987 = vpack.c.b16 %v2179, %v2171
        %v2988 = vpack.c.b16 %v2180, %v2172
        %v2989 = vpack.c.b16 %v2181, %v2173
        %v2990 = vpack.c.b16 %v2190, %v2182
        %v2991 = vpack.c.b16 %v2191, %v2183
        %v2992 = vpack.c.b16 %v2192, %v2184
        %v2993 = vpack.c.b16 %v2193, %v2185
        %v2994 = vpack.c.b16 %v2194, %v2186
        %v2995 = vpack.c.b16 %v2195, %v2187
        %v2996 = vpack.c.b16 %v2196, %v2188
        %v2997 = vpack.c.b16 %v2197, %v2189
        %v2998 = vpack.c.b16 %v2206, %v2198
        %v2999 = vpack.c.b16 %v2207, %v2199
        %v3000 = vpack.c.b16 %v2208, %v2200
        %v3001 = vpack.c.b16 %v2209, %v2201
        %v3002 = vpack.c.b16 %v2210, %v2202
        %v3003 = vpack.c.b16 %v2211, %v2203
        %v3004 = vpack.c.b16 %v2212, %v2204
        %v3005 = vpack.c.b16 %v2213, %v2205
        %v3006 = vpack.c.b16 %v2222, %v2214
        %v3007 = vpack.c.b16 %v2223, %v2215
        %v3008 = vpack.c.b16 %v2224, %v2216
        %v3009 = vpack.c.b16 %v2225, %v2217
        %v3010 = vpack.c.b16 %v2226, %v2218
        %v3011 = vpack.c.b16 %v2227, %v2219
        %v3012 = vpack.c.b16 %v2228, %v2220
        %v3013 = vpack.c.b16 %v2229, %v2221
        %v3014 = vpack.c.b16 %v2238, %v2230
        %v3015 = vpack.c.b16 %v2239, %v2231
        %v3016 = vpack.c.b16 %v2240, %v2232
        %v3017 = vpack.c.b16 %v2241, %v2233
        %v3018 = vpack.c.b16 %v2242, %v2234
        %v3019 = vpack.c.b16 %v2243, %v2235
        %v3020 = vpack.c.b16 %v2244, %v2236
        %v3021 = vpack.c.b16 %v2245, %v2237
        %v3022 = vpack.c.b16 %v2254, %v2246
        %v3023 = vpack.c.b16 %v2255, %v2247
        %v3024 = vpack.c.b16 %v2256, %v2248
        %v3025 = vpack.c.b16 %v2257, %v2249
        %v3026 = vpack.c.b16 %v2258, %v2250
        %v3027 = vpack.c.b16 %v2259, %v2251
        %v3028 = vpack.c.b16 %v2260, %v2252
        %v3029 = vpack.c.b16 %v2261, %v2253
        %v3030 = vpack.c.b16 %v2270, %v2262
        %v3031 = vpack.c.b16 %v2271, %v2263
        %v3032 = vpack.c.b16 %v2272, %v2264
        %v3033 = vpack.c.b16 %v2273, %v2265
        %v3034 = vpack.c.b16 %v2274, %v2266
        %v3035 = vpack.c.b16 %v2275, %v2267
        %v3036 = vpack.c.b16 %v2276, %v2268
        %v3037 = vpack.c.b16 %v2277, %v2269
        %v3038 = vpack.c.b16 %v2286, %v2278
        %v3039 = vpack.c.b16 %v2287, %v2279
        %v3040 = vpack.c.b16 %v2288, %v2280
        %v3041 = vpack.c.b16 %v2289, %v2281
        %v3042 = vpack.c.b16 %v2290, %v2282
        %v3043 = vpack.c.b16 %v2291, %v2283
        %v3044 = vpack.c.b16 %v2292, %v2284
        %v3045 = vpack.c.b16 %v2293, %v2285
        %v3046 = vpack.c.b16 %v2302, %v2294
        %v3047 = vpack.c.b16 %v2303, %v2295
        %v3048 = vpack.c.b16 %v2304, %v2296
        %v3049 = vpack.c.b16 %v2305, %v2297
        %v3050 = vpack.c.b16 %v2306, %v2298
        %v3051 = vpack.c.b16 %v2307, %v2299
        %v3052 = vpack.c.b16 %v2308, %v2300
        %v3053 = vpack.c.b16 %v2309, %v2301
        %v3054 = vpack.c.b16 %v2318, %v2310
        %v3055 = vpack.c.b16 %v2319, %v2311
        %v3056 = vpack.c.b16 %v2320, %v2312
        %v3057 = vpack.c.b16 %v2321, %v2313
        %v3058 = vpack.c.b16 %v2322, %v2314
        %v3059 = vpack.c.b16 %v2323, %v2315
        %v3060 = vpack.c.b16 %v2324, %v2316
        %v3061 = vpack.c.b16 %v2325, %v2317
        %v3062 = vpack.c.b16 %v2334, %v2326
        %v3063 = vpack.c.b16 %v2335, %v2327
        %v3064 = vpack.c.b16 %v2336, %v2328
        %v3065 = vpack.c.b16 %v2337, %v2329
        %v3066 = vpack.c.b16 %v2338, %v2330
        %v3067 = vpack.c.b16 %v2339, %v2331
        %v3068 = vpack.c.b16 %v2340, %v2332
        %v3069 = vpack.c.b16 %v2341, %v2333
        %v3070 = vpack.c.b16 %v2350, %v2342
        %v3071 = vpack.c.b16 %v2351, %v2343
        %v3072 = vpack.c.b16 %v2352, %v2344
        %v3073 = vpack.c.b16 %v2353, %v2345
        %v3074 = vpack.c.b16 %v2354, %v2346
        %v3075 = vpack.c.b16 %v2355, %v2347
        %v3076 = vpack.c.b16 %v2356, %v2348
        %v3077 = vpack.c.b16 %v2357, %v2349
        %v3078 = vpack.c.b16 %v2366, %v2358
        %v3079 = vpack.c.b16 %v2367, %v2359
        %v3080 = vpack.c.b16 %v2368, %v2360
        %v3081 = vpack.c.b16 %v2369, %v2361
        %v3082 = vpack.c.b16 %v2370, %v2362
        %v3083 = vpack.c.b16 %v2371, %v2363
        %v3084 = vpack.c.b16 %v2372, %v2364
        %v3085 = vpack.c.b16 %v2373, %v2365
        %v3086 = vpack.c.b16 %v2382, %v2374
        %v3087 = vpack.c.b16 %v2383, %v2375
        %v3088 = vpack.c.b16 %v2384, %v2376
        %v3089 = vpack.c.b16 %v2385, %v2377
        %v3090 = vpack.c.b16 %v2386, %v2378
        %v3091 = vpack.c.b16 %v2387, %v2379
        %v3092 = vpack.c.b16 %v2388, %v2380
        %v3093 = vpack.c.b16 %v2389, %v2381
        %v3094 = vpack.c.b16 %v2398, %v2390
        %v3095 = vpack.c.b16 %v2399, %v2391
        %v3096 = vpack.c.b16 %v2400, %v2392
        %v3097 = vpack.c.b16 %v2401, %v2393
        %v3098 = vpack.c.b16 %v2402, %v2394
        %v3099 = vpack.c.b16 %v2403, %v2395
        %v3100 = vpack.c.b16 %v2404, %v2396
        %v3101 = vpack.c.b16 %v2405, %v2397
        %v3102 = vpack.c.b16 %v2414, %v2406
        %v3103 = vpack.c.b16 %v2415, %v2407
        %v3104 = vpack.c.b16 %v2416, %v2408
        %v3105 = vpack.c.b16 %v2417, %v2409
        %v3106 = vpack.c.b16 %v2418, %v2410
        %v3107 = vpack.c.b16 %v2419, %v2411
        %v3108 = vpack.c.b16 %v2420, %v2412
        %v3109 = vpack.c.b16 %v2421, %v2413
        %v3110 = vpack.c.b16 %v2430, %v2422
        %v3111 = vpack.c.b16 %v2431, %v2423
        %v3112 = vpack.c.b16 %v2432, %v2424
        %v3113 = vpack.c.b16 %v2433, %v2425
        %v3114 = vpack.c.b16 %v2434, %v2426
        %v3115 = vpack.c.b16 %v2435, %v2427
        %v3116 = vpack.c.b16 %v2436, %v2428
        %v3117 = vpack.c.b16 %v2437, %v2429
        %v3118 = vpack.c.b16 %v2446, %v2438
        %v3119 = vpack.c.b16 %v2447, %v2439
        %v3120 = vpack.c.b16 %v2448, %v2440
        %v3121 = vpack.c.b16 %v2449, %v2441
        %v3122 = vpack.c.b16 %v2450, %v2442
        %v3123 = vpack.c.b16 %v2451, %v2443
        %v3124 = vpack.c.b16 %v2452, %v2444
        %v3125 = vpack.c.b16 %v2453, %v2445
        %v3126 = vpack.c.b16 %v2462, %v2454
        %v3127 = vpack.c.b16 %v2463, %v2455
        %v3128 = vpack.c.b16 %v2464, %v2456
        %v3129 = vpack.c.b16 %v2465, %v2457
        %v3130 = vpack.c.b16 %v2466, %v2458
        %v3131 = vpack.c.b16 %v2467, %v2459
        %v3132 = vpack.c.b16 %v2468, %v2460
        %v3133 = vpack.c.b16 %v2469, %v2461
        %v3134 = vpack.c.b16 %v2478, %v2470
        %v3135 = vpack.c.b16 %v2479, %v2471
        %v3136 = vpack.c.b16 %v2480, %v2472
        %v3137 = vpack.c.b16 %v2481, %v2473
        %v3138 = vpack.c.b16 %v2482, %v2474
        %v3139 = vpack.c.b16 %v2483, %v2475
        %v3140 = vpack.c.b16 %v2484, %v2476
        %v3141 = vpack.c.b16 %v2485, %v2477
        %v3142 = vpack.c.b16 %v2494, %v2486
        %v3143 = vpack.c.b16 %v2495, %v2487
        %v3144 = vpack.c.b16 %v2496, %v2488
        %v3145 = vpack.c.b16 %v2497, %v2489
        %v3146 = vpack.c.b16 %v2498, %v2490
        %v3147 = vpack.c.b16 %v2499, %v2491
        %v3148 = vpack.c.b16 %v2500, %v2492
        %v3149 = vpack.c.b16 %v2501, %v2493
        %v3150 = vpack.c.b16 %v2510, %v2502
        %v3151 = vpack.c.b16 %v2511, %v2503
        %v3152 = vpack.c.b16 %v2512, %v2504
        %v3153 = vpack.c.b16 %v2513, %v2505
        %v3154 = vpack.c.b16 %v2514, %v2506
        %v3155 = vpack.c.b16 %v2515, %v2507
        %v3156 = vpack.c.b16 %v2516, %v2508
        %v3157 = vpack.c.b16 %v2517, %v2509
        %v3158 = vpack.c.b16 %v2526, %v2518
        %v3159 = vpack.c.b16 %v2527, %v2519
        %v3160 = vpack.c.b16 %v2528, %v2520
        %v3161 = vpack.c.b16 %v2529, %v2521
        %v3162 = vpack.c.b16 %v2530, %v2522
        %v3163 = vpack.c.b16 %v2531, %v2523
        %v3164 = vpack.c.b16 %v2532, %v2524
        %v3165 = vpack.c.b16 %v2533, %v2525
        %v3166 = vpack.c.b16 %v2542, %v2534
        %v3167 = vpack.c.b16 %v2543, %v2535
        %v3168 = vpack.c.b16 %v2544, %v2536
        %v3169 = vpack.c.b16 %v2545, %v2537
        %v3170 = vpack.c.b16 %v2546, %v2538
        %v3171 = vpack.c.b16 %v2547, %v2539
        %v3172 = vpack.c.b16 %v2548, %v2540
        %v3173 = vpack.c.b16 %v2549, %v2541
        %v3174 = vpack.c.b16 %v2558, %v2550
        %v3175 = vpack.c.b16 %v2559, %v2551
        %v3176 = vpack.c.b16 %v2560, %v2552
        %v3177 = vpack.c.b16 %v2561, %v2553
        %v3178 = vpack.c.b16 %v2562, %v2554
        %v3179 = vpack.c.b16 %v2563, %v2555
        %v3180 = vpack.c.b16 %v2564, %v2556
        %v3181 = vpack.c.b16 %v2565, %v2557
        %v3182 = vpack.c.b16 %v2574, %v2566
        %v3183 = vpack.c.b16 %v2575, %v2567
        %v3184 = vpack.c.b16 %v2576, %v2568
        %v3185 = vpack.c.b16 %v2577, %v2569
        %v3186 = vpack.c.b16 %v2578, %v2570
        %v3187 = vpack.c.b16 %v2579, %v2571
        %v3188 = vpack.c.b16 %v2580, %v2572
        %v3189 = vpack.c.b16 %v2581, %v2573
        %v3190 = vpack.c.b16 %v2590, %v2582
        %v3191 = vpack.c.b16 %v2591, %v2583
        %v3192 = vpack.c.b16 %v2592, %v2584
        %v3193 = vpack.c.b16 %v2593, %v2585
        %v3194 = vpack.c.b16 %v2594, %v2586
        %v3195 = vpack.c.b16 %v2595, %v2587
        %v3196 = vpack.c.b16 %v2596, %v2588
        %v3197 = vpack.c.b16 %v2597, %v2589
        %v3198 = vpack.c.b16 %v2606, %v2598
        %v3199 = vpack.c.b16 %v2607, %v2599
        %v3200 = vpack.c.b16 %v2608, %v2600
        %v3201 = vpack.c.b16 %v2609, %v2601
        %v3202 = vpack.c.b16 %v2610, %v2602
        %v3203 = vpack.c.b16 %v2611, %v2603
        %v3204 = vpack.c.b16 %v2612, %v2604
        %v3205 = vpack.c.b16 %v2613, %v2605
        %v3206 = vpack.c.b16 %v2622, %v2614
        %v3207 = vpack.c.b16 %v2623, %v2615
        %v3208 = vpack.c.b16 %v2624, %v2616
        %v3209 = vpack.c.b16 %v2625, %v2617
        %v3210 = vpack.c.b16 %v2626, %v2618
        %v3211 = vpack.c.b16 %v2627, %v2619
        %v3212 = vpack.c.b16 %v2628, %v2620
        %v3213 = vpack.c.b16 %v2629, %v2621
        %v3214 = vpack.c.b16 %v2638, %v2630
        %v3215 = vpack.c.b16 %v2639, %v2631
        %v3216 = vpack.c.b16 %v2640, %v2632
        %v3217 = vpack.c.b16 %v2641, %v2633
        %v3218 = vpack.c.b16 %v2642, %v2634
        %v3219 = vpack.c.b16 %v2643, %v2635
        %v3220 = vpack.c.b16 %v2644, %v2636
        %v3221 = vpack.c.b16 %v2645, %v2637
        %v3222 = vpack.c.b16 %v2654, %v2646
        %v3223 = vpack.c.b16 %v2655, %v2647
        %v3224 = vpack.c.b16 %v2656, %v2648
        %v3225 = vpack.c.b16 %v2657, %v2649
        %v3226 = vpack.c.b16 %v2658, %v2650
        %v3227 = vpack.c.b16 %v2659, %v2651
        %v3228 = vpack.c.b16 %v2660, %v2652
        %v3229 = vpack.c.b16 %v2661, %v2653
        %v3230 = vpack.c.b16 %v2670, %v2662
        %v3231 = vpack.c.b16 %v2671, %v2663
        %v3232 = vpack.c.b16 %v2672, %v2664
        %v3233 = vpack.c.b16 %v2673, %v2665
        %v3234 = vpack.c.b16 %v2674, %v2666
        %v3235 = vpack.c.b16 %v2675, %v2667
        %v3236 = vpack.c.b16 %v2676, %v2668
        %v3237 = vpack.c.b16 %v2677, %v2669
        %v3238 = vpack.c.b16 %v2686, %v2678
        %v3239 = vpack.c.b16 %v2687, %v2679
        %v3240 = vpack.c.b16 %v2688, %v2680
        %v3241 = vpack.c.b16 %v2689, %v2681
        %v3242 = vpack.c.b16 %v2690, %v2682
        %v3243 = vpack.c.b16 %v2691, %v2683
        %v3244 = vpack.c.b16 %v2692, %v2684
        %v3245 = vpack.c.b16 %v2693, %v2685
        %v3246 = vpack.c.b16 %v2702, %v2694
        %v3247 = vpack.c.b16 %v2703, %v2695
        %v3248 = vpack.c.b16 %v2704, %v2696
        %v3249 = vpack.c.b16 %v2705, %v2697
        %v3250 = vpack.c.b16 %v2706, %v2698
        %v3251 = vpack.c.b16 %v2707, %v2699
        %v3252 = vpack.c.b16 %v2708, %v2700
        %v3253 = vpack.c.b16 %v2709, %v2701
        %v3254 = vpack.c.b16 %v2718, %v2710
        %v3255 = vpack.c.b16 %v2719, %v2711
        %v3256 = vpack.c.b16 %v2720, %v2712
        %v3257 = vpack.c.b16 %v2721, %v2713
        %v3258 = vpack.c.b16 %v2722, %v2714
        %v3259 = vpack.c.b16 %v2723, %v2715
        %v3260 = vpack.c.b16 %v2724, %v2716
        %v3261 = vpack.c.b16 %v2725, %v2717
        %v3262 = vpack.c.b16 %v2734, %v2726
        %v3263 = vpack.c.b16 %v2735, %v2727
        %v3264 = vpack.c.b16 %v2736, %v2728
        %v3265 = vpack.c.b16 %v2737, %v2729
        %v3266 = vpack.c.b16 %v2738, %v2730
        %v3267 = vpack.c.b16 %v2739, %v2731
        %v3268 = vpack.c.b16 %v2740, %v2732
        %v3269 = vpack.c.b16 %v2741, %v2733
        %v3270 = vpack.c.b16 %v2750, %v2742
        %v3271 = vpack.c.b16 %v2751, %v2743
        %v3272 = vpack.c.b16 %v2752, %v2744
        %v3273 = vpack.c.b16 %v2753, %v2745
        %v3274 = vpack.c.b16 %v2754, %v2746
        %v3275 = vpack.c.b16 %v2755, %v2747
        %v3276 = vpack.c.b16 %v2756, %v2748
        %v3277 = vpack.c.b16 %v2757, %v2749
        %v3278 = vpack.c.b16 %v2766, %v2758
        %v3279 = vpack.c.b16 %v2767, %v2759
        %v3280 = vpack.c.b16 %v2768, %v2760
        %v3281 = vpack.c.b16 %v2769, %v2761
        %v3282 = vpack.c.b16 %v2770, %v2762
        %v3283 = vpack.c.b16 %v2771, %v2763
        %v3284 = vpack.c.b16 %v2772, %v2764
        %v3285 = vpack.c.b16 %v2773, %v2765
        %3798 = vmatprep.subr.bf16.mxu0 %v2831
        %3799 = vmatpush1.bf16.msra.mxu0 %v2830
        %3800 = vmatprep.subr.bf16.mxu0 %v2823
        %3801 = vmatpush1.bf16.msra.mxu0 %v2822
        %3802 = vmatprep.subr.bf16.mxu0 %v2815
        %3803 = vmatpush1.bf16.msra.mxu0 %v2814
        %3804 = vmatprep.subr.bf16.mxu0 %v2807
        %3805 = vmatpush1.bf16.msra.mxu0 %v2806
        %3806 = vmatprep.subr.bf16.mxu0 %v2799
        %3807 = vmatpush1.bf16.msra.mxu0 %v2798
        %3808 = vmatprep.subr.bf16.mxu0 %v2791
        %3809 = vmatpush1.bf16.msra.mxu0 %v2790
        %3810 = vmatprep.subr.bf16.mxu0 %v2783
        %3811 = vmatpush1.bf16.msra.mxu0 %v2782
        %3812 = vmatprep.subr.bf16.mxu0 %v2775
        %3813 = vmatpush1.bf16.msra.mxu0 %v2774
        %3814 = vmatprep.subr.bf16.mxu0 %v2895
        %3815 = vmatpush2.bf16.msra.mxu0 %v2894
        %3816 = vmatprep.subr.bf16.mxu0 %v2887
        %3817 = vmatpush2.bf16.msra.mxu0 %v2886
        %3818 = vmatprep.subr.bf16.mxu0 %v2879
        %3819 = vmatpush2.bf16.msra.mxu0 %v2878
        %3820 = vmatprep.subr.bf16.mxu0 %v2871
        %3821 = vmatpush2.bf16.msra.mxu0 %v2870
        %3822 = vmatprep.subr.bf16.mxu0 %v2863
        %3823 = vmatpush2.bf16.msra.mxu0 %v2862
        %3824 = vmatprep.subr.bf16.mxu0 %v2855
        %3825 = vmatpush2.bf16.msra.mxu0 %v2854
        %3826 = vmatprep.subr.bf16.mxu0 %v2847
        %3827 = vmatpush2.bf16.msra.mxu0 %v2846
        %3828 = vmatprep.subr.bf16.mxu0 %v2839
        %3829 = vmatpush2.bf16.msra.mxu0 %v2838
        %3830 = vmatprep.mubr.bf16.mxu0 %v1111
        %3831 = vmatmul.mubr.bf16.gmra.mxu0 %v1110
        %v3832 = vpop.f32.mrf.mxu0
        %v3833 = vadd.f32 %v881, %v3832
        %v3834 = vpop.f32.mrf.mxu0
        %v3835 = vadd.f32 %v885, %v3834
        %v3836 = vpop.f32.mrf.mxu0
        %v3837 = vadd.f32 %v881, %v3836
        %v3838 = vpop.f32.mrf.mxu0
        %v3839 = vadd.f32 %v885, %v3838
        %3840 = vmatprep.mubr.bf16.mxu0 %v1119
        %3841 = vmatmul.mubr.bf16.gmra.mxu0 %v1118
        %v3842 = vpop.f32.mrf.mxu0
        %v3843 = vadd.f32 %v881, %v3842
        %v3844 = vpop.f32.mrf.mxu0
        %v3845 = vadd.f32 %v885, %v3844
        %v3846 = vpop.f32.mrf.mxu0
        %v3847 = vadd.f32 %v881, %v3846
        %v3848 = vpop.f32.mrf.mxu0
        %v3849 = vadd.f32 %v885, %v3848
        %3850 = vmatprep.mubr.bf16.mxu0 %v1127
        %3851 = vmatmul.mubr.bf16.gmra.mxu0 %v1126
        %v3852 = vpop.f32.mrf.mxu0
        %v3853 = vadd.f32 %v881, %v3852
        %v3854 = vpop.f32.mrf.mxu0
        %v3855 = vadd.f32 %v885, %v3854
        %v3856 = vpop.f32.mrf.mxu0
        %v3857 = vadd.f32 %v881, %v3856
        %v3858 = vpop.f32.mrf.mxu0
        %v3859 = vadd.f32 %v885, %v3858
        %3860 = vmatprep.mubr.bf16.mxu0 %v1135
        %3861 = vmatmul.mubr.bf16.gmra.mxu0 %v1134
        %v3862 = vpop.f32.mrf.mxu0
        %v3863 = vadd.f32 %v881, %v3862
        %v3864 = vpop.f32.mrf.mxu0
        %v3865 = vadd.f32 %v885, %v3864
        %v3866 = vpop.f32.mrf.mxu0
        %v3867 = vadd.f32 %v881, %v3866
        %v3868 = vpop.f32.mrf.mxu0
        %v3869 = vadd.f32 %v885, %v3868
        %3870 = vmatprep.mubr.bf16.mxu0 %v1143
        %3871 = vmatmul.mubr.bf16.gmra.mxu0 %v1142
        %v3872 = vpop.f32.mrf.mxu0
        %v3873 = vadd.f32 %v881, %v3872
        %v3874 = vpop.f32.mrf.mxu0
        %v3875 = vadd.f32 %v885, %v3874
        %v3876 = vpop.f32.mrf.mxu0
        %v3877 = vadd.f32 %v881, %v3876
        %v3878 = vpop.f32.mrf.mxu0
        %v3879 = vadd.f32 %v885, %v3878
        %3880 = vmatprep.mubr.bf16.mxu0 %v1151
        %3881 = vmatmul.mubr.bf16.gmra.mxu0 %v1150
        %v3882 = vpop.f32.mrf.mxu0
        %v3883 = vadd.f32 %v881, %v3882
        %v3884 = vpop.f32.mrf.mxu0
        %v3885 = vadd.f32 %v885, %v3884
        %v3886 = vpop.f32.mrf.mxu0
        %v3887 = vadd.f32 %v881, %v3886
        %v3888 = vpop.f32.mrf.mxu0
        %v3889 = vadd.f32 %v885, %v3888
        %3890 = vmatprep.mubr.bf16.mxu0 %v1159
        %3891 = vmatmul.mubr.bf16.gmra.mxu0 %v1158
        %v3892 = vpop.f32.mrf.mxu0
        %v3893 = vadd.f32 %v881, %v3892
        %v3894 = vpop.f32.mrf.mxu0
        %v3895 = vadd.f32 %v885, %v3894
        %v3896 = vpop.f32.mrf.mxu0
        %v3897 = vadd.f32 %v881, %v3896
        %v3898 = vpop.f32.mrf.mxu0
        %v3899 = vadd.f32 %v885, %v3898
        %3900 = vmatprep.mubr.bf16.mxu0 %v1167
        %3901 = vmatmul.mubr.bf16.gmra.mxu0 %v1166
        %v3902 = vpop.f32.mrf.mxu0
        %v3903 = vadd.f32 %v881, %v3902
        %v3904 = vpop.f32.mrf.mxu0
        %v3905 = vadd.f32 %v885, %v3904
        %v3906 = vpop.f32.mrf.mxu0
        %v3907 = vadd.f32 %v881, %v3906
        %v3908 = vpop.f32.mrf.mxu0
        %v3909 = vadd.f32 %v885, %v3908
        %3910 = vdwg.mxu0
        %3911 = vmatprep.subr.bf16.mxu0 %v2959
        %3912 = vmatpush1.bf16.msra.mxu0 %v2958
        %3913 = vmatprep.subr.bf16.mxu0 %v2951
        %3914 = vmatpush1.bf16.msra.mxu0 %v2950
        %3915 = vmatprep.subr.bf16.mxu0 %v2943
        %3916 = vmatpush1.bf16.msra.mxu0 %v2942
        %3917 = vmatprep.subr.bf16.mxu0 %v2935
        %3918 = vmatpush1.bf16.msra.mxu0 %v2934
        %3919 = vmatprep.subr.bf16.mxu0 %v2927
        %3920 = vmatpush1.bf16.msra.mxu0 %v2926
        %3921 = vmatprep.subr.bf16.mxu0 %v2919
        %3922 = vmatpush1.bf16.msra.mxu0 %v2918
        %3923 = vmatprep.subr.bf16.mxu0 %v2911
        %3924 = vmatpush1.bf16.msra.mxu0 %v2910
        %3925 = vmatprep.subr.bf16.mxu0 %v2903
        %3926 = vmatpush1.bf16.msra.mxu0 %v2902
        %3927 = vmatprep.subr.bf16.mxu0 %v3023
        %3928 = vmatpush2.bf16.msra.mxu0 %v3022
        %3929 = vmatprep.subr.bf16.mxu0 %v3015
        %3930 = vmatpush2.bf16.msra.mxu0 %v3014
        %3931 = vmatprep.subr.bf16.mxu0 %v3007
        %3932 = vmatpush2.bf16.msra.mxu0 %v3006
        %3933 = vmatprep.subr.bf16.mxu0 %v2999
        %3934 = vmatpush2.bf16.msra.mxu0 %v2998
        %3935 = vmatprep.subr.bf16.mxu0 %v2991
        %3936 = vmatpush2.bf16.msra.mxu0 %v2990
        %3937 = vmatprep.subr.bf16.mxu0 %v2983
        %3938 = vmatpush2.bf16.msra.mxu0 %v2982
        %3939 = vmatprep.subr.bf16.mxu0 %v2975
        %3940 = vmatpush2.bf16.msra.mxu0 %v2974
        %3941 = vmatprep.subr.bf16.mxu0 %v2967
        %3942 = vmatpush2.bf16.msra.mxu0 %v2966
        %3943 = vmatprep.mubr.bf16.mxu0 %v1113
        %3944 = vmatmul.mubr.bf16.gmra.mxu0 %v1112
        %v3945 = vpop.f32.mrf.mxu0
        %v3946 = vadd.f32 %v3833, %v3945
        %v3947 = vpop.f32.mrf.mxu0
        %v3948 = vadd.f32 %v3835, %v3947
        %v3949 = vpop.f32.mrf.mxu0
        %v3950 = vadd.f32 %v3837, %v3949
        %v3951 = vpop.f32.mrf.mxu0
        %v3952 = vadd.f32 %v3839, %v3951
        %3953 = vmatprep.mubr.bf16.mxu0 %v1121
        %3954 = vmatmul.mubr.bf16.gmra.mxu0 %v1120
        %v3955 = vpop.f32.mrf.mxu0
        %v3956 = vadd.f32 %v3843, %v3955
        %v3957 = vpop.f32.mrf.mxu0
        %v3958 = vadd.f32 %v3845, %v3957
        %v3959 = vpop.f32.mrf.mxu0
        %v3960 = vadd.f32 %v3847, %v3959
        %v3961 = vpop.f32.mrf.mxu0
        %v3962 = vadd.f32 %v3849, %v3961
        %3963 = vmatprep.mubr.bf16.mxu0 %v1129
        %3964 = vmatmul.mubr.bf16.gmra.mxu0 %v1128
        %v3965 = vpop.f32.mrf.mxu0
        %v3966 = vadd.f32 %v3853, %v3965
        %v3967 = vpop.f32.mrf.mxu0
        %v3968 = vadd.f32 %v3855, %v3967
        %v3969 = vpop.f32.mrf.mxu0
        %v3970 = vadd.f32 %v3857, %v3969
        %v3971 = vpop.f32.mrf.mxu0
        %v3972 = vadd.f32 %v3859, %v3971
        %3973 = vmatprep.mubr.bf16.mxu0 %v1137
        %3974 = vmatmul.mubr.bf16.gmra.mxu0 %v1136
        %v3975 = vpop.f32.mrf.mxu0
        %v3976 = vadd.f32 %v3863, %v3975
        %v3977 = vpop.f32.mrf.mxu0
        %v3978 = vadd.f32 %v3865, %v3977
        %v3979 = vpop.f32.mrf.mxu0
        %v3980 = vadd.f32 %v3867, %v3979
        %v3981 = vpop.f32.mrf.mxu0
        %v3982 = vadd.f32 %v3869, %v3981
        %3983 = vmatprep.mubr.bf16.mxu0 %v1145
        %3984 = vmatmul.mubr.bf16.gmra.mxu0 %v1144
        %v3985 = vpop.f32.mrf.mxu0
        %v3986 = vadd.f32 %v3873, %v3985
        %v3987 = vpop.f32.mrf.mxu0
        %v3988 = vadd.f32 %v3875, %v3987
        %v3989 = vpop.f32.mrf.mxu0
        %v3990 = vadd.f32 %v3877, %v3989
        %v3991 = vpop.f32.mrf.mxu0
        %v3992 = vadd.f32 %v3879, %v3991
        %3993 = vmatprep.mubr.bf16.mxu0 %v1153
        %3994 = vmatmul.mubr.bf16.gmra.mxu0 %v1152
        %v3995 = vpop.f32.mrf.mxu0
        %v3996 = vadd.f32 %v3883, %v3995
        %v3997 = vpop.f32.mrf.mxu0
        %v3998 = vadd.f32 %v3885, %v3997
        %v3999 = vpop.f32.mrf.mxu0
        %v4000 = vadd.f32 %v3887, %v3999
        %v4001 = vpop.f32.mrf.mxu0
        %v4002 = vadd.f32 %v3889, %v4001
        %4003 = vmatprep.mubr.bf16.mxu0 %v1161
        %4004 = vmatmul.mubr.bf16.gmra.mxu0 %v1160
        %v4005 = vpop.f32.mrf.mxu0
        %v4006 = vadd.f32 %v3893, %v4005
        %v4007 = vpop.f32.mrf.mxu0
        %v4008 = vadd.f32 %v3895, %v4007
        %v4009 = vpop.f32.mrf.mxu0
        %v4010 = vadd.f32 %v3897, %v4009
        %v4011 = vpop.f32.mrf.mxu0
        %v4012 = vadd.f32 %v3899, %v4011
        %4013 = vmatprep.mubr.bf16.mxu0 %v1169
        %4014 = vmatmul.mubr.bf16.gmra.mxu0 %v1168
        %v4015 = vpop.f32.mrf.mxu0
        %v4016 = vadd.f32 %v3903, %v4015
        %v4017 = vpop.f32.mrf.mxu0
        %v4018 = vadd.f32 %v3905, %v4017
        %v4019 = vpop.f32.mrf.mxu0
        %v4020 = vadd.f32 %v3907, %v4019
        %v4021 = vpop.f32.mrf.mxu0
        %v4022 = vadd.f32 %v3909, %v4021
        %4023 = vdwg.mxu0
        %4024 = vmatprep.subr.bf16.mxu0 %v3087
        %4025 = vmatpush1.bf16.msra.mxu0 %v3086
        %4026 = vmatprep.subr.bf16.mxu0 %v3079
        %4027 = vmatpush1.bf16.msra.mxu0 %v3078
        %4028 = vmatprep.subr.bf16.mxu0 %v3071
        %4029 = vmatpush1.bf16.msra.mxu0 %v3070
        %4030 = vmatprep.subr.bf16.mxu0 %v3063
        %4031 = vmatpush1.bf16.msra.mxu0 %v3062
        %4032 = vmatprep.subr.bf16.mxu0 %v3055
        %4033 = vmatpush1.bf16.msra.mxu0 %v3054
        %4034 = vmatprep.subr.bf16.mxu0 %v3047
        %4035 = vmatpush1.bf16.msra.mxu0 %v3046
        %4036 = vmatprep.subr.bf16.mxu0 %v3039
        %4037 = vmatpush1.bf16.msra.mxu0 %v3038
        %4038 = vmatprep.subr.bf16.mxu0 %v3031
        %4039 = vmatpush1.bf16.msra.mxu0 %v3030
        %4040 = vmatprep.subr.bf16.mxu0 %v3151
        %4041 = vmatpush2.bf16.msra.mxu0 %v3150
        %4042 = vmatprep.subr.bf16.mxu0 %v3143
        %4043 = vmatpush2.bf16.msra.mxu0 %v3142
        %4044 = vmatprep.subr.bf16.mxu0 %v3135
        %4045 = vmatpush2.bf16.msra.mxu0 %v3134
        %4046 = vmatprep.subr.bf16.mxu0 %v3127
        %4047 = vmatpush2.bf16.msra.mxu0 %v3126
        %4048 = vmatprep.subr.bf16.mxu0 %v3119
        %4049 = vmatpush2.bf16.msra.mxu0 %v3118
        %4050 = vmatprep.subr.bf16.mxu0 %v3111
        %4051 = vmatpush2.bf16.msra.mxu0 %v3110
        %4052 = vmatprep.subr.bf16.mxu0 %v3103
        %4053 = vmatpush2.bf16.msra.mxu0 %v3102
        %4054 = vmatprep.subr.bf16.mxu0 %v3095
        %4055 = vmatpush2.bf16.msra.mxu0 %v3094
        %4056 = vmatprep.mubr.bf16.mxu0 %v1115
        %4057 = vmatmul.mubr.bf16.gmra.mxu0 %v1114
        %v4058 = vpop.f32.mrf.mxu0
        %v4059 = vadd.f32 %v3946, %v4058
        %v4060 = vpop.f32.mrf.mxu0
        %v4061 = vadd.f32 %v3948, %v4060
        %v4062 = vpop.f32.mrf.mxu0
        %v4063 = vadd.f32 %v3950, %v4062
        %v4064 = vpop.f32.mrf.mxu0
        %v4065 = vadd.f32 %v3952, %v4064
        %4066 = vmatprep.mubr.bf16.mxu0 %v1123
        %4067 = vmatmul.mubr.bf16.gmra.mxu0 %v1122
        %v4068 = vpop.f32.mrf.mxu0
        %v4069 = vadd.f32 %v3956, %v4068
        %v4070 = vpop.f32.mrf.mxu0
        %v4071 = vadd.f32 %v3958, %v4070
        %v4072 = vpop.f32.mrf.mxu0
        %v4073 = vadd.f32 %v3960, %v4072
        %v4074 = vpop.f32.mrf.mxu0
        %v4075 = vadd.f32 %v3962, %v4074
        %4076 = vmatprep.mubr.bf16.mxu0 %v1131
        %4077 = vmatmul.mubr.bf16.gmra.mxu0 %v1130
        %v4078 = vpop.f32.mrf.mxu0
        %v4079 = vadd.f32 %v3966, %v4078
        %v4080 = vpop.f32.mrf.mxu0
        %v4081 = vadd.f32 %v3968, %v4080
        %v4082 = vpop.f32.mrf.mxu0
        %v4083 = vadd.f32 %v3970, %v4082
        %v4084 = vpop.f32.mrf.mxu0
        %v4085 = vadd.f32 %v3972, %v4084
        %4086 = vmatprep.mubr.bf16.mxu0 %v1139
        %4087 = vmatmul.mubr.bf16.gmra.mxu0 %v1138
        %v4088 = vpop.f32.mrf.mxu0
        %v4089 = vadd.f32 %v3976, %v4088
        %v4090 = vpop.f32.mrf.mxu0
        %v4091 = vadd.f32 %v3978, %v4090
        %v4092 = vpop.f32.mrf.mxu0
        %v4093 = vadd.f32 %v3980, %v4092
        %v4094 = vpop.f32.mrf.mxu0
        %v4095 = vadd.f32 %v3982, %v4094
        %4096 = vmatprep.mubr.bf16.mxu0 %v1147
        %4097 = vmatmul.mubr.bf16.gmra.mxu0 %v1146
        %v4098 = vpop.f32.mrf.mxu0
        %v4099 = vadd.f32 %v3986, %v4098
        %v4100 = vpop.f32.mrf.mxu0
        %v4101 = vadd.f32 %v3988, %v4100
        %v4102 = vpop.f32.mrf.mxu0
        %v4103 = vadd.f32 %v3990, %v4102
        %v4104 = vpop.f32.mrf.mxu0
        %v4105 = vadd.f32 %v3992, %v4104
        %4106 = vmatprep.mubr.bf16.mxu0 %v1155
        %4107 = vmatmul.mubr.bf16.gmra.mxu0 %v1154
        %v4108 = vpop.f32.mrf.mxu0
        %v4109 = vadd.f32 %v3996, %v4108
        %v4110 = vpop.f32.mrf.mxu0
        %v4111 = vadd.f32 %v3998, %v4110
        %v4112 = vpop.f32.mrf.mxu0
        %v4113 = vadd.f32 %v4000, %v4112
        %v4114 = vpop.f32.mrf.mxu0
        %v4115 = vadd.f32 %v4002, %v4114
        %4116 = vmatprep.mubr.bf16.mxu0 %v1163
        %4117 = vmatmul.mubr.bf16.gmra.mxu0 %v1162
        %v4118 = vpop.f32.mrf.mxu0
        %v4119 = vadd.f32 %v4006, %v4118
        %v4120 = vpop.f32.mrf.mxu0
        %v4121 = vadd.f32 %v4008, %v4120
        %v4122 = vpop.f32.mrf.mxu0
        %v4123 = vadd.f32 %v4010, %v4122
        %v4124 = vpop.f32.mrf.mxu0
        %v4125 = vadd.f32 %v4012, %v4124
        %4126 = vmatprep.mubr.bf16.mxu0 %v1171
        %4127 = vmatmul.mubr.bf16.gmra.mxu0 %v1170
        %v4128 = vpop.f32.mrf.mxu0
        %v4129 = vadd.f32 %v4016, %v4128
        %v4130 = vpop.f32.mrf.mxu0
        %v4131 = vadd.f32 %v4018, %v4130
        %v4132 = vpop.f32.mrf.mxu0
        %v4133 = vadd.f32 %v4020, %v4132
        %v4134 = vpop.f32.mrf.mxu0
        %v4135 = vadd.f32 %v4022, %v4134
        %4136 = vdwg.mxu0
        %4137 = vmatprep.subr.bf16.mxu0 %v3215
        %4138 = vmatpush1.bf16.msra.mxu0 %v3214
        %4139 = vmatprep.subr.bf16.mxu0 %v3207
        %4140 = vmatpush1.bf16.msra.mxu0 %v3206
        %4141 = vmatprep.subr.bf16.mxu0 %v3199
        %4142 = vmatpush1.bf16.msra.mxu0 %v3198
        %4143 = vmatprep.subr.bf16.mxu0 %v3191
        %4144 = vmatpush1.bf16.msra.mxu0 %v3190
        %4145 = vmatprep.subr.bf16.mxu0 %v3183
        %4146 = vmatpush1.bf16.msra.mxu0 %v3182
        %4147 = vmatprep.subr.bf16.mxu0 %v3175
        %4148 = vmatpush1.bf16.msra.mxu0 %v3174
        %4149 = vmatprep.subr.bf16.mxu0 %v3167
        %4150 = vmatpush1.bf16.msra.mxu0 %v3166
        %4151 = vmatprep.subr.bf16.mxu0 %v3159
        %4152 = vmatpush1.bf16.msra.mxu0 %v3158
        %4153 = vmatprep.subr.bf16.mxu0 %v3279
        %4154 = vmatpush2.bf16.msra.mxu0 %v3278
        %4155 = vmatprep.subr.bf16.mxu0 %v3271
        %4156 = vmatpush2.bf16.msra.mxu0 %v3270
        %4157 = vmatprep.subr.bf16.mxu0 %v3263
        %4158 = vmatpush2.bf16.msra.mxu0 %v3262
        %4159 = vmatprep.subr.bf16.mxu0 %v3255
        %4160 = vmatpush2.bf16.msra.mxu0 %v3254
        %4161 = vmatprep.subr.bf16.mxu0 %v3247
        %4162 = vmatpush2.bf16.msra.mxu0 %v3246
        %4163 = vmatprep.subr.bf16.mxu0 %v3239
        %4164 = vmatpush2.bf16.msra.mxu0 %v3238
        %4165 = vmatprep.subr.bf16.mxu0 %v3231
        %4166 = vmatpush2.bf16.msra.mxu0 %v3230
        %4167 = vmatprep.subr.bf16.mxu0 %v3223
        %4168 = vmatpush2.bf16.msra.mxu0 %v3222
        %4169 = vmatprep.mubr.bf16.mxu0 %v1117
        %4170 = vmatmul.mubr.bf16.gmra.mxu0 %v1116
        %v4171 = vpop.f32.mrf.mxu0
        %v4172 = vadd.f32 %v4059, %v4171
        %v4173 = vpop.f32.mrf.mxu0
        %v4174 = vadd.f32 %v4061, %v4173
        %v4175 = vpop.f32.mrf.mxu0
        %v4176 = vadd.f32 %v4063, %v4175
        %v4177 = vpop.f32.mrf.mxu0
        %v4178 = vadd.f32 %v4065, %v4177
        %4179 = vmatprep.mubr.bf16.mxu0 %v1125
        %4180 = vmatmul.mubr.bf16.gmra.mxu0 %v1124
        %v4181 = vpop.f32.mrf.mxu0
        %v4182 = vadd.f32 %v4069, %v4181
        %v4183 = vpop.f32.mrf.mxu0
        %v4184 = vadd.f32 %v4071, %v4183
        %v4185 = vpop.f32.mrf.mxu0
        %v4186 = vadd.f32 %v4073, %v4185
        %v4187 = vpop.f32.mrf.mxu0
        %v4188 = vadd.f32 %v4075, %v4187
        %4189 = vmatprep.mubr.bf16.mxu0 %v1133
        %4190 = vmatmul.mubr.bf16.gmra.mxu0 %v1132
        %v4191 = vpop.f32.mrf.mxu0
        %v4192 = vadd.f32 %v4079, %v4191
        %v4193 = vpop.f32.mrf.mxu0
        %v4194 = vadd.f32 %v4081, %v4193
        %v4195 = vpop.f32.mrf.mxu0
        %v4196 = vadd.f32 %v4083, %v4195
        %v4197 = vpop.f32.mrf.mxu0
        %v4198 = vadd.f32 %v4085, %v4197
        %4199 = vmatprep.mubr.bf16.mxu0 %v1141
        %4200 = vmatmul.mubr.bf16.gmra.mxu0 %v1140
        %v4201 = vpop.f32.mrf.mxu0
        %v4202 = vadd.f32 %v4089, %v4201
        %v4203 = vpop.f32.mrf.mxu0
        %v4204 = vadd.f32 %v4091, %v4203
        %v4205 = vpop.f32.mrf.mxu0
        %v4206 = vadd.f32 %v4093, %v4205
        %v4207 = vpop.f32.mrf.mxu0
        %v4208 = vadd.f32 %v4095, %v4207
        %4209 = vmatprep.mubr.bf16.mxu0 %v1149
        %4210 = vmatmul.mubr.bf16.gmra.mxu0 %v1148
        %v4211 = vpop.f32.mrf.mxu0
        %v4212 = vadd.f32 %v4099, %v4211
        %v4213 = vpop.f32.mrf.mxu0
        %v4214 = vadd.f32 %v4101, %v4213
        %v4215 = vpop.f32.mrf.mxu0
        %v4216 = vadd.f32 %v4103, %v4215
        %v4217 = vpop.f32.mrf.mxu0
        %v4218 = vadd.f32 %v4105, %v4217
        %4219 = vmatprep.mubr.bf16.mxu0 %v1157
        %4220 = vmatmul.mubr.bf16.gmra.mxu0 %v1156
        %v4221 = vpop.f32.mrf.mxu0
        %v4222 = vadd.f32 %v4109, %v4221
        %v4223 = vpop.f32.mrf.mxu0
        %v4224 = vadd.f32 %v4111, %v4223
        %v4225 = vpop.f32.mrf.mxu0
        %v4226 = vadd.f32 %v4113, %v4225
        %v4227 = vpop.f32.mrf.mxu0
        %v4228 = vadd.f32 %v4115, %v4227
        %4229 = vmatprep.mubr.bf16.mxu0 %v1165
        %4230 = vmatmul.mubr.bf16.gmra.mxu0 %v1164
        %v4231 = vpop.f32.mrf.mxu0
        %v4232 = vadd.f32 %v4119, %v4231
        %v4233 = vpop.f32.mrf.mxu0
        %v4234 = vadd.f32 %v4121, %v4233
        %v4235 = vpop.f32.mrf.mxu0
        %v4236 = vadd.f32 %v4123, %v4235
        %v4237 = vpop.f32.mrf.mxu0
        %v4238 = vadd.f32 %v4125, %v4237
        %4239 = vmatprep.mubr.bf16.mxu0 %v1173
        %4240 = vmatmul.mubr.bf16.gmra.mxu0 %v1172
        %v4241 = vpop.f32.mrf.mxu0
        %v4242 = vadd.f32 %v4129, %v4241
        %v4243 = vpop.f32.mrf.mxu0
        %v4244 = vadd.f32 %v4131, %v4243
        %v4245 = vpop.f32.mrf.mxu0
        %v4246 = vadd.f32 %v4133, %v4245
        %v4247 = vpop.f32.mrf.mxu0
        %v4248 = vadd.f32 %v4135, %v4247
        %4249 = vdwg.mxu0
        %4250 = vmatprep.subr.bf16.mxu0 %v2833
        %4251 = vmatpush1.bf16.msra.mxu0 %v2832
        %4252 = vmatprep.subr.bf16.mxu0 %v2825
        %4253 = vmatpush1.bf16.msra.mxu0 %v2824
        %4254 = vmatprep.subr.bf16.mxu0 %v2817
        %4255 = vmatpush1.bf16.msra.mxu0 %v2816
        %4256 = vmatprep.subr.bf16.mxu0 %v2809
        %4257 = vmatpush1.bf16.msra.mxu0 %v2808
        %4258 = vmatprep.subr.bf16.mxu0 %v2801
        %4259 = vmatpush1.bf16.msra.mxu0 %v2800
        %4260 = vmatprep.subr.bf16.mxu0 %v2793
        %4261 = vmatpush1.bf16.msra.mxu0 %v2792
        %4262 = vmatprep.subr.bf16.mxu0 %v2785
        %4263 = vmatpush1.bf16.msra.mxu0 %v2784
        %4264 = vmatprep.subr.bf16.mxu0 %v2777
        %4265 = vmatpush1.bf16.msra.mxu0 %v2776
        %4266 = vmatprep.subr.bf16.mxu0 %v2897
        %4267 = vmatpush2.bf16.msra.mxu0 %v2896
        %4268 = vmatprep.subr.bf16.mxu0 %v2889
        %4269 = vmatpush2.bf16.msra.mxu0 %v2888
        %4270 = vmatprep.subr.bf16.mxu0 %v2881
        %4271 = vmatpush2.bf16.msra.mxu0 %v2880
        %4272 = vmatprep.subr.bf16.mxu0 %v2873
        %4273 = vmatpush2.bf16.msra.mxu0 %v2872
        %4274 = vmatprep.subr.bf16.mxu0 %v2865
        %4275 = vmatpush2.bf16.msra.mxu0 %v2864
        %4276 = vmatprep.subr.bf16.mxu0 %v2857
        %4277 = vmatpush2.bf16.msra.mxu0 %v2856
        %4278 = vmatprep.subr.bf16.mxu0 %v2849
        %4279 = vmatpush2.bf16.msra.mxu0 %v2848
        %4280 = vmatprep.subr.bf16.mxu0 %v2841
        %4281 = vmatpush2.bf16.msra.mxu0 %v2840
        %4282 = vmatprep.mubr.bf16.mxu0 %v1111
        %4283 = vmatmul.mubr.bf16.gmra.mxu0 %v1110
        %v4284 = vpop.f32.mrf.mxu0
        %v4285 = vadd.f32 %v889, %v4284
        %v4286 = vpop.f32.mrf.mxu0
        %v4287 = vadd.f32 %v893, %v4286
        %v4288 = vpop.f32.mrf.mxu0
        %v4289 = vadd.f32 %v889, %v4288
        %v4290 = vpop.f32.mrf.mxu0
        %v4291 = vadd.f32 %v893, %v4290
        %4292 = vmatprep.mubr.bf16.mxu0 %v1119
        %4293 = vmatmul.mubr.bf16.gmra.mxu0 %v1118
        %v4294 = vpop.f32.mrf.mxu0
        %v4295 = vadd.f32 %v889, %v4294
        %v4296 = vpop.f32.mrf.mxu0
        %v4297 = vadd.f32 %v893, %v4296
        %v4298 = vpop.f32.mrf.mxu0
        %v4299 = vadd.f32 %v889, %v4298
        %v4300 = vpop.f32.mrf.mxu0
        %v4301 = vadd.f32 %v893, %v4300
        %4302 = vmatprep.mubr.bf16.mxu0 %v1127
        %4303 = vmatmul.mubr.bf16.gmra.mxu0 %v1126
        %v4304 = vpop.f32.mrf.mxu0
        %v4305 = vadd.f32 %v889, %v4304
        %v4306 = vpop.f32.mrf.mxu0
        %v4307 = vadd.f32 %v893, %v4306
        %v4308 = vpop.f32.mrf.mxu0
        %v4309 = vadd.f32 %v889, %v4308
        %v4310 = vpop.f32.mrf.mxu0
        %v4311 = vadd.f32 %v893, %v4310
        %4312 = vmatprep.mubr.bf16.mxu0 %v1135
        %4313 = vmatmul.mubr.bf16.gmra.mxu0 %v1134
        %v4314 = vpop.f32.mrf.mxu0
        %v4315 = vadd.f32 %v889, %v4314
        %v4316 = vpop.f32.mrf.mxu0
        %v4317 = vadd.f32 %v893, %v4316
        %v4318 = vpop.f32.mrf.mxu0
        %v4319 = vadd.f32 %v889, %v4318
        %v4320 = vpop.f32.mrf.mxu0
        %v4321 = vadd.f32 %v893, %v4320
        %4322 = vmatprep.mubr.bf16.mxu0 %v1143
        %4323 = vmatmul.mubr.bf16.gmra.mxu0 %v1142
        %v4324 = vpop.f32.mrf.mxu0
        %v4325 = vadd.f32 %v889, %v4324
        %v4326 = vpop.f32.mrf.mxu0
        %v4327 = vadd.f32 %v893, %v4326
        %v4328 = vpop.f32.mrf.mxu0
        %v4329 = vadd.f32 %v889, %v4328
        %v4330 = vpop.f32.mrf.mxu0
        %v4331 = vadd.f32 %v893, %v4330
        %4332 = vmatprep.mubr.bf16.mxu0 %v1151
        %4333 = vmatmul.mubr.bf16.gmra.mxu0 %v1150
        %v4334 = vpop.f32.mrf.mxu0
        %v4335 = vadd.f32 %v889, %v4334
        %v4336 = vpop.f32.mrf.mxu0
        %v4337 = vadd.f32 %v893, %v4336
        %v4338 = vpop.f32.mrf.mxu0
        %v4339 = vadd.f32 %v889, %v4338
        %v4340 = vpop.f32.mrf.mxu0
        %v4341 = vadd.f32 %v893, %v4340
        %4342 = vmatprep.mubr.bf16.mxu0 %v1159
        %4343 = vmatmul.mubr.bf16.gmra.mxu0 %v1158
        %v4344 = vpop.f32.mrf.mxu0
        %v4345 = vadd.f32 %v889, %v4344
        %v4346 = vpop.f32.mrf.mxu0
        %v4347 = vadd.f32 %v893, %v4346
        %v4348 = vpop.f32.mrf.mxu0
        %v4349 = vadd.f32 %v889, %v4348
        %v4350 = vpop.f32.mrf.mxu0
        %v4351 = vadd.f32 %v893, %v4350
        %4352 = vmatprep.mubr.bf16.mxu0 %v1167
        %4353 = vmatmul.mubr.bf16.gmra.mxu0 %v1166
        %v4354 = vpop.f32.mrf.mxu0
        %v4355 = vadd.f32 %v889, %v4354
        %v4356 = vpop.f32.mrf.mxu0
        %v4357 = vadd.f32 %v893, %v4356
        %v4358 = vpop.f32.mrf.mxu0
        %v4359 = vadd.f32 %v889, %v4358
        %v4360 = vpop.f32.mrf.mxu0
        %v4361 = vadd.f32 %v893, %v4360
        %4362 = vdwg.mxu0
        %4363 = vmatprep.subr.bf16.mxu0 %v2961
        %4364 = vmatpush1.bf16.msra.mxu0 %v2960
        %4365 = vmatprep.subr.bf16.mxu0 %v2953
        %4366 = vmatpush1.bf16.msra.mxu0 %v2952
        %4367 = vmatprep.subr.bf16.mxu0 %v2945
        %4368 = vmatpush1.bf16.msra.mxu0 %v2944
        %4369 = vmatprep.subr.bf16.mxu0 %v2937
        %4370 = vmatpush1.bf16.msra.mxu0 %v2936
        %4371 = vmatprep.subr.bf16.mxu0 %v2929
        %4372 = vmatpush1.bf16.msra.mxu0 %v2928
        %4373 = vmatprep.subr.bf16.mxu0 %v2921
        %4374 = vmatpush1.bf16.msra.mxu0 %v2920
        %4375 = vmatprep.subr.bf16.mxu0 %v2913
        %4376 = vmatpush1.bf16.msra.mxu0 %v2912
        %4377 = vmatprep.subr.bf16.mxu0 %v2905
        %4378 = vmatpush1.bf16.msra.mxu0 %v2904
        %4379 = vmatprep.subr.bf16.mxu0 %v3025
        %4380 = vmatpush2.bf16.msra.mxu0 %v3024
        %4381 = vmatprep.subr.bf16.mxu0 %v3017
        %4382 = vmatpush2.bf16.msra.mxu0 %v3016
        %4383 = vmatprep.subr.bf16.mxu0 %v3009
        %4384 = vmatpush2.bf16.msra.mxu0 %v3008
        %4385 = vmatprep.subr.bf16.mxu0 %v3001
        %4386 = vmatpush2.bf16.msra.mxu0 %v3000
        %4387 = vmatprep.subr.bf16.mxu0 %v2993
        %4388 = vmatpush2.bf16.msra.mxu0 %v2992
        %4389 = vmatprep.subr.bf16.mxu0 %v2985
        %4390 = vmatpush2.bf16.msra.mxu0 %v2984
        %4391 = vmatprep.subr.bf16.mxu0 %v2977
        %4392 = vmatpush2.bf16.msra.mxu0 %v2976
        %4393 = vmatprep.subr.bf16.mxu0 %v2969
        %4394 = vmatpush2.bf16.msra.mxu0 %v2968
        %4395 = vmatprep.mubr.bf16.mxu0 %v1113
        %4396 = vmatmul.mubr.bf16.gmra.mxu0 %v1112
        %v4397 = vpop.f32.mrf.mxu0
        %v4398 = vadd.f32 %v4285, %v4397
        %v4399 = vpop.f32.mrf.mxu0
        %v4400 = vadd.f32 %v4287, %v4399
        %v4401 = vpop.f32.mrf.mxu0
        %v4402 = vadd.f32 %v4289, %v4401
        %v4403 = vpop.f32.mrf.mxu0
        %v4404 = vadd.f32 %v4291, %v4403
        %4405 = vmatprep.mubr.bf16.mxu0 %v1121
        %4406 = vmatmul.mubr.bf16.gmra.mxu0 %v1120
        %v4407 = vpop.f32.mrf.mxu0
        %v4408 = vadd.f32 %v4295, %v4407
        %v4409 = vpop.f32.mrf.mxu0
        %v4410 = vadd.f32 %v4297, %v4409
        %v4411 = vpop.f32.mrf.mxu0
        %v4412 = vadd.f32 %v4299, %v4411
        %v4413 = vpop.f32.mrf.mxu0
        %v4414 = vadd.f32 %v4301, %v4413
        %4415 = vmatprep.mubr.bf16.mxu0 %v1129
        %4416 = vmatmul.mubr.bf16.gmra.mxu0 %v1128
        %v4417 = vpop.f32.mrf.mxu0
        %v4418 = vadd.f32 %v4305, %v4417
        %v4419 = vpop.f32.mrf.mxu0
        %v4420 = vadd.f32 %v4307, %v4419
        %v4421 = vpop.f32.mrf.mxu0
        %v4422 = vadd.f32 %v4309, %v4421
        %v4423 = vpop.f32.mrf.mxu0
        %v4424 = vadd.f32 %v4311, %v4423
        %4425 = vmatprep.mubr.bf16.mxu0 %v1137
        %4426 = vmatmul.mubr.bf16.gmra.mxu0 %v1136
        %v4427 = vpop.f32.mrf.mxu0
        %v4428 = vadd.f32 %v4315, %v4427
        %v4429 = vpop.f32.mrf.mxu0
        %v4430 = vadd.f32 %v4317, %v4429
        %v4431 = vpop.f32.mrf.mxu0
        %v4432 = vadd.f32 %v4319, %v4431
        %v4433 = vpop.f32.mrf.mxu0
        %v4434 = vadd.f32 %v4321, %v4433
        %4435 = vmatprep.mubr.bf16.mxu0 %v1145
        %4436 = vmatmul.mubr.bf16.gmra.mxu0 %v1144
        %v4437 = vpop.f32.mrf.mxu0
        %v4438 = vadd.f32 %v4325, %v4437
        %v4439 = vpop.f32.mrf.mxu0
        %v4440 = vadd.f32 %v4327, %v4439
        %v4441 = vpop.f32.mrf.mxu0
        %v4442 = vadd.f32 %v4329, %v4441
        %v4443 = vpop.f32.mrf.mxu0
        %v4444 = vadd.f32 %v4331, %v4443
        %4445 = vmatprep.mubr.bf16.mxu0 %v1153
        %4446 = vmatmul.mubr.bf16.gmra.mxu0 %v1152
        %v4447 = vpop.f32.mrf.mxu0
        %v4448 = vadd.f32 %v4335, %v4447
        %v4449 = vpop.f32.mrf.mxu0
        %v4450 = vadd.f32 %v4337, %v4449
        %v4451 = vpop.f32.mrf.mxu0
        %v4452 = vadd.f32 %v4339, %v4451
        %v4453 = vpop.f32.mrf.mxu0
        %v4454 = vadd.f32 %v4341, %v4453
        %4455 = vmatprep.mubr.bf16.mxu0 %v1161
        %4456 = vmatmul.mubr.bf16.gmra.mxu0 %v1160
        %v4457 = vpop.f32.mrf.mxu0
        %v4458 = vadd.f32 %v4345, %v4457
        %v4459 = vpop.f32.mrf.mxu0
        %v4460 = vadd.f32 %v4347, %v4459
        %v4461 = vpop.f32.mrf.mxu0
        %v4462 = vadd.f32 %v4349, %v4461
        %v4463 = vpop.f32.mrf.mxu0
        %v4464 = vadd.f32 %v4351, %v4463
        %4465 = vmatprep.mubr.bf16.mxu0 %v1169
        %4466 = vmatmul.mubr.bf16.gmra.mxu0 %v1168
        %v4467 = vpop.f32.mrf.mxu0
        %v4468 = vadd.f32 %v4355, %v4467
        %v4469 = vpop.f32.mrf.mxu0
        %v4470 = vadd.f32 %v4357, %v4469
        %v4471 = vpop.f32.mrf.mxu0
        %v4472 = vadd.f32 %v4359, %v4471
        %v4473 = vpop.f32.mrf.mxu0
        %v4474 = vadd.f32 %v4361, %v4473
        %4475 = vdwg.mxu0
        %4476 = vmatprep.subr.bf16.mxu0 %v3089
        %4477 = vmatpush1.bf16.msra.mxu0 %v3088
        %4478 = vmatprep.subr.bf16.mxu0 %v3081
        %4479 = vmatpush1.bf16.msra.mxu0 %v3080
        %4480 = vmatprep.subr.bf16.mxu0 %v3073
        %4481 = vmatpush1.bf16.msra.mxu0 %v3072
        %4482 = vmatprep.subr.bf16.mxu0 %v3065
        %4483 = vmatpush1.bf16.msra.mxu0 %v3064
        %4484 = vmatprep.subr.bf16.mxu0 %v3057
        %4485 = vmatpush1.bf16.msra.mxu0 %v3056
        %4486 = vmatprep.subr.bf16.mxu0 %v3049
        %4487 = vmatpush1.bf16.msra.mxu0 %v3048
        %4488 = vmatprep.subr.bf16.mxu0 %v3041
        %4489 = vmatpush1.bf16.msra.mxu0 %v3040
        %4490 = vmatprep.subr.bf16.mxu0 %v3033
        %4491 = vmatpush1.bf16.msra.mxu0 %v3032
        %4492 = vmatprep.subr.bf16.mxu0 %v3153
        %4493 = vmatpush2.bf16.msra.mxu0 %v3152
        %4494 = vmatprep.subr.bf16.mxu0 %v3145
        %4495 = vmatpush2.bf16.msra.mxu0 %v3144
        %4496 = vmatprep.subr.bf16.mxu0 %v3137
        %4497 = vmatpush2.bf16.msra.mxu0 %v3136
        %4498 = vmatprep.subr.bf16.mxu0 %v3129
        %4499 = vmatpush2.bf16.msra.mxu0 %v3128
        %4500 = vmatprep.subr.bf16.mxu0 %v3121
        %4501 = vmatpush2.bf16.msra.mxu0 %v3120
        %4502 = vmatprep.subr.bf16.mxu0 %v3113
        %4503 = vmatpush2.bf16.msra.mxu0 %v3112
        %4504 = vmatprep.subr.bf16.mxu0 %v3105
        %4505 = vmatpush2.bf16.msra.mxu0 %v3104
        %4506 = vmatprep.subr.bf16.mxu0 %v3097
        %4507 = vmatpush2.bf16.msra.mxu0 %v3096
        %4508 = vmatprep.mubr.bf16.mxu0 %v1115
        %4509 = vmatmul.mubr.bf16.gmra.mxu0 %v1114
        %v4510 = vpop.f32.mrf.mxu0
        %v4511 = vadd.f32 %v4398, %v4510
        %v4512 = vpop.f32.mrf.mxu0
        %v4513 = vadd.f32 %v4400, %v4512
        %v4514 = vpop.f32.mrf.mxu0
        %v4515 = vadd.f32 %v4402, %v4514
        %v4516 = vpop.f32.mrf.mxu0
        %v4517 = vadd.f32 %v4404, %v4516
        %4518 = vmatprep.mubr.bf16.mxu0 %v1123
        %4519 = vmatmul.mubr.bf16.gmra.mxu0 %v1122
        %v4520 = vpop.f32.mrf.mxu0
        %v4521 = vadd.f32 %v4408, %v4520
        %v4522 = vpop.f32.mrf.mxu0
        %v4523 = vadd.f32 %v4410, %v4522
        %v4524 = vpop.f32.mrf.mxu0
        %v4525 = vadd.f32 %v4412, %v4524
        %v4526 = vpop.f32.mrf.mxu0
        %v4527 = vadd.f32 %v4414, %v4526
        %4528 = vmatprep.mubr.bf16.mxu0 %v1131
        %4529 = vmatmul.mubr.bf16.gmra.mxu0 %v1130
        %v4530 = vpop.f32.mrf.mxu0
        %v4531 = vadd.f32 %v4418, %v4530
        %v4532 = vpop.f32.mrf.mxu0
        %v4533 = vadd.f32 %v4420, %v4532
        %v4534 = vpop.f32.mrf.mxu0
        %v4535 = vadd.f32 %v4422, %v4534
        %v4536 = vpop.f32.mrf.mxu0
        %v4537 = vadd.f32 %v4424, %v4536
        %4538 = vmatprep.mubr.bf16.mxu0 %v1139
        %4539 = vmatmul.mubr.bf16.gmra.mxu0 %v1138
        %v4540 = vpop.f32.mrf.mxu0
        %v4541 = vadd.f32 %v4428, %v4540
        %v4542 = vpop.f32.mrf.mxu0
        %v4543 = vadd.f32 %v4430, %v4542
        %v4544 = vpop.f32.mrf.mxu0
        %v4545 = vadd.f32 %v4432, %v4544
        %v4546 = vpop.f32.mrf.mxu0
        %v4547 = vadd.f32 %v4434, %v4546
        %4548 = vmatprep.mubr.bf16.mxu0 %v1147
        %4549 = vmatmul.mubr.bf16.gmra.mxu0 %v1146
        %v4550 = vpop.f32.mrf.mxu0
        %v4551 = vadd.f32 %v4438, %v4550
        %v4552 = vpop.f32.mrf.mxu0
        %v4553 = vadd.f32 %v4440, %v4552
        %v4554 = vpop.f32.mrf.mxu0
        %v4555 = vadd.f32 %v4442, %v4554
        %v4556 = vpop.f32.mrf.mxu0
        %v4557 = vadd.f32 %v4444, %v4556
        %4558 = vmatprep.mubr.bf16.mxu0 %v1155
        %4559 = vmatmul.mubr.bf16.gmra.mxu0 %v1154
        %v4560 = vpop.f32.mrf.mxu0
        %v4561 = vadd.f32 %v4448, %v4560
        %v4562 = vpop.f32.mrf.mxu0
        %v4563 = vadd.f32 %v4450, %v4562
        %v4564 = vpop.f32.mrf.mxu0
        %v4565 = vadd.f32 %v4452, %v4564
        %v4566 = vpop.f32.mrf.mxu0
        %v4567 = vadd.f32 %v4454, %v4566
        %4568 = vmatprep.mubr.bf16.mxu0 %v1163
        %4569 = vmatmul.mubr.bf16.gmra.mxu0 %v1162
        %v4570 = vpop.f32.mrf.mxu0
        %v4571 = vadd.f32 %v4458, %v4570
        %v4572 = vpop.f32.mrf.mxu0
        %v4573 = vadd.f32 %v4460, %v4572
        %v4574 = vpop.f32.mrf.mxu0
        %v4575 = vadd.f32 %v4462, %v4574
        %v4576 = vpop.f32.mrf.mxu0
        %v4577 = vadd.f32 %v4464, %v4576
        %4578 = vmatprep.mubr.bf16.mxu0 %v1171
        %4579 = vmatmul.mubr.bf16.gmra.mxu0 %v1170
        %v4580 = vpop.f32.mrf.mxu0
        %v4581 = vadd.f32 %v4468, %v4580
        %v4582 = vpop.f32.mrf.mxu0
        %v4583 = vadd.f32 %v4470, %v4582
        %v4584 = vpop.f32.mrf.mxu0
        %v4585 = vadd.f32 %v4472, %v4584
        %v4586 = vpop.f32.mrf.mxu0
        %v4587 = vadd.f32 %v4474, %v4586
        %4588 = vdwg.mxu0
        %4589 = vmatprep.subr.bf16.mxu0 %v3217
        %4590 = vmatpush1.bf16.msra.mxu0 %v3216
        %4591 = vmatprep.subr.bf16.mxu0 %v3209
        %4592 = vmatpush1.bf16.msra.mxu0 %v3208
        %4593 = vmatprep.subr.bf16.mxu0 %v3201
        %4594 = vmatpush1.bf16.msra.mxu0 %v3200
        %4595 = vmatprep.subr.bf16.mxu0 %v3193
        %4596 = vmatpush1.bf16.msra.mxu0 %v3192
        %4597 = vmatprep.subr.bf16.mxu0 %v3185
        %4598 = vmatpush1.bf16.msra.mxu0 %v3184
        %4599 = vmatprep.subr.bf16.mxu0 %v3177
        %4600 = vmatpush1.bf16.msra.mxu0 %v3176
        %4601 = vmatprep.subr.bf16.mxu0 %v3169
        %4602 = vmatpush1.bf16.msra.mxu0 %v3168
        %4603 = vmatprep.subr.bf16.mxu0 %v3161
        %4604 = vmatpush1.bf16.msra.mxu0 %v3160
        %4605 = vmatprep.subr.bf16.mxu0 %v3281
        %4606 = vmatpush2.bf16.msra.mxu0 %v3280
        %4607 = vmatprep.subr.bf16.mxu0 %v3273
        %4608 = vmatpush2.bf16.msra.mxu0 %v3272
        %4609 = vmatprep.subr.bf16.mxu0 %v3265
        %4610 = vmatpush2.bf16.msra.mxu0 %v3264
        %4611 = vmatprep.subr.bf16.mxu0 %v3257
        %4612 = vmatpush2.bf16.msra.mxu0 %v3256
        %4613 = vmatprep.subr.bf16.mxu0 %v3249
        %4614 = vmatpush2.bf16.msra.mxu0 %v3248
        %4615 = vmatprep.subr.bf16.mxu0 %v3241
        %4616 = vmatpush2.bf16.msra.mxu0 %v3240
        %4617 = vmatprep.subr.bf16.mxu0 %v3233
        %4618 = vmatpush2.bf16.msra.mxu0 %v3232
        %4619 = vmatprep.subr.bf16.mxu0 %v3225
        %4620 = vmatpush2.bf16.msra.mxu0 %v3224
        %4621 = vmatprep.mubr.bf16.mxu0 %v1117
        %4622 = vmatmul.mubr.bf16.gmra.mxu0 %v1116
        %v4623 = vpop.f32.mrf.mxu0
        %v4624 = vadd.f32 %v4511, %v4623
        %v4625 = vpop.f32.mrf.mxu0
        %v4626 = vadd.f32 %v4513, %v4625
        %v4627 = vpop.f32.mrf.mxu0
        %v4628 = vadd.f32 %v4515, %v4627
        %v4629 = vpop.f32.mrf.mxu0
        %v4630 = vadd.f32 %v4517, %v4629
        %4631 = vmatprep.mubr.bf16.mxu0 %v1125
        %4632 = vmatmul.mubr.bf16.gmra.mxu0 %v1124
        %v4633 = vpop.f32.mrf.mxu0
        %v4634 = vadd.f32 %v4521, %v4633
        %v4635 = vpop.f32.mrf.mxu0
        %v4636 = vadd.f32 %v4523, %v4635
        %v4637 = vpop.f32.mrf.mxu0
        %v4638 = vadd.f32 %v4525, %v4637
        %v4639 = vpop.f32.mrf.mxu0
        %v4640 = vadd.f32 %v4527, %v4639
        %4641 = vmatprep.mubr.bf16.mxu0 %v1133
        %4642 = vmatmul.mubr.bf16.gmra.mxu0 %v1132
        %v4643 = vpop.f32.mrf.mxu0
        %v4644 = vadd.f32 %v4531, %v4643
        %v4645 = vpop.f32.mrf.mxu0
        %v4646 = vadd.f32 %v4533, %v4645
        %v4647 = vpop.f32.mrf.mxu0
        %v4648 = vadd.f32 %v4535, %v4647
        %v4649 = vpop.f32.mrf.mxu0
        %v4650 = vadd.f32 %v4537, %v4649
        %4651 = vmatprep.mubr.bf16.mxu0 %v1141
        %4652 = vmatmul.mubr.bf16.gmra.mxu0 %v1140
        %v4653 = vpop.f32.mrf.mxu0
        %v4654 = vadd.f32 %v4541, %v4653
        %v4655 = vpop.f32.mrf.mxu0
        %v4656 = vadd.f32 %v4543, %v4655
        %v4657 = vpop.f32.mrf.mxu0
        %v4658 = vadd.f32 %v4545, %v4657
        %v4659 = vpop.f32.mrf.mxu0
        %v4660 = vadd.f32 %v4547, %v4659
        %4661 = vmatprep.mubr.bf16.mxu0 %v1149
        %4662 = vmatmul.mubr.bf16.gmra.mxu0 %v1148
        %v4663 = vpop.f32.mrf.mxu0
        %v4664 = vadd.f32 %v4551, %v4663
        %v4665 = vpop.f32.mrf.mxu0
        %v4666 = vadd.f32 %v4553, %v4665
        %v4667 = vpop.f32.mrf.mxu0
        %v4668 = vadd.f32 %v4555, %v4667
        %v4669 = vpop.f32.mrf.mxu0
        %v4670 = vadd.f32 %v4557, %v4669
        %4671 = vmatprep.mubr.bf16.mxu0 %v1157
        %4672 = vmatmul.mubr.bf16.gmra.mxu0 %v1156
        %v4673 = vpop.f32.mrf.mxu0
        %v4674 = vadd.f32 %v4561, %v4673
        %v4675 = vpop.f32.mrf.mxu0
        %v4676 = vadd.f32 %v4563, %v4675
        %v4677 = vpop.f32.mrf.mxu0
        %v4678 = vadd.f32 %v4565, %v4677
        %v4679 = vpop.f32.mrf.mxu0
        %v4680 = vadd.f32 %v4567, %v4679
        %4681 = vmatprep.mubr.bf16.mxu0 %v1165
        %4682 = vmatmul.mubr.bf16.gmra.mxu0 %v1164
        %v4683 = vpop.f32.mrf.mxu0
        %v4684 = vadd.f32 %v4571, %v4683
        %v4685 = vpop.f32.mrf.mxu0
        %v4686 = vadd.f32 %v4573, %v4685
        %v4687 = vpop.f32.mrf.mxu0
        %v4688 = vadd.f32 %v4575, %v4687
        %v4689 = vpop.f32.mrf.mxu0
        %v4690 = vadd.f32 %v4577, %v4689
        %4691 = vmatprep.mubr.bf16.mxu0 %v1173
        %4692 = vmatmul.mubr.bf16.gmra.mxu0 %v1172
        %v4693 = vpop.f32.mrf.mxu0
        %v4694 = vadd.f32 %v4581, %v4693
        %v4695 = vpop.f32.mrf.mxu0
        %v4696 = vadd.f32 %v4583, %v4695
        %v4697 = vpop.f32.mrf.mxu0
        %v4698 = vadd.f32 %v4585, %v4697
        %v4699 = vpop.f32.mrf.mxu0
        %v4700 = vadd.f32 %v4587, %v4699
        %4701 = vdwg.mxu0
        %4702 = vmatprep.subr.bf16.mxu0 %v2835
        %4703 = vmatpush1.bf16.msra.mxu0 %v2834
        %4704 = vmatprep.subr.bf16.mxu0 %v2827
        %4705 = vmatpush1.bf16.msra.mxu0 %v2826
        %4706 = vmatprep.subr.bf16.mxu0 %v2819
        %4707 = vmatpush1.bf16.msra.mxu0 %v2818
        %4708 = vmatprep.subr.bf16.mxu0 %v2811
        %4709 = vmatpush1.bf16.msra.mxu0 %v2810
        %4710 = vmatprep.subr.bf16.mxu0 %v2803
        %4711 = vmatpush1.bf16.msra.mxu0 %v2802
        %4712 = vmatprep.subr.bf16.mxu0 %v2795
        %4713 = vmatpush1.bf16.msra.mxu0 %v2794
        %4714 = vmatprep.subr.bf16.mxu0 %v2787
        %4715 = vmatpush1.bf16.msra.mxu0 %v2786
        %4716 = vmatprep.subr.bf16.mxu0 %v2779
        %4717 = vmatpush1.bf16.msra.mxu0 %v2778
        %4718 = vmatprep.subr.bf16.mxu0 %v2899
        %4719 = vmatpush2.bf16.msra.mxu0 %v2898
        %4720 = vmatprep.subr.bf16.mxu0 %v2891
        %4721 = vmatpush2.bf16.msra.mxu0 %v2890
        %4722 = vmatprep.subr.bf16.mxu0 %v2883
        %4723 = vmatpush2.bf16.msra.mxu0 %v2882
        %4724 = vmatprep.subr.bf16.mxu0 %v2875
        %4725 = vmatpush2.bf16.msra.mxu0 %v2874
        %4726 = vmatprep.subr.bf16.mxu0 %v2867
        %4727 = vmatpush2.bf16.msra.mxu0 %v2866
        %4728 = vmatprep.subr.bf16.mxu0 %v2859
        %4729 = vmatpush2.bf16.msra.mxu0 %v2858
        %4730 = vmatprep.subr.bf16.mxu0 %v2851
        %4731 = vmatpush2.bf16.msra.mxu0 %v2850
        %4732 = vmatprep.subr.bf16.mxu0 %v2843
        %4733 = vmatpush2.bf16.msra.mxu0 %v2842
        %4734 = vmatprep.mubr.bf16.mxu0 %v1111
        %4735 = vmatmul.mubr.bf16.gmra.mxu0 %v1110
        %v4736 = vpop.f32.mrf.mxu0
        %v4737 = vadd.f32 %v897, %v4736
        %v4738 = vpop.f32.mrf.mxu0
        %v4739 = vadd.f32 %v901, %v4738
        %v4740 = vpop.f32.mrf.mxu0
        %v4741 = vadd.f32 %v897, %v4740
        %v4742 = vpop.f32.mrf.mxu0
        %v4743 = vadd.f32 %v901, %v4742
        %4744 = vmatprep.mubr.bf16.mxu0 %v1119
        %4745 = vmatmul.mubr.bf16.gmra.mxu0 %v1118
        %v4746 = vpop.f32.mrf.mxu0
        %v4747 = vadd.f32 %v897, %v4746
        %v4748 = vpop.f32.mrf.mxu0
        %v4749 = vadd.f32 %v901, %v4748
        %v4750 = vpop.f32.mrf.mxu0
        %v4751 = vadd.f32 %v897, %v4750
        %v4752 = vpop.f32.mrf.mxu0
        %v4753 = vadd.f32 %v901, %v4752
        %4754 = vmatprep.mubr.bf16.mxu0 %v1127
        %4755 = vmatmul.mubr.bf16.gmra.mxu0 %v1126
        %v4756 = vpop.f32.mrf.mxu0
        %v4757 = vadd.f32 %v897, %v4756
        %v4758 = vpop.f32.mrf.mxu0
        %v4759 = vadd.f32 %v901, %v4758
        %v4760 = vpop.f32.mrf.mxu0
        %v4761 = vadd.f32 %v897, %v4760
        %v4762 = vpop.f32.mrf.mxu0
        %v4763 = vadd.f32 %v901, %v4762
        %4764 = vmatprep.mubr.bf16.mxu0 %v1135
        %4765 = vmatmul.mubr.bf16.gmra.mxu0 %v1134
        %v4766 = vpop.f32.mrf.mxu0
        %v4767 = vadd.f32 %v897, %v4766
        %v4768 = vpop.f32.mrf.mxu0
        %v4769 = vadd.f32 %v901, %v4768
        %v4770 = vpop.f32.mrf.mxu0
        %v4771 = vadd.f32 %v897, %v4770
        %v4772 = vpop.f32.mrf.mxu0
        %v4773 = vadd.f32 %v901, %v4772
        %4774 = vmatprep.mubr.bf16.mxu0 %v1143
        %4775 = vmatmul.mubr.bf16.gmra.mxu0 %v1142
        %v4776 = vpop.f32.mrf.mxu0
        %v4777 = vadd.f32 %v897, %v4776
        %v4778 = vpop.f32.mrf.mxu0
        %v4779 = vadd.f32 %v901, %v4778
        %v4780 = vpop.f32.mrf.mxu0
        %v4781 = vadd.f32 %v897, %v4780
        %v4782 = vpop.f32.mrf.mxu0
        %v4783 = vadd.f32 %v901, %v4782
        %4784 = vmatprep.mubr.bf16.mxu0 %v1151
        %4785 = vmatmul.mubr.bf16.gmra.mxu0 %v1150
        %v4786 = vpop.f32.mrf.mxu0
        %v4787 = vadd.f32 %v897, %v4786
        %v4788 = vpop.f32.mrf.mxu0
        %v4789 = vadd.f32 %v901, %v4788
        %v4790 = vpop.f32.mrf.mxu0
        %v4791 = vadd.f32 %v897, %v4790
        %v4792 = vpop.f32.mrf.mxu0
        %v4793 = vadd.f32 %v901, %v4792
        %4794 = vmatprep.mubr.bf16.mxu0 %v1159
        %4795 = vmatmul.mubr.bf16.gmra.mxu0 %v1158
        %v4796 = vpop.f32.mrf.mxu0
        %v4797 = vadd.f32 %v897, %v4796
        %v4798 = vpop.f32.mrf.mxu0
        %v4799 = vadd.f32 %v901, %v4798
        %v4800 = vpop.f32.mrf.mxu0
        %v4801 = vadd.f32 %v897, %v4800
        %v4802 = vpop.f32.mrf.mxu0
        %v4803 = vadd.f32 %v901, %v4802
        %4804 = vmatprep.mubr.bf16.mxu0 %v1167
        %4805 = vmatmul.mubr.bf16.gmra.mxu0 %v1166
        %v4806 = vpop.f32.mrf.mxu0
        %v4807 = vadd.f32 %v897, %v4806
        %v4808 = vpop.f32.mrf.mxu0
        %v4809 = vadd.f32 %v901, %v4808
        %v4810 = vpop.f32.mrf.mxu0
        %v4811 = vadd.f32 %v897, %v4810
        %v4812 = vpop.f32.mrf.mxu0
        %v4813 = vadd.f32 %v901, %v4812
        %4814 = vdwg.mxu0
        %4815 = vmatprep.subr.bf16.mxu0 %v2963
        %4816 = vmatpush1.bf16.msra.mxu0 %v2962
        %4817 = vmatprep.subr.bf16.mxu0 %v2955
        %4818 = vmatpush1.bf16.msra.mxu0 %v2954
        %4819 = vmatprep.subr.bf16.mxu0 %v2947
        %4820 = vmatpush1.bf16.msra.mxu0 %v2946
        %4821 = vmatprep.subr.bf16.mxu0 %v2939
        %4822 = vmatpush1.bf16.msra.mxu0 %v2938
        %4823 = vmatprep.subr.bf16.mxu0 %v2931
        %4824 = vmatpush1.bf16.msra.mxu0 %v2930
        %4825 = vmatprep.subr.bf16.mxu0 %v2923
        %4826 = vmatpush1.bf16.msra.mxu0 %v2922
        %4827 = vmatprep.subr.bf16.mxu0 %v2915
        %4828 = vmatpush1.bf16.msra.mxu0 %v2914
        %4829 = vmatprep.subr.bf16.mxu0 %v2907
        %4830 = vmatpush1.bf16.msra.mxu0 %v2906
        %4831 = vmatprep.subr.bf16.mxu0 %v3027
        %4832 = vmatpush2.bf16.msra.mxu0 %v3026
        %4833 = vmatprep.subr.bf16.mxu0 %v3019
        %4834 = vmatpush2.bf16.msra.mxu0 %v3018
        %4835 = vmatprep.subr.bf16.mxu0 %v3011
        %4836 = vmatpush2.bf16.msra.mxu0 %v3010
        %4837 = vmatprep.subr.bf16.mxu0 %v3003
        %4838 = vmatpush2.bf16.msra.mxu0 %v3002
        %4839 = vmatprep.subr.bf16.mxu0 %v2995
        %4840 = vmatpush2.bf16.msra.mxu0 %v2994
        %4841 = vmatprep.subr.bf16.mxu0 %v2987
        %4842 = vmatpush2.bf16.msra.mxu0 %v2986
        %4843 = vmatprep.subr.bf16.mxu0 %v2979
        %4844 = vmatpush2.bf16.msra.mxu0 %v2978
        %4845 = vmatprep.subr.bf16.mxu0 %v2971
        %4846 = vmatpush2.bf16.msra.mxu0 %v2970
        %4847 = vmatprep.mubr.bf16.mxu0 %v1113
        %4848 = vmatmul.mubr.bf16.gmra.mxu0 %v1112
        %v4849 = vpop.f32.mrf.mxu0
        %v4850 = vadd.f32 %v4737, %v4849
        %v4851 = vpop.f32.mrf.mxu0
        %v4852 = vadd.f32 %v4739, %v4851
        %v4853 = vpop.f32.mrf.mxu0
        %v4854 = vadd.f32 %v4741, %v4853
        %v4855 = vpop.f32.mrf.mxu0
        %v4856 = vadd.f32 %v4743, %v4855
        %4857 = vmatprep.mubr.bf16.mxu0 %v1121
        %4858 = vmatmul.mubr.bf16.gmra.mxu0 %v1120
        %v4859 = vpop.f32.mrf.mxu0
        %v4860 = vadd.f32 %v4747, %v4859
        %v4861 = vpop.f32.mrf.mxu0
        %v4862 = vadd.f32 %v4749, %v4861
        %v4863 = vpop.f32.mrf.mxu0
        %v4864 = vadd.f32 %v4751, %v4863
        %v4865 = vpop.f32.mrf.mxu0
        %v4866 = vadd.f32 %v4753, %v4865
        %4867 = vmatprep.mubr.bf16.mxu0 %v1129
        %4868 = vmatmul.mubr.bf16.gmra.mxu0 %v1128
        %v4869 = vpop.f32.mrf.mxu0
        %v4870 = vadd.f32 %v4757, %v4869
        %v4871 = vpop.f32.mrf.mxu0
        %v4872 = vadd.f32 %v4759, %v4871
        %v4873 = vpop.f32.mrf.mxu0
        %v4874 = vadd.f32 %v4761, %v4873
        %v4875 = vpop.f32.mrf.mxu0
        %v4876 = vadd.f32 %v4763, %v4875
        %4877 = vmatprep.mubr.bf16.mxu0 %v1137
        %4878 = vmatmul.mubr.bf16.gmra.mxu0 %v1136
        %v4879 = vpop.f32.mrf.mxu0
        %v4880 = vadd.f32 %v4767, %v4879
        %v4881 = vpop.f32.mrf.mxu0
        %v4882 = vadd.f32 %v4769, %v4881
        %v4883 = vpop.f32.mrf.mxu0
        %v4884 = vadd.f32 %v4771, %v4883
        %v4885 = vpop.f32.mrf.mxu0
        %v4886 = vadd.f32 %v4773, %v4885
        %4887 = vmatprep.mubr.bf16.mxu0 %v1145
        %4888 = vmatmul.mubr.bf16.gmra.mxu0 %v1144
        %v4889 = vpop.f32.mrf.mxu0
        %v4890 = vadd.f32 %v4777, %v4889
        %v4891 = vpop.f32.mrf.mxu0
        %v4892 = vadd.f32 %v4779, %v4891
        %v4893 = vpop.f32.mrf.mxu0
        %v4894 = vadd.f32 %v4781, %v4893
        %v4895 = vpop.f32.mrf.mxu0
        %v4896 = vadd.f32 %v4783, %v4895
        %4897 = vmatprep.mubr.bf16.mxu0 %v1153
        %4898 = vmatmul.mubr.bf16.gmra.mxu0 %v1152
        %v4899 = vpop.f32.mrf.mxu0
        %v4900 = vadd.f32 %v4787, %v4899
        %v4901 = vpop.f32.mrf.mxu0
        %v4902 = vadd.f32 %v4789, %v4901
        %v4903 = vpop.f32.mrf.mxu0
        %v4904 = vadd.f32 %v4791, %v4903
        %v4905 = vpop.f32.mrf.mxu0
        %v4906 = vadd.f32 %v4793, %v4905
        %4907 = vmatprep.mubr.bf16.mxu0 %v1161
        %4908 = vmatmul.mubr.bf16.gmra.mxu0 %v1160
        %v4909 = vpop.f32.mrf.mxu0
        %v4910 = vadd.f32 %v4797, %v4909
        %v4911 = vpop.f32.mrf.mxu0
        %v4912 = vadd.f32 %v4799, %v4911
        %v4913 = vpop.f32.mrf.mxu0
        %v4914 = vadd.f32 %v4801, %v4913
        %v4915 = vpop.f32.mrf.mxu0
        %v4916 = vadd.f32 %v4803, %v4915
        %4917 = vmatprep.mubr.bf16.mxu0 %v1169
        %4918 = vmatmul.mubr.bf16.gmra.mxu0 %v1168
        %v4919 = vpop.f32.mrf.mxu0
        %v4920 = vadd.f32 %v4807, %v4919
        %v4921 = vpop.f32.mrf.mxu0
        %v4922 = vadd.f32 %v4809, %v4921
        %v4923 = vpop.f32.mrf.mxu0
        %v4924 = vadd.f32 %v4811, %v4923
        %v4925 = vpop.f32.mrf.mxu0
        %v4926 = vadd.f32 %v4813, %v4925
        %4927 = vdwg.mxu0
        %4928 = vmatprep.subr.bf16.mxu0 %v3091
        %4929 = vmatpush1.bf16.msra.mxu0 %v3090
        %4930 = vmatprep.subr.bf16.mxu0 %v3083
        %4931 = vmatpush1.bf16.msra.mxu0 %v3082
        %4932 = vmatprep.subr.bf16.mxu0 %v3075
        %4933 = vmatpush1.bf16.msra.mxu0 %v3074
        %4934 = vmatprep.subr.bf16.mxu0 %v3067
        %4935 = vmatpush1.bf16.msra.mxu0 %v3066
        %4936 = vmatprep.subr.bf16.mxu0 %v3059
        %4937 = vmatpush1.bf16.msra.mxu0 %v3058
        %4938 = vmatprep.subr.bf16.mxu0 %v3051
        %4939 = vmatpush1.bf16.msra.mxu0 %v3050
        %4940 = vmatprep.subr.bf16.mxu0 %v3043
        %4941 = vmatpush1.bf16.msra.mxu0 %v3042
        %4942 = vmatprep.subr.bf16.mxu0 %v3035
        %4943 = vmatpush1.bf16.msra.mxu0 %v3034
        %4944 = vmatprep.subr.bf16.mxu0 %v3155
        %4945 = vmatpush2.bf16.msra.mxu0 %v3154
        %4946 = vmatprep.subr.bf16.mxu0 %v3147
        %4947 = vmatpush2.bf16.msra.mxu0 %v3146
        %4948 = vmatprep.subr.bf16.mxu0 %v3139
        %4949 = vmatpush2.bf16.msra.mxu0 %v3138
        %4950 = vmatprep.subr.bf16.mxu0 %v3131
        %4951 = vmatpush2.bf16.msra.mxu0 %v3130
        %4952 = vmatprep.subr.bf16.mxu0 %v3123
        %4953 = vmatpush2.bf16.msra.mxu0 %v3122
        %4954 = vmatprep.subr.bf16.mxu0 %v3115
        %4955 = vmatpush2.bf16.msra.mxu0 %v3114
        %4956 = vmatprep.subr.bf16.mxu0 %v3107
        %4957 = vmatpush2.bf16.msra.mxu0 %v3106
        %4958 = vmatprep.subr.bf16.mxu0 %v3099
        %4959 = vmatpush2.bf16.msra.mxu0 %v3098
        %4960 = vmatprep.mubr.bf16.mxu0 %v1115
        %4961 = vmatmul.mubr.bf16.gmra.mxu0 %v1114
        %v4962 = vpop.f32.mrf.mxu0
        %v4963 = vadd.f32 %v4850, %v4962
        %v4964 = vpop.f32.mrf.mxu0
        %v4965 = vadd.f32 %v4852, %v4964
        %v4966 = vpop.f32.mrf.mxu0
        %v4967 = vadd.f32 %v4854, %v4966
        %v4968 = vpop.f32.mrf.mxu0
        %v4969 = vadd.f32 %v4856, %v4968
        %4970 = vmatprep.mubr.bf16.mxu0 %v1123
        %4971 = vmatmul.mubr.bf16.gmra.mxu0 %v1122
        %v4972 = vpop.f32.mrf.mxu0
        %v4973 = vadd.f32 %v4860, %v4972
        %v4974 = vpop.f32.mrf.mxu0
        %v4975 = vadd.f32 %v4862, %v4974
        %v4976 = vpop.f32.mrf.mxu0
        %v4977 = vadd.f32 %v4864, %v4976
        %v4978 = vpop.f32.mrf.mxu0
        %v4979 = vadd.f32 %v4866, %v4978
        %4980 = vmatprep.mubr.bf16.mxu0 %v1131
        %4981 = vmatmul.mubr.bf16.gmra.mxu0 %v1130
        %v4982 = vpop.f32.mrf.mxu0
        %v4983 = vadd.f32 %v4870, %v4982
        %v4984 = vpop.f32.mrf.mxu0
        %v4985 = vadd.f32 %v4872, %v4984
        %v4986 = vpop.f32.mrf.mxu0
        %v4987 = vadd.f32 %v4874, %v4986
        %v4988 = vpop.f32.mrf.mxu0
        %v4989 = vadd.f32 %v4876, %v4988
        %4990 = vmatprep.mubr.bf16.mxu0 %v1139
        %4991 = vmatmul.mubr.bf16.gmra.mxu0 %v1138
        %v4992 = vpop.f32.mrf.mxu0
        %v4993 = vadd.f32 %v4880, %v4992
        %v4994 = vpop.f32.mrf.mxu0
        %v4995 = vadd.f32 %v4882, %v4994
        %v4996 = vpop.f32.mrf.mxu0
        %v4997 = vadd.f32 %v4884, %v4996
        %v4998 = vpop.f32.mrf.mxu0
        %v4999 = vadd.f32 %v4886, %v4998
        %5000 = vmatprep.mubr.bf16.mxu0 %v1147
        %5001 = vmatmul.mubr.bf16.gmra.mxu0 %v1146
        %v5002 = vpop.f32.mrf.mxu0
        %v5003 = vadd.f32 %v4890, %v5002
        %v5004 = vpop.f32.mrf.mxu0
        %v5005 = vadd.f32 %v4892, %v5004
        %v5006 = vpop.f32.mrf.mxu0
        %v5007 = vadd.f32 %v4894, %v5006
        %v5008 = vpop.f32.mrf.mxu0
        %v5009 = vadd.f32 %v4896, %v5008
        %5010 = vmatprep.mubr.bf16.mxu0 %v1155
        %5011 = vmatmul.mubr.bf16.gmra.mxu0 %v1154
        %v5012 = vpop.f32.mrf.mxu0
        %v5013 = vadd.f32 %v4900, %v5012
        %v5014 = vpop.f32.mrf.mxu0
        %v5015 = vadd.f32 %v4902, %v5014
        %v5016 = vpop.f32.mrf.mxu0
        %v5017 = vadd.f32 %v4904, %v5016
        %v5018 = vpop.f32.mrf.mxu0
        %v5019 = vadd.f32 %v4906, %v5018
        %5020 = vmatprep.mubr.bf16.mxu0 %v1163
        %5021 = vmatmul.mubr.bf16.gmra.mxu0 %v1162
        %v5022 = vpop.f32.mrf.mxu0
        %v5023 = vadd.f32 %v4910, %v5022
        %v5024 = vpop.f32.mrf.mxu0
        %v5025 = vadd.f32 %v4912, %v5024
        %v5026 = vpop.f32.mrf.mxu0
        %v5027 = vadd.f32 %v4914, %v5026
        %v5028 = vpop.f32.mrf.mxu0
        %v5029 = vadd.f32 %v4916, %v5028
        %5030 = vmatprep.mubr.bf16.mxu0 %v1171
        %5031 = vmatmul.mubr.bf16.gmra.mxu0 %v1170
        %v5032 = vpop.f32.mrf.mxu0
        %v5033 = vadd.f32 %v4920, %v5032
        %v5034 = vpop.f32.mrf.mxu0
        %v5035 = vadd.f32 %v4922, %v5034
        %v5036 = vpop.f32.mrf.mxu0
        %v5037 = vadd.f32 %v4924, %v5036
        %v5038 = vpop.f32.mrf.mxu0
        %v5039 = vadd.f32 %v4926, %v5038
        %5040 = vdwg.mxu0
        %5041 = vmatprep.subr.bf16.mxu0 %v3219
        %5042 = vmatpush1.bf16.msra.mxu0 %v3218
        %5043 = vmatprep.subr.bf16.mxu0 %v3211
        %5044 = vmatpush1.bf16.msra.mxu0 %v3210
        %5045 = vmatprep.subr.bf16.mxu0 %v3203
        %5046 = vmatpush1.bf16.msra.mxu0 %v3202
        %5047 = vmatprep.subr.bf16.mxu0 %v3195
        %5048 = vmatpush1.bf16.msra.mxu0 %v3194
        %5049 = vmatprep.subr.bf16.mxu0 %v3187
        %5050 = vmatpush1.bf16.msra.mxu0 %v3186
        %5051 = vmatprep.subr.bf16.mxu0 %v3179
        %5052 = vmatpush1.bf16.msra.mxu0 %v3178
        %5053 = vmatprep.subr.bf16.mxu0 %v3171
        %5054 = vmatpush1.bf16.msra.mxu0 %v3170
        %5055 = vmatprep.subr.bf16.mxu0 %v3163
        %5056 = vmatpush1.bf16.msra.mxu0 %v3162
        %5057 = vmatprep.subr.bf16.mxu0 %v3283
        %5058 = vmatpush2.bf16.msra.mxu0 %v3282
        %5059 = vmatprep.subr.bf16.mxu0 %v3275
        %5060 = vmatpush2.bf16.msra.mxu0 %v3274
        %5061 = vmatprep.subr.bf16.mxu0 %v3267
        %5062 = vmatpush2.bf16.msra.mxu0 %v3266
        %5063 = vmatprep.subr.bf16.mxu0 %v3259
        %5064 = vmatpush2.bf16.msra.mxu0 %v3258
        %5065 = vmatprep.subr.bf16.mxu0 %v3251
        %5066 = vmatpush2.bf16.msra.mxu0 %v3250
        %5067 = vmatprep.subr.bf16.mxu0 %v3243
        %5068 = vmatpush2.bf16.msra.mxu0 %v3242
        %5069 = vmatprep.subr.bf16.mxu0 %v3235
        %5070 = vmatpush2.bf16.msra.mxu0 %v3234
        %5071 = vmatprep.subr.bf16.mxu0 %v3227
        %5072 = vmatpush2.bf16.msra.mxu0 %v3226
        %5073 = vmatprep.mubr.bf16.mxu0 %v1117
        %5074 = vmatmul.mubr.bf16.gmra.mxu0 %v1116
        %v5075 = vpop.f32.mrf.mxu0
        %v5076 = vadd.f32 %v4963, %v5075
        %v5077 = vpop.f32.mrf.mxu0
        %v5078 = vadd.f32 %v4965, %v5077
        %v5079 = vpop.f32.mrf.mxu0
        %v5080 = vadd.f32 %v4967, %v5079
        %v5081 = vpop.f32.mrf.mxu0
        %v5082 = vadd.f32 %v4969, %v5081
        %5083 = vmatprep.mubr.bf16.mxu0 %v1125
        %5084 = vmatmul.mubr.bf16.gmra.mxu0 %v1124
        %v5085 = vpop.f32.mrf.mxu0
        %v5086 = vadd.f32 %v4973, %v5085
        %v5087 = vpop.f32.mrf.mxu0
        %v5088 = vadd.f32 %v4975, %v5087
        %v5089 = vpop.f32.mrf.mxu0
        %v5090 = vadd.f32 %v4977, %v5089
        %v5091 = vpop.f32.mrf.mxu0
        %v5092 = vadd.f32 %v4979, %v5091
        %5093 = vmatprep.mubr.bf16.mxu0 %v1133
        %5094 = vmatmul.mubr.bf16.gmra.mxu0 %v1132
        %v5095 = vpop.f32.mrf.mxu0
        %v5096 = vadd.f32 %v4983, %v5095
        %v5097 = vpop.f32.mrf.mxu0
        %v5098 = vadd.f32 %v4985, %v5097
        %v5099 = vpop.f32.mrf.mxu0
        %v5100 = vadd.f32 %v4987, %v5099
        %v5101 = vpop.f32.mrf.mxu0
        %v5102 = vadd.f32 %v4989, %v5101
        %5103 = vmatprep.mubr.bf16.mxu0 %v1141
        %5104 = vmatmul.mubr.bf16.gmra.mxu0 %v1140
        %v5105 = vpop.f32.mrf.mxu0
        %v5106 = vadd.f32 %v4993, %v5105
        %v5107 = vpop.f32.mrf.mxu0
        %v5108 = vadd.f32 %v4995, %v5107
        %v5109 = vpop.f32.mrf.mxu0
        %v5110 = vadd.f32 %v4997, %v5109
        %v5111 = vpop.f32.mrf.mxu0
        %v5112 = vadd.f32 %v4999, %v5111
        %5113 = vmatprep.mubr.bf16.mxu0 %v1149
        %5114 = vmatmul.mubr.bf16.gmra.mxu0 %v1148
        %v5115 = vpop.f32.mrf.mxu0
        %v5116 = vadd.f32 %v5003, %v5115
        %v5117 = vpop.f32.mrf.mxu0
        %v5118 = vadd.f32 %v5005, %v5117
        %v5119 = vpop.f32.mrf.mxu0
        %v5120 = vadd.f32 %v5007, %v5119
        %v5121 = vpop.f32.mrf.mxu0
        %v5122 = vadd.f32 %v5009, %v5121
        %5123 = vmatprep.mubr.bf16.mxu0 %v1157
        %5124 = vmatmul.mubr.bf16.gmra.mxu0 %v1156
        %v5125 = vpop.f32.mrf.mxu0
        %v5126 = vadd.f32 %v5013, %v5125
        %v5127 = vpop.f32.mrf.mxu0
        %v5128 = vadd.f32 %v5015, %v5127
        %v5129 = vpop.f32.mrf.mxu0
        %v5130 = vadd.f32 %v5017, %v5129
        %v5131 = vpop.f32.mrf.mxu0
        %v5132 = vadd.f32 %v5019, %v5131
        %5133 = vmatprep.mubr.bf16.mxu0 %v1165
        %5134 = vmatmul.mubr.bf16.gmra.mxu0 %v1164
        %v5135 = vpop.f32.mrf.mxu0
        %v5136 = vadd.f32 %v5023, %v5135
        %v5137 = vpop.f32.mrf.mxu0
        %v5138 = vadd.f32 %v5025, %v5137
        %v5139 = vpop.f32.mrf.mxu0
        %v5140 = vadd.f32 %v5027, %v5139
        %v5141 = vpop.f32.mrf.mxu0
        %v5142 = vadd.f32 %v5029, %v5141
        %5143 = vmatprep.mubr.bf16.mxu0 %v1173
        %5144 = vmatmul.mubr.bf16.gmra.mxu0 %v1172
        %v5145 = vpop.f32.mrf.mxu0
        %v5146 = vadd.f32 %v5033, %v5145
        %v5147 = vpop.f32.mrf.mxu0
        %v5148 = vadd.f32 %v5035, %v5147
        %v5149 = vpop.f32.mrf.mxu0
        %v5150 = vadd.f32 %v5037, %v5149
        %v5151 = vpop.f32.mrf.mxu0
        %v5152 = vadd.f32 %v5039, %v5151
        %5153 = vdwg.mxu0
        %5154 = vmatprep.subr.bf16.mxu0 %v2837
        %5155 = vmatpush1.bf16.msra.mxu0 %v2836
        %5156 = vmatprep.subr.bf16.mxu0 %v2829
        %5157 = vmatpush1.bf16.msra.mxu0 %v2828
        %5158 = vmatprep.subr.bf16.mxu0 %v2821
        %5159 = vmatpush1.bf16.msra.mxu0 %v2820
        %5160 = vmatprep.subr.bf16.mxu0 %v2813
        %5161 = vmatpush1.bf16.msra.mxu0 %v2812
        %5162 = vmatprep.subr.bf16.mxu0 %v2805
        %5163 = vmatpush1.bf16.msra.mxu0 %v2804
        %5164 = vmatprep.subr.bf16.mxu0 %v2797
        %5165 = vmatpush1.bf16.msra.mxu0 %v2796
        %5166 = vmatprep.subr.bf16.mxu0 %v2789
        %5167 = vmatpush1.bf16.msra.mxu0 %v2788
        %5168 = vmatprep.subr.bf16.mxu0 %v2781
        %5169 = vmatpush1.bf16.msra.mxu0 %v2780
        %5170 = vmatprep.subr.bf16.mxu0 %v2901
        %5171 = vmatpush2.bf16.msra.mxu0 %v2900
        %5172 = vmatprep.subr.bf16.mxu0 %v2893
        %5173 = vmatpush2.bf16.msra.mxu0 %v2892
        %5174 = vmatprep.subr.bf16.mxu0 %v2885
        %5175 = vmatpush2.bf16.msra.mxu0 %v2884
        %5176 = vmatprep.subr.bf16.mxu0 %v2877
        %5177 = vmatpush2.bf16.msra.mxu0 %v2876
        %5178 = vmatprep.subr.bf16.mxu0 %v2869
        %5179 = vmatpush2.bf16.msra.mxu0 %v2868
        %5180 = vmatprep.subr.bf16.mxu0 %v2861
        %5181 = vmatpush2.bf16.msra.mxu0 %v2860
        %5182 = vmatprep.subr.bf16.mxu0 %v2853
        %5183 = vmatpush2.bf16.msra.mxu0 %v2852
        %5184 = vmatprep.subr.bf16.mxu0 %v2845
        %5185 = vmatpush2.bf16.msra.mxu0 %v2844
        %5186 = vmatprep.mubr.bf16.mxu0 %v1111
        %5187 = vmatmul.mubr.bf16.gmra.mxu0 %v1110
        %v5188 = vpop.f32.mrf.mxu0
        %v5189 = vadd.f32 %v905, %v5188
        %v5190 = vpop.f32.mrf.mxu0
        %v5191 = vadd.f32 %v909, %v5190
        %v5192 = vpop.f32.mrf.mxu0
        %v5193 = vadd.f32 %v905, %v5192
        %v5194 = vpop.f32.mrf.mxu0
        %v5195 = vadd.f32 %v909, %v5194
        %5196 = vmatprep.mubr.bf16.mxu0 %v1119
        %5197 = vmatmul.mubr.bf16.gmra.mxu0 %v1118
        %v5198 = vpop.f32.mrf.mxu0
        %v5199 = vadd.f32 %v905, %v5198
        %v5200 = vpop.f32.mrf.mxu0
        %v5201 = vadd.f32 %v909, %v5200
        %v5202 = vpop.f32.mrf.mxu0
        %v5203 = vadd.f32 %v905, %v5202
        %v5204 = vpop.f32.mrf.mxu0
        %v5205 = vadd.f32 %v909, %v5204
        %5206 = vmatprep.mubr.bf16.mxu0 %v1127
        %5207 = vmatmul.mubr.bf16.gmra.mxu0 %v1126
        %v5208 = vpop.f32.mrf.mxu0
        %v5209 = vadd.f32 %v905, %v5208
        %v5210 = vpop.f32.mrf.mxu0
        %v5211 = vadd.f32 %v909, %v5210
        %v5212 = vpop.f32.mrf.mxu0
        %v5213 = vadd.f32 %v905, %v5212
        %v5214 = vpop.f32.mrf.mxu0
        %v5215 = vadd.f32 %v909, %v5214
        %5216 = vmatprep.mubr.bf16.mxu0 %v1135
        %5217 = vmatmul.mubr.bf16.gmra.mxu0 %v1134
        %v5218 = vpop.f32.mrf.mxu0
        %v5219 = vadd.f32 %v905, %v5218
        %v5220 = vpop.f32.mrf.mxu0
        %v5221 = vadd.f32 %v909, %v5220
        %v5222 = vpop.f32.mrf.mxu0
        %v5223 = vadd.f32 %v905, %v5222
        %v5224 = vpop.f32.mrf.mxu0
        %v5225 = vadd.f32 %v909, %v5224
        %5226 = vmatprep.mubr.bf16.mxu0 %v1143
        %5227 = vmatmul.mubr.bf16.gmra.mxu0 %v1142
        %v5228 = vpop.f32.mrf.mxu0
        %v5229 = vadd.f32 %v905, %v5228
        %v5230 = vpop.f32.mrf.mxu0
        %v5231 = vadd.f32 %v909, %v5230
        %v5232 = vpop.f32.mrf.mxu0
        %v5233 = vadd.f32 %v905, %v5232
        %v5234 = vpop.f32.mrf.mxu0
        %v5235 = vadd.f32 %v909, %v5234
        %5236 = vmatprep.mubr.bf16.mxu0 %v1151
        %5237 = vmatmul.mubr.bf16.gmra.mxu0 %v1150
        %v5238 = vpop.f32.mrf.mxu0
        %v5239 = vadd.f32 %v905, %v5238
        %v5240 = vpop.f32.mrf.mxu0
        %v5241 = vadd.f32 %v909, %v5240
        %v5242 = vpop.f32.mrf.mxu0
        %v5243 = vadd.f32 %v905, %v5242
        %v5244 = vpop.f32.mrf.mxu0
        %v5245 = vadd.f32 %v909, %v5244
        %5246 = vmatprep.mubr.bf16.mxu0 %v1159
        %5247 = vmatmul.mubr.bf16.gmra.mxu0 %v1158
        %v5248 = vpop.f32.mrf.mxu0
        %v5249 = vadd.f32 %v905, %v5248
        %v5250 = vpop.f32.mrf.mxu0
        %v5251 = vadd.f32 %v909, %v5250
        %v5252 = vpop.f32.mrf.mxu0
        %v5253 = vadd.f32 %v905, %v5252
        %v5254 = vpop.f32.mrf.mxu0
        %v5255 = vadd.f32 %v909, %v5254
        %5256 = vmatprep.mubr.bf16.mxu0 %v1167
        %5257 = vmatmul.mubr.bf16.gmra.mxu0 %v1166
        %v5258 = vpop.f32.mrf.mxu0
        %v5259 = vadd.f32 %v905, %v5258
        %v5260 = vpop.f32.mrf.mxu0
        %v5261 = vadd.f32 %v909, %v5260
        %v5262 = vpop.f32.mrf.mxu0
        %v5263 = vadd.f32 %v905, %v5262
        %v5264 = vpop.f32.mrf.mxu0
        %v5265 = vadd.f32 %v909, %v5264
        %5266 = vdwg.mxu0
        %5267 = vmatprep.subr.bf16.mxu0 %v2965
        %5268 = vmatpush1.bf16.msra.mxu0 %v2964
        %5269 = vmatprep.subr.bf16.mxu0 %v2957
        %5270 = vmatpush1.bf16.msra.mxu0 %v2956
        %5271 = vmatprep.subr.bf16.mxu0 %v2949
        %5272 = vmatpush1.bf16.msra.mxu0 %v2948
        %5273 = vmatprep.subr.bf16.mxu0 %v2941
        %5274 = vmatpush1.bf16.msra.mxu0 %v2940
        %5275 = vmatprep.subr.bf16.mxu0 %v2933
        %5276 = vmatpush1.bf16.msra.mxu0 %v2932
        %5277 = vmatprep.subr.bf16.mxu0 %v2925
        %5278 = vmatpush1.bf16.msra.mxu0 %v2924
        %5279 = vmatprep.subr.bf16.mxu0 %v2917
        %5280 = vmatpush1.bf16.msra.mxu0 %v2916
        %5281 = vmatprep.subr.bf16.mxu0 %v2909
        %5282 = vmatpush1.bf16.msra.mxu0 %v2908
        %5283 = vmatprep.subr.bf16.mxu0 %v3029
        %5284 = vmatpush2.bf16.msra.mxu0 %v3028
        %5285 = vmatprep.subr.bf16.mxu0 %v3021
        %5286 = vmatpush2.bf16.msra.mxu0 %v3020
        %5287 = vmatprep.subr.bf16.mxu0 %v3013
        %5288 = vmatpush2.bf16.msra.mxu0 %v3012
        %5289 = vmatprep.subr.bf16.mxu0 %v3005
        %5290 = vmatpush2.bf16.msra.mxu0 %v3004
        %5291 = vmatprep.subr.bf16.mxu0 %v2997
        %5292 = vmatpush2.bf16.msra.mxu0 %v2996
        %5293 = vmatprep.subr.bf16.mxu0 %v2989
        %5294 = vmatpush2.bf16.msra.mxu0 %v2988
        %5295 = vmatprep.subr.bf16.mxu0 %v2981
        %5296 = vmatpush2.bf16.msra.mxu0 %v2980
        %5297 = vmatprep.subr.bf16.mxu0 %v2973
        %5298 = vmatpush2.bf16.msra.mxu0 %v2972
        %5299 = vmatprep.mubr.bf16.mxu0 %v1113
        %5300 = vmatmul.mubr.bf16.gmra.mxu0 %v1112
        %v5301 = vpop.f32.mrf.mxu0
        %v5302 = vadd.f32 %v5189, %v5301
        %v5303 = vpop.f32.mrf.mxu0
        %v5304 = vadd.f32 %v5191, %v5303
        %v5305 = vpop.f32.mrf.mxu0
        %v5306 = vadd.f32 %v5193, %v5305
        %v5307 = vpop.f32.mrf.mxu0
        %v5308 = vadd.f32 %v5195, %v5307
        %5309 = vmatprep.mubr.bf16.mxu0 %v1121
        %5310 = vmatmul.mubr.bf16.gmra.mxu0 %v1120
        %v5311 = vpop.f32.mrf.mxu0
        %v5312 = vadd.f32 %v5199, %v5311
        %v5313 = vpop.f32.mrf.mxu0
        %v5314 = vadd.f32 %v5201, %v5313
        %v5315 = vpop.f32.mrf.mxu0
        %v5316 = vadd.f32 %v5203, %v5315
        %v5317 = vpop.f32.mrf.mxu0
        %v5318 = vadd.f32 %v5205, %v5317
        %5319 = vmatprep.mubr.bf16.mxu0 %v1129
        %5320 = vmatmul.mubr.bf16.gmra.mxu0 %v1128
        %v5321 = vpop.f32.mrf.mxu0
        %v5322 = vadd.f32 %v5209, %v5321
        %v5323 = vpop.f32.mrf.mxu0
        %v5324 = vadd.f32 %v5211, %v5323
        %v5325 = vpop.f32.mrf.mxu0
        %v5326 = vadd.f32 %v5213, %v5325
        %v5327 = vpop.f32.mrf.mxu0
        %v5328 = vadd.f32 %v5215, %v5327
        %5329 = vmatprep.mubr.bf16.mxu0 %v1137
        %5330 = vmatmul.mubr.bf16.gmra.mxu0 %v1136
        %v5331 = vpop.f32.mrf.mxu0
        %v5332 = vadd.f32 %v5219, %v5331
        %v5333 = vpop.f32.mrf.mxu0
        %v5334 = vadd.f32 %v5221, %v5333
        %v5335 = vpop.f32.mrf.mxu0
        %v5336 = vadd.f32 %v5223, %v5335
        %v5337 = vpop.f32.mrf.mxu0
        %v5338 = vadd.f32 %v5225, %v5337
        %5339 = vmatprep.mubr.bf16.mxu0 %v1145
        %5340 = vmatmul.mubr.bf16.gmra.mxu0 %v1144
        %v5341 = vpop.f32.mrf.mxu0
        %v5342 = vadd.f32 %v5229, %v5341
        %v5343 = vpop.f32.mrf.mxu0
        %v5344 = vadd.f32 %v5231, %v5343
        %v5345 = vpop.f32.mrf.mxu0
        %v5346 = vadd.f32 %v5233, %v5345
        %v5347 = vpop.f32.mrf.mxu0
        %v5348 = vadd.f32 %v5235, %v5347
        %5349 = vmatprep.mubr.bf16.mxu0 %v1153
        %5350 = vmatmul.mubr.bf16.gmra.mxu0 %v1152
        %v5351 = vpop.f32.mrf.mxu0
        %v5352 = vadd.f32 %v5239, %v5351
        %v5353 = vpop.f32.mrf.mxu0
        %v5354 = vadd.f32 %v5241, %v5353
        %v5355 = vpop.f32.mrf.mxu0
        %v5356 = vadd.f32 %v5243, %v5355
        %v5357 = vpop.f32.mrf.mxu0
        %v5358 = vadd.f32 %v5245, %v5357
        %5359 = vmatprep.mubr.bf16.mxu0 %v1161
        %5360 = vmatmul.mubr.bf16.gmra.mxu0 %v1160
        %v5361 = vpop.f32.mrf.mxu0
        %v5362 = vadd.f32 %v5249, %v5361
        %v5363 = vpop.f32.mrf.mxu0
        %v5364 = vadd.f32 %v5251, %v5363
        %v5365 = vpop.f32.mrf.mxu0
        %v5366 = vadd.f32 %v5253, %v5365
        %v5367 = vpop.f32.mrf.mxu0
        %v5368 = vadd.f32 %v5255, %v5367
        %5369 = vmatprep.mubr.bf16.mxu0 %v1169
        %5370 = vmatmul.mubr.bf16.gmra.mxu0 %v1168
        %v5371 = vpop.f32.mrf.mxu0
        %v5372 = vadd.f32 %v5259, %v5371
        %v5373 = vpop.f32.mrf.mxu0
        %v5374 = vadd.f32 %v5261, %v5373
        %v5375 = vpop.f32.mrf.mxu0
        %v5376 = vadd.f32 %v5263, %v5375
        %v5377 = vpop.f32.mrf.mxu0
        %v5378 = vadd.f32 %v5265, %v5377
        %5379 = vdwg.mxu0
        %5380 = vmatprep.subr.bf16.mxu0 %v3093
        %5381 = vmatpush1.bf16.msra.mxu0 %v3092
        %5382 = vmatprep.subr.bf16.mxu0 %v3085
        %5383 = vmatpush1.bf16.msra.mxu0 %v3084
        %5384 = vmatprep.subr.bf16.mxu0 %v3077
        %5385 = vmatpush1.bf16.msra.mxu0 %v3076
        %5386 = vmatprep.subr.bf16.mxu0 %v3069
        %5387 = vmatpush1.bf16.msra.mxu0 %v3068
        %5388 = vmatprep.subr.bf16.mxu0 %v3061
        %5389 = vmatpush1.bf16.msra.mxu0 %v3060
        %5390 = vmatprep.subr.bf16.mxu0 %v3053
        %5391 = vmatpush1.bf16.msra.mxu0 %v3052
        %5392 = vmatprep.subr.bf16.mxu0 %v3045
        %5393 = vmatpush1.bf16.msra.mxu0 %v3044
        %5394 = vmatprep.subr.bf16.mxu0 %v3037
        %5395 = vmatpush1.bf16.msra.mxu0 %v3036
        %5396 = vmatprep.subr.bf16.mxu0 %v3157
        %5397 = vmatpush2.bf16.msra.mxu0 %v3156
        %5398 = vmatprep.subr.bf16.mxu0 %v3149
        %5399 = vmatpush2.bf16.msra.mxu0 %v3148
        %5400 = vmatprep.subr.bf16.mxu0 %v3141
        %5401 = vmatpush2.bf16.msra.mxu0 %v3140
        %5402 = vmatprep.subr.bf16.mxu0 %v3133
        %5403 = vmatpush2.bf16.msra.mxu0 %v3132
        %5404 = vmatprep.subr.bf16.mxu0 %v3125
        %5405 = vmatpush2.bf16.msra.mxu0 %v3124
        %5406 = vmatprep.subr.bf16.mxu0 %v3117
        %5407 = vmatpush2.bf16.msra.mxu0 %v3116
        %5408 = vmatprep.subr.bf16.mxu0 %v3109
        %5409 = vmatpush2.bf16.msra.mxu0 %v3108
        %5410 = vmatprep.subr.bf16.mxu0 %v3101
        %5411 = vmatpush2.bf16.msra.mxu0 %v3100
        %5412 = vmatprep.mubr.bf16.mxu0 %v1115
        %5413 = vmatmul.mubr.bf16.gmra.mxu0 %v1114
        %v5414 = vpop.f32.mrf.mxu0
        %v5415 = vadd.f32 %v5302, %v5414
        %v5416 = vpop.f32.mrf.mxu0
        %v5417 = vadd.f32 %v5304, %v5416
        %v5418 = vpop.f32.mrf.mxu0
        %v5419 = vadd.f32 %v5306, %v5418
        %v5420 = vpop.f32.mrf.mxu0
        %v5421 = vadd.f32 %v5308, %v5420
        %5422 = vmatprep.mubr.bf16.mxu0 %v1123
        %5423 = vmatmul.mubr.bf16.gmra.mxu0 %v1122
        %v5424 = vpop.f32.mrf.mxu0
        %v5425 = vadd.f32 %v5312, %v5424
        %v5426 = vpop.f32.mrf.mxu0
        %v5427 = vadd.f32 %v5314, %v5426
        %v5428 = vpop.f32.mrf.mxu0
        %v5429 = vadd.f32 %v5316, %v5428
        %v5430 = vpop.f32.mrf.mxu0
        %v5431 = vadd.f32 %v5318, %v5430
        %5432 = vmatprep.mubr.bf16.mxu0 %v1131
        %5433 = vmatmul.mubr.bf16.gmra.mxu0 %v1130
        %v5434 = vpop.f32.mrf.mxu0
        %v5435 = vadd.f32 %v5322, %v5434
        %v5436 = vpop.f32.mrf.mxu0
        %v5437 = vadd.f32 %v5324, %v5436
        %v5438 = vpop.f32.mrf.mxu0
        %v5439 = vadd.f32 %v5326, %v5438
        %v5440 = vpop.f32.mrf.mxu0
        %v5441 = vadd.f32 %v5328, %v5440
        %5442 = vmatprep.mubr.bf16.mxu0 %v1139
        %5443 = vmatmul.mubr.bf16.gmra.mxu0 %v1138
        %v5444 = vpop.f32.mrf.mxu0
        %v5445 = vadd.f32 %v5332, %v5444
        %v5446 = vpop.f32.mrf.mxu0
        %v5447 = vadd.f32 %v5334, %v5446
        %v5448 = vpop.f32.mrf.mxu0
        %v5449 = vadd.f32 %v5336, %v5448
        %v5450 = vpop.f32.mrf.mxu0
        %v5451 = vadd.f32 %v5338, %v5450
        %5452 = vmatprep.mubr.bf16.mxu0 %v1147
        %5453 = vmatmul.mubr.bf16.gmra.mxu0 %v1146
        %v5454 = vpop.f32.mrf.mxu0
        %v5455 = vadd.f32 %v5342, %v5454
        %v5456 = vpop.f32.mrf.mxu0
        %v5457 = vadd.f32 %v5344, %v5456
        %v5458 = vpop.f32.mrf.mxu0
        %v5459 = vadd.f32 %v5346, %v5458
        %v5460 = vpop.f32.mrf.mxu0
        %v5461 = vadd.f32 %v5348, %v5460
        %5462 = vmatprep.mubr.bf16.mxu0 %v1155
        %5463 = vmatmul.mubr.bf16.gmra.mxu0 %v1154
        %v5464 = vpop.f32.mrf.mxu0
        %v5465 = vadd.f32 %v5352, %v5464
        %v5466 = vpop.f32.mrf.mxu0
        %v5467 = vadd.f32 %v5354, %v5466
        %v5468 = vpop.f32.mrf.mxu0
        %v5469 = vadd.f32 %v5356, %v5468
        %v5470 = vpop.f32.mrf.mxu0
        %v5471 = vadd.f32 %v5358, %v5470
        %5472 = vmatprep.mubr.bf16.mxu0 %v1163
        %5473 = vmatmul.mubr.bf16.gmra.mxu0 %v1162
        %v5474 = vpop.f32.mrf.mxu0
        %v5475 = vadd.f32 %v5362, %v5474
        %v5476 = vpop.f32.mrf.mxu0
        %v5477 = vadd.f32 %v5364, %v5476
        %v5478 = vpop.f32.mrf.mxu0
        %v5479 = vadd.f32 %v5366, %v5478
        %v5480 = vpop.f32.mrf.mxu0
        %v5481 = vadd.f32 %v5368, %v5480
        %5482 = vmatprep.mubr.bf16.mxu0 %v1171
        %5483 = vmatmul.mubr.bf16.gmra.mxu0 %v1170
        %v5484 = vpop.f32.mrf.mxu0
        %v5485 = vadd.f32 %v5372, %v5484
        %v5486 = vpop.f32.mrf.mxu0
        %v5487 = vadd.f32 %v5374, %v5486
        %v5488 = vpop.f32.mrf.mxu0
        %v5489 = vadd.f32 %v5376, %v5488
        %v5490 = vpop.f32.mrf.mxu0
        %v5491 = vadd.f32 %v5378, %v5490
        %5492 = vdwg.mxu0
        %5493 = vmatprep.subr.bf16.mxu0 %v3221
        %5494 = vmatpush1.bf16.msra.mxu0 %v3220
        %5495 = vmatprep.subr.bf16.mxu0 %v3213
        %5496 = vmatpush1.bf16.msra.mxu0 %v3212
        %5497 = vmatprep.subr.bf16.mxu0 %v3205
        %5498 = vmatpush1.bf16.msra.mxu0 %v3204
        %5499 = vmatprep.subr.bf16.mxu0 %v3197
        %5500 = vmatpush1.bf16.msra.mxu0 %v3196
        %5501 = vmatprep.subr.bf16.mxu0 %v3189
        %5502 = vmatpush1.bf16.msra.mxu0 %v3188
        %5503 = vmatprep.subr.bf16.mxu0 %v3181
        %5504 = vmatpush1.bf16.msra.mxu0 %v3180
        %5505 = vmatprep.subr.bf16.mxu0 %v3173
        %5506 = vmatpush1.bf16.msra.mxu0 %v3172
        %5507 = vmatprep.subr.bf16.mxu0 %v3165
        %5508 = vmatpush1.bf16.msra.mxu0 %v3164
        %5509 = vmatprep.subr.bf16.mxu0 %v3285
        %5510 = vmatpush2.bf16.msra.mxu0 %v3284
        %5511 = vmatprep.subr.bf16.mxu0 %v3277
        %5512 = vmatpush2.bf16.msra.mxu0 %v3276
        %5513 = vmatprep.subr.bf16.mxu0 %v3269
        %5514 = vmatpush2.bf16.msra.mxu0 %v3268
        %5515 = vmatprep.subr.bf16.mxu0 %v3261
        %5516 = vmatpush2.bf16.msra.mxu0 %v3260
        %5517 = vmatprep.subr.bf16.mxu0 %v3253
        %5518 = vmatpush2.bf16.msra.mxu0 %v3252
        %5519 = vmatprep.subr.bf16.mxu0 %v3245
        %5520 = vmatpush2.bf16.msra.mxu0 %v3244
        %5521 = vmatprep.subr.bf16.mxu0 %v3237
        %5522 = vmatpush2.bf16.msra.mxu0 %v3236
        %5523 = vmatprep.subr.bf16.mxu0 %v3229
        %5524 = vmatpush2.bf16.msra.mxu0 %v3228
        %5525 = vmatprep.mubr.bf16.mxu0 %v1117
        %5526 = vmatmul.mubr.bf16.gmra.mxu0 %v1116
        %v5527 = vpop.f32.mrf.mxu0
        %v5528 = vadd.f32 %v5415, %v5527
        %v5529 = vpop.f32.mrf.mxu0
        %v5530 = vadd.f32 %v5417, %v5529
        %v5531 = vpop.f32.mrf.mxu0
        %v5532 = vadd.f32 %v5419, %v5531
        %v5533 = vpop.f32.mrf.mxu0
        %v5534 = vadd.f32 %v5421, %v5533
        %5535 = vmatprep.mubr.bf16.mxu0 %v1125
        %5536 = vmatmul.mubr.bf16.gmra.mxu0 %v1124
        %v5537 = vpop.f32.mrf.mxu0
        %v5538 = vadd.f32 %v5425, %v5537
        %v5539 = vpop.f32.mrf.mxu0
        %v5540 = vadd.f32 %v5427, %v5539
        %v5541 = vpop.f32.mrf.mxu0
        %v5542 = vadd.f32 %v5429, %v5541
        %v5543 = vpop.f32.mrf.mxu0
        %v5544 = vadd.f32 %v5431, %v5543
        %5545 = vmatprep.mubr.bf16.mxu0 %v1133
        %5546 = vmatmul.mubr.bf16.gmra.mxu0 %v1132
        %v5547 = vpop.f32.mrf.mxu0
        %v5548 = vadd.f32 %v5435, %v5547
        %v5549 = vpop.f32.mrf.mxu0
        %v5550 = vadd.f32 %v5437, %v5549
        %v5551 = vpop.f32.mrf.mxu0
        %v5552 = vadd.f32 %v5439, %v5551
        %v5553 = vpop.f32.mrf.mxu0
        %v5554 = vadd.f32 %v5441, %v5553
        %5555 = vmatprep.mubr.bf16.mxu0 %v1141
        %5556 = vmatmul.mubr.bf16.gmra.mxu0 %v1140
        %v5557 = vpop.f32.mrf.mxu0
        %v5558 = vadd.f32 %v5445, %v5557
        %v5559 = vpop.f32.mrf.mxu0
        %v5560 = vadd.f32 %v5447, %v5559
        %v5561 = vpop.f32.mrf.mxu0
        %v5562 = vadd.f32 %v5449, %v5561
        %v5563 = vpop.f32.mrf.mxu0
        %v5564 = vadd.f32 %v5451, %v5563
        %5565 = vmatprep.mubr.bf16.mxu0 %v1149
        %5566 = vmatmul.mubr.bf16.gmra.mxu0 %v1148
        %v5567 = vpop.f32.mrf.mxu0
        %v5568 = vadd.f32 %v5455, %v5567
        %v5569 = vpop.f32.mrf.mxu0
        %v5570 = vadd.f32 %v5457, %v5569
        %v5571 = vpop.f32.mrf.mxu0
        %v5572 = vadd.f32 %v5459, %v5571
        %v5573 = vpop.f32.mrf.mxu0
        %v5574 = vadd.f32 %v5461, %v5573
        %5575 = vmatprep.mubr.bf16.mxu0 %v1157
        %5576 = vmatmul.mubr.bf16.gmra.mxu0 %v1156
        %v5577 = vpop.f32.mrf.mxu0
        %v5578 = vadd.f32 %v5465, %v5577
        %v5579 = vpop.f32.mrf.mxu0
        %v5580 = vadd.f32 %v5467, %v5579
        %v5581 = vpop.f32.mrf.mxu0
        %v5582 = vadd.f32 %v5469, %v5581
        %v5583 = vpop.f32.mrf.mxu0
        %v5584 = vadd.f32 %v5471, %v5583
        %5585 = vmatprep.mubr.bf16.mxu0 %v1165
        %5586 = vmatmul.mubr.bf16.gmra.mxu0 %v1164
        %v5587 = vpop.f32.mrf.mxu0
        %v5588 = vadd.f32 %v5475, %v5587
        %v5589 = vpop.f32.mrf.mxu0
        %v5590 = vadd.f32 %v5477, %v5589
        %v5591 = vpop.f32.mrf.mxu0
        %v5592 = vadd.f32 %v5479, %v5591
        %v5593 = vpop.f32.mrf.mxu0
        %v5594 = vadd.f32 %v5481, %v5593
        %5595 = vmatprep.mubr.bf16.mxu0 %v1173
        %5596 = vmatmul.mubr.bf16.gmra.mxu0 %v1172
        %v5597 = vpop.f32.mrf.mxu0
        %v5598 = vadd.f32 %v5485, %v5597
        %v5599 = vpop.f32.mrf.mxu0
        %v5600 = vadd.f32 %v5487, %v5599
        %v5601 = vpop.f32.mrf.mxu0
        %v5602 = vadd.f32 %v5489, %v5601
        %v5603 = vpop.f32.mrf.mxu0
        %v5604 = vadd.f32 %v5491, %v5603
        %5605 = vdwg.mxu0
        %v5606 = vmax.f32 %v4172, 0.0
        %v5607 = vmax.f32 %v4174, 0.0
        %v5608 = vmax.f32 %v4624, 0.0
        %v5609 = vmax.f32 %v4626, 0.0
        %v5610 = vmax.f32 %v5076, 0.0
        %v5611 = vmax.f32 %v5078, 0.0
        %v5612 = vmax.f32 %v5528, 0.0
        %v5613 = vmax.f32 %v5530, 0.0
        %v5614 = vmax.f32 %v4176, 0.0
        %v5615 = vmax.f32 %v4178, 0.0
        %v5616 = vmax.f32 %v4628, 0.0
        %v5617 = vmax.f32 %v4630, 0.0
        %v5618 = vmax.f32 %v5080, 0.0
        %v5619 = vmax.f32 %v5082, 0.0
        %v5620 = vmax.f32 %v5532, 0.0
        %v5621 = vmax.f32 %v5534, 0.0
        %v5622 = vmax.f32 %v4182, 0.0
        %v5623 = vmax.f32 %v4184, 0.0
        %v5624 = vmax.f32 %v4634, 0.0
        %v5625 = vmax.f32 %v4636, 0.0
        %v5626 = vmax.f32 %v5086, 0.0
        %v5627 = vmax.f32 %v5088, 0.0
        %v5628 = vmax.f32 %v5538, 0.0
        %v5629 = vmax.f32 %v5540, 0.0
        %v5630 = vmax.f32 %v4186, 0.0
        %v5631 = vmax.f32 %v4188, 0.0
        %v5632 = vmax.f32 %v4638, 0.0
        %v5633 = vmax.f32 %v4640, 0.0
        %v5634 = vmax.f32 %v5090, 0.0
        %v5635 = vmax.f32 %v5092, 0.0
        %v5636 = vmax.f32 %v5542, 0.0
        %v5637 = vmax.f32 %v5544, 0.0
        %v5638 = vmax.f32 %v4192, 0.0
        %v5639 = vmax.f32 %v4194, 0.0
        %v5640 = vmax.f32 %v4644, 0.0
        %v5641 = vmax.f32 %v4646, 0.0
        %v5642 = vmax.f32 %v5096, 0.0
        %v5643 = vmax.f32 %v5098, 0.0
        %v5644 = vmax.f32 %v5548, 0.0
        %v5645 = vmax.f32 %v5550, 0.0
        %v5646 = vmax.f32 %v4196, 0.0
        %v5647 = vmax.f32 %v4198, 0.0
        %v5648 = vmax.f32 %v4648, 0.0
        %v5649 = vmax.f32 %v4650, 0.0
        %v5650 = vmax.f32 %v5100, 0.0
        %v5651 = vmax.f32 %v5102, 0.0
        %v5652 = vmax.f32 %v5552, 0.0
        %v5653 = vmax.f32 %v5554, 0.0
        %v5654 = vmax.f32 %v4202, 0.0
        %v5655 = vmax.f32 %v4204, 0.0
        %v5656 = vmax.f32 %v4654, 0.0
        %v5657 = vmax.f32 %v4656, 0.0
        %v5658 = vmax.f32 %v5106, 0.0
        %v5659 = vmax.f32 %v5108, 0.0
        %v5660 = vmax.f32 %v5558, 0.0
        %v5661 = vmax.f32 %v5560, 0.0
        %v5662 = vmax.f32 %v4206, 0.0
        %v5663 = vmax.f32 %v4208, 0.0
        %v5664 = vmax.f32 %v4658, 0.0
        %v5665 = vmax.f32 %v4660, 0.0
        %v5666 = vmax.f32 %v5110, 0.0
        %v5667 = vmax.f32 %v5112, 0.0
        %v5668 = vmax.f32 %v5562, 0.0
        %v5669 = vmax.f32 %v5564, 0.0
        %v5670 = vmax.f32 %v4212, 0.0
        %v5671 = vmax.f32 %v4214, 0.0
        %v5672 = vmax.f32 %v4664, 0.0
        %v5673 = vmax.f32 %v4666, 0.0
        %v5674 = vmax.f32 %v5116, 0.0
        %v5675 = vmax.f32 %v5118, 0.0
        %v5676 = vmax.f32 %v5568, 0.0
        %v5677 = vmax.f32 %v5570, 0.0
        %v5678 = vmax.f32 %v4216, 0.0
        %v5679 = vmax.f32 %v4218, 0.0
        %v5680 = vmax.f32 %v4668, 0.0
        %v5681 = vmax.f32 %v4670, 0.0
        %v5682 = vmax.f32 %v5120, 0.0
        %v5683 = vmax.f32 %v5122, 0.0
        %v5684 = vmax.f32 %v5572, 0.0
        %v5685 = vmax.f32 %v5574, 0.0
        %v5686 = vmax.f32 %v4222, 0.0
        %v5687 = vmax.f32 %v4224, 0.0
        %v5688 = vmax.f32 %v4674, 0.0
        %v5689 = vmax.f32 %v4676, 0.0
        %v5690 = vmax.f32 %v5126, 0.0
        %v5691 = vmax.f32 %v5128, 0.0
        %v5692 = vmax.f32 %v5578, 0.0
        %v5693 = vmax.f32 %v5580, 0.0
        %v5694 = vmax.f32 %v4226, 0.0
        %v5695 = vmax.f32 %v4228, 0.0
        %v5696 = vmax.f32 %v4678, 0.0
        %v5697 = vmax.f32 %v4680, 0.0
        %v5698 = vmax.f32 %v5130, 0.0
        %v5699 = vmax.f32 %v5132, 0.0
        %v5700 = vmax.f32 %v5582, 0.0
        %v5701 = vmax.f32 %v5584, 0.0
        %v5702 = vmax.f32 %v4232, 0.0
        %v5703 = vmax.f32 %v4234, 0.0
        %v5704 = vmax.f32 %v4684, 0.0
        %v5705 = vmax.f32 %v4686, 0.0
        %v5706 = vmax.f32 %v5136, 0.0
        %v5707 = vmax.f32 %v5138, 0.0
        %v5708 = vmax.f32 %v5588, 0.0
        %v5709 = vmax.f32 %v5590, 0.0
        %v5710 = vmax.f32 %v4236, 0.0
        %v5711 = vmax.f32 %v4238, 0.0
        %v5712 = vmax.f32 %v4688, 0.0
        %v5713 = vmax.f32 %v4690, 0.0
        %v5714 = vmax.f32 %v5140, 0.0
        %v5715 = vmax.f32 %v5142, 0.0
        %v5716 = vmax.f32 %v5592, 0.0
        %v5717 = vmax.f32 %v5594, 0.0
        %v5718 = vmax.f32 %v4242, 0.0
        %v5719 = vmax.f32 %v4244, 0.0
        %v5720 = vmax.f32 %v4694, 0.0
        %v5721 = vmax.f32 %v4696, 0.0
        %v5722 = vmax.f32 %v5146, 0.0
        %v5723 = vmax.f32 %v5148, 0.0
        %v5724 = vmax.f32 %v5598, 0.0
        %v5725 = vmax.f32 %v5600, 0.0
        %v5726 = vmax.f32 %v4246, 0.0
        %v5727 = vmax.f32 %v4248, 0.0
        %v5728 = vmax.f32 %v4698, 0.0
        %v5729 = vmax.f32 %v4700, 0.0
        %v5730 = vmax.f32 %v5150, 0.0
        %v5731 = vmax.f32 %v5152, 0.0
        %v5732 = vmax.f32 %v5602, 0.0
        %v5733 = vmax.f32 %v5604, 0.0
        %v5734 = vpack.c.bf16 %v5614, %v5606
        %v5735 = vpack.c.bf16 %v5615, %v5607
        %v5736 = vpack.c.bf16 %v5616, %v5608
        %v5737 = vpack.c.bf16 %v5617, %v5609
        %v5738 = vpack.c.bf16 %v5618, %v5610
        %v5739 = vpack.c.bf16 %v5619, %v5611
        %v5740 = vpack.c.bf16 %v5620, %v5612
        %v5741 = vpack.c.bf16 %v5621, %v5613
        %v5742 = vpack.c.bf16 %v5630, %v5622
        %v5743 = vpack.c.bf16 %v5631, %v5623
        %v5744 = vpack.c.bf16 %v5632, %v5624
        %v5745 = vpack.c.bf16 %v5633, %v5625
        %v5746 = vpack.c.bf16 %v5634, %v5626
        %v5747 = vpack.c.bf16 %v5635, %v5627
        %v5748 = vpack.c.bf16 %v5636, %v5628
        %v5749 = vpack.c.bf16 %v5637, %v5629
        %v5750 = vpack.c.bf16 %v5646, %v5638
        %v5751 = vpack.c.bf16 %v5647, %v5639
        %v5752 = vpack.c.bf16 %v5648, %v5640
        %v5753 = vpack.c.bf16 %v5649, %v5641
        %v5754 = vpack.c.bf16 %v5650, %v5642
        %v5755 = vpack.c.bf16 %v5651, %v5643
        %v5756 = vpack.c.bf16 %v5652, %v5644
        %v5757 = vpack.c.bf16 %v5653, %v5645
        %v5758 = vpack.c.bf16 %v5662, %v5654
        %v5759 = vpack.c.bf16 %v5663, %v5655
        %v5760 = vpack.c.bf16 %v5664, %v5656
        %v5761 = vpack.c.bf16 %v5665, %v5657
        %v5762 = vpack.c.bf16 %v5666, %v5658
        %v5763 = vpack.c.bf16 %v5667, %v5659
        %v5764 = vpack.c.bf16 %v5668, %v5660
        %v5765 = vpack.c.bf16 %v5669, %v5661
        %v5766 = vpack.c.bf16 %v5678, %v5670
        %v5767 = vpack.c.bf16 %v5679, %v5671
        %v5768 = vpack.c.bf16 %v5680, %v5672
        %v5769 = vpack.c.bf16 %v5681, %v5673
        %v5770 = vpack.c.bf16 %v5682, %v5674
        %v5771 = vpack.c.bf16 %v5683, %v5675
        %v5772 = vpack.c.bf16 %v5684, %v5676
        %v5773 = vpack.c.bf16 %v5685, %v5677
        %v5774 = vpack.c.bf16 %v5694, %v5686
        %v5775 = vpack.c.bf16 %v5695, %v5687
        %v5776 = vpack.c.bf16 %v5696, %v5688
        %v5777 = vpack.c.bf16 %v5697, %v5689
        %v5778 = vpack.c.bf16 %v5698, %v5690
        %v5779 = vpack.c.bf16 %v5699, %v5691
        %v5780 = vpack.c.bf16 %v5700, %v5692
        %v5781 = vpack.c.bf16 %v5701, %v5693
        %v5782 = vpack.c.bf16 %v5710, %v5702
        %v5783 = vpack.c.bf16 %v5711, %v5703
        %v5784 = vpack.c.bf16 %v5712, %v5704
        %v5785 = vpack.c.bf16 %v5713, %v5705
        %v5786 = vpack.c.bf16 %v5714, %v5706
        %v5787 = vpack.c.bf16 %v5715, %v5707
        %v5788 = vpack.c.bf16 %v5716, %v5708
        %v5789 = vpack.c.bf16 %v5717, %v5709
        %v5790 = vpack.c.bf16 %v5726, %v5718
        %v5791 = vpack.c.bf16 %v5727, %v5719
        %v5792 = vpack.c.bf16 %v5728, %v5720
        %v5793 = vpack.c.bf16 %v5729, %v5721
        %v5794 = vpack.c.bf16 %v5730, %v5722
        %v5795 = vpack.c.bf16 %v5731, %v5723
        %v5796 = vpack.c.bf16 %v5732, %v5724
        %v5797 = vpack.c.bf16 %v5733, %v5725
        %v5798 = vld [vmem:[#allocation8] sm:$0xff]
        %v5799 = vld [vmem:[#allocation8 + $0x8] sm:$0xff]
        %v5800 = vld [vmem:[#allocation8 + $0x10] sm:$0xff]
        %v5801 = vld [vmem:[#allocation8 + $0x18] sm:$0xff]
        %v5802 = vld [vmem:[#allocation8 + $0x20] sm:$0xff]
        %v5803 = vld [vmem:[#allocation8 + $0x28] sm:$0xff]
        %v5804 = vld [vmem:[#allocation8 + $0x30] sm:$0xff]
        %v5805 = vld [vmem:[#allocation8 + $0x38] sm:$0xff]
        %v5806 = vld [vmem:[#allocation8 + $0x40] sm:$0xff]
        %v5807 = vld [vmem:[#allocation8 + $0x48] sm:$0xff]
        %v5808 = vld [vmem:[#allocation8 + $0x50] sm:$0xff]
        %v5809 = vld [vmem:[#allocation8 + $0x58] sm:$0xff]
        %v5810 = vld [vmem:[#allocation8 + $0x60] sm:$0xff]
        %v5811 = vld [vmem:[#allocation8 + $0x68] sm:$0xff]
        %v5812 = vld [vmem:[#allocation8 + $0x70] sm:$0xff]
        %v5813 = vld [vmem:[#allocation8 + $0x78] sm:$0xff]
        %v5814 = vld [vmem:[#allocation8 + $0x80] sm:$0xff]
        %v5815 = vld [vmem:[#allocation8 + $0x88] sm:$0xff]
        %v5816 = vld [vmem:[#allocation8 + $0x90] sm:$0xff]
        %v5817 = vld [vmem:[#allocation8 + $0x98] sm:$0xff]
        %v5818 = vld [vmem:[#allocation8 + $0xa0] sm:$0xff]
        %v5819 = vld [vmem:[#allocation8 + $0xa8] sm:$0xff]
        %v5820 = vld [vmem:[#allocation8 + $0xb0] sm:$0xff]
        %v5821 = vld [vmem:[#allocation8 + $0xb8] sm:$0xff]
        %v5822 = vld [vmem:[#allocation8 + $0xc0] sm:$0xff]
        %v5823 = vld [vmem:[#allocation8 + $0xc8] sm:$0xff]
        %v5824 = vld [vmem:[#allocation8 + $0xd0] sm:$0xff]
        %v5825 = vld [vmem:[#allocation8 + $0xd8] sm:$0xff]
        %v5826 = vld [vmem:[#allocation8 + $0xe0] sm:$0xff]
        %v5827 = vld [vmem:[#allocation8 + $0xe8] sm:$0xff]
        %v5828 = vld [vmem:[#allocation8 + $0xf0] sm:$0xff]
        %v5829 = vld [vmem:[#allocation8 + $0xf8] sm:$0xff]
        %v5830 = vld [vmem:[#allocation8 + $0x100] sm:$0xff]
        %v5831 = vld [vmem:[#allocation8 + $0x108] sm:$0xff]
        %v5832 = vld [vmem:[#allocation8 + $0x110] sm:$0xff]
        %v5833 = vld [vmem:[#allocation8 + $0x118] sm:$0xff]
        %v5834 = vld [vmem:[#allocation8 + $0x120] sm:$0xff]
        %v5835 = vld [vmem:[#allocation8 + $0x128] sm:$0xff]
        %v5836 = vld [vmem:[#allocation8 + $0x130] sm:$0xff]
        %v5837 = vld [vmem:[#allocation8 + $0x138] sm:$0xff]
        %v5838 = vld [vmem:[#allocation8 + $0x140] sm:$0xff]
        %v5839 = vld [vmem:[#allocation8 + $0x148] sm:$0xff]
        %v5840 = vld [vmem:[#allocation8 + $0x150] sm:$0xff]
        %v5841 = vld [vmem:[#allocation8 + $0x158] sm:$0xff]
        %v5842 = vld [vmem:[#allocation8 + $0x160] sm:$0xff]
        %v5843 = vld [vmem:[#allocation8 + $0x168] sm:$0xff]
        %v5844 = vld [vmem:[#allocation8 + $0x170] sm:$0xff]
        %v5845 = vld [vmem:[#allocation8 + $0x178] sm:$0xff]
        %v5846 = vld [vmem:[#allocation8 + $0x180] sm:$0xff]
        %v5847 = vld [vmem:[#allocation8 + $0x188] sm:$0xff]
        %v5848 = vld [vmem:[#allocation8 + $0x190] sm:$0xff]
        %v5849 = vld [vmem:[#allocation8 + $0x198] sm:$0xff]
        %v5850 = vld [vmem:[#allocation8 + $0x1a0] sm:$0xff]
        %v5851 = vld [vmem:[#allocation8 + $0x1a8] sm:$0xff]
        %v5852 = vld [vmem:[#allocation8 + $0x1b0] sm:$0xff]
        %v5853 = vld [vmem:[#allocation8 + $0x1b8] sm:$0xff]
        %v5854 = vld [vmem:[#allocation8 + $0x1c0] sm:$0xff]
        %v5855 = vld [vmem:[#allocation8 + $0x1c8] sm:$0xff]
        %v5856 = vld [vmem:[#allocation8 + $0x1d0] sm:$0xff]
        %v5857 = vld [vmem:[#allocation8 + $0x1d8] sm:$0xff]
        %v5858 = vld [vmem:[#allocation8 + $0x1e0] sm:$0xff]
        %v5859 = vld [vmem:[#allocation8 + $0x1e8] sm:$0xff]
        %v5860 = vld [vmem:[#allocation8 + $0x1f0] sm:$0xff]
        %v5861 = vld [vmem:[#allocation8 + $0x1f8] sm:$0xff]
        %v5862 = vld [vmem:[#allocation8 + $0x200] sm:$0xff]
        %v5863 = vld [vmem:[#allocation8 + $0x208] sm:$0xff]
        %v5864 = vld [vmem:[#allocation8 + $0x210] sm:$0xff]
        %v5865 = vld [vmem:[#allocation8 + $0x218] sm:$0xff]
        %v5866 = vld [vmem:[#allocation8 + $0x220] sm:$0xff]
        %v5867 = vld [vmem:[#allocation8 + $0x228] sm:$0xff]
        %v5868 = vld [vmem:[#allocation8 + $0x230] sm:$0xff]
        %v5869 = vld [vmem:[#allocation8 + $0x238] sm:$0xff]
        %v5870 = vld [vmem:[#allocation8 + $0x240] sm:$0xff]
        %v5871 = vld [vmem:[#allocation8 + $0x248] sm:$0xff]
        %v5872 = vld [vmem:[#allocation8 + $0x250] sm:$0xff]
        %v5873 = vld [vmem:[#allocation8 + $0x258] sm:$0xff]
        %v5874 = vld [vmem:[#allocation8 + $0x260] sm:$0xff]
        %v5875 = vld [vmem:[#allocation8 + $0x268] sm:$0xff]
        %v5876 = vld [vmem:[#allocation8 + $0x270] sm:$0xff]
        %v5877 = vld [vmem:[#allocation8 + $0x278] sm:$0xff]
        %v5878 = vld [vmem:[#allocation8 + $0x280] sm:$0xff]
        %v5879 = vld [vmem:[#allocation8 + $0x288] sm:$0xff]
        %v5880 = vld [vmem:[#allocation8 + $0x290] sm:$0xff]
        %v5881 = vld [vmem:[#allocation8 + $0x298] sm:$0xff]
        %v5882 = vld [vmem:[#allocation8 + $0x2a0] sm:$0xff]
        %v5883 = vld [vmem:[#allocation8 + $0x2a8] sm:$0xff]
        %v5884 = vld [vmem:[#allocation8 + $0x2b0] sm:$0xff]
        %v5885 = vld [vmem:[#allocation8 + $0x2b8] sm:$0xff]
        %v5886 = vld [vmem:[#allocation8 + $0x2c0] sm:$0xff]
        %v5887 = vld [vmem:[#allocation8 + $0x2c8] sm:$0xff]
        %v5888 = vld [vmem:[#allocation8 + $0x2d0] sm:$0xff]
        %v5889 = vld [vmem:[#allocation8 + $0x2d8] sm:$0xff]
        %v5890 = vld [vmem:[#allocation8 + $0x2e0] sm:$0xff]
        %v5891 = vld [vmem:[#allocation8 + $0x2e8] sm:$0xff]
        %v5892 = vld [vmem:[#allocation8 + $0x2f0] sm:$0xff]
        %v5893 = vld [vmem:[#allocation8 + $0x2f8] sm:$0xff]
        %v5894 = vld [vmem:[#allocation8 + $0x300] sm:$0xff]
        %v5895 = vld [vmem:[#allocation8 + $0x308] sm:$0xff]
        %v5896 = vld [vmem:[#allocation8 + $0x310] sm:$0xff]
        %v5897 = vld [vmem:[#allocation8 + $0x318] sm:$0xff]
        %v5898 = vld [vmem:[#allocation8 + $0x320] sm:$0xff]
        %v5899 = vld [vmem:[#allocation8 + $0x328] sm:$0xff]
        %v5900 = vld [vmem:[#allocation8 + $0x330] sm:$0xff]
        %v5901 = vld [vmem:[#allocation8 + $0x338] sm:$0xff]
        %v5902 = vld [vmem:[#allocation8 + $0x340] sm:$0xff]
        %v5903 = vld [vmem:[#allocation8 + $0x348] sm:$0xff]
        %v5904 = vld [vmem:[#allocation8 + $0x350] sm:$0xff]
        %v5905 = vld [vmem:[#allocation8 + $0x358] sm:$0xff]
        %v5906 = vld [vmem:[#allocation8 + $0x360] sm:$0xff]
        %v5907 = vld [vmem:[#allocation8 + $0x368] sm:$0xff]
        %v5908 = vld [vmem:[#allocation8 + $0x370] sm:$0xff]
        %v5909 = vld [vmem:[#allocation8 + $0x378] sm:$0xff]
        %v5910 = vld [vmem:[#allocation8 + $0x380] sm:$0xff]
        %v5911 = vld [vmem:[#allocation8 + $0x388] sm:$0xff]
        %v5912 = vld [vmem:[#allocation8 + $0x390] sm:$0xff]
        %v5913 = vld [vmem:[#allocation8 + $0x398] sm:$0xff]
        %v5914 = vld [vmem:[#allocation8 + $0x3a0] sm:$0xff]
        %v5915 = vld [vmem:[#allocation8 + $0x3a8] sm:$0xff]
        %v5916 = vld [vmem:[#allocation8 + $0x3b0] sm:$0xff]
        %v5917 = vld [vmem:[#allocation8 + $0x3b8] sm:$0xff]
        %v5918 = vld [vmem:[#allocation8 + $0x3c0] sm:$0xff]
        %v5919 = vld [vmem:[#allocation8 + $0x3c8] sm:$0xff]
        %v5920 = vld [vmem:[#allocation8 + $0x3d0] sm:$0xff]
        %v5921 = vld [vmem:[#allocation8 + $0x3d8] sm:$0xff]
        %v5922 = vld [vmem:[#allocation8 + $0x3e0] sm:$0xff]
        %v5923 = vld [vmem:[#allocation8 + $0x3e8] sm:$0xff]
        %v5924 = vld [vmem:[#allocation8 + $0x3f0] sm:$0xff]
        %v5925 = vld [vmem:[#allocation8 + $0x3f8] sm:$0xff]
        %v5926 = vld [vmem:[#allocation8 + $0x400] sm:$0xff]
        %v5927 = vld [vmem:[#allocation8 + $0x408] sm:$0xff]
        %v5928 = vld [vmem:[#allocation8 + $0x410] sm:$0xff]
        %v5929 = vld [vmem:[#allocation8 + $0x418] sm:$0xff]
        %v5930 = vld [vmem:[#allocation8 + $0x420] sm:$0xff]
        %v5931 = vld [vmem:[#allocation8 + $0x428] sm:$0xff]
        %v5932 = vld [vmem:[#allocation8 + $0x430] sm:$0xff]
        %v5933 = vld [vmem:[#allocation8 + $0x438] sm:$0xff]
        %v5934 = vld [vmem:[#allocation8 + $0x440] sm:$0xff]
        %v5935 = vld [vmem:[#allocation8 + $0x448] sm:$0xff]
        %v5936 = vld [vmem:[#allocation8 + $0x450] sm:$0xff]
        %v5937 = vld [vmem:[#allocation8 + $0x458] sm:$0xff]
        %v5938 = vld [vmem:[#allocation8 + $0x460] sm:$0xff]
        %v5939 = vld [vmem:[#allocation8 + $0x468] sm:$0xff]
        %v5940 = vld [vmem:[#allocation8 + $0x470] sm:$0xff]
        %v5941 = vld [vmem:[#allocation8 + $0x478] sm:$0xff]
        %v5942 = vld [vmem:[#allocation8 + $0x480] sm:$0xff]
        %v5943 = vld [vmem:[#allocation8 + $0x488] sm:$0xff]
        %v5944 = vld [vmem:[#allocation8 + $0x490] sm:$0xff]
        %v5945 = vld [vmem:[#allocation8 + $0x498] sm:$0xff]
        %v5946 = vld [vmem:[#allocation8 + $0x4a0] sm:$0xff]
        %v5947 = vld [vmem:[#allocation8 + $0x4a8] sm:$0xff]
        %v5948 = vld [vmem:[#allocation8 + $0x4b0] sm:$0xff]
        %v5949 = vld [vmem:[#allocation8 + $0x4b8] sm:$0xff]
        %v5950 = vld [vmem:[#allocation8 + $0x4c0] sm:$0xff]
        %v5951 = vld [vmem:[#allocation8 + $0x4c8] sm:$0xff]
        %v5952 = vld [vmem:[#allocation8 + $0x4d0] sm:$0xff]
        %v5953 = vld [vmem:[#allocation8 + $0x4d8] sm:$0xff]
        %v5954 = vld [vmem:[#allocation8 + $0x4e0] sm:$0xff]
        %v5955 = vld [vmem:[#allocation8 + $0x4e8] sm:$0xff]
        %v5956 = vld [vmem:[#allocation8 + $0x4f0] sm:$0xff]
        %v5957 = vld [vmem:[#allocation8 + $0x4f8] sm:$0xff]
        %v5958 = vld [vmem:[#allocation8 + $0x500] sm:$0xff]
        %v5959 = vld [vmem:[#allocation8 + $0x508] sm:$0xff]
        %v5960 = vld [vmem:[#allocation8 + $0x510] sm:$0xff]
        %v5961 = vld [vmem:[#allocation8 + $0x518] sm:$0xff]
        %v5962 = vld [vmem:[#allocation8 + $0x520] sm:$0xff]
        %v5963 = vld [vmem:[#allocation8 + $0x528] sm:$0xff]
        %v5964 = vld [vmem:[#allocation8 + $0x530] sm:$0xff]
        %v5965 = vld [vmem:[#allocation8 + $0x538] sm:$0xff]
        %v5966 = vld [vmem:[#allocation8 + $0x540] sm:$0xff]
        %v5967 = vld [vmem:[#allocation8 + $0x548] sm:$0xff]
        %v5968 = vld [vmem:[#allocation8 + $0x550] sm:$0xff]
        %v5969 = vld [vmem:[#allocation8 + $0x558] sm:$0xff]
        %v5970 = vld [vmem:[#allocation8 + $0x560] sm:$0xff]
        %v5971 = vld [vmem:[#allocation8 + $0x568] sm:$0xff]
        %v5972 = vld [vmem:[#allocation8 + $0x570] sm:$0xff]
        %v5973 = vld [vmem:[#allocation8 + $0x578] sm:$0xff]
        %v5974 = vld [vmem:[#allocation8 + $0x580] sm:$0xff]
        %v5975 = vld [vmem:[#allocation8 + $0x588] sm:$0xff]
        %v5976 = vld [vmem:[#allocation8 + $0x590] sm:$0xff]
        %v5977 = vld [vmem:[#allocation8 + $0x598] sm:$0xff]
        %v5978 = vld [vmem:[#allocation8 + $0x5a0] sm:$0xff]
        %v5979 = vld [vmem:[#allocation8 + $0x5a8] sm:$0xff]
        %v5980 = vld [vmem:[#allocation8 + $0x5b0] sm:$0xff]
        %v5981 = vld [vmem:[#allocation8 + $0x5b8] sm:$0xff]
        %v5982 = vld [vmem:[#allocation8 + $0x5c0] sm:$0xff]
        %v5983 = vld [vmem:[#allocation8 + $0x5c8] sm:$0xff]
        %v5984 = vld [vmem:[#allocation8 + $0x5d0] sm:$0xff]
        %v5985 = vld [vmem:[#allocation8 + $0x5d8] sm:$0xff]
        %v5986 = vld [vmem:[#allocation8 + $0x5e0] sm:$0xff]
        %v5987 = vld [vmem:[#allocation8 + $0x5e8] sm:$0xff]
        %v5988 = vld [vmem:[#allocation8 + $0x5f0] sm:$0xff]
        %v5989 = vld [vmem:[#allocation8 + $0x5f8] sm:$0xff]
        %v5990 = vld [vmem:[#allocation8 + $0x600] sm:$0xff]
        %v5991 = vld [vmem:[#allocation8 + $0x608] sm:$0xff]
        %v5992 = vld [vmem:[#allocation8 + $0x610] sm:$0xff]
        %v5993 = vld [vmem:[#allocation8 + $0x618] sm:$0xff]
        %v5994 = vld [vmem:[#allocation8 + $0x620] sm:$0xff]
        %v5995 = vld [vmem:[#allocation8 + $0x628] sm:$0xff]
        %v5996 = vld [vmem:[#allocation8 + $0x630] sm:$0xff]
        %v5997 = vld [vmem:[#allocation8 + $0x638] sm:$0xff]
        %v5998 = vld [vmem:[#allocation8 + $0x640] sm:$0xff]
        %v5999 = vld [vmem:[#allocation8 + $0x648] sm:$0xff]
        %v6000 = vld [vmem:[#allocation8 + $0x650] sm:$0xff]
        %v6001 = vld [vmem:[#allocation8 + $0x658] sm:$0xff]
        %v6002 = vld [vmem:[#allocation8 + $0x660] sm:$0xff]
        %v6003 = vld [vmem:[#allocation8 + $0x668] sm:$0xff]
        %v6004 = vld [vmem:[#allocation8 + $0x670] sm:$0xff]
        %v6005 = vld [vmem:[#allocation8 + $0x678] sm:$0xff]
        %v6006 = vld [vmem:[#allocation8 + $0x680] sm:$0xff]
        %v6007 = vld [vmem:[#allocation8 + $0x688] sm:$0xff]
        %v6008 = vld [vmem:[#allocation8 + $0x690] sm:$0xff]
        %v6009 = vld [vmem:[#allocation8 + $0x698] sm:$0xff]
        %v6010 = vld [vmem:[#allocation8 + $0x6a0] sm:$0xff]
        %v6011 = vld [vmem:[#allocation8 + $0x6a8] sm:$0xff]
        %v6012 = vld [vmem:[#allocation8 + $0x6b0] sm:$0xff]
        %v6013 = vld [vmem:[#allocation8 + $0x6b8] sm:$0xff]
        %v6014 = vld [vmem:[#allocation8 + $0x6c0] sm:$0xff]
        %v6015 = vld [vmem:[#allocation8 + $0x6c8] sm:$0xff]
        %v6016 = vld [vmem:[#allocation8 + $0x6d0] sm:$0xff]
        %v6017 = vld [vmem:[#allocation8 + $0x6d8] sm:$0xff]
        %v6018 = vld [vmem:[#allocation8 + $0x6e0] sm:$0xff]
        %v6019 = vld [vmem:[#allocation8 + $0x6e8] sm:$0xff]
        %v6020 = vld [vmem:[#allocation8 + $0x6f0] sm:$0xff]
        %v6021 = vld [vmem:[#allocation8 + $0x6f8] sm:$0xff]
        %v6022 = vld [vmem:[#allocation8 + $0x700] sm:$0xff]
        %v6023 = vld [vmem:[#allocation8 + $0x708] sm:$0xff]
        %v6024 = vld [vmem:[#allocation8 + $0x710] sm:$0xff]
        %v6025 = vld [vmem:[#allocation8 + $0x718] sm:$0xff]
        %v6026 = vld [vmem:[#allocation8 + $0x720] sm:$0xff]
        %v6027 = vld [vmem:[#allocation8 + $0x728] sm:$0xff]
        %v6028 = vld [vmem:[#allocation8 + $0x730] sm:$0xff]
        %v6029 = vld [vmem:[#allocation8 + $0x738] sm:$0xff]
        %v6030 = vld [vmem:[#allocation8 + $0x740] sm:$0xff]
        %v6031 = vld [vmem:[#allocation8 + $0x748] sm:$0xff]
        %v6032 = vld [vmem:[#allocation8 + $0x750] sm:$0xff]
        %v6033 = vld [vmem:[#allocation8 + $0x758] sm:$0xff]
        %v6034 = vld [vmem:[#allocation8 + $0x760] sm:$0xff]
        %v6035 = vld [vmem:[#allocation8 + $0x768] sm:$0xff]
        %v6036 = vld [vmem:[#allocation8 + $0x770] sm:$0xff]
        %v6037 = vld [vmem:[#allocation8 + $0x778] sm:$0xff]
        %v6038 = vld [vmem:[#allocation8 + $0x780] sm:$0xff]
        %v6039 = vld [vmem:[#allocation8 + $0x788] sm:$0xff]
        %v6040 = vld [vmem:[#allocation8 + $0x790] sm:$0xff]
        %v6041 = vld [vmem:[#allocation8 + $0x798] sm:$0xff]
        %v6042 = vld [vmem:[#allocation8 + $0x7a0] sm:$0xff]
        %v6043 = vld [vmem:[#allocation8 + $0x7a8] sm:$0xff]
        %v6044 = vld [vmem:[#allocation8 + $0x7b0] sm:$0xff]
        %v6045 = vld [vmem:[#allocation8 + $0x7b8] sm:$0xff]
        %v6046 = vld [vmem:[#allocation8 + $0x7c0] sm:$0xff]
        %v6047 = vld [vmem:[#allocation8 + $0x7c8] sm:$0xff]
        %v6048 = vld [vmem:[#allocation8 + $0x7d0] sm:$0xff]
        %v6049 = vld [vmem:[#allocation8 + $0x7d8] sm:$0xff]
        %v6050 = vld [vmem:[#allocation8 + $0x7e0] sm:$0xff]
        %v6051 = vld [vmem:[#allocation8 + $0x7e8] sm:$0xff]
        %v6052 = vld [vmem:[#allocation8 + $0x7f0] sm:$0xff]
        %v6053 = vld [vmem:[#allocation8 + $0x7f8] sm:$0xff]
        %v6054 = vld [vmem:[#allocation8 + $0x800] sm:$0xff]
        %v6055 = vld [vmem:[#allocation8 + $0x808] sm:$0xff]
        %v6056 = vld [vmem:[#allocation8 + $0x810] sm:$0xff]
        %v6057 = vld [vmem:[#allocation8 + $0x818] sm:$0xff]
        %v6058 = vld [vmem:[#allocation8 + $0x820] sm:$0xff]
        %v6059 = vld [vmem:[#allocation8 + $0x828] sm:$0xff]
        %v6060 = vld [vmem:[#allocation8 + $0x830] sm:$0xff]
        %v6061 = vld [vmem:[#allocation8 + $0x838] sm:$0xff]
        %v6062 = vld [vmem:[#allocation8 + $0x840] sm:$0xff]
        %v6063 = vld [vmem:[#allocation8 + $0x848] sm:$0xff]
        %v6064 = vld [vmem:[#allocation8 + $0x850] sm:$0xff]
        %v6065 = vld [vmem:[#allocation8 + $0x858] sm:$0xff]
        %v6066 = vld [vmem:[#allocation8 + $0x860] sm:$0xff]
        %v6067 = vld [vmem:[#allocation8 + $0x868] sm:$0xff]
        %v6068 = vld [vmem:[#allocation8 + $0x870] sm:$0xff]
        %v6069 = vld [vmem:[#allocation8 + $0x878] sm:$0xff]
        %v6070 = vld [vmem:[#allocation8 + $0x880] sm:$0xff]
        %v6071 = vld [vmem:[#allocation8 + $0x888] sm:$0xff]
        %v6072 = vld [vmem:[#allocation8 + $0x890] sm:$0xff]
        %v6073 = vld [vmem:[#allocation8 + $0x898] sm:$0xff]
        %v6074 = vld [vmem:[#allocation8 + $0x8a0] sm:$0xff]
        %v6075 = vld [vmem:[#allocation8 + $0x8a8] sm:$0xff]
        %v6076 = vld [vmem:[#allocation8 + $0x8b0] sm:$0xff]
        %v6077 = vld [vmem:[#allocation8 + $0x8b8] sm:$0xff]
        %v6078 = vld [vmem:[#allocation8 + $0x8c0] sm:$0xff]
        %v6079 = vld [vmem:[#allocation8 + $0x8c8] sm:$0xff]
        %v6080 = vld [vmem:[#allocation8 + $0x8d0] sm:$0xff]
        %v6081 = vld [vmem:[#allocation8 + $0x8d8] sm:$0xff]
        %v6082 = vld [vmem:[#allocation8 + $0x8e0] sm:$0xff]
        %v6083 = vld [vmem:[#allocation8 + $0x8e8] sm:$0xff]
        %v6084 = vld [vmem:[#allocation8 + $0x8f0] sm:$0xff]
        %v6085 = vld [vmem:[#allocation8 + $0x8f8] sm:$0xff]
        %v6086 = vld [vmem:[#allocation8 + $0x900] sm:$0xff]
        %v6087 = vld [vmem:[#allocation8 + $0x908] sm:$0xff]
        %v6088 = vld [vmem:[#allocation8 + $0x910] sm:$0xff]
        %v6089 = vld [vmem:[#allocation8 + $0x918] sm:$0xff]
        %v6090 = vld [vmem:[#allocation8 + $0x920] sm:$0xff]
        %v6091 = vld [vmem:[#allocation8 + $0x928] sm:$0xff]
        %v6092 = vld [vmem:[#allocation8 + $0x930] sm:$0xff]
        %v6093 = vld [vmem:[#allocation8 + $0x938] sm:$0xff]
        %v6094 = vld [vmem:[#allocation8 + $0x940] sm:$0xff]
        %v6095 = vld [vmem:[#allocation8 + $0x948] sm:$0xff]
        %v6096 = vld [vmem:[#allocation8 + $0x950] sm:$0xff]
        %v6097 = vld [vmem:[#allocation8 + $0x958] sm:$0xff]
        %v6098 = vld [vmem:[#allocation8 + $0x960] sm:$0xff]
        %v6099 = vld [vmem:[#allocation8 + $0x968] sm:$0xff]
        %v6100 = vld [vmem:[#allocation8 + $0x970] sm:$0xff]
        %v6101 = vld [vmem:[#allocation8 + $0x978] sm:$0xff]
        %v6102 = vld [vmem:[#allocation8 + $0x980] sm:$0xff]
        %v6103 = vld [vmem:[#allocation8 + $0x988] sm:$0xff]
        %v6104 = vld [vmem:[#allocation8 + $0x990] sm:$0xff]
        %v6105 = vld [vmem:[#allocation8 + $0x998] sm:$0xff]
        %v6106 = vld [vmem:[#allocation8 + $0x9a0] sm:$0xff]
        %v6107 = vld [vmem:[#allocation8 + $0x9a8] sm:$0xff]
        %v6108 = vld [vmem:[#allocation8 + $0x9b0] sm:$0xff]
        %v6109 = vld [vmem:[#allocation8 + $0x9b8] sm:$0xff]
        %v6110 = vld [vmem:[#allocation8 + $0x9c0] sm:$0xff]
        %v6111 = vld [vmem:[#allocation8 + $0x9c8] sm:$0xff]
        %v6112 = vld [vmem:[#allocation8 + $0x9d0] sm:$0xff]
        %v6113 = vld [vmem:[#allocation8 + $0x9d8] sm:$0xff]
        %v6114 = vld [vmem:[#allocation8 + $0x9e0] sm:$0xff]
        %v6115 = vld [vmem:[#allocation8 + $0x9e8] sm:$0xff]
        %v6116 = vld [vmem:[#allocation8 + $0x9f0] sm:$0xff]
        %v6117 = vld [vmem:[#allocation8 + $0x9f8] sm:$0xff]
        %v6118 = vld [vmem:[#allocation8 + $0xa00] sm:$0xff]
        %v6119 = vld [vmem:[#allocation8 + $0xa08] sm:$0xff]
        %v6120 = vld [vmem:[#allocation8 + $0xa10] sm:$0xff]
        %v6121 = vld [vmem:[#allocation8 + $0xa18] sm:$0xff]
        %v6122 = vld [vmem:[#allocation8 + $0xa20] sm:$0xff]
        %v6123 = vld [vmem:[#allocation8 + $0xa28] sm:$0xff]
        %v6124 = vld [vmem:[#allocation8 + $0xa30] sm:$0xff]
        %v6125 = vld [vmem:[#allocation8 + $0xa38] sm:$0xff]
        %v6126 = vld [vmem:[#allocation8 + $0xa40] sm:$0xff]
        %v6127 = vld [vmem:[#allocation8 + $0xa48] sm:$0xff]
        %v6128 = vld [vmem:[#allocation8 + $0xa50] sm:$0xff]
        %v6129 = vld [vmem:[#allocation8 + $0xa58] sm:$0xff]
        %v6130 = vld [vmem:[#allocation8 + $0xa60] sm:$0xff]
        %v6131 = vld [vmem:[#allocation8 + $0xa68] sm:$0xff]
        %v6132 = vld [vmem:[#allocation8 + $0xa70] sm:$0xff]
        %v6133 = vld [vmem:[#allocation8 + $0xa78] sm:$0xff]
        %v6134 = vld [vmem:[#allocation8 + $0xa80] sm:$0xff]
        %v6135 = vld [vmem:[#allocation8 + $0xa88] sm:$0xff]
        %v6136 = vld [vmem:[#allocation8 + $0xa90] sm:$0xff]
        %v6137 = vld [vmem:[#allocation8 + $0xa98] sm:$0xff]
        %v6138 = vld [vmem:[#allocation8 + $0xaa0] sm:$0xff]
        %v6139 = vld [vmem:[#allocation8 + $0xaa8] sm:$0xff]
        %v6140 = vld [vmem:[#allocation8 + $0xab0] sm:$0xff]
        %v6141 = vld [vmem:[#allocation8 + $0xab8] sm:$0xff]
        %v6142 = vld [vmem:[#allocation8 + $0xac0] sm:$0xff]
        %v6143 = vld [vmem:[#allocation8 + $0xac8] sm:$0xff]
        %v6144 = vld [vmem:[#allocation8 + $0xad0] sm:$0xff]
        %v6145 = vld [vmem:[#allocation8 + $0xad8] sm:$0xff]
        %v6146 = vld [vmem:[#allocation8 + $0xae0] sm:$0xff]
        %v6147 = vld [vmem:[#allocation8 + $0xae8] sm:$0xff]
        %v6148 = vld [vmem:[#allocation8 + $0xaf0] sm:$0xff]
        %v6149 = vld [vmem:[#allocation8 + $0xaf8] sm:$0xff]
        %v6150 = vld [vmem:[#allocation8 + $0xb00] sm:$0xff]
        %v6151 = vld [vmem:[#allocation8 + $0xb08] sm:$0xff]
        %v6152 = vld [vmem:[#allocation8 + $0xb10] sm:$0xff]
        %v6153 = vld [vmem:[#allocation8 + $0xb18] sm:$0xff]
        %v6154 = vld [vmem:[#allocation8 + $0xb20] sm:$0xff]
        %v6155 = vld [vmem:[#allocation8 + $0xb28] sm:$0xff]
        %v6156 = vld [vmem:[#allocation8 + $0xb30] sm:$0xff]
        %v6157 = vld [vmem:[#allocation8 + $0xb38] sm:$0xff]
        %v6158 = vld [vmem:[#allocation8 + $0xb40] sm:$0xff]
        %v6159 = vld [vmem:[#allocation8 + $0xb48] sm:$0xff]
        %v6160 = vld [vmem:[#allocation8 + $0xb50] sm:$0xff]
        %v6161 = vld [vmem:[#allocation8 + $0xb58] sm:$0xff]
        %v6162 = vld [vmem:[#allocation8 + $0xb60] sm:$0xff]
        %v6163 = vld [vmem:[#allocation8 + $0xb68] sm:$0xff]
        %v6164 = vld [vmem:[#allocation8 + $0xb70] sm:$0xff]
        %v6165 = vld [vmem:[#allocation8 + $0xb78] sm:$0xff]
        %v6166 = vld [vmem:[#allocation8 + $0xb80] sm:$0xff]
        %v6167 = vld [vmem:[#allocation8 + $0xb88] sm:$0xff]
        %v6168 = vld [vmem:[#allocation8 + $0xb90] sm:$0xff]
        %v6169 = vld [vmem:[#allocation8 + $0xb98] sm:$0xff]
        %v6170 = vld [vmem:[#allocation8 + $0xba0] sm:$0xff]
        %v6171 = vld [vmem:[#allocation8 + $0xba8] sm:$0xff]
        %v6172 = vld [vmem:[#allocation8 + $0xbb0] sm:$0xff]
        %v6173 = vld [vmem:[#allocation8 + $0xbb8] sm:$0xff]
        %v6174 = vld [vmem:[#allocation8 + $0xbc0] sm:$0xff]
        %v6175 = vld [vmem:[#allocation8 + $0xbc8] sm:$0xff]
        %v6176 = vld [vmem:[#allocation8 + $0xbd0] sm:$0xff]
        %v6177 = vld [vmem:[#allocation8 + $0xbd8] sm:$0xff]
        %v6178 = vld [vmem:[#allocation8 + $0xbe0] sm:$0xff]
        %v6179 = vld [vmem:[#allocation8 + $0xbe8] sm:$0xff]
        %v6180 = vld [vmem:[#allocation8 + $0xbf0] sm:$0xff]
        %v6181 = vld [vmem:[#allocation8 + $0xbf8] sm:$0xff]
        %v6182 = vld [vmem:[#allocation8 + $0xc00] sm:$0xff]
        %v6183 = vld [vmem:[#allocation8 + $0xc08] sm:$0xff]
        %v6184 = vld [vmem:[#allocation8 + $0xc10] sm:$0xff]
        %v6185 = vld [vmem:[#allocation8 + $0xc18] sm:$0xff]
        %v6186 = vld [vmem:[#allocation8 + $0xc20] sm:$0xff]
        %v6187 = vld [vmem:[#allocation8 + $0xc28] sm:$0xff]
        %v6188 = vld [vmem:[#allocation8 + $0xc30] sm:$0xff]
        %v6189 = vld [vmem:[#allocation8 + $0xc38] sm:$0xff]
        %v6190 = vld [vmem:[#allocation8 + $0xc40] sm:$0xff]
        %v6191 = vld [vmem:[#allocation8 + $0xc48] sm:$0xff]
        %v6192 = vld [vmem:[#allocation8 + $0xc50] sm:$0xff]
        %v6193 = vld [vmem:[#allocation8 + $0xc58] sm:$0xff]
        %v6194 = vld [vmem:[#allocation8 + $0xc60] sm:$0xff]
        %v6195 = vld [vmem:[#allocation8 + $0xc68] sm:$0xff]
        %v6196 = vld [vmem:[#allocation8 + $0xc70] sm:$0xff]
        %v6197 = vld [vmem:[#allocation8 + $0xc78] sm:$0xff]
        %v6198 = vld [vmem:[#allocation8 + $0xc80] sm:$0xff]
        %v6199 = vld [vmem:[#allocation8 + $0xc88] sm:$0xff]
        %v6200 = vld [vmem:[#allocation8 + $0xc90] sm:$0xff]
        %v6201 = vld [vmem:[#allocation8 + $0xc98] sm:$0xff]
        %v6202 = vld [vmem:[#allocation8 + $0xca0] sm:$0xff]
        %v6203 = vld [vmem:[#allocation8 + $0xca8] sm:$0xff]
        %v6204 = vld [vmem:[#allocation8 + $0xcb0] sm:$0xff]
        %v6205 = vld [vmem:[#allocation8 + $0xcb8] sm:$0xff]
        %v6206 = vld [vmem:[#allocation8 + $0xcc0] sm:$0xff]
        %v6207 = vld [vmem:[#allocation8 + $0xcc8] sm:$0xff]
        %v6208 = vld [vmem:[#allocation8 + $0xcd0] sm:$0xff]
        %v6209 = vld [vmem:[#allocation8 + $0xcd8] sm:$0xff]
        %v6210 = vld [vmem:[#allocation8 + $0xce0] sm:$0xff]
        %v6211 = vld [vmem:[#allocation8 + $0xce8] sm:$0xff]
        %v6212 = vld [vmem:[#allocation8 + $0xcf0] sm:$0xff]
        %v6213 = vld [vmem:[#allocation8 + $0xcf8] sm:$0xff]
        %v6214 = vld [vmem:[#allocation8 + $0xd00] sm:$0xff]
        %v6215 = vld [vmem:[#allocation8 + $0xd08] sm:$0xff]
        %v6216 = vld [vmem:[#allocation8 + $0xd10] sm:$0xff]
        %v6217 = vld [vmem:[#allocation8 + $0xd18] sm:$0xff]
        %v6218 = vld [vmem:[#allocation8 + $0xd20] sm:$0xff]
        %v6219 = vld [vmem:[#allocation8 + $0xd28] sm:$0xff]
        %v6220 = vld [vmem:[#allocation8 + $0xd30] sm:$0xff]
        %v6221 = vld [vmem:[#allocation8 + $0xd38] sm:$0xff]
        %v6222 = vld [vmem:[#allocation8 + $0xd40] sm:$0xff]
        %v6223 = vld [vmem:[#allocation8 + $0xd48] sm:$0xff]
        %v6224 = vld [vmem:[#allocation8 + $0xd50] sm:$0xff]
        %v6225 = vld [vmem:[#allocation8 + $0xd58] sm:$0xff]
        %v6226 = vld [vmem:[#allocation8 + $0xd60] sm:$0xff]
        %v6227 = vld [vmem:[#allocation8 + $0xd68] sm:$0xff]
        %v6228 = vld [vmem:[#allocation8 + $0xd70] sm:$0xff]
        %v6229 = vld [vmem:[#allocation8 + $0xd78] sm:$0xff]
        %v6230 = vld [vmem:[#allocation8 + $0xd80] sm:$0xff]
        %v6231 = vld [vmem:[#allocation8 + $0xd88] sm:$0xff]
        %v6232 = vld [vmem:[#allocation8 + $0xd90] sm:$0xff]
        %v6233 = vld [vmem:[#allocation8 + $0xd98] sm:$0xff]
        %v6234 = vld [vmem:[#allocation8 + $0xda0] sm:$0xff]
        %v6235 = vld [vmem:[#allocation8 + $0xda8] sm:$0xff]
        %v6236 = vld [vmem:[#allocation8 + $0xdb0] sm:$0xff]
        %v6237 = vld [vmem:[#allocation8 + $0xdb8] sm:$0xff]
        %v6238 = vld [vmem:[#allocation8 + $0xdc0] sm:$0xff]
        %v6239 = vld [vmem:[#allocation8 + $0xdc8] sm:$0xff]
        %v6240 = vld [vmem:[#allocation8 + $0xdd0] sm:$0xff]
        %v6241 = vld [vmem:[#allocation8 + $0xdd8] sm:$0xff]
        %v6242 = vld [vmem:[#allocation8 + $0xde0] sm:$0xff]
        %v6243 = vld [vmem:[#allocation8 + $0xde8] sm:$0xff]
        %v6244 = vld [vmem:[#allocation8 + $0xdf0] sm:$0xff]
        %v6245 = vld [vmem:[#allocation8 + $0xdf8] sm:$0xff]
        %v6246 = vld [vmem:[#allocation8 + $0xe00] sm:$0xff]
        %v6247 = vld [vmem:[#allocation8 + $0xe08] sm:$0xff]
        %v6248 = vld [vmem:[#allocation8 + $0xe10] sm:$0xff]
        %v6249 = vld [vmem:[#allocation8 + $0xe18] sm:$0xff]
        %v6250 = vld [vmem:[#allocation8 + $0xe20] sm:$0xff]
        %v6251 = vld [vmem:[#allocation8 + $0xe28] sm:$0xff]
        %v6252 = vld [vmem:[#allocation8 + $0xe30] sm:$0xff]
        %v6253 = vld [vmem:[#allocation8 + $0xe38] sm:$0xff]
        %v6254 = vld [vmem:[#allocation8 + $0xe40] sm:$0xff]
        %v6255 = vld [vmem:[#allocation8 + $0xe48] sm:$0xff]
        %v6256 = vld [vmem:[#allocation8 + $0xe50] sm:$0xff]
        %v6257 = vld [vmem:[#allocation8 + $0xe58] sm:$0xff]
        %v6258 = vld [vmem:[#allocation8 + $0xe60] sm:$0xff]
        %v6259 = vld [vmem:[#allocation8 + $0xe68] sm:$0xff]
        %v6260 = vld [vmem:[#allocation8 + $0xe70] sm:$0xff]
        %v6261 = vld [vmem:[#allocation8 + $0xe78] sm:$0xff]
        %v6262 = vld [vmem:[#allocation8 + $0xe80] sm:$0xff]
        %v6263 = vld [vmem:[#allocation8 + $0xe88] sm:$0xff]
        %v6264 = vld [vmem:[#allocation8 + $0xe90] sm:$0xff]
        %v6265 = vld [vmem:[#allocation8 + $0xe98] sm:$0xff]
        %v6266 = vld [vmem:[#allocation8 + $0xea0] sm:$0xff]
        %v6267 = vld [vmem:[#allocation8 + $0xea8] sm:$0xff]
        %v6268 = vld [vmem:[#allocation8 + $0xeb0] sm:$0xff]
        %v6269 = vld [vmem:[#allocation8 + $0xeb8] sm:$0xff]
        %v6270 = vld [vmem:[#allocation8 + $0xec0] sm:$0xff]
        %v6271 = vld [vmem:[#allocation8 + $0xec8] sm:$0xff]
        %v6272 = vld [vmem:[#allocation8 + $0xed0] sm:$0xff]
        %v6273 = vld [vmem:[#allocation8 + $0xed8] sm:$0xff]
        %v6274 = vld [vmem:[#allocation8 + $0xee0] sm:$0xff]
        %v6275 = vld [vmem:[#allocation8 + $0xee8] sm:$0xff]
        %v6276 = vld [vmem:[#allocation8 + $0xef0] sm:$0xff]
        %v6277 = vld [vmem:[#allocation8 + $0xef8] sm:$0xff]
        %v6278 = vld [vmem:[#allocation8 + $0xf00] sm:$0xff]
        %v6279 = vld [vmem:[#allocation8 + $0xf08] sm:$0xff]
        %v6280 = vld [vmem:[#allocation8 + $0xf10] sm:$0xff]
        %v6281 = vld [vmem:[#allocation8 + $0xf18] sm:$0xff]
        %v6282 = vld [vmem:[#allocation8 + $0xf20] sm:$0xff]
        %v6283 = vld [vmem:[#allocation8 + $0xf28] sm:$0xff]
        %v6284 = vld [vmem:[#allocation8 + $0xf30] sm:$0xff]
        %v6285 = vld [vmem:[#allocation8 + $0xf38] sm:$0xff]
        %v6286 = vld [vmem:[#allocation8 + $0xf40] sm:$0xff]
        %v6287 = vld [vmem:[#allocation8 + $0xf48] sm:$0xff]
        %v6288 = vld [vmem:[#allocation8 + $0xf50] sm:$0xff]
        %v6289 = vld [vmem:[#allocation8 + $0xf58] sm:$0xff]
        %v6290 = vld [vmem:[#allocation8 + $0xf60] sm:$0xff]
        %v6291 = vld [vmem:[#allocation8 + $0xf68] sm:$0xff]
        %v6292 = vld [vmem:[#allocation8 + $0xf70] sm:$0xff]
        %v6293 = vld [vmem:[#allocation8 + $0xf78] sm:$0xff]
        %v6294 = vld [vmem:[#allocation8 + $0xf80] sm:$0xff]
        %v6295 = vld [vmem:[#allocation8 + $0xf88] sm:$0xff]
        %v6296 = vld [vmem:[#allocation8 + $0xf90] sm:$0xff]
        %v6297 = vld [vmem:[#allocation8 + $0xf98] sm:$0xff]
        %v6298 = vld [vmem:[#allocation8 + $0xfa0] sm:$0xff]
        %v6299 = vld [vmem:[#allocation8 + $0xfa8] sm:$0xff]
        %v6300 = vld [vmem:[#allocation8 + $0xfb0] sm:$0xff]
        %v6301 = vld [vmem:[#allocation8 + $0xfb8] sm:$0xff]
        %v6302 = vld [vmem:[#allocation8 + $0xfc0] sm:$0xff]
        %v6303 = vld [vmem:[#allocation8 + $0xfc8] sm:$0xff]
        %v6304 = vld [vmem:[#allocation8 + $0xfd0] sm:$0xff]
        %v6305 = vld [vmem:[#allocation8 + $0xfd8] sm:$0xff]
        %v6306 = vld [vmem:[#allocation8 + $0xfe0] sm:$0xff]
        %v6307 = vld [vmem:[#allocation8 + $0xfe8] sm:$0xff]
        %v6308 = vld [vmem:[#allocation8 + $0xff0] sm:$0xff]
        %v6309 = vld [vmem:[#allocation8 + $0xff8] sm:$0xff]
        %v6310 = vld [vmem:[#allocation10] sm:$0xff]
        %v6312 = vlaneseq
        %v6313 = vshrl.u32 %v6312, 7
        %v6314 = vsub.s32 0, %v6313
        %v6315 = vrot.slane %v6310, %v6314
        %v6316 = vlaneseq
        %v6317 = vshrl.u32 %v6316, 7
        %v6318 = vsub.s32 1, %v6317
        %v6319 = vrot.slane %v6310, %v6318
        %v6320 = vlaneseq
        %v6321 = vshrl.u32 %v6320, 7
        %v6322 = vsub.s32 2, %v6321
        %v6323 = vrot.slane %v6310, %v6322
        %v6324 = vlaneseq
        %v6325 = vshrl.u32 %v6324, 7
        %v6326 = vsub.s32 3, %v6325
        %v6327 = vrot.slane %v6310, %v6326
        %v6328 = vlaneseq
        %v6329 = vshrl.u32 %v6328, 7
        %v6330 = vsub.s32 4, %v6329
        %v6331 = vrot.slane %v6310, %v6330
        %v6332 = vlaneseq
        %v6333 = vshrl.u32 %v6332, 7
        %v6334 = vsub.s32 5, %v6333
        %v6335 = vrot.slane %v6310, %v6334
        %v6336 = vlaneseq
        %v6337 = vshrl.u32 %v6336, 7
        %v6338 = vsub.s32 6, %v6337
        %v6339 = vrot.slane %v6310, %v6338
        %v6340 = vlaneseq
        %v6341 = vshrl.u32 %v6340, 7
        %v6342 = vsub.s32 7, %v6341
        %v6343 = vrot.slane %v6310, %v6342
        %v6864 = vunpack.c.l.b16 %v5798
        %v6865 = vunpack.c.h.b16 %v5798
        %v6866 = vunpack.c.l.b16 %v5799
        %v6867 = vunpack.c.h.b16 %v5799
        %v6868 = vunpack.c.l.b16 %v5800
        %v6869 = vunpack.c.h.b16 %v5800
        %v6870 = vunpack.c.l.b16 %v5801
        %v6871 = vunpack.c.h.b16 %v5801
        %v6872 = vunpack.c.l.b16 %v5802
        %v6873 = vunpack.c.h.b16 %v5802
        %v6874 = vunpack.c.l.b16 %v5803
        %v6875 = vunpack.c.h.b16 %v5803
        %v6876 = vunpack.c.l.b16 %v5804
        %v6877 = vunpack.c.h.b16 %v5804
        %v6878 = vunpack.c.l.b16 %v5805
        %v6879 = vunpack.c.h.b16 %v5805
        %v6880 = vunpack.c.l.b16 %v5806
        %v6881 = vunpack.c.h.b16 %v5806
        %v6882 = vunpack.c.l.b16 %v5807
        %v6883 = vunpack.c.h.b16 %v5807
        %v6884 = vunpack.c.l.b16 %v5808
        %v6885 = vunpack.c.h.b16 %v5808
        %v6886 = vunpack.c.l.b16 %v5809
        %v6887 = vunpack.c.h.b16 %v5809
        %v6888 = vunpack.c.l.b16 %v5810
        %v6889 = vunpack.c.h.b16 %v5810
        %v6890 = vunpack.c.l.b16 %v5811
        %v6891 = vunpack.c.h.b16 %v5811
        %v6892 = vunpack.c.l.b16 %v5812
        %v6893 = vunpack.c.h.b16 %v5812
        %v6894 = vunpack.c.l.b16 %v5813
        %v6895 = vunpack.c.h.b16 %v5813
        %v6896 = vunpack.c.l.b16 %v5814
        %v6897 = vunpack.c.h.b16 %v5814
        %v6898 = vunpack.c.l.b16 %v5815
        %v6899 = vunpack.c.h.b16 %v5815
        %v6900 = vunpack.c.l.b16 %v5816
        %v6901 = vunpack.c.h.b16 %v5816
        %v6902 = vunpack.c.l.b16 %v5817
        %v6903 = vunpack.c.h.b16 %v5817
        %v6904 = vunpack.c.l.b16 %v5818
        %v6905 = vunpack.c.h.b16 %v5818
        %v6906 = vunpack.c.l.b16 %v5819
        %v6907 = vunpack.c.h.b16 %v5819
        %v6908 = vunpack.c.l.b16 %v5820
        %v6909 = vunpack.c.h.b16 %v5820
        %v6910 = vunpack.c.l.b16 %v5821
        %v6911 = vunpack.c.h.b16 %v5821
        %v6912 = vunpack.c.l.b16 %v5822
        %v6913 = vunpack.c.h.b16 %v5822
        %v6914 = vunpack.c.l.b16 %v5823
        %v6915 = vunpack.c.h.b16 %v5823
        %v6916 = vunpack.c.l.b16 %v5824
        %v6917 = vunpack.c.h.b16 %v5824
        %v6918 = vunpack.c.l.b16 %v5825
        %v6919 = vunpack.c.h.b16 %v5825
        %v6920 = vunpack.c.l.b16 %v5826
        %v6921 = vunpack.c.h.b16 %v5826
        %v6922 = vunpack.c.l.b16 %v5827
        %v6923 = vunpack.c.h.b16 %v5827
        %v6924 = vunpack.c.l.b16 %v5828
        %v6925 = vunpack.c.h.b16 %v5828
        %v6926 = vunpack.c.l.b16 %v5829
        %v6927 = vunpack.c.h.b16 %v5829
        %v6928 = vunpack.c.l.b16 %v5830
        %v6929 = vunpack.c.h.b16 %v5830
        %v6930 = vunpack.c.l.b16 %v5831
        %v6931 = vunpack.c.h.b16 %v5831
        %v6932 = vunpack.c.l.b16 %v5832
        %v6933 = vunpack.c.h.b16 %v5832
        %v6934 = vunpack.c.l.b16 %v5833
        %v6935 = vunpack.c.h.b16 %v5833
        %v6936 = vunpack.c.l.b16 %v5834
        %v6937 = vunpack.c.h.b16 %v5834
        %v6938 = vunpack.c.l.b16 %v5835
        %v6939 = vunpack.c.h.b16 %v5835
        %v6940 = vunpack.c.l.b16 %v5836
        %v6941 = vunpack.c.h.b16 %v5836
        %v6942 = vunpack.c.l.b16 %v5837
        %v6943 = vunpack.c.h.b16 %v5837
        %v6944 = vunpack.c.l.b16 %v5838
        %v6945 = vunpack.c.h.b16 %v5838
        %v6946 = vunpack.c.l.b16 %v5839
        %v6947 = vunpack.c.h.b16 %v5839
        %v6948 = vunpack.c.l.b16 %v5840
        %v6949 = vunpack.c.h.b16 %v5840
        %v6950 = vunpack.c.l.b16 %v5841
        %v6951 = vunpack.c.h.b16 %v5841
        %v6952 = vunpack.c.l.b16 %v5842
        %v6953 = vunpack.c.h.b16 %v5842
        %v6954 = vunpack.c.l.b16 %v5843
        %v6955 = vunpack.c.h.b16 %v5843
        %v6956 = vunpack.c.l.b16 %v5844
        %v6957 = vunpack.c.h.b16 %v5844
        %v6958 = vunpack.c.l.b16 %v5845
        %v6959 = vunpack.c.h.b16 %v5845
        %v6960 = vunpack.c.l.b16 %v5846
        %v6961 = vunpack.c.h.b16 %v5846
        %v6962 = vunpack.c.l.b16 %v5847
        %v6963 = vunpack.c.h.b16 %v5847
        %v6964 = vunpack.c.l.b16 %v5848
        %v6965 = vunpack.c.h.b16 %v5848
        %v6966 = vunpack.c.l.b16 %v5849
        %v6967 = vunpack.c.h.b16 %v5849
        %v6968 = vunpack.c.l.b16 %v5850
        %v6969 = vunpack.c.h.b16 %v5850
        %v6970 = vunpack.c.l.b16 %v5851
        %v6971 = vunpack.c.h.b16 %v5851
        %v6972 = vunpack.c.l.b16 %v5852
        %v6973 = vunpack.c.h.b16 %v5852
        %v6974 = vunpack.c.l.b16 %v5853
        %v6975 = vunpack.c.h.b16 %v5853
        %v6976 = vunpack.c.l.b16 %v5854
        %v6977 = vunpack.c.h.b16 %v5854
        %v6978 = vunpack.c.l.b16 %v5855
        %v6979 = vunpack.c.h.b16 %v5855
        %v6980 = vunpack.c.l.b16 %v5856
        %v6981 = vunpack.c.h.b16 %v5856
        %v6982 = vunpack.c.l.b16 %v5857
        %v6983 = vunpack.c.h.b16 %v5857
        %v6984 = vunpack.c.l.b16 %v5858
        %v6985 = vunpack.c.h.b16 %v5858
        %v6986 = vunpack.c.l.b16 %v5859
        %v6987 = vunpack.c.h.b16 %v5859
        %v6988 = vunpack.c.l.b16 %v5860
        %v6989 = vunpack.c.h.b16 %v5860
        %v6990 = vunpack.c.l.b16 %v5861
        %v6991 = vunpack.c.h.b16 %v5861
        %v6992 = vunpack.c.l.b16 %v5862
        %v6993 = vunpack.c.h.b16 %v5862
        %v6994 = vunpack.c.l.b16 %v5863
        %v6995 = vunpack.c.h.b16 %v5863
        %v6996 = vunpack.c.l.b16 %v5864
        %v6997 = vunpack.c.h.b16 %v5864
        %v6998 = vunpack.c.l.b16 %v5865
        %v6999 = vunpack.c.h.b16 %v5865
        %v7000 = vunpack.c.l.b16 %v5866
        %v7001 = vunpack.c.h.b16 %v5866
        %v7002 = vunpack.c.l.b16 %v5867
        %v7003 = vunpack.c.h.b16 %v5867
        %v7004 = vunpack.c.l.b16 %v5868
        %v7005 = vunpack.c.h.b16 %v5868
        %v7006 = vunpack.c.l.b16 %v5869
        %v7007 = vunpack.c.h.b16 %v5869
        %v7008 = vunpack.c.l.b16 %v5870
        %v7009 = vunpack.c.h.b16 %v5870
        %v7010 = vunpack.c.l.b16 %v5871
        %v7011 = vunpack.c.h.b16 %v5871
        %v7012 = vunpack.c.l.b16 %v5872
        %v7013 = vunpack.c.h.b16 %v5872
        %v7014 = vunpack.c.l.b16 %v5873
        %v7015 = vunpack.c.h.b16 %v5873
        %v7016 = vunpack.c.l.b16 %v5874
        %v7017 = vunpack.c.h.b16 %v5874
        %v7018 = vunpack.c.l.b16 %v5875
        %v7019 = vunpack.c.h.b16 %v5875
        %v7020 = vunpack.c.l.b16 %v5876
        %v7021 = vunpack.c.h.b16 %v5876
        %v7022 = vunpack.c.l.b16 %v5877
        %v7023 = vunpack.c.h.b16 %v5877
        %v7024 = vunpack.c.l.b16 %v5878
        %v7025 = vunpack.c.h.b16 %v5878
        %v7026 = vunpack.c.l.b16 %v5879
        %v7027 = vunpack.c.h.b16 %v5879
        %v7028 = vunpack.c.l.b16 %v5880
        %v7029 = vunpack.c.h.b16 %v5880
        %v7030 = vunpack.c.l.b16 %v5881
        %v7031 = vunpack.c.h.b16 %v5881
        %v7032 = vunpack.c.l.b16 %v5882
        %v7033 = vunpack.c.h.b16 %v5882
        %v7034 = vunpack.c.l.b16 %v5883
        %v7035 = vunpack.c.h.b16 %v5883
        %v7036 = vunpack.c.l.b16 %v5884
        %v7037 = vunpack.c.h.b16 %v5884
        %v7038 = vunpack.c.l.b16 %v5885
        %v7039 = vunpack.c.h.b16 %v5885
        %v7040 = vunpack.c.l.b16 %v5886
        %v7041 = vunpack.c.h.b16 %v5886
        %v7042 = vunpack.c.l.b16 %v5887
        %v7043 = vunpack.c.h.b16 %v5887
        %v7044 = vunpack.c.l.b16 %v5888
        %v7045 = vunpack.c.h.b16 %v5888
        %v7046 = vunpack.c.l.b16 %v5889
        %v7047 = vunpack.c.h.b16 %v5889
        %v7048 = vunpack.c.l.b16 %v5890
        %v7049 = vunpack.c.h.b16 %v5890
        %v7050 = vunpack.c.l.b16 %v5891
        %v7051 = vunpack.c.h.b16 %v5891
        %v7052 = vunpack.c.l.b16 %v5892
        %v7053 = vunpack.c.h.b16 %v5892
        %v7054 = vunpack.c.l.b16 %v5893
        %v7055 = vunpack.c.h.b16 %v5893
        %v7056 = vunpack.c.l.b16 %v5894
        %v7057 = vunpack.c.h.b16 %v5894
        %v7058 = vunpack.c.l.b16 %v5895
        %v7059 = vunpack.c.h.b16 %v5895
        %v7060 = vunpack.c.l.b16 %v5896
        %v7061 = vunpack.c.h.b16 %v5896
        %v7062 = vunpack.c.l.b16 %v5897
        %v7063 = vunpack.c.h.b16 %v5897
        %v7064 = vunpack.c.l.b16 %v5898
        %v7065 = vunpack.c.h.b16 %v5898
        %v7066 = vunpack.c.l.b16 %v5899
        %v7067 = vunpack.c.h.b16 %v5899
        %v7068 = vunpack.c.l.b16 %v5900
        %v7069 = vunpack.c.h.b16 %v5900
        %v7070 = vunpack.c.l.b16 %v5901
        %v7071 = vunpack.c.h.b16 %v5901
        %v7072 = vunpack.c.l.b16 %v5902
        %v7073 = vunpack.c.h.b16 %v5902
        %v7074 = vunpack.c.l.b16 %v5903
        %v7075 = vunpack.c.h.b16 %v5903
        %v7076 = vunpack.c.l.b16 %v5904
        %v7077 = vunpack.c.h.b16 %v5904
        %v7078 = vunpack.c.l.b16 %v5905
        %v7079 = vunpack.c.h.b16 %v5905
        %v7080 = vunpack.c.l.b16 %v5906
        %v7081 = vunpack.c.h.b16 %v5906
        %v7082 = vunpack.c.l.b16 %v5907
        %v7083 = vunpack.c.h.b16 %v5907
        %v7084 = vunpack.c.l.b16 %v5908
        %v7085 = vunpack.c.h.b16 %v5908
        %v7086 = vunpack.c.l.b16 %v5909
        %v7087 = vunpack.c.h.b16 %v5909
        %v7088 = vunpack.c.l.b16 %v5910
        %v7089 = vunpack.c.h.b16 %v5910
        %v7090 = vunpack.c.l.b16 %v5911
        %v7091 = vunpack.c.h.b16 %v5911
        %v7092 = vunpack.c.l.b16 %v5912
        %v7093 = vunpack.c.h.b16 %v5912
        %v7094 = vunpack.c.l.b16 %v5913
        %v7095 = vunpack.c.h.b16 %v5913
        %v7096 = vunpack.c.l.b16 %v5914
        %v7097 = vunpack.c.h.b16 %v5914
        %v7098 = vunpack.c.l.b16 %v5915
        %v7099 = vunpack.c.h.b16 %v5915
        %v7100 = vunpack.c.l.b16 %v5916
        %v7101 = vunpack.c.h.b16 %v5916
        %v7102 = vunpack.c.l.b16 %v5917
        %v7103 = vunpack.c.h.b16 %v5917
        %v7104 = vunpack.c.l.b16 %v5918
        %v7105 = vunpack.c.h.b16 %v5918
        %v7106 = vunpack.c.l.b16 %v5919
        %v7107 = vunpack.c.h.b16 %v5919
        %v7108 = vunpack.c.l.b16 %v5920
        %v7109 = vunpack.c.h.b16 %v5920
        %v7110 = vunpack.c.l.b16 %v5921
        %v7111 = vunpack.c.h.b16 %v5921
        %v7112 = vunpack.c.l.b16 %v5922
        %v7113 = vunpack.c.h.b16 %v5922
        %v7114 = vunpack.c.l.b16 %v5923
        %v7115 = vunpack.c.h.b16 %v5923
        %v7116 = vunpack.c.l.b16 %v5924
        %v7117 = vunpack.c.h.b16 %v5924
        %v7118 = vunpack.c.l.b16 %v5925
        %v7119 = vunpack.c.h.b16 %v5925
        %v7120 = vunpack.c.l.b16 %v5926
        %v7121 = vunpack.c.h.b16 %v5926
        %v7122 = vunpack.c.l.b16 %v5927
        %v7123 = vunpack.c.h.b16 %v5927
        %v7124 = vunpack.c.l.b16 %v5928
        %v7125 = vunpack.c.h.b16 %v5928
        %v7126 = vunpack.c.l.b16 %v5929
        %v7127 = vunpack.c.h.b16 %v5929
        %v7128 = vunpack.c.l.b16 %v5930
        %v7129 = vunpack.c.h.b16 %v5930
        %v7130 = vunpack.c.l.b16 %v5931
        %v7131 = vunpack.c.h.b16 %v5931
        %v7132 = vunpack.c.l.b16 %v5932
        %v7133 = vunpack.c.h.b16 %v5932
        %v7134 = vunpack.c.l.b16 %v5933
        %v7135 = vunpack.c.h.b16 %v5933
        %v7136 = vunpack.c.l.b16 %v5934
        %v7137 = vunpack.c.h.b16 %v5934
        %v7138 = vunpack.c.l.b16 %v5935
        %v7139 = vunpack.c.h.b16 %v5935
        %v7140 = vunpack.c.l.b16 %v5936
        %v7141 = vunpack.c.h.b16 %v5936
        %v7142 = vunpack.c.l.b16 %v5937
        %v7143 = vunpack.c.h.b16 %v5937
        %v7144 = vunpack.c.l.b16 %v5938
        %v7145 = vunpack.c.h.b16 %v5938
        %v7146 = vunpack.c.l.b16 %v5939
        %v7147 = vunpack.c.h.b16 %v5939
        %v7148 = vunpack.c.l.b16 %v5940
        %v7149 = vunpack.c.h.b16 %v5940
        %v7150 = vunpack.c.l.b16 %v5941
        %v7151 = vunpack.c.h.b16 %v5941
        %v7152 = vunpack.c.l.b16 %v5942
        %v7153 = vunpack.c.h.b16 %v5942
        %v7154 = vunpack.c.l.b16 %v5943
        %v7155 = vunpack.c.h.b16 %v5943
        %v7156 = vunpack.c.l.b16 %v5944
        %v7157 = vunpack.c.h.b16 %v5944
        %v7158 = vunpack.c.l.b16 %v5945
        %v7159 = vunpack.c.h.b16 %v5945
        %v7160 = vunpack.c.l.b16 %v5946
        %v7161 = vunpack.c.h.b16 %v5946
        %v7162 = vunpack.c.l.b16 %v5947
        %v7163 = vunpack.c.h.b16 %v5947
        %v7164 = vunpack.c.l.b16 %v5948
        %v7165 = vunpack.c.h.b16 %v5948
        %v7166 = vunpack.c.l.b16 %v5949
        %v7167 = vunpack.c.h.b16 %v5949
        %v7168 = vunpack.c.l.b16 %v5950
        %v7169 = vunpack.c.h.b16 %v5950
        %v7170 = vunpack.c.l.b16 %v5951
        %v7171 = vunpack.c.h.b16 %v5951
        %v7172 = vunpack.c.l.b16 %v5952
        %v7173 = vunpack.c.h.b16 %v5952
        %v7174 = vunpack.c.l.b16 %v5953
        %v7175 = vunpack.c.h.b16 %v5953
        %v7176 = vunpack.c.l.b16 %v5954
        %v7177 = vunpack.c.h.b16 %v5954
        %v7178 = vunpack.c.l.b16 %v5955
        %v7179 = vunpack.c.h.b16 %v5955
        %v7180 = vunpack.c.l.b16 %v5956
        %v7181 = vunpack.c.h.b16 %v5956
        %v7182 = vunpack.c.l.b16 %v5957
        %v7183 = vunpack.c.h.b16 %v5957
        %v7184 = vunpack.c.l.b16 %v5958
        %v7185 = vunpack.c.h.b16 %v5958
        %v7186 = vunpack.c.l.b16 %v5959
        %v7187 = vunpack.c.h.b16 %v5959
        %v7188 = vunpack.c.l.b16 %v5960
        %v7189 = vunpack.c.h.b16 %v5960
        %v7190 = vunpack.c.l.b16 %v5961
        %v7191 = vunpack.c.h.b16 %v5961
        %v7192 = vunpack.c.l.b16 %v5962
        %v7193 = vunpack.c.h.b16 %v5962
        %v7194 = vunpack.c.l.b16 %v5963
        %v7195 = vunpack.c.h.b16 %v5963
        %v7196 = vunpack.c.l.b16 %v5964
        %v7197 = vunpack.c.h.b16 %v5964
        %v7198 = vunpack.c.l.b16 %v5965
        %v7199 = vunpack.c.h.b16 %v5965
        %v7200 = vunpack.c.l.b16 %v5966
        %v7201 = vunpack.c.h.b16 %v5966
        %v7202 = vunpack.c.l.b16 %v5967
        %v7203 = vunpack.c.h.b16 %v5967
        %v7204 = vunpack.c.l.b16 %v5968
        %v7205 = vunpack.c.h.b16 %v5968
        %v7206 = vunpack.c.l.b16 %v5969
        %v7207 = vunpack.c.h.b16 %v5969
        %v7208 = vunpack.c.l.b16 %v5970
        %v7209 = vunpack.c.h.b16 %v5970
        %v7210 = vunpack.c.l.b16 %v5971
        %v7211 = vunpack.c.h.b16 %v5971
        %v7212 = vunpack.c.l.b16 %v5972
        %v7213 = vunpack.c.h.b16 %v5972
        %v7214 = vunpack.c.l.b16 %v5973
        %v7215 = vunpack.c.h.b16 %v5973
        %v7216 = vunpack.c.l.b16 %v5974
        %v7217 = vunpack.c.h.b16 %v5974
        %v7218 = vunpack.c.l.b16 %v5975
        %v7219 = vunpack.c.h.b16 %v5975
        %v7220 = vunpack.c.l.b16 %v5976
        %v7221 = vunpack.c.h.b16 %v5976
        %v7222 = vunpack.c.l.b16 %v5977
        %v7223 = vunpack.c.h.b16 %v5977
        %v7224 = vunpack.c.l.b16 %v5978
        %v7225 = vunpack.c.h.b16 %v5978
        %v7226 = vunpack.c.l.b16 %v5979
        %v7227 = vunpack.c.h.b16 %v5979
        %v7228 = vunpack.c.l.b16 %v5980
        %v7229 = vunpack.c.h.b16 %v5980
        %v7230 = vunpack.c.l.b16 %v5981
        %v7231 = vunpack.c.h.b16 %v5981
        %v7232 = vunpack.c.l.b16 %v5982
        %v7233 = vunpack.c.h.b16 %v5982
        %v7234 = vunpack.c.l.b16 %v5983
        %v7235 = vunpack.c.h.b16 %v5983
        %v7236 = vunpack.c.l.b16 %v5984
        %v7237 = vunpack.c.h.b16 %v5984
        %v7238 = vunpack.c.l.b16 %v5985
        %v7239 = vunpack.c.h.b16 %v5985
        %v7240 = vunpack.c.l.b16 %v5986
        %v7241 = vunpack.c.h.b16 %v5986
        %v7242 = vunpack.c.l.b16 %v5987
        %v7243 = vunpack.c.h.b16 %v5987
        %v7244 = vunpack.c.l.b16 %v5988
        %v7245 = vunpack.c.h.b16 %v5988
        %v7246 = vunpack.c.l.b16 %v5989
        %v7247 = vunpack.c.h.b16 %v5989
        %v7248 = vunpack.c.l.b16 %v5990
        %v7249 = vunpack.c.h.b16 %v5990
        %v7250 = vunpack.c.l.b16 %v5991
        %v7251 = vunpack.c.h.b16 %v5991
        %v7252 = vunpack.c.l.b16 %v5992
        %v7253 = vunpack.c.h.b16 %v5992
        %v7254 = vunpack.c.l.b16 %v5993
        %v7255 = vunpack.c.h.b16 %v5993
        %v7256 = vunpack.c.l.b16 %v5994
        %v7257 = vunpack.c.h.b16 %v5994
        %v7258 = vunpack.c.l.b16 %v5995
        %v7259 = vunpack.c.h.b16 %v5995
        %v7260 = vunpack.c.l.b16 %v5996
        %v7261 = vunpack.c.h.b16 %v5996
        %v7262 = vunpack.c.l.b16 %v5997
        %v7263 = vunpack.c.h.b16 %v5997
        %v7264 = vunpack.c.l.b16 %v5998
        %v7265 = vunpack.c.h.b16 %v5998
        %v7266 = vunpack.c.l.b16 %v5999
        %v7267 = vunpack.c.h.b16 %v5999
        %v7268 = vunpack.c.l.b16 %v6000
        %v7269 = vunpack.c.h.b16 %v6000
        %v7270 = vunpack.c.l.b16 %v6001
        %v7271 = vunpack.c.h.b16 %v6001
        %v7272 = vunpack.c.l.b16 %v6002
        %v7273 = vunpack.c.h.b16 %v6002
        %v7274 = vunpack.c.l.b16 %v6003
        %v7275 = vunpack.c.h.b16 %v6003
        %v7276 = vunpack.c.l.b16 %v6004
        %v7277 = vunpack.c.h.b16 %v6004
        %v7278 = vunpack.c.l.b16 %v6005
        %v7279 = vunpack.c.h.b16 %v6005
        %v7280 = vunpack.c.l.b16 %v6006
        %v7281 = vunpack.c.h.b16 %v6006
        %v7282 = vunpack.c.l.b16 %v6007
        %v7283 = vunpack.c.h.b16 %v6007
        %v7284 = vunpack.c.l.b16 %v6008
        %v7285 = vunpack.c.h.b16 %v6008
        %v7286 = vunpack.c.l.b16 %v6009
        %v7287 = vunpack.c.h.b16 %v6009
        %v7288 = vunpack.c.l.b16 %v6010
        %v7289 = vunpack.c.h.b16 %v6010
        %v7290 = vunpack.c.l.b16 %v6011
        %v7291 = vunpack.c.h.b16 %v6011
        %v7292 = vunpack.c.l.b16 %v6012
        %v7293 = vunpack.c.h.b16 %v6012
        %v7294 = vunpack.c.l.b16 %v6013
        %v7295 = vunpack.c.h.b16 %v6013
        %v7296 = vunpack.c.l.b16 %v6014
        %v7297 = vunpack.c.h.b16 %v6014
        %v7298 = vunpack.c.l.b16 %v6015
        %v7299 = vunpack.c.h.b16 %v6015
        %v7300 = vunpack.c.l.b16 %v6016
        %v7301 = vunpack.c.h.b16 %v6016
        %v7302 = vunpack.c.l.b16 %v6017
        %v7303 = vunpack.c.h.b16 %v6017
        %v7304 = vunpack.c.l.b16 %v6018
        %v7305 = vunpack.c.h.b16 %v6018
        %v7306 = vunpack.c.l.b16 %v6019
        %v7307 = vunpack.c.h.b16 %v6019
        %v7308 = vunpack.c.l.b16 %v6020
        %v7309 = vunpack.c.h.b16 %v6020
        %v7310 = vunpack.c.l.b16 %v6021
        %v7311 = vunpack.c.h.b16 %v6021
        %v7312 = vunpack.c.l.b16 %v6022
        %v7313 = vunpack.c.h.b16 %v6022
        %v7314 = vunpack.c.l.b16 %v6023
        %v7315 = vunpack.c.h.b16 %v6023
        %v7316 = vunpack.c.l.b16 %v6024
        %v7317 = vunpack.c.h.b16 %v6024
        %v7318 = vunpack.c.l.b16 %v6025
        %v7319 = vunpack.c.h.b16 %v6025
        %v7320 = vunpack.c.l.b16 %v6026
        %v7321 = vunpack.c.h.b16 %v6026
        %v7322 = vunpack.c.l.b16 %v6027
        %v7323 = vunpack.c.h.b16 %v6027
        %v7324 = vunpack.c.l.b16 %v6028
        %v7325 = vunpack.c.h.b16 %v6028
        %v7326 = vunpack.c.l.b16 %v6029
        %v7327 = vunpack.c.h.b16 %v6029
        %v7328 = vunpack.c.l.b16 %v6030
        %v7329 = vunpack.c.h.b16 %v6030
        %v7330 = vunpack.c.l.b16 %v6031
        %v7331 = vunpack.c.h.b16 %v6031
        %v7332 = vunpack.c.l.b16 %v6032
        %v7333 = vunpack.c.h.b16 %v6032
        %v7334 = vunpack.c.l.b16 %v6033
        %v7335 = vunpack.c.h.b16 %v6033
        %v7336 = vunpack.c.l.b16 %v6034
        %v7337 = vunpack.c.h.b16 %v6034
        %v7338 = vunpack.c.l.b16 %v6035
        %v7339 = vunpack.c.h.b16 %v6035
        %v7340 = vunpack.c.l.b16 %v6036
        %v7341 = vunpack.c.h.b16 %v6036
        %v7342 = vunpack.c.l.b16 %v6037
        %v7343 = vunpack.c.h.b16 %v6037
        %v7344 = vunpack.c.l.b16 %v6038
        %v7345 = vunpack.c.h.b16 %v6038
        %v7346 = vunpack.c.l.b16 %v6039
        %v7347 = vunpack.c.h.b16 %v6039
        %v7348 = vunpack.c.l.b16 %v6040
        %v7349 = vunpack.c.h.b16 %v6040
        %v7350 = vunpack.c.l.b16 %v6041
        %v7351 = vunpack.c.h.b16 %v6041
        %v7352 = vunpack.c.l.b16 %v6042
        %v7353 = vunpack.c.h.b16 %v6042
        %v7354 = vunpack.c.l.b16 %v6043
        %v7355 = vunpack.c.h.b16 %v6043
        %v7356 = vunpack.c.l.b16 %v6044
        %v7357 = vunpack.c.h.b16 %v6044
        %v7358 = vunpack.c.l.b16 %v6045
        %v7359 = vunpack.c.h.b16 %v6045
        %v7360 = vunpack.c.l.b16 %v6046
        %v7361 = vunpack.c.h.b16 %v6046
        %v7362 = vunpack.c.l.b16 %v6047
        %v7363 = vunpack.c.h.b16 %v6047
        %v7364 = vunpack.c.l.b16 %v6048
        %v7365 = vunpack.c.h.b16 %v6048
        %v7366 = vunpack.c.l.b16 %v6049
        %v7367 = vunpack.c.h.b16 %v6049
        %v7368 = vunpack.c.l.b16 %v6050
        %v7369 = vunpack.c.h.b16 %v6050
        %v7370 = vunpack.c.l.b16 %v6051
        %v7371 = vunpack.c.h.b16 %v6051
        %v7372 = vunpack.c.l.b16 %v6052
        %v7373 = vunpack.c.h.b16 %v6052
        %v7374 = vunpack.c.l.b16 %v6053
        %v7375 = vunpack.c.h.b16 %v6053
        %v7376 = vunpack.c.l.b16 %v6054
        %v7377 = vunpack.c.h.b16 %v6054
        %v7378 = vunpack.c.l.b16 %v6055
        %v7379 = vunpack.c.h.b16 %v6055
        %v7380 = vunpack.c.l.b16 %v6056
        %v7381 = vunpack.c.h.b16 %v6056
        %v7382 = vunpack.c.l.b16 %v6057
        %v7383 = vunpack.c.h.b16 %v6057
        %v7384 = vunpack.c.l.b16 %v6058
        %v7385 = vunpack.c.h.b16 %v6058
        %v7386 = vunpack.c.l.b16 %v6059
        %v7387 = vunpack.c.h.b16 %v6059
        %v7388 = vunpack.c.l.b16 %v6060
        %v7389 = vunpack.c.h.b16 %v6060
        %v7390 = vunpack.c.l.b16 %v6061
        %v7391 = vunpack.c.h.b16 %v6061
        %v7392 = vunpack.c.l.b16 %v6062
        %v7393 = vunpack.c.h.b16 %v6062
        %v7394 = vunpack.c.l.b16 %v6063
        %v7395 = vunpack.c.h.b16 %v6063
        %v7396 = vunpack.c.l.b16 %v6064
        %v7397 = vunpack.c.h.b16 %v6064
        %v7398 = vunpack.c.l.b16 %v6065
        %v7399 = vunpack.c.h.b16 %v6065
        %v7400 = vunpack.c.l.b16 %v6066
        %v7401 = vunpack.c.h.b16 %v6066
        %v7402 = vunpack.c.l.b16 %v6067
        %v7403 = vunpack.c.h.b16 %v6067
        %v7404 = vunpack.c.l.b16 %v6068
        %v7405 = vunpack.c.h.b16 %v6068
        %v7406 = vunpack.c.l.b16 %v6069
        %v7407 = vunpack.c.h.b16 %v6069
        %v7408 = vunpack.c.l.b16 %v6070
        %v7409 = vunpack.c.h.b16 %v6070
        %v7410 = vunpack.c.l.b16 %v6071
        %v7411 = vunpack.c.h.b16 %v6071
        %v7412 = vunpack.c.l.b16 %v6072
        %v7413 = vunpack.c.h.b16 %v6072
        %v7414 = vunpack.c.l.b16 %v6073
        %v7415 = vunpack.c.h.b16 %v6073
        %v7416 = vunpack.c.l.b16 %v6074
        %v7417 = vunpack.c.h.b16 %v6074
        %v7418 = vunpack.c.l.b16 %v6075
        %v7419 = vunpack.c.h.b16 %v6075
        %v7420 = vunpack.c.l.b16 %v6076
        %v7421 = vunpack.c.h.b16 %v6076
        %v7422 = vunpack.c.l.b16 %v6077
        %v7423 = vunpack.c.h.b16 %v6077
        %v7424 = vunpack.c.l.b16 %v6078
        %v7425 = vunpack.c.h.b16 %v6078
        %v7426 = vunpack.c.l.b16 %v6079
        %v7427 = vunpack.c.h.b16 %v6079
        %v7428 = vunpack.c.l.b16 %v6080
        %v7429 = vunpack.c.h.b16 %v6080
        %v7430 = vunpack.c.l.b16 %v6081
        %v7431 = vunpack.c.h.b16 %v6081
        %v7432 = vunpack.c.l.b16 %v6082
        %v7433 = vunpack.c.h.b16 %v6082
        %v7434 = vunpack.c.l.b16 %v6083
        %v7435 = vunpack.c.h.b16 %v6083
        %v7436 = vunpack.c.l.b16 %v6084
        %v7437 = vunpack.c.h.b16 %v6084
        %v7438 = vunpack.c.l.b16 %v6085
        %v7439 = vunpack.c.h.b16 %v6085
        %v7440 = vunpack.c.l.b16 %v6086
        %v7441 = vunpack.c.h.b16 %v6086
        %v7442 = vunpack.c.l.b16 %v6087
        %v7443 = vunpack.c.h.b16 %v6087
        %v7444 = vunpack.c.l.b16 %v6088
        %v7445 = vunpack.c.h.b16 %v6088
        %v7446 = vunpack.c.l.b16 %v6089
        %v7447 = vunpack.c.h.b16 %v6089
        %v7448 = vunpack.c.l.b16 %v6090
        %v7449 = vunpack.c.h.b16 %v6090
        %v7450 = vunpack.c.l.b16 %v6091
        %v7451 = vunpack.c.h.b16 %v6091
        %v7452 = vunpack.c.l.b16 %v6092
        %v7453 = vunpack.c.h.b16 %v6092
        %v7454 = vunpack.c.l.b16 %v6093
        %v7455 = vunpack.c.h.b16 %v6093
        %v7456 = vunpack.c.l.b16 %v6094
        %v7457 = vunpack.c.h.b16 %v6094
        %v7458 = vunpack.c.l.b16 %v6095
        %v7459 = vunpack.c.h.b16 %v6095
        %v7460 = vunpack.c.l.b16 %v6096
        %v7461 = vunpack.c.h.b16 %v6096
        %v7462 = vunpack.c.l.b16 %v6097
        %v7463 = vunpack.c.h.b16 %v6097
        %v7464 = vunpack.c.l.b16 %v6098
        %v7465 = vunpack.c.h.b16 %v6098
        %v7466 = vunpack.c.l.b16 %v6099
        %v7467 = vunpack.c.h.b16 %v6099
        %v7468 = vunpack.c.l.b16 %v6100
        %v7469 = vunpack.c.h.b16 %v6100
        %v7470 = vunpack.c.l.b16 %v6101
        %v7471 = vunpack.c.h.b16 %v6101
        %v7472 = vunpack.c.l.b16 %v6102
        %v7473 = vunpack.c.h.b16 %v6102
        %v7474 = vunpack.c.l.b16 %v6103
        %v7475 = vunpack.c.h.b16 %v6103
        %v7476 = vunpack.c.l.b16 %v6104
        %v7477 = vunpack.c.h.b16 %v6104
        %v7478 = vunpack.c.l.b16 %v6105
        %v7479 = vunpack.c.h.b16 %v6105
        %v7480 = vunpack.c.l.b16 %v6106
        %v7481 = vunpack.c.h.b16 %v6106
        %v7482 = vunpack.c.l.b16 %v6107
        %v7483 = vunpack.c.h.b16 %v6107
        %v7484 = vunpack.c.l.b16 %v6108
        %v7485 = vunpack.c.h.b16 %v6108
        %v7486 = vunpack.c.l.b16 %v6109
        %v7487 = vunpack.c.h.b16 %v6109
        %v7488 = vunpack.c.l.b16 %v6110
        %v7489 = vunpack.c.h.b16 %v6110
        %v7490 = vunpack.c.l.b16 %v6111
        %v7491 = vunpack.c.h.b16 %v6111
        %v7492 = vunpack.c.l.b16 %v6112
        %v7493 = vunpack.c.h.b16 %v6112
        %v7494 = vunpack.c.l.b16 %v6113
        %v7495 = vunpack.c.h.b16 %v6113
        %v7496 = vunpack.c.l.b16 %v6114
        %v7497 = vunpack.c.h.b16 %v6114
        %v7498 = vunpack.c.l.b16 %v6115
        %v7499 = vunpack.c.h.b16 %v6115
        %v7500 = vunpack.c.l.b16 %v6116
        %v7501 = vunpack.c.h.b16 %v6116
        %v7502 = vunpack.c.l.b16 %v6117
        %v7503 = vunpack.c.h.b16 %v6117
        %v7504 = vunpack.c.l.b16 %v6118
        %v7505 = vunpack.c.h.b16 %v6118
        %v7506 = vunpack.c.l.b16 %v6119
        %v7507 = vunpack.c.h.b16 %v6119
        %v7508 = vunpack.c.l.b16 %v6120
        %v7509 = vunpack.c.h.b16 %v6120
        %v7510 = vunpack.c.l.b16 %v6121
        %v7511 = vunpack.c.h.b16 %v6121
        %v7512 = vunpack.c.l.b16 %v6122
        %v7513 = vunpack.c.h.b16 %v6122
        %v7514 = vunpack.c.l.b16 %v6123
        %v7515 = vunpack.c.h.b16 %v6123
        %v7516 = vunpack.c.l.b16 %v6124
        %v7517 = vunpack.c.h.b16 %v6124
        %v7518 = vunpack.c.l.b16 %v6125
        %v7519 = vunpack.c.h.b16 %v6125
        %v7520 = vunpack.c.l.b16 %v6126
        %v7521 = vunpack.c.h.b16 %v6126
        %v7522 = vunpack.c.l.b16 %v6127
        %v7523 = vunpack.c.h.b16 %v6127
        %v7524 = vunpack.c.l.b16 %v6128
        %v7525 = vunpack.c.h.b16 %v6128
        %v7526 = vunpack.c.l.b16 %v6129
        %v7527 = vunpack.c.h.b16 %v6129
        %v7528 = vunpack.c.l.b16 %v6130
        %v7529 = vunpack.c.h.b16 %v6130
        %v7530 = vunpack.c.l.b16 %v6131
        %v7531 = vunpack.c.h.b16 %v6131
        %v7532 = vunpack.c.l.b16 %v6132
        %v7533 = vunpack.c.h.b16 %v6132
        %v7534 = vunpack.c.l.b16 %v6133
        %v7535 = vunpack.c.h.b16 %v6133
        %v7536 = vunpack.c.l.b16 %v6134
        %v7537 = vunpack.c.h.b16 %v6134
        %v7538 = vunpack.c.l.b16 %v6135
        %v7539 = vunpack.c.h.b16 %v6135
        %v7540 = vunpack.c.l.b16 %v6136
        %v7541 = vunpack.c.h.b16 %v6136
        %v7542 = vunpack.c.l.b16 %v6137
        %v7543 = vunpack.c.h.b16 %v6137
        %v7544 = vunpack.c.l.b16 %v6138
        %v7545 = vunpack.c.h.b16 %v6138
        %v7546 = vunpack.c.l.b16 %v6139
        %v7547 = vunpack.c.h.b16 %v6139
        %v7548 = vunpack.c.l.b16 %v6140
        %v7549 = vunpack.c.h.b16 %v6140
        %v7550 = vunpack.c.l.b16 %v6141
        %v7551 = vunpack.c.h.b16 %v6141
        %v7552 = vunpack.c.l.b16 %v6142
        %v7553 = vunpack.c.h.b16 %v6142
        %v7554 = vunpack.c.l.b16 %v6143
        %v7555 = vunpack.c.h.b16 %v6143
        %v7556 = vunpack.c.l.b16 %v6144
        %v7557 = vunpack.c.h.b16 %v6144
        %v7558 = vunpack.c.l.b16 %v6145
        %v7559 = vunpack.c.h.b16 %v6145
        %v7560 = vunpack.c.l.b16 %v6146
        %v7561 = vunpack.c.h.b16 %v6146
        %v7562 = vunpack.c.l.b16 %v6147
        %v7563 = vunpack.c.h.b16 %v6147
        %v7564 = vunpack.c.l.b16 %v6148
        %v7565 = vunpack.c.h.b16 %v6148
        %v7566 = vunpack.c.l.b16 %v6149
        %v7567 = vunpack.c.h.b16 %v6149
        %v7568 = vunpack.c.l.b16 %v6150
        %v7569 = vunpack.c.h.b16 %v6150
        %v7570 = vunpack.c.l.b16 %v6151
        %v7571 = vunpack.c.h.b16 %v6151
        %v7572 = vunpack.c.l.b16 %v6152
        %v7573 = vunpack.c.h.b16 %v6152
        %v7574 = vunpack.c.l.b16 %v6153
        %v7575 = vunpack.c.h.b16 %v6153
        %v7576 = vunpack.c.l.b16 %v6154
        %v7577 = vunpack.c.h.b16 %v6154
        %v7578 = vunpack.c.l.b16 %v6155
        %v7579 = vunpack.c.h.b16 %v6155
        %v7580 = vunpack.c.l.b16 %v6156
        %v7581 = vunpack.c.h.b16 %v6156
        %v7582 = vunpack.c.l.b16 %v6157
        %v7583 = vunpack.c.h.b16 %v6157
        %v7584 = vunpack.c.l.b16 %v6158
        %v7585 = vunpack.c.h.b16 %v6158
        %v7586 = vunpack.c.l.b16 %v6159
        %v7587 = vunpack.c.h.b16 %v6159
        %v7588 = vunpack.c.l.b16 %v6160
        %v7589 = vunpack.c.h.b16 %v6160
        %v7590 = vunpack.c.l.b16 %v6161
        %v7591 = vunpack.c.h.b16 %v6161
        %v7592 = vunpack.c.l.b16 %v6162
        %v7593 = vunpack.c.h.b16 %v6162
        %v7594 = vunpack.c.l.b16 %v6163
        %v7595 = vunpack.c.h.b16 %v6163
        %v7596 = vunpack.c.l.b16 %v6164
        %v7597 = vunpack.c.h.b16 %v6164
        %v7598 = vunpack.c.l.b16 %v6165
        %v7599 = vunpack.c.h.b16 %v6165
        %v7600 = vunpack.c.l.b16 %v6166
        %v7601 = vunpack.c.h.b16 %v6166
        %v7602 = vunpack.c.l.b16 %v6167
        %v7603 = vunpack.c.h.b16 %v6167
        %v7604 = vunpack.c.l.b16 %v6168
        %v7605 = vunpack.c.h.b16 %v6168
        %v7606 = vunpack.c.l.b16 %v6169
        %v7607 = vunpack.c.h.b16 %v6169
        %v7608 = vunpack.c.l.b16 %v6170
        %v7609 = vunpack.c.h.b16 %v6170
        %v7610 = vunpack.c.l.b16 %v6171
        %v7611 = vunpack.c.h.b16 %v6171
        %v7612 = vunpack.c.l.b16 %v6172
        %v7613 = vunpack.c.h.b16 %v6172
        %v7614 = vunpack.c.l.b16 %v6173
        %v7615 = vunpack.c.h.b16 %v6173
        %v7616 = vunpack.c.l.b16 %v6174
        %v7617 = vunpack.c.h.b16 %v6174
        %v7618 = vunpack.c.l.b16 %v6175
        %v7619 = vunpack.c.h.b16 %v6175
        %v7620 = vunpack.c.l.b16 %v6176
        %v7621 = vunpack.c.h.b16 %v6176
        %v7622 = vunpack.c.l.b16 %v6177
        %v7623 = vunpack.c.h.b16 %v6177
        %v7624 = vunpack.c.l.b16 %v6178
        %v7625 = vunpack.c.h.b16 %v6178
        %v7626 = vunpack.c.l.b16 %v6179
        %v7627 = vunpack.c.h.b16 %v6179
        %v7628 = vunpack.c.l.b16 %v6180
        %v7629 = vunpack.c.h.b16 %v6180
        %v7630 = vunpack.c.l.b16 %v6181
        %v7631 = vunpack.c.h.b16 %v6181
        %v7632 = vunpack.c.l.b16 %v6182
        %v7633 = vunpack.c.h.b16 %v6182
        %v7634 = vunpack.c.l.b16 %v6183
        %v7635 = vunpack.c.h.b16 %v6183
        %v7636 = vunpack.c.l.b16 %v6184
        %v7637 = vunpack.c.h.b16 %v6184
        %v7638 = vunpack.c.l.b16 %v6185
        %v7639 = vunpack.c.h.b16 %v6185
        %v7640 = vunpack.c.l.b16 %v6186
        %v7641 = vunpack.c.h.b16 %v6186
        %v7642 = vunpack.c.l.b16 %v6187
        %v7643 = vunpack.c.h.b16 %v6187
        %v7644 = vunpack.c.l.b16 %v6188
        %v7645 = vunpack.c.h.b16 %v6188
        %v7646 = vunpack.c.l.b16 %v6189
        %v7647 = vunpack.c.h.b16 %v6189
        %v7648 = vunpack.c.l.b16 %v6190
        %v7649 = vunpack.c.h.b16 %v6190
        %v7650 = vunpack.c.l.b16 %v6191
        %v7651 = vunpack.c.h.b16 %v6191
        %v7652 = vunpack.c.l.b16 %v6192
        %v7653 = vunpack.c.h.b16 %v6192
        %v7654 = vunpack.c.l.b16 %v6193
        %v7655 = vunpack.c.h.b16 %v6193
        %v7656 = vunpack.c.l.b16 %v6194
        %v7657 = vunpack.c.h.b16 %v6194
        %v7658 = vunpack.c.l.b16 %v6195
        %v7659 = vunpack.c.h.b16 %v6195
        %v7660 = vunpack.c.l.b16 %v6196
        %v7661 = vunpack.c.h.b16 %v6196
        %v7662 = vunpack.c.l.b16 %v6197
        %v7663 = vunpack.c.h.b16 %v6197
        %v7664 = vunpack.c.l.b16 %v6198
        %v7665 = vunpack.c.h.b16 %v6198
        %v7666 = vunpack.c.l.b16 %v6199
        %v7667 = vunpack.c.h.b16 %v6199
        %v7668 = vunpack.c.l.b16 %v6200
        %v7669 = vunpack.c.h.b16 %v6200
        %v7670 = vunpack.c.l.b16 %v6201
        %v7671 = vunpack.c.h.b16 %v6201
        %v7672 = vunpack.c.l.b16 %v6202
        %v7673 = vunpack.c.h.b16 %v6202
        %v7674 = vunpack.c.l.b16 %v6203
        %v7675 = vunpack.c.h.b16 %v6203
        %v7676 = vunpack.c.l.b16 %v6204
        %v7677 = vunpack.c.h.b16 %v6204
        %v7678 = vunpack.c.l.b16 %v6205
        %v7679 = vunpack.c.h.b16 %v6205
        %v7680 = vunpack.c.l.b16 %v6206
        %v7681 = vunpack.c.h.b16 %v6206
        %v7682 = vunpack.c.l.b16 %v6207
        %v7683 = vunpack.c.h.b16 %v6207
        %v7684 = vunpack.c.l.b16 %v6208
        %v7685 = vunpack.c.h.b16 %v6208
        %v7686 = vunpack.c.l.b16 %v6209
        %v7687 = vunpack.c.h.b16 %v6209
        %v7688 = vunpack.c.l.b16 %v6210
        %v7689 = vunpack.c.h.b16 %v6210
        %v7690 = vunpack.c.l.b16 %v6211
        %v7691 = vunpack.c.h.b16 %v6211
        %v7692 = vunpack.c.l.b16 %v6212
        %v7693 = vunpack.c.h.b16 %v6212
        %v7694 = vunpack.c.l.b16 %v6213
        %v7695 = vunpack.c.h.b16 %v6213
        %v7696 = vunpack.c.l.b16 %v6214
        %v7697 = vunpack.c.h.b16 %v6214
        %v7698 = vunpack.c.l.b16 %v6215
        %v7699 = vunpack.c.h.b16 %v6215
        %v7700 = vunpack.c.l.b16 %v6216
        %v7701 = vunpack.c.h.b16 %v6216
        %v7702 = vunpack.c.l.b16 %v6217
        %v7703 = vunpack.c.h.b16 %v6217
        %v7704 = vunpack.c.l.b16 %v6218
        %v7705 = vunpack.c.h.b16 %v6218
        %v7706 = vunpack.c.l.b16 %v6219
        %v7707 = vunpack.c.h.b16 %v6219
        %v7708 = vunpack.c.l.b16 %v6220
        %v7709 = vunpack.c.h.b16 %v6220
        %v7710 = vunpack.c.l.b16 %v6221
        %v7711 = vunpack.c.h.b16 %v6221
        %v7712 = vunpack.c.l.b16 %v6222
        %v7713 = vunpack.c.h.b16 %v6222
        %v7714 = vunpack.c.l.b16 %v6223
        %v7715 = vunpack.c.h.b16 %v6223
        %v7716 = vunpack.c.l.b16 %v6224
        %v7717 = vunpack.c.h.b16 %v6224
        %v7718 = vunpack.c.l.b16 %v6225
        %v7719 = vunpack.c.h.b16 %v6225
        %v7720 = vunpack.c.l.b16 %v6226
        %v7721 = vunpack.c.h.b16 %v6226
        %v7722 = vunpack.c.l.b16 %v6227
        %v7723 = vunpack.c.h.b16 %v6227
        %v7724 = vunpack.c.l.b16 %v6228
        %v7725 = vunpack.c.h.b16 %v6228
        %v7726 = vunpack.c.l.b16 %v6229
        %v7727 = vunpack.c.h.b16 %v6229
        %v7728 = vunpack.c.l.b16 %v6230
        %v7729 = vunpack.c.h.b16 %v6230
        %v7730 = vunpack.c.l.b16 %v6231
        %v7731 = vunpack.c.h.b16 %v6231
        %v7732 = vunpack.c.l.b16 %v6232
        %v7733 = vunpack.c.h.b16 %v6232
        %v7734 = vunpack.c.l.b16 %v6233
        %v7735 = vunpack.c.h.b16 %v6233
        %v7736 = vunpack.c.l.b16 %v6234
        %v7737 = vunpack.c.h.b16 %v6234
        %v7738 = vunpack.c.l.b16 %v6235
        %v7739 = vunpack.c.h.b16 %v6235
        %v7740 = vunpack.c.l.b16 %v6236
        %v7741 = vunpack.c.h.b16 %v6236
        %v7742 = vunpack.c.l.b16 %v6237
        %v7743 = vunpack.c.h.b16 %v6237
        %v7744 = vunpack.c.l.b16 %v6238
        %v7745 = vunpack.c.h.b16 %v6238
        %v7746 = vunpack.c.l.b16 %v6239
        %v7747 = vunpack.c.h.b16 %v6239
        %v7748 = vunpack.c.l.b16 %v6240
        %v7749 = vunpack.c.h.b16 %v6240
        %v7750 = vunpack.c.l.b16 %v6241
        %v7751 = vunpack.c.h.b16 %v6241
        %v7752 = vunpack.c.l.b16 %v6242
        %v7753 = vunpack.c.h.b16 %v6242
        %v7754 = vunpack.c.l.b16 %v6243
        %v7755 = vunpack.c.h.b16 %v6243
        %v7756 = vunpack.c.l.b16 %v6244
        %v7757 = vunpack.c.h.b16 %v6244
        %v7758 = vunpack.c.l.b16 %v6245
        %v7759 = vunpack.c.h.b16 %v6245
        %v7760 = vunpack.c.l.b16 %v6246
        %v7761 = vunpack.c.h.b16 %v6246
        %v7762 = vunpack.c.l.b16 %v6247
        %v7763 = vunpack.c.h.b16 %v6247
        %v7764 = vunpack.c.l.b16 %v6248
        %v7765 = vunpack.c.h.b16 %v6248
        %v7766 = vunpack.c.l.b16 %v6249
        %v7767 = vunpack.c.h.b16 %v6249
        %v7768 = vunpack.c.l.b16 %v6250
        %v7769 = vunpack.c.h.b16 %v6250
        %v7770 = vunpack.c.l.b16 %v6251
        %v7771 = vunpack.c.h.b16 %v6251
        %v7772 = vunpack.c.l.b16 %v6252
        %v7773 = vunpack.c.h.b16 %v6252
        %v7774 = vunpack.c.l.b16 %v6253
        %v7775 = vunpack.c.h.b16 %v6253
        %v7776 = vunpack.c.l.b16 %v6254
        %v7777 = vunpack.c.h.b16 %v6254
        %v7778 = vunpack.c.l.b16 %v6255
        %v7779 = vunpack.c.h.b16 %v6255
        %v7780 = vunpack.c.l.b16 %v6256
        %v7781 = vunpack.c.h.b16 %v6256
        %v7782 = vunpack.c.l.b16 %v6257
        %v7783 = vunpack.c.h.b16 %v6257
        %v7784 = vunpack.c.l.b16 %v6258
        %v7785 = vunpack.c.h.b16 %v6258
        %v7786 = vunpack.c.l.b16 %v6259
        %v7787 = vunpack.c.h.b16 %v6259
        %v7788 = vunpack.c.l.b16 %v6260
        %v7789 = vunpack.c.h.b16 %v6260
        %v7790 = vunpack.c.l.b16 %v6261
        %v7791 = vunpack.c.h.b16 %v6261
        %v7792 = vunpack.c.l.b16 %v6262
        %v7793 = vunpack.c.h.b16 %v6262
        %v7794 = vunpack.c.l.b16 %v6263
        %v7795 = vunpack.c.h.b16 %v6263
        %v7796 = vunpack.c.l.b16 %v6264
        %v7797 = vunpack.c.h.b16 %v6264
        %v7798 = vunpack.c.l.b16 %v6265
        %v7799 = vunpack.c.h.b16 %v6265
        %v7800 = vunpack.c.l.b16 %v6266
        %v7801 = vunpack.c.h.b16 %v6266
        %v7802 = vunpack.c.l.b16 %v6267
        %v7803 = vunpack.c.h.b16 %v6267
        %v7804 = vunpack.c.l.b16 %v6268
        %v7805 = vunpack.c.h.b16 %v6268
        %v7806 = vunpack.c.l.b16 %v6269
        %v7807 = vunpack.c.h.b16 %v6269
        %v7808 = vunpack.c.l.b16 %v6270
        %v7809 = vunpack.c.h.b16 %v6270
        %v7810 = vunpack.c.l.b16 %v6271
        %v7811 = vunpack.c.h.b16 %v6271
        %v7812 = vunpack.c.l.b16 %v6272
        %v7813 = vunpack.c.h.b16 %v6272
        %v7814 = vunpack.c.l.b16 %v6273
        %v7815 = vunpack.c.h.b16 %v6273
        %v7816 = vunpack.c.l.b16 %v6274
        %v7817 = vunpack.c.h.b16 %v6274
        %v7818 = vunpack.c.l.b16 %v6275
        %v7819 = vunpack.c.h.b16 %v6275
        %v7820 = vunpack.c.l.b16 %v6276
        %v7821 = vunpack.c.h.b16 %v6276
        %v7822 = vunpack.c.l.b16 %v6277
        %v7823 = vunpack.c.h.b16 %v6277
        %v7824 = vunpack.c.l.b16 %v6278
        %v7825 = vunpack.c.h.b16 %v6278
        %v7826 = vunpack.c.l.b16 %v6279
        %v7827 = vunpack.c.h.b16 %v6279
        %v7828 = vunpack.c.l.b16 %v6280
        %v7829 = vunpack.c.h.b16 %v6280
        %v7830 = vunpack.c.l.b16 %v6281
        %v7831 = vunpack.c.h.b16 %v6281
        %v7832 = vunpack.c.l.b16 %v6282
        %v7833 = vunpack.c.h.b16 %v6282
        %v7834 = vunpack.c.l.b16 %v6283
        %v7835 = vunpack.c.h.b16 %v6283
        %v7836 = vunpack.c.l.b16 %v6284
        %v7837 = vunpack.c.h.b16 %v6284
        %v7838 = vunpack.c.l.b16 %v6285
        %v7839 = vunpack.c.h.b16 %v6285
        %v7840 = vunpack.c.l.b16 %v6286
        %v7841 = vunpack.c.h.b16 %v6286
        %v7842 = vunpack.c.l.b16 %v6287
        %v7843 = vunpack.c.h.b16 %v6287
        %v7844 = vunpack.c.l.b16 %v6288
        %v7845 = vunpack.c.h.b16 %v6288
        %v7846 = vunpack.c.l.b16 %v6289
        %v7847 = vunpack.c.h.b16 %v6289
        %v7848 = vunpack.c.l.b16 %v6290
        %v7849 = vunpack.c.h.b16 %v6290
        %v7850 = vunpack.c.l.b16 %v6291
        %v7851 = vunpack.c.h.b16 %v6291
        %v7852 = vunpack.c.l.b16 %v6292
        %v7853 = vunpack.c.h.b16 %v6292
        %v7854 = vunpack.c.l.b16 %v6293
        %v7855 = vunpack.c.h.b16 %v6293
        %v7856 = vunpack.c.l.b16 %v6294
        %v7857 = vunpack.c.h.b16 %v6294
        %v7858 = vunpack.c.l.b16 %v6295
        %v7859 = vunpack.c.h.b16 %v6295
        %v7860 = vunpack.c.l.b16 %v6296
        %v7861 = vunpack.c.h.b16 %v6296
        %v7862 = vunpack.c.l.b16 %v6297
        %v7863 = vunpack.c.h.b16 %v6297
        %v7864 = vunpack.c.l.b16 %v6298
        %v7865 = vunpack.c.h.b16 %v6298
        %v7866 = vunpack.c.l.b16 %v6299
        %v7867 = vunpack.c.h.b16 %v6299
        %v7868 = vunpack.c.l.b16 %v6300
        %v7869 = vunpack.c.h.b16 %v6300
        %v7870 = vunpack.c.l.b16 %v6301
        %v7871 = vunpack.c.h.b16 %v6301
        %v7872 = vunpack.c.l.b16 %v6302
        %v7873 = vunpack.c.h.b16 %v6302
        %v7874 = vunpack.c.l.b16 %v6303
        %v7875 = vunpack.c.h.b16 %v6303
        %v7876 = vunpack.c.l.b16 %v6304
        %v7877 = vunpack.c.h.b16 %v6304
        %v7878 = vunpack.c.l.b16 %v6305
        %v7879 = vunpack.c.h.b16 %v6305
        %v7880 = vunpack.c.l.b16 %v6306
        %v7881 = vunpack.c.h.b16 %v6306
        %v7882 = vunpack.c.l.b16 %v6307
        %v7883 = vunpack.c.h.b16 %v6307
        %v7884 = vunpack.c.l.b16 %v6308
        %v7885 = vunpack.c.h.b16 %v6308
        %v7886 = vunpack.c.l.b16 %v6309
        %v7887 = vunpack.c.h.b16 %v6309
        %v7888 = vpack.c.b16 %v6872, %v6864
        %v7889 = vpack.c.b16 %v6873, %v6865
        %v7890 = vpack.c.b16 %v6874, %v6866
        %v7891 = vpack.c.b16 %v6875, %v6867
        %v7892 = vpack.c.b16 %v6876, %v6868
        %v7893 = vpack.c.b16 %v6877, %v6869
        %v7894 = vpack.c.b16 %v6878, %v6870
        %v7895 = vpack.c.b16 %v6879, %v6871
        %v7896 = vpack.c.b16 %v6888, %v6880
        %v7897 = vpack.c.b16 %v6889, %v6881
        %v7898 = vpack.c.b16 %v6890, %v6882
        %v7899 = vpack.c.b16 %v6891, %v6883
        %v7900 = vpack.c.b16 %v6892, %v6884
        %v7901 = vpack.c.b16 %v6893, %v6885
        %v7902 = vpack.c.b16 %v6894, %v6886
        %v7903 = vpack.c.b16 %v6895, %v6887
        %v7904 = vpack.c.b16 %v6904, %v6896
        %v7905 = vpack.c.b16 %v6905, %v6897
        %v7906 = vpack.c.b16 %v6906, %v6898
        %v7907 = vpack.c.b16 %v6907, %v6899
        %v7908 = vpack.c.b16 %v6908, %v6900
        %v7909 = vpack.c.b16 %v6909, %v6901
        %v7910 = vpack.c.b16 %v6910, %v6902
        %v7911 = vpack.c.b16 %v6911, %v6903
        %v7912 = vpack.c.b16 %v6920, %v6912
        %v7913 = vpack.c.b16 %v6921, %v6913
        %v7914 = vpack.c.b16 %v6922, %v6914
        %v7915 = vpack.c.b16 %v6923, %v6915
        %v7916 = vpack.c.b16 %v6924, %v6916
        %v7917 = vpack.c.b16 %v6925, %v6917
        %v7918 = vpack.c.b16 %v6926, %v6918
        %v7919 = vpack.c.b16 %v6927, %v6919
        %v7920 = vpack.c.b16 %v6936, %v6928
        %v7921 = vpack.c.b16 %v6937, %v6929
        %v7922 = vpack.c.b16 %v6938, %v6930
        %v7923 = vpack.c.b16 %v6939, %v6931
        %v7924 = vpack.c.b16 %v6940, %v6932
        %v7925 = vpack.c.b16 %v6941, %v6933
        %v7926 = vpack.c.b16 %v6942, %v6934
        %v7927 = vpack.c.b16 %v6943, %v6935
        %v7928 = vpack.c.b16 %v6952, %v6944
        %v7929 = vpack.c.b16 %v6953, %v6945
        %v7930 = vpack.c.b16 %v6954, %v6946
        %v7931 = vpack.c.b16 %v6955, %v6947
        %v7932 = vpack.c.b16 %v6956, %v6948
        %v7933 = vpack.c.b16 %v6957, %v6949
        %v7934 = vpack.c.b16 %v6958, %v6950
        %v7935 = vpack.c.b16 %v6959, %v6951
        %v7936 = vpack.c.b16 %v6968, %v6960
        %v7937 = vpack.c.b16 %v6969, %v6961
        %v7938 = vpack.c.b16 %v6970, %v6962
        %v7939 = vpack.c.b16 %v6971, %v6963
        %v7940 = vpack.c.b16 %v6972, %v6964
        %v7941 = vpack.c.b16 %v6973, %v6965
        %v7942 = vpack.c.b16 %v6974, %v6966
        %v7943 = vpack.c.b16 %v6975, %v6967
        %v7944 = vpack.c.b16 %v6984, %v6976
        %v7945 = vpack.c.b16 %v6985, %v6977
        %v7946 = vpack.c.b16 %v6986, %v6978
        %v7947 = vpack.c.b16 %v6987, %v6979
        %v7948 = vpack.c.b16 %v6988, %v6980
        %v7949 = vpack.c.b16 %v6989, %v6981
        %v7950 = vpack.c.b16 %v6990, %v6982
        %v7951 = vpack.c.b16 %v6991, %v6983
        %v7952 = vpack.c.b16 %v7000, %v6992
        %v7953 = vpack.c.b16 %v7001, %v6993
        %v7954 = vpack.c.b16 %v7002, %v6994
        %v7955 = vpack.c.b16 %v7003, %v6995
        %v7956 = vpack.c.b16 %v7004, %v6996
        %v7957 = vpack.c.b16 %v7005, %v6997
        %v7958 = vpack.c.b16 %v7006, %v6998
        %v7959 = vpack.c.b16 %v7007, %v6999
        %v7960 = vpack.c.b16 %v7016, %v7008
        %v7961 = vpack.c.b16 %v7017, %v7009
        %v7962 = vpack.c.b16 %v7018, %v7010
        %v7963 = vpack.c.b16 %v7019, %v7011
        %v7964 = vpack.c.b16 %v7020, %v7012
        %v7965 = vpack.c.b16 %v7021, %v7013
        %v7966 = vpack.c.b16 %v7022, %v7014
        %v7967 = vpack.c.b16 %v7023, %v7015
        %v7968 = vpack.c.b16 %v7032, %v7024
        %v7969 = vpack.c.b16 %v7033, %v7025
        %v7970 = vpack.c.b16 %v7034, %v7026
        %v7971 = vpack.c.b16 %v7035, %v7027
        %v7972 = vpack.c.b16 %v7036, %v7028
        %v7973 = vpack.c.b16 %v7037, %v7029
        %v7974 = vpack.c.b16 %v7038, %v7030
        %v7975 = vpack.c.b16 %v7039, %v7031
        %v7976 = vpack.c.b16 %v7048, %v7040
        %v7977 = vpack.c.b16 %v7049, %v7041
        %v7978 = vpack.c.b16 %v7050, %v7042
        %v7979 = vpack.c.b16 %v7051, %v7043
        %v7980 = vpack.c.b16 %v7052, %v7044
        %v7981 = vpack.c.b16 %v7053, %v7045
        %v7982 = vpack.c.b16 %v7054, %v7046
        %v7983 = vpack.c.b16 %v7055, %v7047
        %v7984 = vpack.c.b16 %v7064, %v7056
        %v7985 = vpack.c.b16 %v7065, %v7057
        %v7986 = vpack.c.b16 %v7066, %v7058
        %v7987 = vpack.c.b16 %v7067, %v7059
        %v7988 = vpack.c.b16 %v7068, %v7060
        %v7989 = vpack.c.b16 %v7069, %v7061
        %v7990 = vpack.c.b16 %v7070, %v7062
        %v7991 = vpack.c.b16 %v7071, %v7063
        %v7992 = vpack.c.b16 %v7080, %v7072
        %v7993 = vpack.c.b16 %v7081, %v7073
        %v7994 = vpack.c.b16 %v7082, %v7074
        %v7995 = vpack.c.b16 %v7083, %v7075
        %v7996 = vpack.c.b16 %v7084, %v7076
        %v7997 = vpack.c.b16 %v7085, %v7077
        %v7998 = vpack.c.b16 %v7086, %v7078
        %v7999 = vpack.c.b16 %v7087, %v7079
        %v8000 = vpack.c.b16 %v7096, %v7088
        %v8001 = vpack.c.b16 %v7097, %v7089
        %v8002 = vpack.c.b16 %v7098, %v7090
        %v8003 = vpack.c.b16 %v7099, %v7091
        %v8004 = vpack.c.b16 %v7100, %v7092
        %v8005 = vpack.c.b16 %v7101, %v7093
        %v8006 = vpack.c.b16 %v7102, %v7094
        %v8007 = vpack.c.b16 %v7103, %v7095
        %v8008 = vpack.c.b16 %v7112, %v7104
        %v8009 = vpack.c.b16 %v7113, %v7105
        %v8010 = vpack.c.b16 %v7114, %v7106
        %v8011 = vpack.c.b16 %v7115, %v7107
        %v8012 = vpack.c.b16 %v7116, %v7108
        %v8013 = vpack.c.b16 %v7117, %v7109
        %v8014 = vpack.c.b16 %v7118, %v7110
        %v8015 = vpack.c.b16 %v7119, %v7111
        %v8016 = vpack.c.b16 %v7128, %v7120
        %v8017 = vpack.c.b16 %v7129, %v7121
        %v8018 = vpack.c.b16 %v7130, %v7122
        %v8019 = vpack.c.b16 %v7131, %v7123
        %v8020 = vpack.c.b16 %v7132, %v7124
        %v8021 = vpack.c.b16 %v7133, %v7125
        %v8022 = vpack.c.b16 %v7134, %v7126
        %v8023 = vpack.c.b16 %v7135, %v7127
        %v8024 = vpack.c.b16 %v7144, %v7136
        %v8025 = vpack.c.b16 %v7145, %v7137
        %v8026 = vpack.c.b16 %v7146, %v7138
        %v8027 = vpack.c.b16 %v7147, %v7139
        %v8028 = vpack.c.b16 %v7148, %v7140
        %v8029 = vpack.c.b16 %v7149, %v7141
        %v8030 = vpack.c.b16 %v7150, %v7142
        %v8031 = vpack.c.b16 %v7151, %v7143
        %v8032 = vpack.c.b16 %v7160, %v7152
        %v8033 = vpack.c.b16 %v7161, %v7153
        %v8034 = vpack.c.b16 %v7162, %v7154
        %v8035 = vpack.c.b16 %v7163, %v7155
        %v8036 = vpack.c.b16 %v7164, %v7156
        %v8037 = vpack.c.b16 %v7165, %v7157
        %v8038 = vpack.c.b16 %v7166, %v7158
        %v8039 = vpack.c.b16 %v7167, %v7159
        %v8040 = vpack.c.b16 %v7176, %v7168
        %v8041 = vpack.c.b16 %v7177, %v7169
        %v8042 = vpack.c.b16 %v7178, %v7170
        %v8043 = vpack.c.b16 %v7179, %v7171
        %v8044 = vpack.c.b16 %v7180, %v7172
        %v8045 = vpack.c.b16 %v7181, %v7173
        %v8046 = vpack.c.b16 %v7182, %v7174
        %v8047 = vpack.c.b16 %v7183, %v7175
        %v8048 = vpack.c.b16 %v7192, %v7184
        %v8049 = vpack.c.b16 %v7193, %v7185
        %v8050 = vpack.c.b16 %v7194, %v7186
        %v8051 = vpack.c.b16 %v7195, %v7187
        %v8052 = vpack.c.b16 %v7196, %v7188
        %v8053 = vpack.c.b16 %v7197, %v7189
        %v8054 = vpack.c.b16 %v7198, %v7190
        %v8055 = vpack.c.b16 %v7199, %v7191
        %v8056 = vpack.c.b16 %v7208, %v7200
        %v8057 = vpack.c.b16 %v7209, %v7201
        %v8058 = vpack.c.b16 %v7210, %v7202
        %v8059 = vpack.c.b16 %v7211, %v7203
        %v8060 = vpack.c.b16 %v7212, %v7204
        %v8061 = vpack.c.b16 %v7213, %v7205
        %v8062 = vpack.c.b16 %v7214, %v7206
        %v8063 = vpack.c.b16 %v7215, %v7207
        %v8064 = vpack.c.b16 %v7224, %v7216
        %v8065 = vpack.c.b16 %v7225, %v7217
        %v8066 = vpack.c.b16 %v7226, %v7218
        %v8067 = vpack.c.b16 %v7227, %v7219
        %v8068 = vpack.c.b16 %v7228, %v7220
        %v8069 = vpack.c.b16 %v7229, %v7221
        %v8070 = vpack.c.b16 %v7230, %v7222
        %v8071 = vpack.c.b16 %v7231, %v7223
        %v8072 = vpack.c.b16 %v7240, %v7232
        %v8073 = vpack.c.b16 %v7241, %v7233
        %v8074 = vpack.c.b16 %v7242, %v7234
        %v8075 = vpack.c.b16 %v7243, %v7235
        %v8076 = vpack.c.b16 %v7244, %v7236
        %v8077 = vpack.c.b16 %v7245, %v7237
        %v8078 = vpack.c.b16 %v7246, %v7238
        %v8079 = vpack.c.b16 %v7247, %v7239
        %v8080 = vpack.c.b16 %v7256, %v7248
        %v8081 = vpack.c.b16 %v7257, %v7249
        %v8082 = vpack.c.b16 %v7258, %v7250
        %v8083 = vpack.c.b16 %v7259, %v7251
        %v8084 = vpack.c.b16 %v7260, %v7252
        %v8085 = vpack.c.b16 %v7261, %v7253
        %v8086 = vpack.c.b16 %v7262, %v7254
        %v8087 = vpack.c.b16 %v7263, %v7255
        %v8088 = vpack.c.b16 %v7272, %v7264
        %v8089 = vpack.c.b16 %v7273, %v7265
        %v8090 = vpack.c.b16 %v7274, %v7266
        %v8091 = vpack.c.b16 %v7275, %v7267
        %v8092 = vpack.c.b16 %v7276, %v7268
        %v8093 = vpack.c.b16 %v7277, %v7269
        %v8094 = vpack.c.b16 %v7278, %v7270
        %v8095 = vpack.c.b16 %v7279, %v7271
        %v8096 = vpack.c.b16 %v7288, %v7280
        %v8097 = vpack.c.b16 %v7289, %v7281
        %v8098 = vpack.c.b16 %v7290, %v7282
        %v8099 = vpack.c.b16 %v7291, %v7283
        %v8100 = vpack.c.b16 %v7292, %v7284
        %v8101 = vpack.c.b16 %v7293, %v7285
        %v8102 = vpack.c.b16 %v7294, %v7286
        %v8103 = vpack.c.b16 %v7295, %v7287
        %v8104 = vpack.c.b16 %v7304, %v7296
        %v8105 = vpack.c.b16 %v7305, %v7297
        %v8106 = vpack.c.b16 %v7306, %v7298
        %v8107 = vpack.c.b16 %v7307, %v7299
        %v8108 = vpack.c.b16 %v7308, %v7300
        %v8109 = vpack.c.b16 %v7309, %v7301
        %v8110 = vpack.c.b16 %v7310, %v7302
        %v8111 = vpack.c.b16 %v7311, %v7303
        %v8112 = vpack.c.b16 %v7320, %v7312
        %v8113 = vpack.c.b16 %v7321, %v7313
        %v8114 = vpack.c.b16 %v7322, %v7314
        %v8115 = vpack.c.b16 %v7323, %v7315
        %v8116 = vpack.c.b16 %v7324, %v7316
        %v8117 = vpack.c.b16 %v7325, %v7317
        %v8118 = vpack.c.b16 %v7326, %v7318
        %v8119 = vpack.c.b16 %v7327, %v7319
        %v8120 = vpack.c.b16 %v7336, %v7328
        %v8121 = vpack.c.b16 %v7337, %v7329
        %v8122 = vpack.c.b16 %v7338, %v7330
        %v8123 = vpack.c.b16 %v7339, %v7331
        %v8124 = vpack.c.b16 %v7340, %v7332
        %v8125 = vpack.c.b16 %v7341, %v7333
        %v8126 = vpack.c.b16 %v7342, %v7334
        %v8127 = vpack.c.b16 %v7343, %v7335
        %v8128 = vpack.c.b16 %v7352, %v7344
        %v8129 = vpack.c.b16 %v7353, %v7345
        %v8130 = vpack.c.b16 %v7354, %v7346
        %v8131 = vpack.c.b16 %v7355, %v7347
        %v8132 = vpack.c.b16 %v7356, %v7348
        %v8133 = vpack.c.b16 %v7357, %v7349
        %v8134 = vpack.c.b16 %v7358, %v7350
        %v8135 = vpack.c.b16 %v7359, %v7351
        %v8136 = vpack.c.b16 %v7368, %v7360
        %v8137 = vpack.c.b16 %v7369, %v7361
        %v8138 = vpack.c.b16 %v7370, %v7362
        %v8139 = vpack.c.b16 %v7371, %v7363
        %v8140 = vpack.c.b16 %v7372, %v7364
        %v8141 = vpack.c.b16 %v7373, %v7365
        %v8142 = vpack.c.b16 %v7374, %v7366
        %v8143 = vpack.c.b16 %v7375, %v7367
        %v8144 = vpack.c.b16 %v7384, %v7376
        %v8145 = vpack.c.b16 %v7385, %v7377
        %v8146 = vpack.c.b16 %v7386, %v7378
        %v8147 = vpack.c.b16 %v7387, %v7379
        %v8148 = vpack.c.b16 %v7388, %v7380
        %v8149 = vpack.c.b16 %v7389, %v7381
        %v8150 = vpack.c.b16 %v7390, %v7382
        %v8151 = vpack.c.b16 %v7391, %v7383
        %v8152 = vpack.c.b16 %v7400, %v7392
        %v8153 = vpack.c.b16 %v7401, %v7393
        %v8154 = vpack.c.b16 %v7402, %v7394
        %v8155 = vpack.c.b16 %v7403, %v7395
        %v8156 = vpack.c.b16 %v7404, %v7396
        %v8157 = vpack.c.b16 %v7405, %v7397
        %v8158 = vpack.c.b16 %v7406, %v7398
        %v8159 = vpack.c.b16 %v7407, %v7399
        %v8160 = vpack.c.b16 %v7416, %v7408
        %v8161 = vpack.c.b16 %v7417, %v7409
        %v8162 = vpack.c.b16 %v7418, %v7410
        %v8163 = vpack.c.b16 %v7419, %v7411
        %v8164 = vpack.c.b16 %v7420, %v7412
        %v8165 = vpack.c.b16 %v7421, %v7413
        %v8166 = vpack.c.b16 %v7422, %v7414
        %v8167 = vpack.c.b16 %v7423, %v7415
        %v8168 = vpack.c.b16 %v7432, %v7424
        %v8169 = vpack.c.b16 %v7433, %v7425
        %v8170 = vpack.c.b16 %v7434, %v7426
        %v8171 = vpack.c.b16 %v7435, %v7427
        %v8172 = vpack.c.b16 %v7436, %v7428
        %v8173 = vpack.c.b16 %v7437, %v7429
        %v8174 = vpack.c.b16 %v7438, %v7430
        %v8175 = vpack.c.b16 %v7439, %v7431
        %v8176 = vpack.c.b16 %v7448, %v7440
        %v8177 = vpack.c.b16 %v7449, %v7441
        %v8178 = vpack.c.b16 %v7450, %v7442
        %v8179 = vpack.c.b16 %v7451, %v7443
        %v8180 = vpack.c.b16 %v7452, %v7444
        %v8181 = vpack.c.b16 %v7453, %v7445
        %v8182 = vpack.c.b16 %v7454, %v7446
        %v8183 = vpack.c.b16 %v7455, %v7447
        %v8184 = vpack.c.b16 %v7464, %v7456
        %v8185 = vpack.c.b16 %v7465, %v7457
        %v8186 = vpack.c.b16 %v7466, %v7458
        %v8187 = vpack.c.b16 %v7467, %v7459
        %v8188 = vpack.c.b16 %v7468, %v7460
        %v8189 = vpack.c.b16 %v7469, %v7461
        %v8190 = vpack.c.b16 %v7470, %v7462
        %v8191 = vpack.c.b16 %v7471, %v7463
        %v8192 = vpack.c.b16 %v7480, %v7472
        %v8193 = vpack.c.b16 %v7481, %v7473
        %v8194 = vpack.c.b16 %v7482, %v7474
        %v8195 = vpack.c.b16 %v7483, %v7475
        %v8196 = vpack.c.b16 %v7484, %v7476
        %v8197 = vpack.c.b16 %v7485, %v7477
        %v8198 = vpack.c.b16 %v7486, %v7478
        %v8199 = vpack.c.b16 %v7487, %v7479
        %v8200 = vpack.c.b16 %v7496, %v7488
        %v8201 = vpack.c.b16 %v7497, %v7489
        %v8202 = vpack.c.b16 %v7498, %v7490
        %v8203 = vpack.c.b16 %v7499, %v7491
        %v8204 = vpack.c.b16 %v7500, %v7492
        %v8205 = vpack.c.b16 %v7501, %v7493
        %v8206 = vpack.c.b16 %v7502, %v7494
        %v8207 = vpack.c.b16 %v7503, %v7495
        %v8208 = vpack.c.b16 %v7512, %v7504
        %v8209 = vpack.c.b16 %v7513, %v7505
        %v8210 = vpack.c.b16 %v7514, %v7506
        %v8211 = vpack.c.b16 %v7515, %v7507
        %v8212 = vpack.c.b16 %v7516, %v7508
        %v8213 = vpack.c.b16 %v7517, %v7509
        %v8214 = vpack.c.b16 %v7518, %v7510
        %v8215 = vpack.c.b16 %v7519, %v7511
        %v8216 = vpack.c.b16 %v7528, %v7520
        %v8217 = vpack.c.b16 %v7529, %v7521
        %v8218 = vpack.c.b16 %v7530, %v7522
        %v8219 = vpack.c.b16 %v7531, %v7523
        %v8220 = vpack.c.b16 %v7532, %v7524
        %v8221 = vpack.c.b16 %v7533, %v7525
        %v8222 = vpack.c.b16 %v7534, %v7526
        %v8223 = vpack.c.b16 %v7535, %v7527
        %v8224 = vpack.c.b16 %v7544, %v7536
        %v8225 = vpack.c.b16 %v7545, %v7537
        %v8226 = vpack.c.b16 %v7546, %v7538
        %v8227 = vpack.c.b16 %v7547, %v7539
        %v8228 = vpack.c.b16 %v7548, %v7540
        %v8229 = vpack.c.b16 %v7549, %v7541
        %v8230 = vpack.c.b16 %v7550, %v7542
        %v8231 = vpack.c.b16 %v7551, %v7543
        %v8232 = vpack.c.b16 %v7560, %v7552
        %v8233 = vpack.c.b16 %v7561, %v7553
        %v8234 = vpack.c.b16 %v7562, %v7554
        %v8235 = vpack.c.b16 %v7563, %v7555
        %v8236 = vpack.c.b16 %v7564, %v7556
        %v8237 = vpack.c.b16 %v7565, %v7557
        %v8238 = vpack.c.b16 %v7566, %v7558
        %v8239 = vpack.c.b16 %v7567, %v7559
        %v8240 = vpack.c.b16 %v7576, %v7568
        %v8241 = vpack.c.b16 %v7577, %v7569
        %v8242 = vpack.c.b16 %v7578, %v7570
        %v8243 = vpack.c.b16 %v7579, %v7571
        %v8244 = vpack.c.b16 %v7580, %v7572
        %v8245 = vpack.c.b16 %v7581, %v7573
        %v8246 = vpack.c.b16 %v7582, %v7574
        %v8247 = vpack.c.b16 %v7583, %v7575
        %v8248 = vpack.c.b16 %v7592, %v7584
        %v8249 = vpack.c.b16 %v7593, %v7585
        %v8250 = vpack.c.b16 %v7594, %v7586
        %v8251 = vpack.c.b16 %v7595, %v7587
        %v8252 = vpack.c.b16 %v7596, %v7588
        %v8253 = vpack.c.b16 %v7597, %v7589
        %v8254 = vpack.c.b16 %v7598, %v7590
        %v8255 = vpack.c.b16 %v7599, %v7591
        %v8256 = vpack.c.b16 %v7608, %v7600
        %v8257 = vpack.c.b16 %v7609, %v7601
        %v8258 = vpack.c.b16 %v7610, %v7602
        %v8259 = vpack.c.b16 %v7611, %v7603
        %v8260 = vpack.c.b16 %v7612, %v7604
        %v8261 = vpack.c.b16 %v7613, %v7605
        %v8262 = vpack.c.b16 %v7614, %v7606
        %v8263 = vpack.c.b16 %v7615, %v7607
        %v8264 = vpack.c.b16 %v7624, %v7616
        %v8265 = vpack.c.b16 %v7625, %v7617
        %v8266 = vpack.c.b16 %v7626, %v7618
        %v8267 = vpack.c.b16 %v7627, %v7619
        %v8268 = vpack.c.b16 %v7628, %v7620
        %v8269 = vpack.c.b16 %v7629, %v7621
        %v8270 = vpack.c.b16 %v7630, %v7622
        %v8271 = vpack.c.b16 %v7631, %v7623
        %v8272 = vpack.c.b16 %v7640, %v7632
        %v8273 = vpack.c.b16 %v7641, %v7633
        %v8274 = vpack.c.b16 %v7642, %v7634
        %v8275 = vpack.c.b16 %v7643, %v7635
        %v8276 = vpack.c.b16 %v7644, %v7636
        %v8277 = vpack.c.b16 %v7645, %v7637
        %v8278 = vpack.c.b16 %v7646, %v7638
        %v8279 = vpack.c.b16 %v7647, %v7639
        %v8280 = vpack.c.b16 %v7656, %v7648
        %v8281 = vpack.c.b16 %v7657, %v7649
        %v8282 = vpack.c.b16 %v7658, %v7650
        %v8283 = vpack.c.b16 %v7659, %v7651
        %v8284 = vpack.c.b16 %v7660, %v7652
        %v8285 = vpack.c.b16 %v7661, %v7653
        %v8286 = vpack.c.b16 %v7662, %v7654
        %v8287 = vpack.c.b16 %v7663, %v7655
        %v8288 = vpack.c.b16 %v7672, %v7664
        %v8289 = vpack.c.b16 %v7673, %v7665
        %v8290 = vpack.c.b16 %v7674, %v7666
        %v8291 = vpack.c.b16 %v7675, %v7667
        %v8292 = vpack.c.b16 %v7676, %v7668
        %v8293 = vpack.c.b16 %v7677, %v7669
        %v8294 = vpack.c.b16 %v7678, %v7670
        %v8295 = vpack.c.b16 %v7679, %v7671
        %v8296 = vpack.c.b16 %v7688, %v7680
        %v8297 = vpack.c.b16 %v7689, %v7681
        %v8298 = vpack.c.b16 %v7690, %v7682
        %v8299 = vpack.c.b16 %v7691, %v7683
        %v8300 = vpack.c.b16 %v7692, %v7684
        %v8301 = vpack.c.b16 %v7693, %v7685
        %v8302 = vpack.c.b16 %v7694, %v7686
        %v8303 = vpack.c.b16 %v7695, %v7687
        %v8304 = vpack.c.b16 %v7704, %v7696
        %v8305 = vpack.c.b16 %v7705, %v7697
        %v8306 = vpack.c.b16 %v7706, %v7698
        %v8307 = vpack.c.b16 %v7707, %v7699
        %v8308 = vpack.c.b16 %v7708, %v7700
        %v8309 = vpack.c.b16 %v7709, %v7701
        %v8310 = vpack.c.b16 %v7710, %v7702
        %v8311 = vpack.c.b16 %v7711, %v7703
        %v8312 = vpack.c.b16 %v7720, %v7712
        %v8313 = vpack.c.b16 %v7721, %v7713
        %v8314 = vpack.c.b16 %v7722, %v7714
        %v8315 = vpack.c.b16 %v7723, %v7715
        %v8316 = vpack.c.b16 %v7724, %v7716
        %v8317 = vpack.c.b16 %v7725, %v7717
        %v8318 = vpack.c.b16 %v7726, %v7718
        %v8319 = vpack.c.b16 %v7727, %v7719
        %v8320 = vpack.c.b16 %v7736, %v7728
        %v8321 = vpack.c.b16 %v7737, %v7729
        %v8322 = vpack.c.b16 %v7738, %v7730
        %v8323 = vpack.c.b16 %v7739, %v7731
        %v8324 = vpack.c.b16 %v7740, %v7732
        %v8325 = vpack.c.b16 %v7741, %v7733
        %v8326 = vpack.c.b16 %v7742, %v7734
        %v8327 = vpack.c.b16 %v7743, %v7735
        %v8328 = vpack.c.b16 %v7752, %v7744
        %v8329 = vpack.c.b16 %v7753, %v7745
        %v8330 = vpack.c.b16 %v7754, %v7746
        %v8331 = vpack.c.b16 %v7755, %v7747
        %v8332 = vpack.c.b16 %v7756, %v7748
        %v8333 = vpack.c.b16 %v7757, %v7749
        %v8334 = vpack.c.b16 %v7758, %v7750
        %v8335 = vpack.c.b16 %v7759, %v7751
        %v8336 = vpack.c.b16 %v7768, %v7760
        %v8337 = vpack.c.b16 %v7769, %v7761
        %v8338 = vpack.c.b16 %v7770, %v7762
        %v8339 = vpack.c.b16 %v7771, %v7763
        %v8340 = vpack.c.b16 %v7772, %v7764
        %v8341 = vpack.c.b16 %v7773, %v7765
        %v8342 = vpack.c.b16 %v7774, %v7766
        %v8343 = vpack.c.b16 %v7775, %v7767
        %v8344 = vpack.c.b16 %v7784, %v7776
        %v8345 = vpack.c.b16 %v7785, %v7777
        %v8346 = vpack.c.b16 %v7786, %v7778
        %v8347 = vpack.c.b16 %v7787, %v7779
        %v8348 = vpack.c.b16 %v7788, %v7780
        %v8349 = vpack.c.b16 %v7789, %v7781
        %v8350 = vpack.c.b16 %v7790, %v7782
        %v8351 = vpack.c.b16 %v7791, %v7783
        %v8352 = vpack.c.b16 %v7800, %v7792
        %v8353 = vpack.c.b16 %v7801, %v7793
        %v8354 = vpack.c.b16 %v7802, %v7794
        %v8355 = vpack.c.b16 %v7803, %v7795
        %v8356 = vpack.c.b16 %v7804, %v7796
        %v8357 = vpack.c.b16 %v7805, %v7797
        %v8358 = vpack.c.b16 %v7806, %v7798
        %v8359 = vpack.c.b16 %v7807, %v7799
        %v8360 = vpack.c.b16 %v7816, %v7808
        %v8361 = vpack.c.b16 %v7817, %v7809
        %v8362 = vpack.c.b16 %v7818, %v7810
        %v8363 = vpack.c.b16 %v7819, %v7811
        %v8364 = vpack.c.b16 %v7820, %v7812
        %v8365 = vpack.c.b16 %v7821, %v7813
        %v8366 = vpack.c.b16 %v7822, %v7814
        %v8367 = vpack.c.b16 %v7823, %v7815
        %v8368 = vpack.c.b16 %v7832, %v7824
        %v8369 = vpack.c.b16 %v7833, %v7825
        %v8370 = vpack.c.b16 %v7834, %v7826
        %v8371 = vpack.c.b16 %v7835, %v7827
        %v8372 = vpack.c.b16 %v7836, %v7828
        %v8373 = vpack.c.b16 %v7837, %v7829
        %v8374 = vpack.c.b16 %v7838, %v7830
        %v8375 = vpack.c.b16 %v7839, %v7831
        %v8376 = vpack.c.b16 %v7848, %v7840
        %v8377 = vpack.c.b16 %v7849, %v7841
        %v8378 = vpack.c.b16 %v7850, %v7842
        %v8379 = vpack.c.b16 %v7851, %v7843
        %v8380 = vpack.c.b16 %v7852, %v7844
        %v8381 = vpack.c.b16 %v7853, %v7845
        %v8382 = vpack.c.b16 %v7854, %v7846
        %v8383 = vpack.c.b16 %v7855, %v7847
        %v8384 = vpack.c.b16 %v7864, %v7856
        %v8385 = vpack.c.b16 %v7865, %v7857
        %v8386 = vpack.c.b16 %v7866, %v7858
        %v8387 = vpack.c.b16 %v7867, %v7859
        %v8388 = vpack.c.b16 %v7868, %v7860
        %v8389 = vpack.c.b16 %v7869, %v7861
        %v8390 = vpack.c.b16 %v7870, %v7862
        %v8391 = vpack.c.b16 %v7871, %v7863
        %v8392 = vpack.c.b16 %v7880, %v7872
        %v8393 = vpack.c.b16 %v7881, %v7873
        %v8394 = vpack.c.b16 %v7882, %v7874
        %v8395 = vpack.c.b16 %v7883, %v7875
        %v8396 = vpack.c.b16 %v7884, %v7876
        %v8397 = vpack.c.b16 %v7885, %v7877
        %v8398 = vpack.c.b16 %v7886, %v7878
        %v8399 = vpack.c.b16 %v7887, %v7879
        %8912 = vmatprep.subr.bf16.mxu0 %v7945
        %8913 = vmatpush1.bf16.msra.mxu0 %v7944
        %8914 = vmatprep.subr.bf16.mxu0 %v7937
        %8915 = vmatpush1.bf16.msra.mxu0 %v7936
        %8916 = vmatprep.subr.bf16.mxu0 %v7929
        %8917 = vmatpush1.bf16.msra.mxu0 %v7928
        %8918 = vmatprep.subr.bf16.mxu0 %v7921
        %8919 = vmatpush1.bf16.msra.mxu0 %v7920
        %8920 = vmatprep.subr.bf16.mxu0 %v7913
        %8921 = vmatpush1.bf16.msra.mxu0 %v7912
        %8922 = vmatprep.subr.bf16.mxu0 %v7905
        %8923 = vmatpush1.bf16.msra.mxu0 %v7904
        %8924 = vmatprep.subr.bf16.mxu0 %v7897
        %8925 = vmatpush1.bf16.msra.mxu0 %v7896
        %8926 = vmatprep.subr.bf16.mxu0 %v7889
        %8927 = vmatpush1.bf16.msra.mxu0 %v7888
        %8928 = vmatprep.subr.bf16.mxu0 %v8009
        %8929 = vmatpush2.bf16.msra.mxu0 %v8008
        %8930 = vmatprep.subr.bf16.mxu0 %v8001
        %8931 = vmatpush2.bf16.msra.mxu0 %v8000
        %8932 = vmatprep.subr.bf16.mxu0 %v7993
        %8933 = vmatpush2.bf16.msra.mxu0 %v7992
        %8934 = vmatprep.subr.bf16.mxu0 %v7985
        %8935 = vmatpush2.bf16.msra.mxu0 %v7984
        %8936 = vmatprep.subr.bf16.mxu0 %v7977
        %8937 = vmatpush2.bf16.msra.mxu0 %v7976
        %8938 = vmatprep.subr.bf16.mxu0 %v7969
        %8939 = vmatpush2.bf16.msra.mxu0 %v7968
        %8940 = vmatprep.subr.bf16.mxu0 %v7961
        %8941 = vmatpush2.bf16.msra.mxu0 %v7960
        %8942 = vmatprep.subr.bf16.mxu0 %v7953
        %8943 = vmatpush2.bf16.msra.mxu0 %v7952
        %8944 = vmatprep.mubr.bf16.mxu0 %v5735
        %8945 = vmatmul.mubr.bf16.gmra.mxu0 %v5734
        %v8946 = vpop.f32.mrf.mxu0
        %v8947 = vadd.f32 %v6315, %v8946
        %v8948 = vpop.f32.mrf.mxu0
        %v8949 = vadd.f32 %v6319, %v8948
        %v8950 = vpop.f32.mrf.mxu0
        %v8951 = vadd.f32 %v6315, %v8950
        %v8952 = vpop.f32.mrf.mxu0
        %v8953 = vadd.f32 %v6319, %v8952
        %8954 = vmatprep.mubr.bf16.mxu0 %v5743
        %8955 = vmatmul.mubr.bf16.gmra.mxu0 %v5742
        %v8956 = vpop.f32.mrf.mxu0
        %v8957 = vadd.f32 %v6315, %v8956
        %v8958 = vpop.f32.mrf.mxu0
        %v8959 = vadd.f32 %v6319, %v8958
        %v8960 = vpop.f32.mrf.mxu0
        %v8961 = vadd.f32 %v6315, %v8960
        %v8962 = vpop.f32.mrf.mxu0
        %v8963 = vadd.f32 %v6319, %v8962
        %8964 = vmatprep.mubr.bf16.mxu0 %v5751
        %8965 = vmatmul.mubr.bf16.gmra.mxu0 %v5750
        %v8966 = vpop.f32.mrf.mxu0
        %v8967 = vadd.f32 %v6315, %v8966
        %v8968 = vpop.f32.mrf.mxu0
        %v8969 = vadd.f32 %v6319, %v8968
        %v8970 = vpop.f32.mrf.mxu0
        %v8971 = vadd.f32 %v6315, %v8970
        %v8972 = vpop.f32.mrf.mxu0
        %v8973 = vadd.f32 %v6319, %v8972
        %8974 = vmatprep.mubr.bf16.mxu0 %v5759
        %8975 = vmatmul.mubr.bf16.gmra.mxu0 %v5758
        %v8976 = vpop.f32.mrf.mxu0
        %v8977 = vadd.f32 %v6315, %v8976
        %v8978 = vpop.f32.mrf.mxu0
        %v8979 = vadd.f32 %v6319, %v8978
        %v8980 = vpop.f32.mrf.mxu0
        %v8981 = vadd.f32 %v6315, %v8980
        %v8982 = vpop.f32.mrf.mxu0
        %v8983 = vadd.f32 %v6319, %v8982
        %8984 = vmatprep.mubr.bf16.mxu0 %v5767
        %8985 = vmatmul.mubr.bf16.gmra.mxu0 %v5766
        %v8986 = vpop.f32.mrf.mxu0
        %v8987 = vadd.f32 %v6315, %v8986
        %v8988 = vpop.f32.mrf.mxu0
        %v8989 = vadd.f32 %v6319, %v8988
        %v8990 = vpop.f32.mrf.mxu0
        %v8991 = vadd.f32 %v6315, %v8990
        %v8992 = vpop.f32.mrf.mxu0
        %v8993 = vadd.f32 %v6319, %v8992
        %8994 = vmatprep.mubr.bf16.mxu0 %v5775
        %8995 = vmatmul.mubr.bf16.gmra.mxu0 %v5774
        %v8996 = vpop.f32.mrf.mxu0
        %v8997 = vadd.f32 %v6315, %v8996
        %v8998 = vpop.f32.mrf.mxu0
        %v8999 = vadd.f32 %v6319, %v8998
        %v9000 = vpop.f32.mrf.mxu0
        %v9001 = vadd.f32 %v6315, %v9000
        %v9002 = vpop.f32.mrf.mxu0
        %v9003 = vadd.f32 %v6319, %v9002
        %9004 = vmatprep.mubr.bf16.mxu0 %v5783
        %9005 = vmatmul.mubr.bf16.gmra.mxu0 %v5782
        %v9006 = vpop.f32.mrf.mxu0
        %v9007 = vadd.f32 %v6315, %v9006
        %v9008 = vpop.f32.mrf.mxu0
        %v9009 = vadd.f32 %v6319, %v9008
        %v9010 = vpop.f32.mrf.mxu0
        %v9011 = vadd.f32 %v6315, %v9010
        %v9012 = vpop.f32.mrf.mxu0
        %v9013 = vadd.f32 %v6319, %v9012
        %9014 = vmatprep.mubr.bf16.mxu0 %v5791
        %9015 = vmatmul.mubr.bf16.gmra.mxu0 %v5790
        %v9016 = vpop.f32.mrf.mxu0
        %v9017 = vadd.f32 %v6315, %v9016
        %v9018 = vpop.f32.mrf.mxu0
        %v9019 = vadd.f32 %v6319, %v9018
        %v9020 = vpop.f32.mrf.mxu0
        %v9021 = vadd.f32 %v6315, %v9020
        %v9022 = vpop.f32.mrf.mxu0
        %v9023 = vadd.f32 %v6319, %v9022
        %9024 = vdwg.mxu0
        %9025 = vmatprep.subr.bf16.mxu0 %v8073
        %9026 = vmatpush1.bf16.msra.mxu0 %v8072
        %9027 = vmatprep.subr.bf16.mxu0 %v8065
        %9028 = vmatpush1.bf16.msra.mxu0 %v8064
        %9029 = vmatprep.subr.bf16.mxu0 %v8057
        %9030 = vmatpush1.bf16.msra.mxu0 %v8056
        %9031 = vmatprep.subr.bf16.mxu0 %v8049
        %9032 = vmatpush1.bf16.msra.mxu0 %v8048
        %9033 = vmatprep.subr.bf16.mxu0 %v8041
        %9034 = vmatpush1.bf16.msra.mxu0 %v8040
        %9035 = vmatprep.subr.bf16.mxu0 %v8033
        %9036 = vmatpush1.bf16.msra.mxu0 %v8032
        %9037 = vmatprep.subr.bf16.mxu0 %v8025
        %9038 = vmatpush1.bf16.msra.mxu0 %v8024
        %9039 = vmatprep.subr.bf16.mxu0 %v8017
        %9040 = vmatpush1.bf16.msra.mxu0 %v8016
        %9041 = vmatprep.subr.bf16.mxu0 %v8137
        %9042 = vmatpush2.bf16.msra.mxu0 %v8136
        %9043 = vmatprep.subr.bf16.mxu0 %v8129
        %9044 = vmatpush2.bf16.msra.mxu0 %v8128
        %9045 = vmatprep.subr.bf16.mxu0 %v8121
        %9046 = vmatpush2.bf16.msra.mxu0 %v8120
        %9047 = vmatprep.subr.bf16.mxu0 %v8113
        %9048 = vmatpush2.bf16.msra.mxu0 %v8112
        %9049 = vmatprep.subr.bf16.mxu0 %v8105
        %9050 = vmatpush2.bf16.msra.mxu0 %v8104
        %9051 = vmatprep.subr.bf16.mxu0 %v8097
        %9052 = vmatpush2.bf16.msra.mxu0 %v8096
        %9053 = vmatprep.subr.bf16.mxu0 %v8089
        %9054 = vmatpush2.bf16.msra.mxu0 %v8088
        %9055 = vmatprep.subr.bf16.mxu0 %v8081
        %9056 = vmatpush2.bf16.msra.mxu0 %v8080
        %9057 = vmatprep.mubr.bf16.mxu0 %v5737
        %9058 = vmatmul.mubr.bf16.gmra.mxu0 %v5736
        %v9059 = vpop.f32.mrf.mxu0
        %v9060 = vadd.f32 %v8947, %v9059
        %v9061 = vpop.f32.mrf.mxu0
        %v9062 = vadd.f32 %v8949, %v9061
        %v9063 = vpop.f32.mrf.mxu0
        %v9064 = vadd.f32 %v8951, %v9063
        %v9065 = vpop.f32.mrf.mxu0
        %v9066 = vadd.f32 %v8953, %v9065
        %9067 = vmatprep.mubr.bf16.mxu0 %v5745
        %9068 = vmatmul.mubr.bf16.gmra.mxu0 %v5744
        %v9069 = vpop.f32.mrf.mxu0
        %v9070 = vadd.f32 %v8957, %v9069
        %v9071 = vpop.f32.mrf.mxu0
        %v9072 = vadd.f32 %v8959, %v9071
        %v9073 = vpop.f32.mrf.mxu0
        %v9074 = vadd.f32 %v8961, %v9073
        %v9075 = vpop.f32.mrf.mxu0
        %v9076 = vadd.f32 %v8963, %v9075
        %9077 = vmatprep.mubr.bf16.mxu0 %v5753
        %9078 = vmatmul.mubr.bf16.gmra.mxu0 %v5752
        %v9079 = vpop.f32.mrf.mxu0
        %v9080 = vadd.f32 %v8967, %v9079
        %v9081 = vpop.f32.mrf.mxu0
        %v9082 = vadd.f32 %v8969, %v9081
        %v9083 = vpop.f32.mrf.mxu0
        %v9084 = vadd.f32 %v8971, %v9083
        %v9085 = vpop.f32.mrf.mxu0
        %v9086 = vadd.f32 %v8973, %v9085
        %9087 = vmatprep.mubr.bf16.mxu0 %v5761
        %9088 = vmatmul.mubr.bf16.gmra.mxu0 %v5760
        %v9089 = vpop.f32.mrf.mxu0
        %v9090 = vadd.f32 %v8977, %v9089
        %v9091 = vpop.f32.mrf.mxu0
        %v9092 = vadd.f32 %v8979, %v9091
        %v9093 = vpop.f32.mrf.mxu0
        %v9094 = vadd.f32 %v8981, %v9093
        %v9095 = vpop.f32.mrf.mxu0
        %v9096 = vadd.f32 %v8983, %v9095
        %9097 = vmatprep.mubr.bf16.mxu0 %v5769
        %9098 = vmatmul.mubr.bf16.gmra.mxu0 %v5768
        %v9099 = vpop.f32.mrf.mxu0
        %v9100 = vadd.f32 %v8987, %v9099
        %v9101 = vpop.f32.mrf.mxu0
        %v9102 = vadd.f32 %v8989, %v9101
        %v9103 = vpop.f32.mrf.mxu0
        %v9104 = vadd.f32 %v8991, %v9103
        %v9105 = vpop.f32.mrf.mxu0
        %v9106 = vadd.f32 %v8993, %v9105
        %9107 = vmatprep.mubr.bf16.mxu0 %v5777
        %9108 = vmatmul.mubr.bf16.gmra.mxu0 %v5776
        %v9109 = vpop.f32.mrf.mxu0
        %v9110 = vadd.f32 %v8997, %v9109
        %v9111 = vpop.f32.mrf.mxu0
        %v9112 = vadd.f32 %v8999, %v9111
        %v9113 = vpop.f32.mrf.mxu0
        %v9114 = vadd.f32 %v9001, %v9113
        %v9115 = vpop.f32.mrf.mxu0
        %v9116 = vadd.f32 %v9003, %v9115
        %9117 = vmatprep.mubr.bf16.mxu0 %v5785
        %9118 = vmatmul.mubr.bf16.gmra.mxu0 %v5784
        %v9119 = vpop.f32.mrf.mxu0
        %v9120 = vadd.f32 %v9007, %v9119
        %v9121 = vpop.f32.mrf.mxu0
        %v9122 = vadd.f32 %v9009, %v9121
        %v9123 = vpop.f32.mrf.mxu0
        %v9124 = vadd.f32 %v9011, %v9123
        %v9125 = vpop.f32.mrf.mxu0
        %v9126 = vadd.f32 %v9013, %v9125
        %9127 = vmatprep.mubr.bf16.mxu0 %v5793
        %9128 = vmatmul.mubr.bf16.gmra.mxu0 %v5792
        %v9129 = vpop.f32.mrf.mxu0
        %v9130 = vadd.f32 %v9017, %v9129
        %v9131 = vpop.f32.mrf.mxu0
        %v9132 = vadd.f32 %v9019, %v9131
        %v9133 = vpop.f32.mrf.mxu0
        %v9134 = vadd.f32 %v9021, %v9133
        %v9135 = vpop.f32.mrf.mxu0
        %v9136 = vadd.f32 %v9023, %v9135
        %9137 = vdwg.mxu0
        %9138 = vmatprep.subr.bf16.mxu0 %v8201
        %9139 = vmatpush1.bf16.msra.mxu0 %v8200
        %9140 = vmatprep.subr.bf16.mxu0 %v8193
        %9141 = vmatpush1.bf16.msra.mxu0 %v8192
        %9142 = vmatprep.subr.bf16.mxu0 %v8185
        %9143 = vmatpush1.bf16.msra.mxu0 %v8184
        %9144 = vmatprep.subr.bf16.mxu0 %v8177
        %9145 = vmatpush1.bf16.msra.mxu0 %v8176
        %9146 = vmatprep.subr.bf16.mxu0 %v8169
        %9147 = vmatpush1.bf16.msra.mxu0 %v8168
        %9148 = vmatprep.subr.bf16.mxu0 %v8161
        %9149 = vmatpush1.bf16.msra.mxu0 %v8160
        %9150 = vmatprep.subr.bf16.mxu0 %v8153
        %9151 = vmatpush1.bf16.msra.mxu0 %v8152
        %9152 = vmatprep.subr.bf16.mxu0 %v8145
        %9153 = vmatpush1.bf16.msra.mxu0 %v8144
        %9154 = vmatprep.subr.bf16.mxu0 %v8265
        %9155 = vmatpush2.bf16.msra.mxu0 %v8264
        %9156 = vmatprep.subr.bf16.mxu0 %v8257
        %9157 = vmatpush2.bf16.msra.mxu0 %v8256
        %9158 = vmatprep.subr.bf16.mxu0 %v8249
        %9159 = vmatpush2.bf16.msra.mxu0 %v8248
        %9160 = vmatprep.subr.bf16.mxu0 %v8241
        %9161 = vmatpush2.bf16.msra.mxu0 %v8240
        %9162 = vmatprep.subr.bf16.mxu0 %v8233
        %9163 = vmatpush2.bf16.msra.mxu0 %v8232
        %9164 = vmatprep.subr.bf16.mxu0 %v8225
        %9165 = vmatpush2.bf16.msra.mxu0 %v8224
        %9166 = vmatprep.subr.bf16.mxu0 %v8217
        %9167 = vmatpush2.bf16.msra.mxu0 %v8216
        %9168 = vmatprep.subr.bf16.mxu0 %v8209
        %9169 = vmatpush2.bf16.msra.mxu0 %v8208
        %9170 = vmatprep.mubr.bf16.mxu0 %v5739
        %9171 = vmatmul.mubr.bf16.gmra.mxu0 %v5738
        %v9172 = vpop.f32.mrf.mxu0
        %v9173 = vadd.f32 %v9060, %v9172
        %v9174 = vpop.f32.mrf.mxu0
        %v9175 = vadd.f32 %v9062, %v9174
        %v9176 = vpop.f32.mrf.mxu0
        %v9177 = vadd.f32 %v9064, %v9176
        %v9178 = vpop.f32.mrf.mxu0
        %v9179 = vadd.f32 %v9066, %v9178
        %9180 = vmatprep.mubr.bf16.mxu0 %v5747
        %9181 = vmatmul.mubr.bf16.gmra.mxu0 %v5746
        %v9182 = vpop.f32.mrf.mxu0
        %v9183 = vadd.f32 %v9070, %v9182
        %v9184 = vpop.f32.mrf.mxu0
        %v9185 = vadd.f32 %v9072, %v9184
        %v9186 = vpop.f32.mrf.mxu0
        %v9187 = vadd.f32 %v9074, %v9186
        %v9188 = vpop.f32.mrf.mxu0
        %v9189 = vadd.f32 %v9076, %v9188
        %9190 = vmatprep.mubr.bf16.mxu0 %v5755
        %9191 = vmatmul.mubr.bf16.gmra.mxu0 %v5754
        %v9192 = vpop.f32.mrf.mxu0
        %v9193 = vadd.f32 %v9080, %v9192
        %v9194 = vpop.f32.mrf.mxu0
        %v9195 = vadd.f32 %v9082, %v9194
        %v9196 = vpop.f32.mrf.mxu0
        %v9197 = vadd.f32 %v9084, %v9196
        %v9198 = vpop.f32.mrf.mxu0
        %v9199 = vadd.f32 %v9086, %v9198
        %9200 = vmatprep.mubr.bf16.mxu0 %v5763
        %9201 = vmatmul.mubr.bf16.gmra.mxu0 %v5762
        %v9202 = vpop.f32.mrf.mxu0
        %v9203 = vadd.f32 %v9090, %v9202
        %v9204 = vpop.f32.mrf.mxu0
        %v9205 = vadd.f32 %v9092, %v9204
        %v9206 = vpop.f32.mrf.mxu0
        %v9207 = vadd.f32 %v9094, %v9206
        %v9208 = vpop.f32.mrf.mxu0
        %v9209 = vadd.f32 %v9096, %v9208
        %9210 = vmatprep.mubr.bf16.mxu0 %v5771
        %9211 = vmatmul.mubr.bf16.gmra.mxu0 %v5770
        %v9212 = vpop.f32.mrf.mxu0
        %v9213 = vadd.f32 %v9100, %v9212
        %v9214 = vpop.f32.mrf.mxu0
        %v9215 = vadd.f32 %v9102, %v9214
        %v9216 = vpop.f32.mrf.mxu0
        %v9217 = vadd.f32 %v9104, %v9216
        %v9218 = vpop.f32.mrf.mxu0
        %v9219 = vadd.f32 %v9106, %v9218
        %9220 = vmatprep.mubr.bf16.mxu0 %v5779
        %9221 = vmatmul.mubr.bf16.gmra.mxu0 %v5778
        %v9222 = vpop.f32.mrf.mxu0
        %v9223 = vadd.f32 %v9110, %v9222
        %v9224 = vpop.f32.mrf.mxu0
        %v9225 = vadd.f32 %v9112, %v9224
        %v9226 = vpop.f32.mrf.mxu0
        %v9227 = vadd.f32 %v9114, %v9226
        %v9228 = vpop.f32.mrf.mxu0
        %v9229 = vadd.f32 %v9116, %v9228
        %9230 = vmatprep.mubr.bf16.mxu0 %v5787
        %9231 = vmatmul.mubr.bf16.gmra.mxu0 %v5786
        %v9232 = vpop.f32.mrf.mxu0
        %v9233 = vadd.f32 %v9120, %v9232
        %v9234 = vpop.f32.mrf.mxu0
        %v9235 = vadd.f32 %v9122, %v9234
        %v9236 = vpop.f32.mrf.mxu0
        %v9237 = vadd.f32 %v9124, %v9236
        %v9238 = vpop.f32.mrf.mxu0
        %v9239 = vadd.f32 %v9126, %v9238
        %9240 = vmatprep.mubr.bf16.mxu0 %v5795
        %9241 = vmatmul.mubr.bf16.gmra.mxu0 %v5794
        %v9242 = vpop.f32.mrf.mxu0
        %v9243 = vadd.f32 %v9130, %v9242
        %v9244 = vpop.f32.mrf.mxu0
        %v9245 = vadd.f32 %v9132, %v9244
        %v9246 = vpop.f32.mrf.mxu0
        %v9247 = vadd.f32 %v9134, %v9246
        %v9248 = vpop.f32.mrf.mxu0
        %v9249 = vadd.f32 %v9136, %v9248
        %9250 = vdwg.mxu0
        %9251 = vmatprep.subr.bf16.mxu0 %v8329
        %9252 = vmatpush1.bf16.msra.mxu0 %v8328
        %9253 = vmatprep.subr.bf16.mxu0 %v8321
        %9254 = vmatpush1.bf16.msra.mxu0 %v8320
        %9255 = vmatprep.subr.bf16.mxu0 %v8313
        %9256 = vmatpush1.bf16.msra.mxu0 %v8312
        %9257 = vmatprep.subr.bf16.mxu0 %v8305
        %9258 = vmatpush1.bf16.msra.mxu0 %v8304
        %9259 = vmatprep.subr.bf16.mxu0 %v8297
        %9260 = vmatpush1.bf16.msra.mxu0 %v8296
        %9261 = vmatprep.subr.bf16.mxu0 %v8289
        %9262 = vmatpush1.bf16.msra.mxu0 %v8288
        %9263 = vmatprep.subr.bf16.mxu0 %v8281
        %9264 = vmatpush1.bf16.msra.mxu0 %v8280
        %9265 = vmatprep.subr.bf16.mxu0 %v8273
        %9266 = vmatpush1.bf16.msra.mxu0 %v8272
        %9267 = vmatprep.subr.bf16.mxu0 %v8393
        %9268 = vmatpush2.bf16.msra.mxu0 %v8392
        %9269 = vmatprep.subr.bf16.mxu0 %v8385
        %9270 = vmatpush2.bf16.msra.mxu0 %v8384
        %9271 = vmatprep.subr.bf16.mxu0 %v8377
        %9272 = vmatpush2.bf16.msra.mxu0 %v8376
        %9273 = vmatprep.subr.bf16.mxu0 %v8369
        %9274 = vmatpush2.bf16.msra.mxu0 %v8368
        %9275 = vmatprep.subr.bf16.mxu0 %v8361
        %9276 = vmatpush2.bf16.msra.mxu0 %v8360
        %9277 = vmatprep.subr.bf16.mxu0 %v8353
        %9278 = vmatpush2.bf16.msra.mxu0 %v8352
        %9279 = vmatprep.subr.bf16.mxu0 %v8345
        %9280 = vmatpush2.bf16.msra.mxu0 %v8344
        %9281 = vmatprep.subr.bf16.mxu0 %v8337
        %9282 = vmatpush2.bf16.msra.mxu0 %v8336
        %9283 = vmatprep.mubr.bf16.mxu0 %v5741
        %9284 = vmatmul.mubr.bf16.gmra.mxu0 %v5740
        %v9285 = vpop.f32.mrf.mxu0
        %v9286 = vadd.f32 %v9173, %v9285
        %v9287 = vpop.f32.mrf.mxu0
        %v9288 = vadd.f32 %v9175, %v9287
        %v9289 = vpop.f32.mrf.mxu0
        %v9290 = vadd.f32 %v9177, %v9289
        %v9291 = vpop.f32.mrf.mxu0
        %v9292 = vadd.f32 %v9179, %v9291
        %9293 = vmatprep.mubr.bf16.mxu0 %v5749
        %9294 = vmatmul.mubr.bf16.gmra.mxu0 %v5748
        %v9295 = vpop.f32.mrf.mxu0
        %v9296 = vadd.f32 %v9183, %v9295
        %v9297 = vpop.f32.mrf.mxu0
        %v9298 = vadd.f32 %v9185, %v9297
        %v9299 = vpop.f32.mrf.mxu0
        %v9300 = vadd.f32 %v9187, %v9299
        %v9301 = vpop.f32.mrf.mxu0
        %v9302 = vadd.f32 %v9189, %v9301
        %9303 = vmatprep.mubr.bf16.mxu0 %v5757
        %9304 = vmatmul.mubr.bf16.gmra.mxu0 %v5756
        %v9305 = vpop.f32.mrf.mxu0
        %v9306 = vadd.f32 %v9193, %v9305
        %v9307 = vpop.f32.mrf.mxu0
        %v9308 = vadd.f32 %v9195, %v9307
        %v9309 = vpop.f32.mrf.mxu0
        %v9310 = vadd.f32 %v9197, %v9309
        %v9311 = vpop.f32.mrf.mxu0
        %v9312 = vadd.f32 %v9199, %v9311
        %9313 = vmatprep.mubr.bf16.mxu0 %v5765
        %9314 = vmatmul.mubr.bf16.gmra.mxu0 %v5764
        %v9315 = vpop.f32.mrf.mxu0
        %v9316 = vadd.f32 %v9203, %v9315
        %v9317 = vpop.f32.mrf.mxu0
        %v9318 = vadd.f32 %v9205, %v9317
        %v9319 = vpop.f32.mrf.mxu0
        %v9320 = vadd.f32 %v9207, %v9319
        %v9321 = vpop.f32.mrf.mxu0
        %v9322 = vadd.f32 %v9209, %v9321
        %9323 = vmatprep.mubr.bf16.mxu0 %v5773
        %9324 = vmatmul.mubr.bf16.gmra.mxu0 %v5772
        %v9325 = vpop.f32.mrf.mxu0
        %v9326 = vadd.f32 %v9213, %v9325
        %v9327 = vpop.f32.mrf.mxu0
        %v9328 = vadd.f32 %v9215, %v9327
        %v9329 = vpop.f32.mrf.mxu0
        %v9330 = vadd.f32 %v9217, %v9329
        %v9331 = vpop.f32.mrf.mxu0
        %v9332 = vadd.f32 %v9219, %v9331
        %9333 = vmatprep.mubr.bf16.mxu0 %v5781
        %9334 = vmatmul.mubr.bf16.gmra.mxu0 %v5780
        %v9335 = vpop.f32.mrf.mxu0
        %v9336 = vadd.f32 %v9223, %v9335
        %v9337 = vpop.f32.mrf.mxu0
        %v9338 = vadd.f32 %v9225, %v9337
        %v9339 = vpop.f32.mrf.mxu0
        %v9340 = vadd.f32 %v9227, %v9339
        %v9341 = vpop.f32.mrf.mxu0
        %v9342 = vadd.f32 %v9229, %v9341
        %9343 = vmatprep.mubr.bf16.mxu0 %v5789
        %9344 = vmatmul.mubr.bf16.gmra.mxu0 %v5788
        %v9345 = vpop.f32.mrf.mxu0
        %v9346 = vadd.f32 %v9233, %v9345
        %v9347 = vpop.f32.mrf.mxu0
        %v9348 = vadd.f32 %v9235, %v9347
        %v9349 = vpop.f32.mrf.mxu0
        %v9350 = vadd.f32 %v9237, %v9349
        %v9351 = vpop.f32.mrf.mxu0
        %v9352 = vadd.f32 %v9239, %v9351
        %9353 = vmatprep.mubr.bf16.mxu0 %v5797
        %9354 = vmatmul.mubr.bf16.gmra.mxu0 %v5796
        %v9355 = vpop.f32.mrf.mxu0
        %v9356 = vadd.f32 %v9243, %v9355
        %v9357 = vpop.f32.mrf.mxu0
        %v9358 = vadd.f32 %v9245, %v9357
        %v9359 = vpop.f32.mrf.mxu0
        %v9360 = vadd.f32 %v9247, %v9359
        %v9361 = vpop.f32.mrf.mxu0
        %v9362 = vadd.f32 %v9249, %v9361
        %9363 = vdwg.mxu0
        %9364 = vmatprep.subr.bf16.mxu0 %v7947
        %9365 = vmatpush1.bf16.msra.mxu0 %v7946
        %9366 = vmatprep.subr.bf16.mxu0 %v7939
        %9367 = vmatpush1.bf16.msra.mxu0 %v7938
        %9368 = vmatprep.subr.bf16.mxu0 %v7931
        %9369 = vmatpush1.bf16.msra.mxu0 %v7930
        %9370 = vmatprep.subr.bf16.mxu0 %v7923
        %9371 = vmatpush1.bf16.msra.mxu0 %v7922
        %9372 = vmatprep.subr.bf16.mxu0 %v7915
        %9373 = vmatpush1.bf16.msra.mxu0 %v7914
        %9374 = vmatprep.subr.bf16.mxu0 %v7907
        %9375 = vmatpush1.bf16.msra.mxu0 %v7906
        %9376 = vmatprep.subr.bf16.mxu0 %v7899
        %9377 = vmatpush1.bf16.msra.mxu0 %v7898
        %9378 = vmatprep.subr.bf16.mxu0 %v7891
        %9379 = vmatpush1.bf16.msra.mxu0 %v7890
        %9380 = vmatprep.subr.bf16.mxu0 %v8011
        %9381 = vmatpush2.bf16.msra.mxu0 %v8010
        %9382 = vmatprep.subr.bf16.mxu0 %v8003
        %9383 = vmatpush2.bf16.msra.mxu0 %v8002
        %9384 = vmatprep.subr.bf16.mxu0 %v7995
        %9385 = vmatpush2.bf16.msra.mxu0 %v7994
        %9386 = vmatprep.subr.bf16.mxu0 %v7987
        %9387 = vmatpush2.bf16.msra.mxu0 %v7986
        %9388 = vmatprep.subr.bf16.mxu0 %v7979
        %9389 = vmatpush2.bf16.msra.mxu0 %v7978
        %9390 = vmatprep.subr.bf16.mxu0 %v7971
        %9391 = vmatpush2.bf16.msra.mxu0 %v7970
        %9392 = vmatprep.subr.bf16.mxu0 %v7963
        %9393 = vmatpush2.bf16.msra.mxu0 %v7962
        %9394 = vmatprep.subr.bf16.mxu0 %v7955
        %9395 = vmatpush2.bf16.msra.mxu0 %v7954
        %9396 = vmatprep.mubr.bf16.mxu0 %v5735
        %9397 = vmatmul.mubr.bf16.gmra.mxu0 %v5734
        %v9398 = vpop.f32.mrf.mxu0
        %v9399 = vadd.f32 %v6323, %v9398
        %v9400 = vpop.f32.mrf.mxu0
        %v9401 = vadd.f32 %v6327, %v9400
        %v9402 = vpop.f32.mrf.mxu0
        %v9403 = vadd.f32 %v6323, %v9402
        %v9404 = vpop.f32.mrf.mxu0
        %v9405 = vadd.f32 %v6327, %v9404
        %9406 = vmatprep.mubr.bf16.mxu0 %v5743
        %9407 = vmatmul.mubr.bf16.gmra.mxu0 %v5742
        %v9408 = vpop.f32.mrf.mxu0
        %v9409 = vadd.f32 %v6323, %v9408
        %v9410 = vpop.f32.mrf.mxu0
        %v9411 = vadd.f32 %v6327, %v9410
        %v9412 = vpop.f32.mrf.mxu0
        %v9413 = vadd.f32 %v6323, %v9412
        %v9414 = vpop.f32.mrf.mxu0
        %v9415 = vadd.f32 %v6327, %v9414
        %9416 = vmatprep.mubr.bf16.mxu0 %v5751
        %9417 = vmatmul.mubr.bf16.gmra.mxu0 %v5750
        %v9418 = vpop.f32.mrf.mxu0
        %v9419 = vadd.f32 %v6323, %v9418
        %v9420 = vpop.f32.mrf.mxu0
        %v9421 = vadd.f32 %v6327, %v9420
        %v9422 = vpop.f32.mrf.mxu0
        %v9423 = vadd.f32 %v6323, %v9422
        %v9424 = vpop.f32.mrf.mxu0
        %v9425 = vadd.f32 %v6327, %v9424
        %9426 = vmatprep.mubr.bf16.mxu0 %v5759
        %9427 = vmatmul.mubr.bf16.gmra.mxu0 %v5758
        %v9428 = vpop.f32.mrf.mxu0
        %v9429 = vadd.f32 %v6323, %v9428
        %v9430 = vpop.f32.mrf.mxu0
        %v9431 = vadd.f32 %v6327, %v9430
        %v9432 = vpop.f32.mrf.mxu0
        %v9433 = vadd.f32 %v6323, %v9432
        %v9434 = vpop.f32.mrf.mxu0
        %v9435 = vadd.f32 %v6327, %v9434
        %9436 = vmatprep.mubr.bf16.mxu0 %v5767
        %9437 = vmatmul.mubr.bf16.gmra.mxu0 %v5766
        %v9438 = vpop.f32.mrf.mxu0
        %v9439 = vadd.f32 %v6323, %v9438
        %v9440 = vpop.f32.mrf.mxu0
        %v9441 = vadd.f32 %v6327, %v9440
        %v9442 = vpop.f32.mrf.mxu0
        %v9443 = vadd.f32 %v6323, %v9442
        %v9444 = vpop.f32.mrf.mxu0
        %v9445 = vadd.f32 %v6327, %v9444
        %9446 = vmatprep.mubr.bf16.mxu0 %v5775
        %9447 = vmatmul.mubr.bf16.gmra.mxu0 %v5774
        %v9448 = vpop.f32.mrf.mxu0
        %v9449 = vadd.f32 %v6323, %v9448
        %v9450 = vpop.f32.mrf.mxu0
        %v9451 = vadd.f32 %v6327, %v9450
        %v9452 = vpop.f32.mrf.mxu0
        %v9453 = vadd.f32 %v6323, %v9452
        %v9454 = vpop.f32.mrf.mxu0
        %v9455 = vadd.f32 %v6327, %v9454
        %9456 = vmatprep.mubr.bf16.mxu0 %v5783
        %9457 = vmatmul.mubr.bf16.gmra.mxu0 %v5782
        %v9458 = vpop.f32.mrf.mxu0
        %v9459 = vadd.f32 %v6323, %v9458
        %v9460 = vpop.f32.mrf.mxu0
        %v9461 = vadd.f32 %v6327, %v9460
        %v9462 = vpop.f32.mrf.mxu0
        %v9463 = vadd.f32 %v6323, %v9462
        %v9464 = vpop.f32.mrf.mxu0
        %v9465 = vadd.f32 %v6327, %v9464
        %9466 = vmatprep.mubr.bf16.mxu0 %v5791
        %9467 = vmatmul.mubr.bf16.gmra.mxu0 %v5790
        %v9468 = vpop.f32.mrf.mxu0
        %v9469 = vadd.f32 %v6323, %v9468
        %v9470 = vpop.f32.mrf.mxu0
        %v9471 = vadd.f32 %v6327, %v9470
        %v9472 = vpop.f32.mrf.mxu0
        %v9473 = vadd.f32 %v6323, %v9472
        %v9474 = vpop.f32.mrf.mxu0
        %v9475 = vadd.f32 %v6327, %v9474
        %9476 = vdwg.mxu0
        %9477 = vmatprep.subr.bf16.mxu0 %v8075
        %9478 = vmatpush1.bf16.msra.mxu0 %v8074
        %9479 = vmatprep.subr.bf16.mxu0 %v8067
        %9480 = vmatpush1.bf16.msra.mxu0 %v8066
        %9481 = vmatprep.subr.bf16.mxu0 %v8059
        %9482 = vmatpush1.bf16.msra.mxu0 %v8058
        %9483 = vmatprep.subr.bf16.mxu0 %v8051
        %9484 = vmatpush1.bf16.msra.mxu0 %v8050
        %9485 = vmatprep.subr.bf16.mxu0 %v8043
        %9486 = vmatpush1.bf16.msra.mxu0 %v8042
        %9487 = vmatprep.subr.bf16.mxu0 %v8035
        %9488 = vmatpush1.bf16.msra.mxu0 %v8034
        %9489 = vmatprep.subr.bf16.mxu0 %v8027
        %9490 = vmatpush1.bf16.msra.mxu0 %v8026
        %9491 = vmatprep.subr.bf16.mxu0 %v8019
        %9492 = vmatpush1.bf16.msra.mxu0 %v8018
        %9493 = vmatprep.subr.bf16.mxu0 %v8139
        %9494 = vmatpush2.bf16.msra.mxu0 %v8138
        %9495 = vmatprep.subr.bf16.mxu0 %v8131
        %9496 = vmatpush2.bf16.msra.mxu0 %v8130
        %9497 = vmatprep.subr.bf16.mxu0 %v8123
        %9498 = vmatpush2.bf16.msra.mxu0 %v8122
        %9499 = vmatprep.subr.bf16.mxu0 %v8115
        %9500 = vmatpush2.bf16.msra.mxu0 %v8114
        %9501 = vmatprep.subr.bf16.mxu0 %v8107
        %9502 = vmatpush2.bf16.msra.mxu0 %v8106
        %9503 = vmatprep.subr.bf16.mxu0 %v8099
        %9504 = vmatpush2.bf16.msra.mxu0 %v8098
        %9505 = vmatprep.subr.bf16.mxu0 %v8091
        %9506 = vmatpush2.bf16.msra.mxu0 %v8090
        %9507 = vmatprep.subr.bf16.mxu0 %v8083
        %9508 = vmatpush2.bf16.msra.mxu0 %v8082
        %9509 = vmatprep.mubr.bf16.mxu0 %v5737
        %9510 = vmatmul.mubr.bf16.gmra.mxu0 %v5736
        %v9511 = vpop.f32.mrf.mxu0
        %v9512 = vadd.f32 %v9399, %v9511
        %v9513 = vpop.f32.mrf.mxu0
        %v9514 = vadd.f32 %v9401, %v9513
        %v9515 = vpop.f32.mrf.mxu0
        %v9516 = vadd.f32 %v9403, %v9515
        %v9517 = vpop.f32.mrf.mxu0
        %v9518 = vadd.f32 %v9405, %v9517
        %9519 = vmatprep.mubr.bf16.mxu0 %v5745
        %9520 = vmatmul.mubr.bf16.gmra.mxu0 %v5744
        %v9521 = vpop.f32.mrf.mxu0
        %v9522 = vadd.f32 %v9409, %v9521
        %v9523 = vpop.f32.mrf.mxu0
        %v9524 = vadd.f32 %v9411, %v9523
        %v9525 = vpop.f32.mrf.mxu0
        %v9526 = vadd.f32 %v9413, %v9525
        %v9527 = vpop.f32.mrf.mxu0
        %v9528 = vadd.f32 %v9415, %v9527
        %9529 = vmatprep.mubr.bf16.mxu0 %v5753
        %9530 = vmatmul.mubr.bf16.gmra.mxu0 %v5752
        %v9531 = vpop.f32.mrf.mxu0
        %v9532 = vadd.f32 %v9419, %v9531
        %v9533 = vpop.f32.mrf.mxu0
        %v9534 = vadd.f32 %v9421, %v9533
        %v9535 = vpop.f32.mrf.mxu0
        %v9536 = vadd.f32 %v9423, %v9535
        %v9537 = vpop.f32.mrf.mxu0
        %v9538 = vadd.f32 %v9425, %v9537
        %9539 = vmatprep.mubr.bf16.mxu0 %v5761
        %9540 = vmatmul.mubr.bf16.gmra.mxu0 %v5760
        %v9541 = vpop.f32.mrf.mxu0
        %v9542 = vadd.f32 %v9429, %v9541
        %v9543 = vpop.f32.mrf.mxu0
        %v9544 = vadd.f32 %v9431, %v9543
        %v9545 = vpop.f32.mrf.mxu0
        %v9546 = vadd.f32 %v9433, %v9545
        %v9547 = vpop.f32.mrf.mxu0
        %v9548 = vadd.f32 %v9435, %v9547
        %9549 = vmatprep.mubr.bf16.mxu0 %v5769
        %9550 = vmatmul.mubr.bf16.gmra.mxu0 %v5768
        %v9551 = vpop.f32.mrf.mxu0
        %v9552 = vadd.f32 %v9439, %v9551
        %v9553 = vpop.f32.mrf.mxu0
        %v9554 = vadd.f32 %v9441, %v9553
        %v9555 = vpop.f32.mrf.mxu0
        %v9556 = vadd.f32 %v9443, %v9555
        %v9557 = vpop.f32.mrf.mxu0
        %v9558 = vadd.f32 %v9445, %v9557
        %9559 = vmatprep.mubr.bf16.mxu0 %v5777
        %9560 = vmatmul.mubr.bf16.gmra.mxu0 %v5776
        %v9561 = vpop.f32.mrf.mxu0
        %v9562 = vadd.f32 %v9449, %v9561
        %v9563 = vpop.f32.mrf.mxu0
        %v9564 = vadd.f32 %v9451, %v9563
        %v9565 = vpop.f32.mrf.mxu0
        %v9566 = vadd.f32 %v9453, %v9565
        %v9567 = vpop.f32.mrf.mxu0
        %v9568 = vadd.f32 %v9455, %v9567
        %9569 = vmatprep.mubr.bf16.mxu0 %v5785
        %9570 = vmatmul.mubr.bf16.gmra.mxu0 %v5784
        %v9571 = vpop.f32.mrf.mxu0
        %v9572 = vadd.f32 %v9459, %v9571
        %v9573 = vpop.f32.mrf.mxu0
        %v9574 = vadd.f32 %v9461, %v9573
        %v9575 = vpop.f32.mrf.mxu0
        %v9576 = vadd.f32 %v9463, %v9575
        %v9577 = vpop.f32.mrf.mxu0
        %v9578 = vadd.f32 %v9465, %v9577
        %9579 = vmatprep.mubr.bf16.mxu0 %v5793
        %9580 = vmatmul.mubr.bf16.gmra.mxu0 %v5792
        %v9581 = vpop.f32.mrf.mxu0
        %v9582 = vadd.f32 %v9469, %v9581
        %v9583 = vpop.f32.mrf.mxu0
        %v9584 = vadd.f32 %v9471, %v9583
        %v9585 = vpop.f32.mrf.mxu0
        %v9586 = vadd.f32 %v9473, %v9585
        %v9587 = vpop.f32.mrf.mxu0
        %v9588 = vadd.f32 %v9475, %v9587
        %9589 = vdwg.mxu0
        %9590 = vmatprep.subr.bf16.mxu0 %v8203
        %9591 = vmatpush1.bf16.msra.mxu0 %v8202
        %9592 = vmatprep.subr.bf16.mxu0 %v8195
        %9593 = vmatpush1.bf16.msra.mxu0 %v8194
        %9594 = vmatprep.subr.bf16.mxu0 %v8187
        %9595 = vmatpush1.bf16.msra.mxu0 %v8186
        %9596 = vmatprep.subr.bf16.mxu0 %v8179
        %9597 = vmatpush1.bf16.msra.mxu0 %v8178
        %9598 = vmatprep.subr.bf16.mxu0 %v8171
        %9599 = vmatpush1.bf16.msra.mxu0 %v8170
        %9600 = vmatprep.subr.bf16.mxu0 %v8163
        %9601 = vmatpush1.bf16.msra.mxu0 %v8162
        %9602 = vmatprep.subr.bf16.mxu0 %v8155
        %9603 = vmatpush1.bf16.msra.mxu0 %v8154
        %9604 = vmatprep.subr.bf16.mxu0 %v8147
        %9605 = vmatpush1.bf16.msra.mxu0 %v8146
        %9606 = vmatprep.subr.bf16.mxu0 %v8267
        %9607 = vmatpush2.bf16.msra.mxu0 %v8266
        %9608 = vmatprep.subr.bf16.mxu0 %v8259
        %9609 = vmatpush2.bf16.msra.mxu0 %v8258
        %9610 = vmatprep.subr.bf16.mxu0 %v8251
        %9611 = vmatpush2.bf16.msra.mxu0 %v8250
        %9612 = vmatprep.subr.bf16.mxu0 %v8243
        %9613 = vmatpush2.bf16.msra.mxu0 %v8242
        %9614 = vmatprep.subr.bf16.mxu0 %v8235
        %9615 = vmatpush2.bf16.msra.mxu0 %v8234
        %9616 = vmatprep.subr.bf16.mxu0 %v8227
        %9617 = vmatpush2.bf16.msra.mxu0 %v8226
        %9618 = vmatprep.subr.bf16.mxu0 %v8219
        %9619 = vmatpush2.bf16.msra.mxu0 %v8218
        %9620 = vmatprep.subr.bf16.mxu0 %v8211
        %9621 = vmatpush2.bf16.msra.mxu0 %v8210
        %9622 = vmatprep.mubr.bf16.mxu0 %v5739
        %9623 = vmatmul.mubr.bf16.gmra.mxu0 %v5738
        %v9624 = vpop.f32.mrf.mxu0
        %v9625 = vadd.f32 %v9512, %v9624
        %v9626 = vpop.f32.mrf.mxu0
        %v9627 = vadd.f32 %v9514, %v9626
        %v9628 = vpop.f32.mrf.mxu0
        %v9629 = vadd.f32 %v9516, %v9628
        %v9630 = vpop.f32.mrf.mxu0
        %v9631 = vadd.f32 %v9518, %v9630
        %9632 = vmatprep.mubr.bf16.mxu0 %v5747
        %9633 = vmatmul.mubr.bf16.gmra.mxu0 %v5746
        %v9634 = vpop.f32.mrf.mxu0
        %v9635 = vadd.f32 %v9522, %v9634
        %v9636 = vpop.f32.mrf.mxu0
        %v9637 = vadd.f32 %v9524, %v9636
        %v9638 = vpop.f32.mrf.mxu0
        %v9639 = vadd.f32 %v9526, %v9638
        %v9640 = vpop.f32.mrf.mxu0
        %v9641 = vadd.f32 %v9528, %v9640
        %9642 = vmatprep.mubr.bf16.mxu0 %v5755
        %9643 = vmatmul.mubr.bf16.gmra.mxu0 %v5754
        %v9644 = vpop.f32.mrf.mxu0
        %v9645 = vadd.f32 %v9532, %v9644
        %v9646 = vpop.f32.mrf.mxu0
        %v9647 = vadd.f32 %v9534, %v9646
        %v9648 = vpop.f32.mrf.mxu0
        %v9649 = vadd.f32 %v9536, %v9648
        %v9650 = vpop.f32.mrf.mxu0
        %v9651 = vadd.f32 %v9538, %v9650
        %9652 = vmatprep.mubr.bf16.mxu0 %v5763
        %9653 = vmatmul.mubr.bf16.gmra.mxu0 %v5762
        %v9654 = vpop.f32.mrf.mxu0
        %v9655 = vadd.f32 %v9542, %v9654
        %v9656 = vpop.f32.mrf.mxu0
        %v9657 = vadd.f32 %v9544, %v9656
        %v9658 = vpop.f32.mrf.mxu0
        %v9659 = vadd.f32 %v9546, %v9658
        %v9660 = vpop.f32.mrf.mxu0
        %v9661 = vadd.f32 %v9548, %v9660
        %9662 = vmatprep.mubr.bf16.mxu0 %v5771
        %9663 = vmatmul.mubr.bf16.gmra.mxu0 %v5770
        %v9664 = vpop.f32.mrf.mxu0
        %v9665 = vadd.f32 %v9552, %v9664
        %v9666 = vpop.f32.mrf.mxu0
        %v9667 = vadd.f32 %v9554, %v9666
        %v9668 = vpop.f32.mrf.mxu0
        %v9669 = vadd.f32 %v9556, %v9668
        %v9670 = vpop.f32.mrf.mxu0
        %v9671 = vadd.f32 %v9558, %v9670
        %9672 = vmatprep.mubr.bf16.mxu0 %v5779
        %9673 = vmatmul.mubr.bf16.gmra.mxu0 %v5778
        %v9674 = vpop.f32.mrf.mxu0
        %v9675 = vadd.f32 %v9562, %v9674
        %v9676 = vpop.f32.mrf.mxu0
        %v9677 = vadd.f32 %v9564, %v9676
        %v9678 = vpop.f32.mrf.mxu0
        %v9679 = vadd.f32 %v9566, %v9678
        %v9680 = vpop.f32.mrf.mxu0
        %v9681 = vadd.f32 %v9568, %v9680
        %9682 = vmatprep.mubr.bf16.mxu0 %v5787
        %9683 = vmatmul.mubr.bf16.gmra.mxu0 %v5786
        %v9684 = vpop.f32.mrf.mxu0
        %v9685 = vadd.f32 %v9572, %v9684
        %v9686 = vpop.f32.mrf.mxu0
        %v9687 = vadd.f32 %v9574, %v9686
        %v9688 = vpop.f32.mrf.mxu0
        %v9689 = vadd.f32 %v9576, %v9688
        %v9690 = vpop.f32.mrf.mxu0
        %v9691 = vadd.f32 %v9578, %v9690
        %9692 = vmatprep.mubr.bf16.mxu0 %v5795
        %9693 = vmatmul.mubr.bf16.gmra.mxu0 %v5794
        %v9694 = vpop.f32.mrf.mxu0
        %v9695 = vadd.f32 %v9582, %v9694
        %v9696 = vpop.f32.mrf.mxu0
        %v9697 = vadd.f32 %v9584, %v9696
        %v9698 = vpop.f32.mrf.mxu0
        %v9699 = vadd.f32 %v9586, %v9698
        %v9700 = vpop.f32.mrf.mxu0
        %v9701 = vadd.f32 %v9588, %v9700
        %9702 = vdwg.mxu0
        %9703 = vmatprep.subr.bf16.mxu0 %v8331
        %9704 = vmatpush1.bf16.msra.mxu0 %v8330
        %9705 = vmatprep.subr.bf16.mxu0 %v8323
        %9706 = vmatpush1.bf16.msra.mxu0 %v8322
        %9707 = vmatprep.subr.bf16.mxu0 %v8315
        %9708 = vmatpush1.bf16.msra.mxu0 %v8314
        %9709 = vmatprep.subr.bf16.mxu0 %v8307
        %9710 = vmatpush1.bf16.msra.mxu0 %v8306
        %9711 = vmatprep.subr.bf16.mxu0 %v8299
        %9712 = vmatpush1.bf16.msra.mxu0 %v8298
        %9713 = vmatprep.subr.bf16.mxu0 %v8291
        %9714 = vmatpush1.bf16.msra.mxu0 %v8290
        %9715 = vmatprep.subr.bf16.mxu0 %v8283
        %9716 = vmatpush1.bf16.msra.mxu0 %v8282
        %9717 = vmatprep.subr.bf16.mxu0 %v8275
        %9718 = vmatpush1.bf16.msra.mxu0 %v8274
        %9719 = vmatprep.subr.bf16.mxu0 %v8395
        %9720 = vmatpush2.bf16.msra.mxu0 %v8394
        %9721 = vmatprep.subr.bf16.mxu0 %v8387
        %9722 = vmatpush2.bf16.msra.mxu0 %v8386
        %9723 = vmatprep.subr.bf16.mxu0 %v8379
        %9724 = vmatpush2.bf16.msra.mxu0 %v8378
        %9725 = vmatprep.subr.bf16.mxu0 %v8371
        %9726 = vmatpush2.bf16.msra.mxu0 %v8370
        %9727 = vmatprep.subr.bf16.mxu0 %v8363
        %9728 = vmatpush2.bf16.msra.mxu0 %v8362
        %9729 = vmatprep.subr.bf16.mxu0 %v8355
        %9730 = vmatpush2.bf16.msra.mxu0 %v8354
        %9731 = vmatprep.subr.bf16.mxu0 %v8347
        %9732 = vmatpush2.bf16.msra.mxu0 %v8346
        %9733 = vmatprep.subr.bf16.mxu0 %v8339
        %9734 = vmatpush2.bf16.msra.mxu0 %v8338
        %9735 = vmatprep.mubr.bf16.mxu0 %v5741
        %9736 = vmatmul.mubr.bf16.gmra.mxu0 %v5740
        %v9737 = vpop.f32.mrf.mxu0
        %v9738 = vadd.f32 %v9625, %v9737
        %v9739 = vpop.f32.mrf.mxu0
        %v9740 = vadd.f32 %v9627, %v9739
        %v9741 = vpop.f32.mrf.mxu0
        %v9742 = vadd.f32 %v9629, %v9741
        %v9743 = vpop.f32.mrf.mxu0
        %v9744 = vadd.f32 %v9631, %v9743
        %9745 = vmatprep.mubr.bf16.mxu0 %v5749
        %9746 = vmatmul.mubr.bf16.gmra.mxu0 %v5748
        %v9747 = vpop.f32.mrf.mxu0
        %v9748 = vadd.f32 %v9635, %v9747
        %v9749 = vpop.f32.mrf.mxu0
        %v9750 = vadd.f32 %v9637, %v9749
        %v9751 = vpop.f32.mrf.mxu0
        %v9752 = vadd.f32 %v9639, %v9751
        %v9753 = vpop.f32.mrf.mxu0
        %v9754 = vadd.f32 %v9641, %v9753
        %9755 = vmatprep.mubr.bf16.mxu0 %v5757
        %9756 = vmatmul.mubr.bf16.gmra.mxu0 %v5756
        %v9757 = vpop.f32.mrf.mxu0
        %v9758 = vadd.f32 %v9645, %v9757
        %v9759 = vpop.f32.mrf.mxu0
        %v9760 = vadd.f32 %v9647, %v9759
        %v9761 = vpop.f32.mrf.mxu0
        %v9762 = vadd.f32 %v9649, %v9761
        %v9763 = vpop.f32.mrf.mxu0
        %v9764 = vadd.f32 %v9651, %v9763
        %9765 = vmatprep.mubr.bf16.mxu0 %v5765
        %9766 = vmatmul.mubr.bf16.gmra.mxu0 %v5764
        %v9767 = vpop.f32.mrf.mxu0
        %v9768 = vadd.f32 %v9655, %v9767
        %v9769 = vpop.f32.mrf.mxu0
        %v9770 = vadd.f32 %v9657, %v9769
        %v9771 = vpop.f32.mrf.mxu0
        %v9772 = vadd.f32 %v9659, %v9771
        %v9773 = vpop.f32.mrf.mxu0
        %v9774 = vadd.f32 %v9661, %v9773
        %9775 = vmatprep.mubr.bf16.mxu0 %v5773
        %9776 = vmatmul.mubr.bf16.gmra.mxu0 %v5772
        %v9777 = vpop.f32.mrf.mxu0
        %v9778 = vadd.f32 %v9665, %v9777
        %v9779 = vpop.f32.mrf.mxu0
        %v9780 = vadd.f32 %v9667, %v9779
        %v9781 = vpop.f32.mrf.mxu0
        %v9782 = vadd.f32 %v9669, %v9781
        %v9783 = vpop.f32.mrf.mxu0
        %v9784 = vadd.f32 %v9671, %v9783
        %9785 = vmatprep.mubr.bf16.mxu0 %v5781
        %9786 = vmatmul.mubr.bf16.gmra.mxu0 %v5780
        %v9787 = vpop.f32.mrf.mxu0
        %v9788 = vadd.f32 %v9675, %v9787
        %v9789 = vpop.f32.mrf.mxu0
        %v9790 = vadd.f32 %v9677, %v9789
        %v9791 = vpop.f32.mrf.mxu0
        %v9792 = vadd.f32 %v9679, %v9791
        %v9793 = vpop.f32.mrf.mxu0
        %v9794 = vadd.f32 %v9681, %v9793
        %9795 = vmatprep.mubr.bf16.mxu0 %v5789
        %9796 = vmatmul.mubr.bf16.gmra.mxu0 %v5788
        %v9797 = vpop.f32.mrf.mxu0
        %v9798 = vadd.f32 %v9685, %v9797
        %v9799 = vpop.f32.mrf.mxu0
        %v9800 = vadd.f32 %v9687, %v9799
        %v9801 = vpop.f32.mrf.mxu0
        %v9802 = vadd.f32 %v9689, %v9801
        %v9803 = vpop.f32.mrf.mxu0
        %v9804 = vadd.f32 %v9691, %v9803
        %9805 = vmatprep.mubr.bf16.mxu0 %v5797
        %9806 = vmatmul.mubr.bf16.gmra.mxu0 %v5796
        %v9807 = vpop.f32.mrf.mxu0
        %v9808 = vadd.f32 %v9695, %v9807
        %v9809 = vpop.f32.mrf.mxu0
        %v9810 = vadd.f32 %v9697, %v9809
        %v9811 = vpop.f32.mrf.mxu0
        %v9812 = vadd.f32 %v9699, %v9811
        %v9813 = vpop.f32.mrf.mxu0
        %v9814 = vadd.f32 %v9701, %v9813
        %9815 = vdwg.mxu0
        %9816 = vmatprep.subr.bf16.mxu0 %v7949
        %9817 = vmatpush1.bf16.msra.mxu0 %v7948
        %9818 = vmatprep.subr.bf16.mxu0 %v7941
        %9819 = vmatpush1.bf16.msra.mxu0 %v7940
        %9820 = vmatprep.subr.bf16.mxu0 %v7933
        %9821 = vmatpush1.bf16.msra.mxu0 %v7932
        %9822 = vmatprep.subr.bf16.mxu0 %v7925
        %9823 = vmatpush1.bf16.msra.mxu0 %v7924
        %9824 = vmatprep.subr.bf16.mxu0 %v7917
        %9825 = vmatpush1.bf16.msra.mxu0 %v7916
        %9826 = vmatprep.subr.bf16.mxu0 %v7909
        %9827 = vmatpush1.bf16.msra.mxu0 %v7908
        %9828 = vmatprep.subr.bf16.mxu0 %v7901
        %9829 = vmatpush1.bf16.msra.mxu0 %v7900
        %9830 = vmatprep.subr.bf16.mxu0 %v7893
        %9831 = vmatpush1.bf16.msra.mxu0 %v7892
        %9832 = vmatprep.subr.bf16.mxu0 %v8013
        %9833 = vmatpush2.bf16.msra.mxu0 %v8012
        %9834 = vmatprep.subr.bf16.mxu0 %v8005
        %9835 = vmatpush2.bf16.msra.mxu0 %v8004
        %9836 = vmatprep.subr.bf16.mxu0 %v7997
        %9837 = vmatpush2.bf16.msra.mxu0 %v7996
        %9838 = vmatprep.subr.bf16.mxu0 %v7989
        %9839 = vmatpush2.bf16.msra.mxu0 %v7988
        %9840 = vmatprep.subr.bf16.mxu0 %v7981
        %9841 = vmatpush2.bf16.msra.mxu0 %v7980
        %9842 = vmatprep.subr.bf16.mxu0 %v7973
        %9843 = vmatpush2.bf16.msra.mxu0 %v7972
        %9844 = vmatprep.subr.bf16.mxu0 %v7965
        %9845 = vmatpush2.bf16.msra.mxu0 %v7964
        %9846 = vmatprep.subr.bf16.mxu0 %v7957
        %9847 = vmatpush2.bf16.msra.mxu0 %v7956
        %9848 = vmatprep.mubr.bf16.mxu0 %v5735
        %9849 = vmatmul.mubr.bf16.gmra.mxu0 %v5734
        %v9850 = vpop.f32.mrf.mxu0
        %v9851 = vadd.f32 %v6331, %v9850
        %v9852 = vpop.f32.mrf.mxu0
        %v9853 = vadd.f32 %v6335, %v9852
        %v9854 = vpop.f32.mrf.mxu0
        %v9855 = vadd.f32 %v6331, %v9854
        %v9856 = vpop.f32.mrf.mxu0
        %v9857 = vadd.f32 %v6335, %v9856
        %9858 = vmatprep.mubr.bf16.mxu0 %v5743
        %9859 = vmatmul.mubr.bf16.gmra.mxu0 %v5742
        %v9860 = vpop.f32.mrf.mxu0
        %v9861 = vadd.f32 %v6331, %v9860
        %v9862 = vpop.f32.mrf.mxu0
        %v9863 = vadd.f32 %v6335, %v9862
        %v9864 = vpop.f32.mrf.mxu0
        %v9865 = vadd.f32 %v6331, %v9864
        %v9866 = vpop.f32.mrf.mxu0
        %v9867 = vadd.f32 %v6335, %v9866
        %9868 = vmatprep.mubr.bf16.mxu0 %v5751
        %9869 = vmatmul.mubr.bf16.gmra.mxu0 %v5750
        %v9870 = vpop.f32.mrf.mxu0
        %v9871 = vadd.f32 %v6331, %v9870
        %v9872 = vpop.f32.mrf.mxu0
        %v9873 = vadd.f32 %v6335, %v9872
        %v9874 = vpop.f32.mrf.mxu0
        %v9875 = vadd.f32 %v6331, %v9874
        %v9876 = vpop.f32.mrf.mxu0
        %v9877 = vadd.f32 %v6335, %v9876
        %9878 = vmatprep.mubr.bf16.mxu0 %v5759
        %9879 = vmatmul.mubr.bf16.gmra.mxu0 %v5758
        %v9880 = vpop.f32.mrf.mxu0
        %v9881 = vadd.f32 %v6331, %v9880
        %v9882 = vpop.f32.mrf.mxu0
        %v9883 = vadd.f32 %v6335, %v9882
        %v9884 = vpop.f32.mrf.mxu0
        %v9885 = vadd.f32 %v6331, %v9884
        %v9886 = vpop.f32.mrf.mxu0
        %v9887 = vadd.f32 %v6335, %v9886
        %9888 = vmatprep.mubr.bf16.mxu0 %v5767
        %9889 = vmatmul.mubr.bf16.gmra.mxu0 %v5766
        %v9890 = vpop.f32.mrf.mxu0
        %v9891 = vadd.f32 %v6331, %v9890
        %v9892 = vpop.f32.mrf.mxu0
        %v9893 = vadd.f32 %v6335, %v9892
        %v9894 = vpop.f32.mrf.mxu0
        %v9895 = vadd.f32 %v6331, %v9894
        %v9896 = vpop.f32.mrf.mxu0
        %v9897 = vadd.f32 %v6335, %v9896
        %9898 = vmatprep.mubr.bf16.mxu0 %v5775
        %9899 = vmatmul.mubr.bf16.gmra.mxu0 %v5774
        %v9900 = vpop.f32.mrf.mxu0
        %v9901 = vadd.f32 %v6331, %v9900
        %v9902 = vpop.f32.mrf.mxu0
        %v9903 = vadd.f32 %v6335, %v9902
        %v9904 = vpop.f32.mrf.mxu0
        %v9905 = vadd.f32 %v6331, %v9904
        %v9906 = vpop.f32.mrf.mxu0
        %v9907 = vadd.f32 %v6335, %v9906
        %9908 = vmatprep.mubr.bf16.mxu0 %v5783
        %9909 = vmatmul.mubr.bf16.gmra.mxu0 %v5782
        %v9910 = vpop.f32.mrf.mxu0
        %v9911 = vadd.f32 %v6331, %v9910
        %v9912 = vpop.f32.mrf.mxu0
        %v9913 = vadd.f32 %v6335, %v9912
        %v9914 = vpop.f32.mrf.mxu0
        %v9915 = vadd.f32 %v6331, %v9914
        %v9916 = vpop.f32.mrf.mxu0
        %v9917 = vadd.f32 %v6335, %v9916
        %9918 = vmatprep.mubr.bf16.mxu0 %v5791
        %9919 = vmatmul.mubr.bf16.gmra.mxu0 %v5790
        %v9920 = vpop.f32.mrf.mxu0
        %v9921 = vadd.f32 %v6331, %v9920
        %v9922 = vpop.f32.mrf.mxu0
        %v9923 = vadd.f32 %v6335, %v9922
        %v9924 = vpop.f32.mrf.mxu0
        %v9925 = vadd.f32 %v6331, %v9924
        %v9926 = vpop.f32.mrf.mxu0
        %v9927 = vadd.f32 %v6335, %v9926
        %9928 = vdwg.mxu0
        %9929 = vmatprep.subr.bf16.mxu0 %v8077
        %9930 = vmatpush1.bf16.msra.mxu0 %v8076
        %9931 = vmatprep.subr.bf16.mxu0 %v8069
        %9932 = vmatpush1.bf16.msra.mxu0 %v8068
        %9933 = vmatprep.subr.bf16.mxu0 %v8061
        %9934 = vmatpush1.bf16.msra.mxu0 %v8060
        %9935 = vmatprep.subr.bf16.mxu0 %v8053
        %9936 = vmatpush1.bf16.msra.mxu0 %v8052
        %9937 = vmatprep.subr.bf16.mxu0 %v8045
        %9938 = vmatpush1.bf16.msra.mxu0 %v8044
        %9939 = vmatprep.subr.bf16.mxu0 %v8037
        %9940 = vmatpush1.bf16.msra.mxu0 %v8036
        %9941 = vmatprep.subr.bf16.mxu0 %v8029
        %9942 = vmatpush1.bf16.msra.mxu0 %v8028
        %9943 = vmatprep.subr.bf16.mxu0 %v8021
        %9944 = vmatpush1.bf16.msra.mxu0 %v8020
        %9945 = vmatprep.subr.bf16.mxu0 %v8141
        %9946 = vmatpush2.bf16.msra.mxu0 %v8140
        %9947 = vmatprep.subr.bf16.mxu0 %v8133
        %9948 = vmatpush2.bf16.msra.mxu0 %v8132
        %9949 = vmatprep.subr.bf16.mxu0 %v8125
        %9950 = vmatpush2.bf16.msra.mxu0 %v8124
        %9951 = vmatprep.subr.bf16.mxu0 %v8117
        %9952 = vmatpush2.bf16.msra.mxu0 %v8116
        %9953 = vmatprep.subr.bf16.mxu0 %v8109
        %9954 = vmatpush2.bf16.msra.mxu0 %v8108
        %9955 = vmatprep.subr.bf16.mxu0 %v8101
        %9956 = vmatpush2.bf16.msra.mxu0 %v8100
        %9957 = vmatprep.subr.bf16.mxu0 %v8093
        %9958 = vmatpush2.bf16.msra.mxu0 %v8092
        %9959 = vmatprep.subr.bf16.mxu0 %v8085
        %9960 = vmatpush2.bf16.msra.mxu0 %v8084
        %9961 = vmatprep.mubr.bf16.mxu0 %v5737
        %9962 = vmatmul.mubr.bf16.gmra.mxu0 %v5736
        %v9963 = vpop.f32.mrf.mxu0
        %v9964 = vadd.f32 %v9851, %v9963
        %v9965 = vpop.f32.mrf.mxu0
        %v9966 = vadd.f32 %v9853, %v9965
        %v9967 = vpop.f32.mrf.mxu0
        %v9968 = vadd.f32 %v9855, %v9967
        %v9969 = vpop.f32.mrf.mxu0
        %v9970 = vadd.f32 %v9857, %v9969
        %9971 = vmatprep.mubr.bf16.mxu0 %v5745
        %9972 = vmatmul.mubr.bf16.gmra.mxu0 %v5744
        %v9973 = vpop.f32.mrf.mxu0
        %v9974 = vadd.f32 %v9861, %v9973
        %v9975 = vpop.f32.mrf.mxu0
        %v9976 = vadd.f32 %v9863, %v9975
        %v9977 = vpop.f32.mrf.mxu0
        %v9978 = vadd.f32 %v9865, %v9977
        %v9979 = vpop.f32.mrf.mxu0
        %v9980 = vadd.f32 %v9867, %v9979
        %9981 = vmatprep.mubr.bf16.mxu0 %v5753
        %9982 = vmatmul.mubr.bf16.gmra.mxu0 %v5752
        %v9983 = vpop.f32.mrf.mxu0
        %v9984 = vadd.f32 %v9871, %v9983
        %v9985 = vpop.f32.mrf.mxu0
        %v9986 = vadd.f32 %v9873, %v9985
        %v9987 = vpop.f32.mrf.mxu0
        %v9988 = vadd.f32 %v9875, %v9987
        %v9989 = vpop.f32.mrf.mxu0
        %v9990 = vadd.f32 %v9877, %v9989
        %9991 = vmatprep.mubr.bf16.mxu0 %v5761
        %9992 = vmatmul.mubr.bf16.gmra.mxu0 %v5760
        %v9993 = vpop.f32.mrf.mxu0
        %v9994 = vadd.f32 %v9881, %v9993
        %v9995 = vpop.f32.mrf.mxu0
        %v9996 = vadd.f32 %v9883, %v9995
        %v9997 = vpop.f32.mrf.mxu0
        %v9998 = vadd.f32 %v9885, %v9997
        %v9999 = vpop.f32.mrf.mxu0
        %v10000 = vadd.f32 %v9887, %v9999
        %10001 = vmatprep.mubr.bf16.mxu0 %v5769
        %10002 = vmatmul.mubr.bf16.gmra.mxu0 %v5768
        %v10003 = vpop.f32.mrf.mxu0
        %v10004 = vadd.f32 %v9891, %v10003
        %v10005 = vpop.f32.mrf.mxu0
        %v10006 = vadd.f32 %v9893, %v10005
        %v10007 = vpop.f32.mrf.mxu0
        %v10008 = vadd.f32 %v9895, %v10007
        %v10009 = vpop.f32.mrf.mxu0
        %v10010 = vadd.f32 %v9897, %v10009
        %10011 = vmatprep.mubr.bf16.mxu0 %v5777
        %10012 = vmatmul.mubr.bf16.gmra.mxu0 %v5776
        %v10013 = vpop.f32.mrf.mxu0
        %v10014 = vadd.f32 %v9901, %v10013
        %v10015 = vpop.f32.mrf.mxu0
        %v10016 = vadd.f32 %v9903, %v10015
        %v10017 = vpop.f32.mrf.mxu0
        %v10018 = vadd.f32 %v9905, %v10017
        %v10019 = vpop.f32.mrf.mxu0
        %v10020 = vadd.f32 %v9907, %v10019
        %10021 = vmatprep.mubr.bf16.mxu0 %v5785
        %10022 = vmatmul.mubr.bf16.gmra.mxu0 %v5784
        %v10023 = vpop.f32.mrf.mxu0
        %v10024 = vadd.f32 %v9911, %v10023
        %v10025 = vpop.f32.mrf.mxu0
        %v10026 = vadd.f32 %v9913, %v10025
        %v10027 = vpop.f32.mrf.mxu0
        %v10028 = vadd.f32 %v9915, %v10027
        %v10029 = vpop.f32.mrf.mxu0
        %v10030 = vadd.f32 %v9917, %v10029
        %10031 = vmatprep.mubr.bf16.mxu0 %v5793
        %10032 = vmatmul.mubr.bf16.gmra.mxu0 %v5792
        %v10033 = vpop.f32.mrf.mxu0
        %v10034 = vadd.f32 %v9921, %v10033
        %v10035 = vpop.f32.mrf.mxu0
        %v10036 = vadd.f32 %v9923, %v10035
        %v10037 = vpop.f32.mrf.mxu0
        %v10038 = vadd.f32 %v9925, %v10037
        %v10039 = vpop.f32.mrf.mxu0
        %v10040 = vadd.f32 %v9927, %v10039
        %10041 = vdwg.mxu0
        %10042 = vmatprep.subr.bf16.mxu0 %v8205
        %10043 = vmatpush1.bf16.msra.mxu0 %v8204
        %10044 = vmatprep.subr.bf16.mxu0 %v8197
        %10045 = vmatpush1.bf16.msra.mxu0 %v8196
        %10046 = vmatprep.subr.bf16.mxu0 %v8189
        %10047 = vmatpush1.bf16.msra.mxu0 %v8188
        %10048 = vmatprep.subr.bf16.mxu0 %v8181
        %10049 = vmatpush1.bf16.msra.mxu0 %v8180
        %10050 = vmatprep.subr.bf16.mxu0 %v8173
        %10051 = vmatpush1.bf16.msra.mxu0 %v8172
        %10052 = vmatprep.subr.bf16.mxu0 %v8165
        %10053 = vmatpush1.bf16.msra.mxu0 %v8164
        %10054 = vmatprep.subr.bf16.mxu0 %v8157
        %10055 = vmatpush1.bf16.msra.mxu0 %v8156
        %10056 = vmatprep.subr.bf16.mxu0 %v8149
        %10057 = vmatpush1.bf16.msra.mxu0 %v8148
        %10058 = vmatprep.subr.bf16.mxu0 %v8269
        %10059 = vmatpush2.bf16.msra.mxu0 %v8268
        %10060 = vmatprep.subr.bf16.mxu0 %v8261
        %10061 = vmatpush2.bf16.msra.mxu0 %v8260
        %10062 = vmatprep.subr.bf16.mxu0 %v8253
        %10063 = vmatpush2.bf16.msra.mxu0 %v8252
        %10064 = vmatprep.subr.bf16.mxu0 %v8245
        %10065 = vmatpush2.bf16.msra.mxu0 %v8244
        %10066 = vmatprep.subr.bf16.mxu0 %v8237
        %10067 = vmatpush2.bf16.msra.mxu0 %v8236
        %10068 = vmatprep.subr.bf16.mxu0 %v8229
        %10069 = vmatpush2.bf16.msra.mxu0 %v8228
        %10070 = vmatprep.subr.bf16.mxu0 %v8221
        %10071 = vmatpush2.bf16.msra.mxu0 %v8220
        %10072 = vmatprep.subr.bf16.mxu0 %v8213
        %10073 = vmatpush2.bf16.msra.mxu0 %v8212
        %10074 = vmatprep.mubr.bf16.mxu0 %v5739
        %10075 = vmatmul.mubr.bf16.gmra.mxu0 %v5738
        %v10076 = vpop.f32.mrf.mxu0
        %v10077 = vadd.f32 %v9964, %v10076
        %v10078 = vpop.f32.mrf.mxu0
        %v10079 = vadd.f32 %v9966, %v10078
        %v10080 = vpop.f32.mrf.mxu0
        %v10081 = vadd.f32 %v9968, %v10080
        %v10082 = vpop.f32.mrf.mxu0
        %v10083 = vadd.f32 %v9970, %v10082
        %10084 = vmatprep.mubr.bf16.mxu0 %v5747
        %10085 = vmatmul.mubr.bf16.gmra.mxu0 %v5746
        %v10086 = vpop.f32.mrf.mxu0
        %v10087 = vadd.f32 %v9974, %v10086
        %v10088 = vpop.f32.mrf.mxu0
        %v10089 = vadd.f32 %v9976, %v10088
        %v10090 = vpop.f32.mrf.mxu0
        %v10091 = vadd.f32 %v9978, %v10090
        %v10092 = vpop.f32.mrf.mxu0
        %v10093 = vadd.f32 %v9980, %v10092
        %10094 = vmatprep.mubr.bf16.mxu0 %v5755
        %10095 = vmatmul.mubr.bf16.gmra.mxu0 %v5754
        %v10096 = vpop.f32.mrf.mxu0
        %v10097 = vadd.f32 %v9984, %v10096
        %v10098 = vpop.f32.mrf.mxu0
        %v10099 = vadd.f32 %v9986, %v10098
        %v10100 = vpop.f32.mrf.mxu0
        %v10101 = vadd.f32 %v9988, %v10100
        %v10102 = vpop.f32.mrf.mxu0
        %v10103 = vadd.f32 %v9990, %v10102
        %10104 = vmatprep.mubr.bf16.mxu0 %v5763
        %10105 = vmatmul.mubr.bf16.gmra.mxu0 %v5762
        %v10106 = vpop.f32.mrf.mxu0
        %v10107 = vadd.f32 %v9994, %v10106
        %v10108 = vpop.f32.mrf.mxu0
        %v10109 = vadd.f32 %v9996, %v10108
        %v10110 = vpop.f32.mrf.mxu0
        %v10111 = vadd.f32 %v9998, %v10110
        %v10112 = vpop.f32.mrf.mxu0
        %v10113 = vadd.f32 %v10000, %v10112
        %10114 = vmatprep.mubr.bf16.mxu0 %v5771
        %10115 = vmatmul.mubr.bf16.gmra.mxu0 %v5770
        %v10116 = vpop.f32.mrf.mxu0
        %v10117 = vadd.f32 %v10004, %v10116
        %v10118 = vpop.f32.mrf.mxu0
        %v10119 = vadd.f32 %v10006, %v10118
        %v10120 = vpop.f32.mrf.mxu0
        %v10121 = vadd.f32 %v10008, %v10120
        %v10122 = vpop.f32.mrf.mxu0
        %v10123 = vadd.f32 %v10010, %v10122
        %10124 = vmatprep.mubr.bf16.mxu0 %v5779
        %10125 = vmatmul.mubr.bf16.gmra.mxu0 %v5778
        %v10126 = vpop.f32.mrf.mxu0
        %v10127 = vadd.f32 %v10014, %v10126
        %v10128 = vpop.f32.mrf.mxu0
        %v10129 = vadd.f32 %v10016, %v10128
        %v10130 = vpop.f32.mrf.mxu0
        %v10131 = vadd.f32 %v10018, %v10130
        %v10132 = vpop.f32.mrf.mxu0
        %v10133 = vadd.f32 %v10020, %v10132
        %10134 = vmatprep.mubr.bf16.mxu0 %v5787
        %10135 = vmatmul.mubr.bf16.gmra.mxu0 %v5786
        %v10136 = vpop.f32.mrf.mxu0
        %v10137 = vadd.f32 %v10024, %v10136
        %v10138 = vpop.f32.mrf.mxu0
        %v10139 = vadd.f32 %v10026, %v10138
        %v10140 = vpop.f32.mrf.mxu0
        %v10141 = vadd.f32 %v10028, %v10140
        %v10142 = vpop.f32.mrf.mxu0
        %v10143 = vadd.f32 %v10030, %v10142
        %10144 = vmatprep.mubr.bf16.mxu0 %v5795
        %10145 = vmatmul.mubr.bf16.gmra.mxu0 %v5794
        %v10146 = vpop.f32.mrf.mxu0
        %v10147 = vadd.f32 %v10034, %v10146
        %v10148 = vpop.f32.mrf.mxu0
        %v10149 = vadd.f32 %v10036, %v10148
        %v10150 = vpop.f32.mrf.mxu0
        %v10151 = vadd.f32 %v10038, %v10150
        %v10152 = vpop.f32.mrf.mxu0
        %v10153 = vadd.f32 %v10040, %v10152
        %10154 = vdwg.mxu0
        %10155 = vmatprep.subr.bf16.mxu0 %v8333
        %10156 = vmatpush1.bf16.msra.mxu0 %v8332
        %10157 = vmatprep.subr.bf16.mxu0 %v8325
        %10158 = vmatpush1.bf16.msra.mxu0 %v8324
        %10159 = vmatprep.subr.bf16.mxu0 %v8317
        %10160 = vmatpush1.bf16.msra.mxu0 %v8316
        %10161 = vmatprep.subr.bf16.mxu0 %v8309
        %10162 = vmatpush1.bf16.msra.mxu0 %v8308
        %10163 = vmatprep.subr.bf16.mxu0 %v8301
        %10164 = vmatpush1.bf16.msra.mxu0 %v8300
        %10165 = vmatprep.subr.bf16.mxu0 %v8293
        %10166 = vmatpush1.bf16.msra.mxu0 %v8292
        %10167 = vmatprep.subr.bf16.mxu0 %v8285
        %10168 = vmatpush1.bf16.msra.mxu0 %v8284
        %10169 = vmatprep.subr.bf16.mxu0 %v8277
        %10170 = vmatpush1.bf16.msra.mxu0 %v8276
        %10171 = vmatprep.subr.bf16.mxu0 %v8397
        %10172 = vmatpush2.bf16.msra.mxu0 %v8396
        %10173 = vmatprep.subr.bf16.mxu0 %v8389
        %10174 = vmatpush2.bf16.msra.mxu0 %v8388
        %10175 = vmatprep.subr.bf16.mxu0 %v8381
        %10176 = vmatpush2.bf16.msra.mxu0 %v8380
        %10177 = vmatprep.subr.bf16.mxu0 %v8373
        %10178 = vmatpush2.bf16.msra.mxu0 %v8372
        %10179 = vmatprep.subr.bf16.mxu0 %v8365
        %10180 = vmatpush2.bf16.msra.mxu0 %v8364
        %10181 = vmatprep.subr.bf16.mxu0 %v8357
        %10182 = vmatpush2.bf16.msra.mxu0 %v8356
        %10183 = vmatprep.subr.bf16.mxu0 %v8349
        %10184 = vmatpush2.bf16.msra.mxu0 %v8348
        %10185 = vmatprep.subr.bf16.mxu0 %v8341
        %10186 = vmatpush2.bf16.msra.mxu0 %v8340
        %10187 = vmatprep.mubr.bf16.mxu0 %v5741
        %10188 = vmatmul.mubr.bf16.gmra.mxu0 %v5740
        %v10189 = vpop.f32.mrf.mxu0
        %v10190 = vadd.f32 %v10077, %v10189
        %v10191 = vpop.f32.mrf.mxu0
        %v10192 = vadd.f32 %v10079, %v10191
        %v10193 = vpop.f32.mrf.mxu0
        %v10194 = vadd.f32 %v10081, %v10193
        %v10195 = vpop.f32.mrf.mxu0
        %v10196 = vadd.f32 %v10083, %v10195
        %10197 = vmatprep.mubr.bf16.mxu0 %v5749
        %10198 = vmatmul.mubr.bf16.gmra.mxu0 %v5748
        %v10199 = vpop.f32.mrf.mxu0
        %v10200 = vadd.f32 %v10087, %v10199
        %v10201 = vpop.f32.mrf.mxu0
        %v10202 = vadd.f32 %v10089, %v10201
        %v10203 = vpop.f32.mrf.mxu0
        %v10204 = vadd.f32 %v10091, %v10203
        %v10205 = vpop.f32.mrf.mxu0
        %v10206 = vadd.f32 %v10093, %v10205
        %10207 = vmatprep.mubr.bf16.mxu0 %v5757
        %10208 = vmatmul.mubr.bf16.gmra.mxu0 %v5756
        %v10209 = vpop.f32.mrf.mxu0
        %v10210 = vadd.f32 %v10097, %v10209
        %v10211 = vpop.f32.mrf.mxu0
        %v10212 = vadd.f32 %v10099, %v10211
        %v10213 = vpop.f32.mrf.mxu0
        %v10214 = vadd.f32 %v10101, %v10213
        %v10215 = vpop.f32.mrf.mxu0
        %v10216 = vadd.f32 %v10103, %v10215
        %10217 = vmatprep.mubr.bf16.mxu0 %v5765
        %10218 = vmatmul.mubr.bf16.gmra.mxu0 %v5764
        %v10219 = vpop.f32.mrf.mxu0
        %v10220 = vadd.f32 %v10107, %v10219
        %v10221 = vpop.f32.mrf.mxu0
        %v10222 = vadd.f32 %v10109, %v10221
        %v10223 = vpop.f32.mrf.mxu0
        %v10224 = vadd.f32 %v10111, %v10223
        %v10225 = vpop.f32.mrf.mxu0
        %v10226 = vadd.f32 %v10113, %v10225
        %10227 = vmatprep.mubr.bf16.mxu0 %v5773
        %10228 = vmatmul.mubr.bf16.gmra.mxu0 %v5772
        %v10229 = vpop.f32.mrf.mxu0
        %v10230 = vadd.f32 %v10117, %v10229
        %v10231 = vpop.f32.mrf.mxu0
        %v10232 = vadd.f32 %v10119, %v10231
        %v10233 = vpop.f32.mrf.mxu0
        %v10234 = vadd.f32 %v10121, %v10233
        %v10235 = vpop.f32.mrf.mxu0
        %v10236 = vadd.f32 %v10123, %v10235
        %10237 = vmatprep.mubr.bf16.mxu0 %v5781
        %10238 = vmatmul.mubr.bf16.gmra.mxu0 %v5780
        %v10239 = vpop.f32.mrf.mxu0
        %v10240 = vadd.f32 %v10127, %v10239
        %v10241 = vpop.f32.mrf.mxu0
        %v10242 = vadd.f32 %v10129, %v10241
        %v10243 = vpop.f32.mrf.mxu0
        %v10244 = vadd.f32 %v10131, %v10243
        %v10245 = vpop.f32.mrf.mxu0
        %v10246 = vadd.f32 %v10133, %v10245
        %10247 = vmatprep.mubr.bf16.mxu0 %v5789
        %10248 = vmatmul.mubr.bf16.gmra.mxu0 %v5788
        %v10249 = vpop.f32.mrf.mxu0
        %v10250 = vadd.f32 %v10137, %v10249
        %v10251 = vpop.f32.mrf.mxu0
        %v10252 = vadd.f32 %v10139, %v10251
        %v10253 = vpop.f32.mrf.mxu0
        %v10254 = vadd.f32 %v10141, %v10253
        %v10255 = vpop.f32.mrf.mxu0
        %v10256 = vadd.f32 %v10143, %v10255
        %10257 = vmatprep.mubr.bf16.mxu0 %v5797
        %10258 = vmatmul.mubr.bf16.gmra.mxu0 %v5796
        %v10259 = vpop.f32.mrf.mxu0
        %v10260 = vadd.f32 %v10147, %v10259
        %v10261 = vpop.f32.mrf.mxu0
        %v10262 = vadd.f32 %v10149, %v10261
        %v10263 = vpop.f32.mrf.mxu0
        %v10264 = vadd.f32 %v10151, %v10263
        %v10265 = vpop.f32.mrf.mxu0
        %v10266 = vadd.f32 %v10153, %v10265
        %10267 = vdwg.mxu0
        %10268 = vmatprep.subr.bf16.mxu0 %v7951
        %10269 = vmatpush1.bf16.msra.mxu0 %v7950
        %10270 = vmatprep.subr.bf16.mxu0 %v7943
        %10271 = vmatpush1.bf16.msra.mxu0 %v7942
        %10272 = vmatprep.subr.bf16.mxu0 %v7935
        %10273 = vmatpush1.bf16.msra.mxu0 %v7934
        %10274 = vmatprep.subr.bf16.mxu0 %v7927
        %10275 = vmatpush1.bf16.msra.mxu0 %v7926
        %10276 = vmatprep.subr.bf16.mxu0 %v7919
        %10277 = vmatpush1.bf16.msra.mxu0 %v7918
        %10278 = vmatprep.subr.bf16.mxu0 %v7911
        %10279 = vmatpush1.bf16.msra.mxu0 %v7910
        %10280 = vmatprep.subr.bf16.mxu0 %v7903
        %10281 = vmatpush1.bf16.msra.mxu0 %v7902
        %10282 = vmatprep.subr.bf16.mxu0 %v7895
        %10283 = vmatpush1.bf16.msra.mxu0 %v7894
        %10284 = vmatprep.subr.bf16.mxu0 %v8015
        %10285 = vmatpush2.bf16.msra.mxu0 %v8014
        %10286 = vmatprep.subr.bf16.mxu0 %v8007
        %10287 = vmatpush2.bf16.msra.mxu0 %v8006
        %10288 = vmatprep.subr.bf16.mxu0 %v7999
        %10289 = vmatpush2.bf16.msra.mxu0 %v7998
        %10290 = vmatprep.subr.bf16.mxu0 %v7991
        %10291 = vmatpush2.bf16.msra.mxu0 %v7990
        %10292 = vmatprep.subr.bf16.mxu0 %v7983
        %10293 = vmatpush2.bf16.msra.mxu0 %v7982
        %10294 = vmatprep.subr.bf16.mxu0 %v7975
        %10295 = vmatpush2.bf16.msra.mxu0 %v7974
        %10296 = vmatprep.subr.bf16.mxu0 %v7967
        %10297 = vmatpush2.bf16.msra.mxu0 %v7966
        %10298 = vmatprep.subr.bf16.mxu0 %v7959
        %10299 = vmatpush2.bf16.msra.mxu0 %v7958
        %10300 = vmatprep.mubr.bf16.mxu0 %v5735
        %10301 = vmatmul.mubr.bf16.gmra.mxu0 %v5734
        %v10302 = vpop.f32.mrf.mxu0
        %v10303 = vadd.f32 %v6339, %v10302
        %v10304 = vpop.f32.mrf.mxu0
        %v10305 = vadd.f32 %v6343, %v10304
        %v10306 = vpop.f32.mrf.mxu0
        %v10307 = vadd.f32 %v6339, %v10306
        %v10308 = vpop.f32.mrf.mxu0
        %v10309 = vadd.f32 %v6343, %v10308
        %10310 = vmatprep.mubr.bf16.mxu0 %v5743
        %10311 = vmatmul.mubr.bf16.gmra.mxu0 %v5742
        %v10312 = vpop.f32.mrf.mxu0
        %v10313 = vadd.f32 %v6339, %v10312
        %v10314 = vpop.f32.mrf.mxu0
        %v10315 = vadd.f32 %v6343, %v10314
        %v10316 = vpop.f32.mrf.mxu0
        %v10317 = vadd.f32 %v6339, %v10316
        %v10318 = vpop.f32.mrf.mxu0
        %v10319 = vadd.f32 %v6343, %v10318
        %10320 = vmatprep.mubr.bf16.mxu0 %v5751
        %10321 = vmatmul.mubr.bf16.gmra.mxu0 %v5750
        %v10322 = vpop.f32.mrf.mxu0
        %v10323 = vadd.f32 %v6339, %v10322
        %v10324 = vpop.f32.mrf.mxu0
        %v10325 = vadd.f32 %v6343, %v10324
        %v10326 = vpop.f32.mrf.mxu0
        %v10327 = vadd.f32 %v6339, %v10326
        %v10328 = vpop.f32.mrf.mxu0
        %v10329 = vadd.f32 %v6343, %v10328
        %10330 = vmatprep.mubr.bf16.mxu0 %v5759
        %10331 = vmatmul.mubr.bf16.gmra.mxu0 %v5758
        %v10332 = vpop.f32.mrf.mxu0
        %v10333 = vadd.f32 %v6339, %v10332
        %v10334 = vpop.f32.mrf.mxu0
        %v10335 = vadd.f32 %v6343, %v10334
        %v10336 = vpop.f32.mrf.mxu0
        %v10337 = vadd.f32 %v6339, %v10336
        %v10338 = vpop.f32.mrf.mxu0
        %v10339 = vadd.f32 %v6343, %v10338
        %10340 = vmatprep.mubr.bf16.mxu0 %v5767
        %10341 = vmatmul.mubr.bf16.gmra.mxu0 %v5766
        %v10342 = vpop.f32.mrf.mxu0
        %v10343 = vadd.f32 %v6339, %v10342
        %v10344 = vpop.f32.mrf.mxu0
        %v10345 = vadd.f32 %v6343, %v10344
        %v10346 = vpop.f32.mrf.mxu0
        %v10347 = vadd.f32 %v6339, %v10346
        %v10348 = vpop.f32.mrf.mxu0
        %v10349 = vadd.f32 %v6343, %v10348
        %10350 = vmatprep.mubr.bf16.mxu0 %v5775
        %10351 = vmatmul.mubr.bf16.gmra.mxu0 %v5774
        %v10352 = vpop.f32.mrf.mxu0
        %v10353 = vadd.f32 %v6339, %v10352
        %v10354 = vpop.f32.mrf.mxu0
        %v10355 = vadd.f32 %v6343, %v10354
        %v10356 = vpop.f32.mrf.mxu0
        %v10357 = vadd.f32 %v6339, %v10356
        %v10358 = vpop.f32.mrf.mxu0
        %v10359 = vadd.f32 %v6343, %v10358
        %10360 = vmatprep.mubr.bf16.mxu0 %v5783
        %10361 = vmatmul.mubr.bf16.gmra.mxu0 %v5782
        %v10362 = vpop.f32.mrf.mxu0
        %v10363 = vadd.f32 %v6339, %v10362
        %v10364 = vpop.f32.mrf.mxu0
        %v10365 = vadd.f32 %v6343, %v10364
        %v10366 = vpop.f32.mrf.mxu0
        %v10367 = vadd.f32 %v6339, %v10366
        %v10368 = vpop.f32.mrf.mxu0
        %v10369 = vadd.f32 %v6343, %v10368
        %10370 = vmatprep.mubr.bf16.mxu0 %v5791
        %10371 = vmatmul.mubr.bf16.gmra.mxu0 %v5790
        %v10372 = vpop.f32.mrf.mxu0
        %v10373 = vadd.f32 %v6339, %v10372
        %v10374 = vpop.f32.mrf.mxu0
        %v10375 = vadd.f32 %v6343, %v10374
        %v10376 = vpop.f32.mrf.mxu0
        %v10377 = vadd.f32 %v6339, %v10376
        %v10378 = vpop.f32.mrf.mxu0
        %v10379 = vadd.f32 %v6343, %v10378
        %10380 = vdwg.mxu0
        %10381 = vmatprep.subr.bf16.mxu0 %v8079
        %10382 = vmatpush1.bf16.msra.mxu0 %v8078
        %10383 = vmatprep.subr.bf16.mxu0 %v8071
        %10384 = vmatpush1.bf16.msra.mxu0 %v8070
        %10385 = vmatprep.subr.bf16.mxu0 %v8063
        %10386 = vmatpush1.bf16.msra.mxu0 %v8062
        %10387 = vmatprep.subr.bf16.mxu0 %v8055
        %10388 = vmatpush1.bf16.msra.mxu0 %v8054
        %10389 = vmatprep.subr.bf16.mxu0 %v8047
        %10390 = vmatpush1.bf16.msra.mxu0 %v8046
        %10391 = vmatprep.subr.bf16.mxu0 %v8039
        %10392 = vmatpush1.bf16.msra.mxu0 %v8038
        %10393 = vmatprep.subr.bf16.mxu0 %v8031
        %10394 = vmatpush1.bf16.msra.mxu0 %v8030
        %10395 = vmatprep.subr.bf16.mxu0 %v8023
        %10396 = vmatpush1.bf16.msra.mxu0 %v8022
        %10397 = vmatprep.subr.bf16.mxu0 %v8143
        %10398 = vmatpush2.bf16.msra.mxu0 %v8142
        %10399 = vmatprep.subr.bf16.mxu0 %v8135
        %10400 = vmatpush2.bf16.msra.mxu0 %v8134
        %10401 = vmatprep.subr.bf16.mxu0 %v8127
        %10402 = vmatpush2.bf16.msra.mxu0 %v8126
        %10403 = vmatprep.subr.bf16.mxu0 %v8119
        %10404 = vmatpush2.bf16.msra.mxu0 %v8118
        %10405 = vmatprep.subr.bf16.mxu0 %v8111
        %10406 = vmatpush2.bf16.msra.mxu0 %v8110
        %10407 = vmatprep.subr.bf16.mxu0 %v8103
        %10408 = vmatpush2.bf16.msra.mxu0 %v8102
        %10409 = vmatprep.subr.bf16.mxu0 %v8095
        %10410 = vmatpush2.bf16.msra.mxu0 %v8094
        %10411 = vmatprep.subr.bf16.mxu0 %v8087
        %10412 = vmatpush2.bf16.msra.mxu0 %v8086
        %10413 = vmatprep.mubr.bf16.mxu0 %v5737
        %10414 = vmatmul.mubr.bf16.gmra.mxu0 %v5736
        %v10415 = vpop.f32.mrf.mxu0
        %v10416 = vadd.f32 %v10303, %v10415
        %v10417 = vpop.f32.mrf.mxu0
        %v10418 = vadd.f32 %v10305, %v10417
        %v10419 = vpop.f32.mrf.mxu0
        %v10420 = vadd.f32 %v10307, %v10419
        %v10421 = vpop.f32.mrf.mxu0
        %v10422 = vadd.f32 %v10309, %v10421
        %10423 = vmatprep.mubr.bf16.mxu0 %v5745
        %10424 = vmatmul.mubr.bf16.gmra.mxu0 %v5744
        %v10425 = vpop.f32.mrf.mxu0
        %v10426 = vadd.f32 %v10313, %v10425
        %v10427 = vpop.f32.mrf.mxu0
        %v10428 = vadd.f32 %v10315, %v10427
        %v10429 = vpop.f32.mrf.mxu0
        %v10430 = vadd.f32 %v10317, %v10429
        %v10431 = vpop.f32.mrf.mxu0
        %v10432 = vadd.f32 %v10319, %v10431
        %10433 = vmatprep.mubr.bf16.mxu0 %v5753
        %10434 = vmatmul.mubr.bf16.gmra.mxu0 %v5752
        %v10435 = vpop.f32.mrf.mxu0
        %v10436 = vadd.f32 %v10323, %v10435
        %v10437 = vpop.f32.mrf.mxu0
        %v10438 = vadd.f32 %v10325, %v10437
        %v10439 = vpop.f32.mrf.mxu0
        %v10440 = vadd.f32 %v10327, %v10439
        %v10441 = vpop.f32.mrf.mxu0
        %v10442 = vadd.f32 %v10329, %v10441
        %10443 = vmatprep.mubr.bf16.mxu0 %v5761
        %10444 = vmatmul.mubr.bf16.gmra.mxu0 %v5760
        %v10445 = vpop.f32.mrf.mxu0
        %v10446 = vadd.f32 %v10333, %v10445
        %v10447 = vpop.f32.mrf.mxu0
        %v10448 = vadd.f32 %v10335, %v10447
        %v10449 = vpop.f32.mrf.mxu0
        %v10450 = vadd.f32 %v10337, %v10449
        %v10451 = vpop.f32.mrf.mxu0
        %v10452 = vadd.f32 %v10339, %v10451
        %10453 = vmatprep.mubr.bf16.mxu0 %v5769
        %10454 = vmatmul.mubr.bf16.gmra.mxu0 %v5768
        %v10455 = vpop.f32.mrf.mxu0
        %v10456 = vadd.f32 %v10343, %v10455
        %v10457 = vpop.f32.mrf.mxu0
        %v10458 = vadd.f32 %v10345, %v10457
        %v10459 = vpop.f32.mrf.mxu0
        %v10460 = vadd.f32 %v10347, %v10459
        %v10461 = vpop.f32.mrf.mxu0
        %v10462 = vadd.f32 %v10349, %v10461
        %10463 = vmatprep.mubr.bf16.mxu0 %v5777
        %10464 = vmatmul.mubr.bf16.gmra.mxu0 %v5776
        %v10465 = vpop.f32.mrf.mxu0
        %v10466 = vadd.f32 %v10353, %v10465
        %v10467 = vpop.f32.mrf.mxu0
        %v10468 = vadd.f32 %v10355, %v10467
        %v10469 = vpop.f32.mrf.mxu0
        %v10470 = vadd.f32 %v10357, %v10469
        %v10471 = vpop.f32.mrf.mxu0
        %v10472 = vadd.f32 %v10359, %v10471
        %10473 = vmatprep.mubr.bf16.mxu0 %v5785
        %10474 = vmatmul.mubr.bf16.gmra.mxu0 %v5784
        %v10475 = vpop.f32.mrf.mxu0
        %v10476 = vadd.f32 %v10363, %v10475
        %v10477 = vpop.f32.mrf.mxu0
        %v10478 = vadd.f32 %v10365, %v10477
        %v10479 = vpop.f32.mrf.mxu0
        %v10480 = vadd.f32 %v10367, %v10479
        %v10481 = vpop.f32.mrf.mxu0
        %v10482 = vadd.f32 %v10369, %v10481
        %10483 = vmatprep.mubr.bf16.mxu0 %v5793
        %10484 = vmatmul.mubr.bf16.gmra.mxu0 %v5792
        %v10485 = vpop.f32.mrf.mxu0
        %v10486 = vadd.f32 %v10373, %v10485
        %v10487 = vpop.f32.mrf.mxu0
        %v10488 = vadd.f32 %v10375, %v10487
        %v10489 = vpop.f32.mrf.mxu0
        %v10490 = vadd.f32 %v10377, %v10489
        %v10491 = vpop.f32.mrf.mxu0
        %v10492 = vadd.f32 %v10379, %v10491
        %10493 = vdwg.mxu0
        %10494 = vmatprep.subr.bf16.mxu0 %v8207
        %10495 = vmatpush1.bf16.msra.mxu0 %v8206
        %10496 = vmatprep.subr.bf16.mxu0 %v8199
        %10497 = vmatpush1.bf16.msra.mxu0 %v8198
        %10498 = vmatprep.subr.bf16.mxu0 %v8191
        %10499 = vmatpush1.bf16.msra.mxu0 %v8190
        %10500 = vmatprep.subr.bf16.mxu0 %v8183
        %10501 = vmatpush1.bf16.msra.mxu0 %v8182
        %10502 = vmatprep.subr.bf16.mxu0 %v8175
        %10503 = vmatpush1.bf16.msra.mxu0 %v8174
        %10504 = vmatprep.subr.bf16.mxu0 %v8167
        %10505 = vmatpush1.bf16.msra.mxu0 %v8166
        %10506 = vmatprep.subr.bf16.mxu0 %v8159
        %10507 = vmatpush1.bf16.msra.mxu0 %v8158
        %10508 = vmatprep.subr.bf16.mxu0 %v8151
        %10509 = vmatpush1.bf16.msra.mxu0 %v8150
        %10510 = vmatprep.subr.bf16.mxu0 %v8271
        %10511 = vmatpush2.bf16.msra.mxu0 %v8270
        %10512 = vmatprep.subr.bf16.mxu0 %v8263
        %10513 = vmatpush2.bf16.msra.mxu0 %v8262
        %10514 = vmatprep.subr.bf16.mxu0 %v8255
        %10515 = vmatpush2.bf16.msra.mxu0 %v8254
        %10516 = vmatprep.subr.bf16.mxu0 %v8247
        %10517 = vmatpush2.bf16.msra.mxu0 %v8246
        %10518 = vmatprep.subr.bf16.mxu0 %v8239
        %10519 = vmatpush2.bf16.msra.mxu0 %v8238
        %10520 = vmatprep.subr.bf16.mxu0 %v8231
        %10521 = vmatpush2.bf16.msra.mxu0 %v8230
        %10522 = vmatprep.subr.bf16.mxu0 %v8223
        %10523 = vmatpush2.bf16.msra.mxu0 %v8222
        %10524 = vmatprep.subr.bf16.mxu0 %v8215
        %10525 = vmatpush2.bf16.msra.mxu0 %v8214
        %10526 = vmatprep.mubr.bf16.mxu0 %v5739
        %10527 = vmatmul.mubr.bf16.gmra.mxu0 %v5738
        %v10528 = vpop.f32.mrf.mxu0
        %v10529 = vadd.f32 %v10416, %v10528
        %v10530 = vpop.f32.mrf.mxu0
        %v10531 = vadd.f32 %v10418, %v10530
        %v10532 = vpop.f32.mrf.mxu0
        %v10533 = vadd.f32 %v10420, %v10532
        %v10534 = vpop.f32.mrf.mxu0
        %v10535 = vadd.f32 %v10422, %v10534
        %10536 = vmatprep.mubr.bf16.mxu0 %v5747
        %10537 = vmatmul.mubr.bf16.gmra.mxu0 %v5746
        %v10538 = vpop.f32.mrf.mxu0
        %v10539 = vadd.f32 %v10426, %v10538
        %v10540 = vpop.f32.mrf.mxu0
        %v10541 = vadd.f32 %v10428, %v10540
        %v10542 = vpop.f32.mrf.mxu0
        %v10543 = vadd.f32 %v10430, %v10542
        %v10544 = vpop.f32.mrf.mxu0
        %v10545 = vadd.f32 %v10432, %v10544
        %10546 = vmatprep.mubr.bf16.mxu0 %v5755
        %10547 = vmatmul.mubr.bf16.gmra.mxu0 %v5754
        %v10548 = vpop.f32.mrf.mxu0
        %v10549 = vadd.f32 %v10436, %v10548
        %v10550 = vpop.f32.mrf.mxu0
        %v10551 = vadd.f32 %v10438, %v10550
        %v10552 = vpop.f32.mrf.mxu0
        %v10553 = vadd.f32 %v10440, %v10552
        %v10554 = vpop.f32.mrf.mxu0
        %v10555 = vadd.f32 %v10442, %v10554
        %10556 = vmatprep.mubr.bf16.mxu0 %v5763
        %10557 = vmatmul.mubr.bf16.gmra.mxu0 %v5762
        %v10558 = vpop.f32.mrf.mxu0
        %v10559 = vadd.f32 %v10446, %v10558
        %v10560 = vpop.f32.mrf.mxu0
        %v10561 = vadd.f32 %v10448, %v10560
        %v10562 = vpop.f32.mrf.mxu0
        %v10563 = vadd.f32 %v10450, %v10562
        %v10564 = vpop.f32.mrf.mxu0
        %v10565 = vadd.f32 %v10452, %v10564
        %10566 = vmatprep.mubr.bf16.mxu0 %v5771
        %10567 = vmatmul.mubr.bf16.gmra.mxu0 %v5770
        %v10568 = vpop.f32.mrf.mxu0
        %v10569 = vadd.f32 %v10456, %v10568
        %v10570 = vpop.f32.mrf.mxu0
        %v10571 = vadd.f32 %v10458, %v10570
        %v10572 = vpop.f32.mrf.mxu0
        %v10573 = vadd.f32 %v10460, %v10572
        %v10574 = vpop.f32.mrf.mxu0
        %v10575 = vadd.f32 %v10462, %v10574
        %10576 = vmatprep.mubr.bf16.mxu0 %v5779
        %10577 = vmatmul.mubr.bf16.gmra.mxu0 %v5778
        %v10578 = vpop.f32.mrf.mxu0
        %v10579 = vadd.f32 %v10466, %v10578
        %v10580 = vpop.f32.mrf.mxu0
        %v10581 = vadd.f32 %v10468, %v10580
        %v10582 = vpop.f32.mrf.mxu0
        %v10583 = vadd.f32 %v10470, %v10582
        %v10584 = vpop.f32.mrf.mxu0
        %v10585 = vadd.f32 %v10472, %v10584
        %10586 = vmatprep.mubr.bf16.mxu0 %v5787
        %10587 = vmatmul.mubr.bf16.gmra.mxu0 %v5786
        %v10588 = vpop.f32.mrf.mxu0
        %v10589 = vadd.f32 %v10476, %v10588
        %v10590 = vpop.f32.mrf.mxu0
        %v10591 = vadd.f32 %v10478, %v10590
        %v10592 = vpop.f32.mrf.mxu0
        %v10593 = vadd.f32 %v10480, %v10592
        %v10594 = vpop.f32.mrf.mxu0
        %v10595 = vadd.f32 %v10482, %v10594
        %10596 = vmatprep.mubr.bf16.mxu0 %v5795
        %10597 = vmatmul.mubr.bf16.gmra.mxu0 %v5794
        %v10598 = vpop.f32.mrf.mxu0
        %v10599 = vadd.f32 %v10486, %v10598
        %v10600 = vpop.f32.mrf.mxu0
        %v10601 = vadd.f32 %v10488, %v10600
        %v10602 = vpop.f32.mrf.mxu0
        %v10603 = vadd.f32 %v10490, %v10602
        %v10604 = vpop.f32.mrf.mxu0
        %v10605 = vadd.f32 %v10492, %v10604
        %10606 = vdwg.mxu0
        %10607 = vmatprep.subr.bf16.mxu0 %v8335
        %10608 = vmatpush1.bf16.msra.mxu0 %v8334
        %10609 = vmatprep.subr.bf16.mxu0 %v8327
        %10610 = vmatpush1.bf16.msra.mxu0 %v8326
        %10611 = vmatprep.subr.bf16.mxu0 %v8319
        %10612 = vmatpush1.bf16.msra.mxu0 %v8318
        %10613 = vmatprep.subr.bf16.mxu0 %v8311
        %10614 = vmatpush1.bf16.msra.mxu0 %v8310
        %10615 = vmatprep.subr.bf16.mxu0 %v8303
        %10616 = vmatpush1.bf16.msra.mxu0 %v8302
        %10617 = vmatprep.subr.bf16.mxu0 %v8295
        %10618 = vmatpush1.bf16.msra.mxu0 %v8294
        %10619 = vmatprep.subr.bf16.mxu0 %v8287
        %10620 = vmatpush1.bf16.msra.mxu0 %v8286
        %10621 = vmatprep.subr.bf16.mxu0 %v8279
        %10622 = vmatpush1.bf16.msra.mxu0 %v8278
        %10623 = vmatprep.subr.bf16.mxu0 %v8399
        %10624 = vmatpush2.bf16.msra.mxu0 %v8398
        %10625 = vmatprep.subr.bf16.mxu0 %v8391
        %10626 = vmatpush2.bf16.msra.mxu0 %v8390
        %10627 = vmatprep.subr.bf16.mxu0 %v8383
        %10628 = vmatpush2.bf16.msra.mxu0 %v8382
        %10629 = vmatprep.subr.bf16.mxu0 %v8375
        %10630 = vmatpush2.bf16.msra.mxu0 %v8374
        %10631 = vmatprep.subr.bf16.mxu0 %v8367
        %10632 = vmatpush2.bf16.msra.mxu0 %v8366
        %10633 = vmatprep.subr.bf16.mxu0 %v8359
        %10634 = vmatpush2.bf16.msra.mxu0 %v8358
        %10635 = vmatprep.subr.bf16.mxu0 %v8351
        %10636 = vmatpush2.bf16.msra.mxu0 %v8350
        %10637 = vmatprep.subr.bf16.mxu0 %v8343
        %10638 = vmatpush2.bf16.msra.mxu0 %v8342
        %10639 = vmatprep.mubr.bf16.mxu0 %v5741
        %10640 = vmatmul.mubr.bf16.gmra.mxu0 %v5740
        %v10641 = vpop.f32.mrf.mxu0
        %v10642 = vadd.f32 %v10529, %v10641
        %v10643 = vpop.f32.mrf.mxu0
        %v10644 = vadd.f32 %v10531, %v10643
        %v10645 = vpop.f32.mrf.mxu0
        %v10646 = vadd.f32 %v10533, %v10645
        %v10647 = vpop.f32.mrf.mxu0
        %v10648 = vadd.f32 %v10535, %v10647
        %10649 = vmatprep.mubr.bf16.mxu0 %v5749
        %10650 = vmatmul.mubr.bf16.gmra.mxu0 %v5748
        %v10651 = vpop.f32.mrf.mxu0
        %v10652 = vadd.f32 %v10539, %v10651
        %v10653 = vpop.f32.mrf.mxu0
        %v10654 = vadd.f32 %v10541, %v10653
        %v10655 = vpop.f32.mrf.mxu0
        %v10656 = vadd.f32 %v10543, %v10655
        %v10657 = vpop.f32.mrf.mxu0
        %v10658 = vadd.f32 %v10545, %v10657
        %10659 = vmatprep.mubr.bf16.mxu0 %v5757
        %10660 = vmatmul.mubr.bf16.gmra.mxu0 %v5756
        %v10661 = vpop.f32.mrf.mxu0
        %v10662 = vadd.f32 %v10549, %v10661
        %v10663 = vpop.f32.mrf.mxu0
        %v10664 = vadd.f32 %v10551, %v10663
        %v10665 = vpop.f32.mrf.mxu0
        %v10666 = vadd.f32 %v10553, %v10665
        %v10667 = vpop.f32.mrf.mxu0
        %v10668 = vadd.f32 %v10555, %v10667
        %10669 = vmatprep.mubr.bf16.mxu0 %v5765
        %10670 = vmatmul.mubr.bf16.gmra.mxu0 %v5764
        %v10671 = vpop.f32.mrf.mxu0
        %v10672 = vadd.f32 %v10559, %v10671
        %v10673 = vpop.f32.mrf.mxu0
        %v10674 = vadd.f32 %v10561, %v10673
        %v10675 = vpop.f32.mrf.mxu0
        %v10676 = vadd.f32 %v10563, %v10675
        %v10677 = vpop.f32.mrf.mxu0
        %v10678 = vadd.f32 %v10565, %v10677
        %10679 = vmatprep.mubr.bf16.mxu0 %v5773
        %10680 = vmatmul.mubr.bf16.gmra.mxu0 %v5772
        %v10681 = vpop.f32.mrf.mxu0
        %v10682 = vadd.f32 %v10569, %v10681
        %v10683 = vpop.f32.mrf.mxu0
        %v10684 = vadd.f32 %v10571, %v10683
        %v10685 = vpop.f32.mrf.mxu0
        %v10686 = vadd.f32 %v10573, %v10685
        %v10687 = vpop.f32.mrf.mxu0
        %v10688 = vadd.f32 %v10575, %v10687
        %10689 = vmatprep.mubr.bf16.mxu0 %v5781
        %10690 = vmatmul.mubr.bf16.gmra.mxu0 %v5780
        %v10691 = vpop.f32.mrf.mxu0
        %v10692 = vadd.f32 %v10579, %v10691
        %v10693 = vpop.f32.mrf.mxu0
        %v10694 = vadd.f32 %v10581, %v10693
        %v10695 = vpop.f32.mrf.mxu0
        %v10696 = vadd.f32 %v10583, %v10695
        %v10697 = vpop.f32.mrf.mxu0
        %v10698 = vadd.f32 %v10585, %v10697
        %10699 = vmatprep.mubr.bf16.mxu0 %v5789
        %10700 = vmatmul.mubr.bf16.gmra.mxu0 %v5788
        %v10701 = vpop.f32.mrf.mxu0
        %v10702 = vadd.f32 %v10589, %v10701
        %v10703 = vpop.f32.mrf.mxu0
        %v10704 = vadd.f32 %v10591, %v10703
        %v10705 = vpop.f32.mrf.mxu0
        %v10706 = vadd.f32 %v10593, %v10705
        %v10707 = vpop.f32.mrf.mxu0
        %v10708 = vadd.f32 %v10595, %v10707
        %10709 = vmatprep.mubr.bf16.mxu0 %v5797
        %10710 = vmatmul.mubr.bf16.gmra.mxu0 %v5796
        %v10711 = vpop.f32.mrf.mxu0
        %v10712 = vadd.f32 %v10599, %v10711
        %v10713 = vpop.f32.mrf.mxu0
        %v10714 = vadd.f32 %v10601, %v10713
        %v10715 = vpop.f32.mrf.mxu0
        %v10716 = vadd.f32 %v10603, %v10715
        %v10717 = vpop.f32.mrf.mxu0
        %v10718 = vadd.f32 %v10605, %v10717
        %10719 = vdwg.mxu0
        %10720 = vst [vmem:[%s297] sm:$0xff] %v9286
        %10721 = vst [vmem:[%s297 + $0x8] sm:$0xff] %v9288
        %10722 = vst [vmem:[%s297 + $0x10] sm:$0xff] %v9738
        %10723 = vst [vmem:[%s297 + $0x18] sm:$0xff] %v9740
        %10724 = vst [vmem:[%s297 + $0x20] sm:$0xff] %v10190
        %10725 = vst [vmem:[%s297 + $0x28] sm:$0xff] %v10192
        %10726 = vst [vmem:[%s297 + $0x30] sm:$0xff] %v10642
        %10727 = vst [vmem:[%s297 + $0x38] sm:$0xff] %v10644
        %10728 = vst [vmem:[%s297 + $0x40] sm:$0xff] %v9290
        %10729 = vst [vmem:[%s297 + $0x48] sm:$0xff] %v9292
        %10730 = vst [vmem:[%s297 + $0x50] sm:$0xff] %v9742
        %10731 = vst [vmem:[%s297 + $0x58] sm:$0xff] %v9744
        %10732 = vst [vmem:[%s297 + $0x60] sm:$0xff] %v10194
        %10733 = vst [vmem:[%s297 + $0x68] sm:$0xff] %v10196
        %10734 = vst [vmem:[%s297 + $0x70] sm:$0xff] %v10646
        %10735 = vst [vmem:[%s297 + $0x78] sm:$0xff] %v10648
        %10736 = vst [vmem:[%s297 + $0x80] sm:$0xff] %v9296
        %10737 = vst [vmem:[%s297 + $0x88] sm:$0xff] %v9298
        %10738 = vst [vmem:[%s297 + $0x90] sm:$0xff] %v9748
        %10739 = vst [vmem:[%s297 + $0x98] sm:$0xff] %v9750
        %10740 = vst [vmem:[%s297 + $0xa0] sm:$0xff] %v10200
        %10741 = vst [vmem:[%s297 + $0xa8] sm:$0xff] %v10202
        %10742 = vst [vmem:[%s297 + $0xb0] sm:$0xff] %v10652
        %10743 = vst [vmem:[%s297 + $0xb8] sm:$0xff] %v10654
        %10744 = vst [vmem:[%s297 + $0xc0] sm:$0xff] %v9300
        %10745 = vst [vmem:[%s297 + $0xc8] sm:$0xff] %v9302
        %10746 = vst [vmem:[%s297 + $0xd0] sm:$0xff] %v9752
        %10747 = vst [vmem:[%s297 + $0xd8] sm:$0xff] %v9754
        %10748 = vst [vmem:[%s297 + $0xe0] sm:$0xff] %v10204
        %10749 = vst [vmem:[%s297 + $0xe8] sm:$0xff] %v10206
        %10750 = vst [vmem:[%s297 + $0xf0] sm:$0xff] %v10656
        %10751 = vst [vmem:[%s297 + $0xf8] sm:$0xff] %v10658
        %10752 = vst [vmem:[%s297 + $0x100] sm:$0xff] %v9306
        %10753 = vst [vmem:[%s297 + $0x108] sm:$0xff] %v9308
        %10754 = vst [vmem:[%s297 + $0x110] sm:$0xff] %v9758
        %10755 = vst [vmem:[%s297 + $0x118] sm:$0xff] %v9760
        %10756 = vst [vmem:[%s297 + $0x120] sm:$0xff] %v10210
        %10757 = vst [vmem:[%s297 + $0x128] sm:$0xff] %v10212
        %10758 = vst [vmem:[%s297 + $0x130] sm:$0xff] %v10662
        %10759 = vst [vmem:[%s297 + $0x138] sm:$0xff] %v10664
        %10760 = vst [vmem:[%s297 + $0x140] sm:$0xff] %v9310
        %10761 = vst [vmem:[%s297 + $0x148] sm:$0xff] %v9312
        %10762 = vst [vmem:[%s297 + $0x150] sm:$0xff] %v9762
        %10763 = vst [vmem:[%s297 + $0x158] sm:$0xff] %v9764
        %10764 = vst [vmem:[%s297 + $0x160] sm:$0xff] %v10214
        %10765 = vst [vmem:[%s297 + $0x168] sm:$0xff] %v10216
        %10766 = vst [vmem:[%s297 + $0x170] sm:$0xff] %v10666
        %10767 = vst [vmem:[%s297 + $0x178] sm:$0xff] %v10668
        %10768 = vst [vmem:[%s297 + $0x180] sm:$0xff] %v9316
        %10769 = vst [vmem:[%s297 + $0x188] sm:$0xff] %v9318
        %10770 = vst [vmem:[%s297 + $0x190] sm:$0xff] %v9768
        %10771 = vst [vmem:[%s297 + $0x198] sm:$0xff] %v9770
        %10772 = vst [vmem:[%s297 + $0x1a0] sm:$0xff] %v10220
        %10773 = vst [vmem:[%s297 + $0x1a8] sm:$0xff] %v10222
        %10774 = vst [vmem:[%s297 + $0x1b0] sm:$0xff] %v10672
        %10775 = vst [vmem:[%s297 + $0x1b8] sm:$0xff] %v10674
        %10776 = vst [vmem:[%s297 + $0x1c0] sm:$0xff] %v9320
        %10777 = vst [vmem:[%s297 + $0x1c8] sm:$0xff] %v9322
        %10778 = vst [vmem:[%s297 + $0x1d0] sm:$0xff] %v9772
        %10779 = vst [vmem:[%s297 + $0x1d8] sm:$0xff] %v9774
        %10780 = vst [vmem:[%s297 + $0x1e0] sm:$0xff] %v10224
        %10781 = vst [vmem:[%s297 + $0x1e8] sm:$0xff] %v10226
        %10782 = vst [vmem:[%s297 + $0x1f0] sm:$0xff] %v10676
        %10783 = vst [vmem:[%s297 + $0x1f8] sm:$0xff] %v10678
        %10784 = vst [vmem:[%s297 + $0x200] sm:$0xff] %v9326
        %10785 = vst [vmem:[%s297 + $0x208] sm:$0xff] %v9328
        %10786 = vst [vmem:[%s297 + $0x210] sm:$0xff] %v9778
        %10787 = vst [vmem:[%s297 + $0x218] sm:$0xff] %v9780
        %10788 = vst [vmem:[%s297 + $0x220] sm:$0xff] %v10230
        %10789 = vst [vmem:[%s297 + $0x228] sm:$0xff] %v10232
        %10790 = vst [vmem:[%s297 + $0x230] sm:$0xff] %v10682
        %10791 = vst [vmem:[%s297 + $0x238] sm:$0xff] %v10684
        %10792 = vst [vmem:[%s297 + $0x240] sm:$0xff] %v9330
        %10793 = vst [vmem:[%s297 + $0x248] sm:$0xff] %v9332
        %10794 = vst [vmem:[%s297 + $0x250] sm:$0xff] %v9782
        %10795 = vst [vmem:[%s297 + $0x258] sm:$0xff] %v9784
        %10796 = vst [vmem:[%s297 + $0x260] sm:$0xff] %v10234
        %10797 = vst [vmem:[%s297 + $0x268] sm:$0xff] %v10236
        %10798 = vst [vmem:[%s297 + $0x270] sm:$0xff] %v10686
        %10799 = vst [vmem:[%s297 + $0x278] sm:$0xff] %v10688
        %10800 = vst [vmem:[%s297 + $0x280] sm:$0xff] %v9336
        %10801 = vst [vmem:[%s297 + $0x288] sm:$0xff] %v9338
        %10802 = vst [vmem:[%s297 + $0x290] sm:$0xff] %v9788
        %10803 = vst [vmem:[%s297 + $0x298] sm:$0xff] %v9790
        %10804 = vst [vmem:[%s297 + $0x2a0] sm:$0xff] %v10240
        %10805 = vst [vmem:[%s297 + $0x2a8] sm:$0xff] %v10242
        %10806 = vst [vmem:[%s297 + $0x2b0] sm:$0xff] %v10692
        %10807 = vst [vmem:[%s297 + $0x2b8] sm:$0xff] %v10694
        %10808 = vst [vmem:[%s297 + $0x2c0] sm:$0xff] %v9340
        %10809 = vst [vmem:[%s297 + $0x2c8] sm:$0xff] %v9342
        %10810 = vst [vmem:[%s297 + $0x2d0] sm:$0xff] %v9792
        %10811 = vst [vmem:[%s297 + $0x2d8] sm:$0xff] %v9794
        %10812 = vst [vmem:[%s297 + $0x2e0] sm:$0xff] %v10244
        %10813 = vst [vmem:[%s297 + $0x2e8] sm:$0xff] %v10246
        %10814 = vst [vmem:[%s297 + $0x2f0] sm:$0xff] %v10696
        %10815 = vst [vmem:[%s297 + $0x2f8] sm:$0xff] %v10698
        %10816 = vst [vmem:[%s297 + $0x300] sm:$0xff] %v9346
        %10817 = vst [vmem:[%s297 + $0x308] sm:$0xff] %v9348
        %10818 = vst [vmem:[%s297 + $0x310] sm:$0xff] %v9798
        %10819 = vst [vmem:[%s297 + $0x318] sm:$0xff] %v9800
        %10820 = vst [vmem:[%s297 + $0x320] sm:$0xff] %v10250
        %10821 = vst [vmem:[%s297 + $0x328] sm:$0xff] %v10252
        %10822 = vst [vmem:[%s297 + $0x330] sm:$0xff] %v10702
        %10823 = vst [vmem:[%s297 + $0x338] sm:$0xff] %v10704
        %10824 = vst [vmem:[%s297 + $0x340] sm:$0xff] %v9350
        %10825 = vst [vmem:[%s297 + $0x348] sm:$0xff] %v9352
        %10826 = vst [vmem:[%s297 + $0x350] sm:$0xff] %v9802
        %10827 = vst [vmem:[%s297 + $0x358] sm:$0xff] %v9804
        %10828 = vst [vmem:[%s297 + $0x360] sm:$0xff] %v10254
        %10829 = vst [vmem:[%s297 + $0x368] sm:$0xff] %v10256
        %10830 = vst [vmem:[%s297 + $0x370] sm:$0xff] %v10706
        %10831 = vst [vmem:[%s297 + $0x378] sm:$0xff] %v10708
        %10832 = vst [vmem:[%s297 + $0x380] sm:$0xff] %v9356
        %10833 = vst [vmem:[%s297 + $0x388] sm:$0xff] %v9358
        %10834 = vst [vmem:[%s297 + $0x390] sm:$0xff] %v9808
        %10835 = vst [vmem:[%s297 + $0x398] sm:$0xff] %v9810
        %10836 = vst [vmem:[%s297 + $0x3a0] sm:$0xff] %v10260
        %10837 = vst [vmem:[%s297 + $0x3a8] sm:$0xff] %v10262
        %10838 = vst [vmem:[%s297 + $0x3b0] sm:$0xff] %v10712
        %10839 = vst [vmem:[%s297 + $0x3b8] sm:$0xff] %v10714
        %10840 = vst [vmem:[%s297 + $0x3c0] sm:$0xff] %v9360
        %10841 = vst [vmem:[%s297 + $0x3c8] sm:$0xff] %v9362
        %10842 = vst [vmem:[%s297 + $0x3d0] sm:$0xff] %v9812
        %10843 = vst [vmem:[%s297 + $0x3d8] sm:$0xff] %v9814
        %10844 = vst [vmem:[%s297 + $0x3e0] sm:$0xff] %v10264
        %10845 = vst [vmem:[%s297 + $0x3e8] sm:$0xff] %v10266
        %10846 = vst [vmem:[%s297 + $0x3f0] sm:$0xff] %v10716
        %10847 = vst [vmem:[%s297 + $0x3f8] sm:$0xff] %v10718
        %s10848 = sand.u32 %s142, 1
        %s10849 = scalar_lea.sflag [#allocation4], %s10848
        %s10850 = sand.u32 %s142, 1
        %s10851 = smul.addr %s10850, 1024
        %s10852 = scalar_lea.vmem [#allocation11], %s10851
        // Predicated region
        $region61: #{tpu_custom_call.1} parent=39 // pred_check
          %p10853 = pneg %p152
        $region62: #{tpu_custom_call.1} parent=39 // pred_check_branch
          %10855 = sbr.rel (%p10853) target = $region64
        $region63: #{tpu_custom_call.1} parent=39 // pred_region
          %s10856 = smul.u32 16, %s24
          %s10858 = ssub.s32 16384, 16384
          %10859 = vsyncadd %s10849, %s10858
          %s10860 = smul.addr %s10856, 8
          %s10861 = smul.addr %s10860, 128
          %s10862 = scalar_lea.hbm %s5, %s10861
          %s10863 = sshll.u32 %s10852, 4
          %s10864 = int_to_ptr.vmem [resolvable:$true] %s10863
          %10869 = dma.vmem_to_hbm [thread:$0]  %s10864, 16384, %s10862, %s10849, 1024, 1024, 64
        $region64: #{tpu_custom_call.1} parent=39 // pred_fallthru
          _
      $region40: #{tpu_custom_call.1} parent=5 // pred_fallthru
        _
      %p10870 = scmp.le.s32.totalorder 2, %s19
      // Predicated region
      $region65: #{tpu_custom_call.1} parent=5 // pred_check
        %p10871 = pneg %p10870
      $region66: #{tpu_custom_call.1} parent=5 // pred_check_branch
        %10873 = sbr.rel (%p10871) target = $region68
      $region67: #{tpu_custom_call.1} parent=5 // pred_region
        %s10874 = ssub.s32 %s19, 2
        // Predicated region
        $region69: #{tpu_custom_call.1} parent=67 // pred_check
          %p10875 = pneg %p158
        $region70: #{tpu_custom_call.1} parent=67 // pred_check_branch
          %10877 = sbr.rel (%p10875) target = $region72
        $region71: #{tpu_custom_call.1} parent=67 // pred_region
          %s10878 = sand.u32 %s143, 1
          %s10879 = scalar_lea.sflag [#allocation4], %s10878
          %s10880 = sand.u32 %s143, 1
          %s10881 = smul.addr %s10880, 1024
          %s10882 = scalar_lea.vmem [#allocation11], %s10881
          %10883 = dma.done %s10879, 16384
        $region72: #{tpu_custom_call.1} parent=67 // pred_fallthru
          _
      $region68: #{tpu_custom_call.1} parent=5 // pred_fallthru
        _
    $region6: #{tpu_custom_call.1} parent=1 // loop_footer
      %s23 = sadd.s32 1, %s19
    $region7: #{tpu_custom_call.1} parent=1 // loop_footer_branch
      %18 = sbr.rel target = $region3
    $region8: #{tpu_custom_call.1} parent=1 // loop_exit
      _
    %10884 = vsyncpa [#allocation3], 1
    %s10885 = scalar_lea.sflag [#allocation3], 1
    %10886 = vsyncpa %s10885, 1
    %10887 = vsyncpa [#allocation6], 1
    %10888 = vsyncpa [#allocation9], 1
    %10889 = vsyncpa [#allocation4], 1
    %s10890 = scalar_lea.sflag [#allocation4], 1
    %10891 = vsyncpa %s10890, 1

</llo_original>
